<compile_context>
chip_gen: v6e
topology: v6e:2x2x1
jax: 0.10.0
libtpu: 0.0.40
codegen_flags: <defaults>
</compile_context>

<pallas_src>
import functools

import numpy as np

import jax
import jax.numpy as jnp
from jax.experimental import pallas as pl

LRELU_SLOPE = 0.2
BN_EPS = 1e-5
KSIZE = 4
STRIDE = 2
PAD = 1


def _lrelu(x):
    return jnp.where(x > 0, x, LRELU_SLOPE * x)


# ------------------------------ fused kernel --------------------------------

def _encoder_kernel(p1_ref, w1_ref,
                    g2_ref, w2_ref, bn2g_ref, bn2b_ref,
                    g3_ref, w3_ref, bn3g_ref, bn3b_ref,
                    g4_ref, w4_ref, bn4g_ref, bn4b_ref,
                    fcw_ref, fcb_ref, out_ref):
    # conv1 + LeakyReLU: patch matrix was prebuilt -> single MXU matmul.
    a = jnp.dot(p1_ref[...], w1_ref[...], preferred_element_type=jnp.float32)
    a = _lrelu(a)                                      # (N*Ho*Wo, dim_h)

    # conv{2,3,4} + BatchNorm(batch stats) + LeakyReLU, fully on-chip.
    for g_ref, w_ref, gam_ref, bet_ref in (
            (g2_ref, w2_ref, bn2g_ref, bn2b_ref),
            (g3_ref, w3_ref, bn3g_ref, bn3b_ref),
            (g4_ref, w4_ref, bn4g_ref, bn4b_ref)):
        n_taps, rows_out, _ = g_ref.shape
        c_out = w_ref.shape[2]
        y = jnp.zeros((rows_out, c_out), jnp.float32)
        for k in range(n_taps):                        # static unroll (16 taps)
            # Window extraction as a matmul with a constant 0/1 selection
            # matrix, then the channel contraction for this (kh, kw) tap.
            patch = jnp.dot(g_ref[k], a, preferred_element_type=jnp.float32)
            y = y + jnp.dot(patch, w_ref[k], preferred_element_type=jnp.float32)
        # Rows of y are exactly the (N, Hout, Wout) positions, so per-column
        # stats == BatchNorm2d training-mode batch statistics (biased var).
        mean = jnp.mean(y, axis=0, keepdims=True)
        var = jnp.mean((y - mean) ** 2, axis=0, keepdims=True)
        z = (y - mean) * jax.lax.rsqrt(var + BN_EPS) * gam_ref[...] + bet_ref[...]
        a = _lrelu(z)

    # Final Linear fused into the same kernel (spatial collapsed to 1x1, so
    # `a` is already the (N, dim_h*8) matrix the fc layer expects).
    out_ref[...] = (jnp.dot(a, fcw_ref[...], preferred_element_type=jnp.float32)
                    + fcb_ref[...])


# ------------------------------- JAX wrapper ---------------------------------

@functools.lru_cache(maxsize=None)
def _selection_matrices(batch, h_in):
    """Per-tap 0/1 matrices mapping flattened (n,h,w) input rows to flattened
    (n,i,j) output rows for a 4x4 / stride-2 / pad-1 conv (block-diag over N)."""
    h_out = h_in // STRIDE
    taps = []
    for kh in range(KSIZE):
        for kw in range(KSIZE):
            b = np.zeros((h_out * h_out, h_in * h_in), np.float32)
            for i in range(h_out):
                h = STRIDE * i + kh - PAD
                if h < 0 or h >= h_in:
                    continue
                for j in range(h_out):
                    w = STRIDE * j + kw - PAD
                    if w < 0 or w >= h_in:
                        continue
                    b[i * h_out + j, h * h_in + w] = 1.0
            taps.append(np.kron(np.eye(batch, dtype=np.float32), b))
    return jnp.asarray(np.stack(taps, axis=0))          # (16, N*Ho*Wo, N*H*W)


def _tap_weights(w_oihw):
    """OIHW conv weight -> (kh*kw, C_in, C_out) per-tap channel matrices."""
    c_out, c_in = w_oihw.shape[0], w_oihw.shape[1]
    return jnp.transpose(w_oihw, (2, 3, 1, 0)).reshape(KSIZE * KSIZE, c_in, c_out)


def _conv1_patches(x_nchw):
    """im2col of the tiny raw input; columns ordered (kh, kw, c_in)."""
    n, c, h, w = x_nchw.shape
    ho, wo = h // STRIDE, w // STRIDE
    xh = jnp.transpose(x_nchw, (0, 2, 3, 1))             # single tiny NHWC transpose
    xp = jnp.pad(xh, ((0, 0), (PAD, PAD), (PAD, PAD), (0, 0)))
    taps = [xp[:, kh:kh + STRIDE * ho:STRIDE, kw:kw + STRIDE * wo:STRIDE, :]
            for kh in range(KSIZE) for kw in range(KSIZE)]
    patches = jnp.stack(taps, axis=3)                    # (N, Ho, Wo, 16, C)
    return patches.reshape(n * ho * wo, KSIZE * KSIZE * c)


def _cost(ins, out_shape):
    p1, w1 = ins[0], ins[1]
    flops = 2 * p1.shape[0] * p1.shape[1] * w1.shape[1]
    trans = 0
    for off in (2, 6, 10):
        g, wt = ins[off], ins[off + 1]
        taps, r_out, r_in = g.shape
        flops += taps * 2 * r_out * r_in * wt.shape[1]          # selection matmuls
        flops += taps * 2 * r_out * wt.shape[1] * wt.shape[2]   # channel matmuls
        trans += wt.shape[2]                                    # rsqrt per channel
    fcw = ins[14]
    flops += 2 * out_shape[0] * fcw.shape[0] * fcw.shape[1]
    bytes_accessed = sum(a.size * a.dtype.itemsize for a in ins)
    bytes_accessed += int(np.prod(out_shape)) * 4
    return int(flops), int(trans), int(bytes_accessed)


@jax.jit
def encoder_forward(x, params):
    n, c_in, h, w = x.shape
    assert h == w, "square spatial input expected"

    ins = [_conv1_patches(x),
           jnp.transpose(params["conv1"], (2, 3, 1, 0)).reshape(
               KSIZE * KSIZE * c_in, params["conv1"].shape[0])]

    spatial = h // STRIDE                                 # conv2 input spatial
    for i in (2, 3, 4):
        ins.append(_selection_matrices(n, spatial))
        ins.append(_tap_weights(params[f"conv{i}"]))
        ins.append(params[f"bn{i}_gamma"].reshape(1, -1))
        ins.append(params[f"bn{i}_beta"].reshape(1, -1))
        spatial //= STRIDE
    assert spatial == 1, "spatial dims must collapse to 1x1 before the fc layer"

    ins.append(params["fc_w"].T)                          # (dim_h*8, n_z)
    ins.append(params["fc_b"].reshape(1, -1))

    n_z = params["fc_b"].shape[0]
    flops, trans, bytes_accessed = _cost(ins, (n, n_z))
    return pl.pallas_call(
        _encoder_kernel,
        out_shape=jax.ShapeDtypeStruct((n, n_z), jnp.float32),
        cost_estimate=pl.CostEstimate(flops=flops, transcendentals=trans,
                                      bytes_accessed=bytes_accessed),
    )(*ins)


# ------------------------------ pure-JAX reference ---------------------------

def ref_forward(x, params):
    hp = jax.lax.Precision.HIGHEST

    def conv(h, w):
        return jax.lax.conv_general_dilated(
            h, w, (STRIDE, STRIDE), ((PAD, PAD), (PAD, PAD)),
            dimension_numbers=("NCHW", "OIHW", "NCHW"), precision=hp)

    h = _lrelu(conv(x, params["conv1"]))
    for i in (2, 3, 4):
        h = conv(h, params[f"conv{i}"])
        mean = h.mean(axis=(0, 2, 3), keepdims=True)
        var = ((h - mean) ** 2).mean(axis=(0, 2, 3), keepdims=True)
        h = ((h - mean) * jax.lax.rsqrt(var + BN_EPS)
             * params[f"bn{i}_gamma"].reshape(1, -1, 1, 1)
             + params[f"bn{i}_beta"].reshape(1, -1, 1, 1))
        h = _lrelu(h)
    h = h.reshape(h.shape[0], h.shape[1])
    return jnp.dot(h, params["fc_w"].T, precision=hp) + params["fc_b"]


# --------------------------------- main --------------------------------------

def init_params(key, n_channel, dim_h, n_z):
    ks = jax.random.split(key, 10)
    return {
        "conv1": 0.05 * jax.random.normal(ks[0], (dim_h, n_channel, 4, 4), jnp.float32),
        "conv2": 0.05 * jax.random.normal(ks[1], (dim_h * 2, dim_h, 4, 4), jnp.float32),
        "conv3": 0.05 * jax.random.normal(ks[2], (dim_h * 4, dim_h * 2, 4, 4), jnp.float32),
        "conv4": 0.05 * jax.random.normal(ks[3], (dim_h * 8, dim_h * 4, 4, 4), jnp.float32),
        "bn2_gamma": 1.0 + 0.1 * jax.random.normal(ks[4], (dim_h * 2,), jnp.float32),
        "bn2_beta": 0.1 * jax.random.normal(ks[5], (dim_h * 2,), jnp.float32),
        "bn3_gamma": 1.0 + 0.1 * jax.random.normal(ks[6], (dim_h * 4,), jnp.float32),
        "bn3_beta": 0.1 * jax.random.normal(ks[7], (dim_h * 4,), jnp.float32),
        "bn4_gamma": jnp.ones((dim_h * 8,), jnp.float32),
        "bn4_beta": jnp.zeros((dim_h * 8,), jnp.float32),
        "fc_w": 0.05 * jax.random.normal(ks[8], (n_z, dim_h * 8), jnp.float32),
        "fc_b": 0.05 * jax.random.normal(ks[9], (n_z,), jnp.float32),
    }


if __name__ == "__main__":
    # 16x16 input halves 4x -> 1x1 before fc, consistent with the module.
    batch, n_channel, dim_h, n_z, spatial = 2, 1, 16, 8, 16

    key = jax.random.PRNGKey(0)
    kx, kp = jax.random.split(key)
    x = jax.random.normal(kx, (batch, n_channel, spatial, spatial), jnp.float32)
    params = init_params(kp, n_channel, dim_h, n_z)

    out = jax.block_until_ready(encoder_forward(x, params))
    ref = jax.block_until_ready(ref_forward(x, params))

    assert out.shape == (batch, n_z), out.shape
    max_diff = float(jnp.max(jnp.abs(out - ref)))
    assert jnp.allclose(out, ref, atol=2e-4, rtol=2e-4), f"max abs diff = {max_diff}"

    print("KERNEL_OK")
</pallas_src>

<mosaic_0001>
module attributes {stable_mosaic.version = 11 : i64} {
  func.func @_encoder_kernel(%arg0: memref<128x16xf32, #tpu.memory_space<vmem>>, %arg1: memref<16x16xf32, #tpu.memory_space<vmem>>, %arg2: memref<16x32x128xf32, #tpu.memory_space<vmem>>, %arg3: memref<16x16x32xf32, #tpu.memory_space<vmem>>, %arg4: memref<1x32xf32, #tpu.memory_space<vmem>>, %arg5: memref<1x32xf32, #tpu.memory_space<vmem>>, %arg6: memref<16x8x32xf32, #tpu.memory_space<vmem>>, %arg7: memref<16x32x64xf32, #tpu.memory_space<vmem>>, %arg8: memref<1x64xf32, #tpu.memory_space<vmem>>, %arg9: memref<1x64xf32, #tpu.memory_space<vmem>>, %arg10: memref<16x2x8xf32, #tpu.memory_space<vmem>>, %arg11: memref<16x64x128xf32, #tpu.memory_space<vmem>>, %arg12: memref<1x128xf32, #tpu.memory_space<vmem>>, %arg13: memref<1x128xf32, #tpu.memory_space<vmem>>, %arg14: memref<128x8xf32, #tpu.memory_space<vmem>>, %arg15: memref<1x8xf32, #tpu.memory_space<vmem>>, %arg16: memref<2x8xf32, #tpu.memory_space<vmem>>) attributes {dimension_semantics = [], scalar_prefetch = 0 : i64, scratch_operands = 0 : i64, tpu.core_type = #tpu.core_type<tc>} {
    %c0 = arith.constant 0 : index
    %c0_0 = arith.constant 0 : index
    %0 = vector.load %arg0[%c0, %c0_0] : memref<128x16xf32, #tpu.memory_space<vmem>>, vector<128x16xf32>
    %c0_1 = arith.constant 0 : index
    %c0_2 = arith.constant 0 : index
    %1 = vector.load %arg1[%c0_1, %c0_2] : memref<16x16xf32, #tpu.memory_space<vmem>>, vector<16x16xf32>
    %cst = arith.constant dense<0.000000e+00> : vector<128x16xf32>
    %2 = tpu.matmul %0, %1, %cst {dimension_numbers = #tpu.dot_dimension_numbers<[1], [0], [0], [1], [0, 0, 1, 1], [], []>} : vector<128x16xf32>, vector<16x16xf32>, vector<128x16xf32> -> vector<128x16xf32>
    %cst_3 = arith.constant 0.000000e+00 : f32
    %3 = vector.broadcast %cst_3 : f32 to vector<128x16xf32>
    %4 = arith.cmpf ogt, %2, %3 : vector<128x16xf32>
    %cst_4 = arith.constant 2.000000e-01 : f32
    %5 = vector.broadcast %cst_4 : f32 to vector<128x16xf32>
    %6 = arith.mulf %5, %2 : vector<128x16xf32>
    %7 = arith.select %4, %2, %6 : vector<128x16xi1>, vector<128x16xf32>
    %cst_5 = arith.constant 0.000000e+00 : f32
    %8 = vector.broadcast %cst_5 : f32 to vector<32x32xf32>
    %c0_6 = arith.constant 0 : index
    %c0_7 = arith.constant 0 : index
    %c0_8 = arith.constant 0 : index
    %9 = vector.load %arg2[%c0_6, %c0_7, %c0_8] : memref<16x32x128xf32, #tpu.memory_space<vmem>>, vector<1x32x128xf32>
    %10 = vector.shape_cast %9 : vector<1x32x128xf32> to vector<32x128xf32>
    %cst_9 = arith.constant dense<0.000000e+00> : vector<32x16xf32>
    %11 = tpu.matmul %10, %7, %cst_9 {dimension_numbers = #tpu.dot_dimension_numbers<[1], [0], [0], [1], [0, 0, 1, 1], [], []>} : vector<32x128xf32>, vector<128x16xf32>, vector<32x16xf32> -> vector<32x16xf32>
    %c0_10 = arith.constant 0 : index
    %c0_11 = arith.constant 0 : index
    %c0_12 = arith.constant 0 : index
    %12 = vector.load %arg3[%c0_10, %c0_11, %c0_12] : memref<16x16x32xf32, #tpu.memory_space<vmem>>, vector<1x16x32xf32>
    %13 = vector.shape_cast %12 : vector<1x16x32xf32> to vector<16x32xf32>
    %cst_13 = arith.constant dense<0.000000e+00> : vector<32x32xf32>
    %14 = tpu.matmul %11, %13, %cst_13 {dimension_numbers = #tpu.dot_dimension_numbers<[1], [0], [0], [1], [0, 0, 1, 1], [], []>} : vector<32x16xf32>, vector<16x32xf32>, vector<32x32xf32> -> vector<32x32xf32>
    %15 = arith.addf %8, %14 : vector<32x32xf32>
    %c1 = arith.constant 1 : index
    %c0_14 = arith.constant 0 : index
    %c0_15 = arith.constant 0 : index
    %16 = vector.load %arg2[%c1, %c0_14, %c0_15] : memref<16x32x128xf32, #tpu.memory_space<vmem>>, vector<1x32x128xf32>
    %17 = vector.shape_cast %16 : vector<1x32x128xf32> to vector<32x128xf32>
    %cst_16 = arith.constant dense<0.000000e+00> : vector<32x16xf32>
    %18 = tpu.matmul %17, %7, %cst_16 {dimension_numbers = #tpu.dot_dimension_numbers<[1], [0], [0], [1], [0, 0, 1, 1], [], []>} : vector<32x128xf32>, vector<128x16xf32>, vector<32x16xf32> -> vector<32x16xf32>
    %c1_17 = arith.constant 1 : index
    %c0_18 = arith.constant 0 : index
    %c0_19 = arith.constant 0 : index
    %19 = vector.load %arg3[%c1_17, %c0_18, %c0_19] : memref<16x16x32xf32, #tpu.memory_space<vmem>>, vector<1x16x32xf32>
    %20 = vector.shape_cast %19 : vector<1x16x32xf32> to vector<16x32xf32>
    %cst_20 = arith.constant dense<0.000000e+00> : vector<32x32xf32>
    %21 = tpu.matmul %18, %20, %cst_20 {dimension_numbers = #tpu.dot_dimension_numbers<[1], [0], [0], [1], [0, 0, 1, 1], [], []>} : vector<32x16xf32>, vector<16x32xf32>, vector<32x32xf32> -> vector<32x32xf32>
    %22 = arith.addf %15, %21 : vector<32x32xf32>
    %c2 = arith.constant 2 : index
    %c0_21 = arith.constant 0 : index
    %c0_22 = arith.constant 0 : index
    %23 = vector.load %arg2[%c2, %c0_21, %c0_22] : memref<16x32x128xf32, #tpu.memory_space<vmem>>, vector<1x32x128xf32>
    %24 = vector.shape_cast %23 : vector<1x32x128xf32> to vector<32x128xf32>
    %cst_23 = arith.constant dense<0.000000e+00> : vector<32x16xf32>
    %25 = tpu.matmul %24, %7, %cst_23 {dimension_numbers = #tpu.dot_dimension_numbers<[1], [0], [0], [1], [0, 0, 1, 1], [], []>} : vector<32x128xf32>, vector<128x16xf32>, vector<32x16xf32> -> vector<32x16xf32>
    %c2_24 = arith.constant 2 : index
    %c0_25 = arith.constant 0 : index
    %c0_26 = arith.constant 0 : index
    %26 = vector.load %arg3[%c2_24, %c0_25, %c0_26] : memref<16x16x32xf32, #tpu.memory_space<vmem>>, vector<1x16x32xf32>
    %27 = vector.shape_cast %26 : vector<1x16x32xf32> to vector<16x32xf32>
    %cst_27 = arith.constant dense<0.000000e+00> : vector<32x32xf32>
    %28 = tpu.matmul %25, %27, %cst_27 {dimension_numbers = #tpu.dot_dimension_numbers<[1], [0], [0], [1], [0, 0, 1, 1], [], []>} : vector<32x16xf32>, vector<16x32xf32>, vector<32x32xf32> -> vector<32x32xf32>
    %29 = arith.addf %22, %28 : vector<32x32xf32>
    %c3 = arith.constant 3 : index
    %c0_28 = arith.constant 0 : index
    %c0_29 = arith.constant 0 : index
    %30 = vector.load %arg2[%c3, %c0_28, %c0_29] : memref<16x32x128xf32, #tpu.memory_space<vmem>>, vector<1x32x128xf32>
    %31 = vector.shape_cast %30 : vector<1x32x128xf32> to vector<32x128xf32>
    %cst_30 = arith.constant dense<0.000000e+00> : vector<32x16xf32>
    %32 = tpu.matmul %31, %7, %cst_30 {dimension_numbers = #tpu.dot_dimension_numbers<[1], [0], [0], [1], [0, 0, 1, 1], [], []>} : vector<32x128xf32>, vector<128x16xf32>, vector<32x16xf32> -> vector<32x16xf32>
    %c3_31 = arith.constant 3 : index
    %c0_32 = arith.constant 0 : index
    %c0_33 = arith.constant 0 : index
    %33 = vector.load %arg3[%c3_31, %c0_32, %c0_33] : memref<16x16x32xf32, #tpu.memory_space<vmem>>, vector<1x16x32xf32>
    %34 = vector.shape_cast %33 : vector<1x16x32xf32> to vector<16x32xf32>
    %cst_34 = arith.constant dense<0.000000e+00> : vector<32x32xf32>
    %35 = tpu.matmul %32, %34, %cst_34 {dimension_numbers = #tpu.dot_dimension_numbers<[1], [0], [0], [1], [0, 0, 1, 1], [], []>} : vector<32x16xf32>, vector<16x32xf32>, vector<32x32xf32> -> vector<32x32xf32>
    %36 = arith.addf %29, %35 : vector<32x32xf32>
    %c4 = arith.constant 4 : index
    %c0_35 = arith.constant 0 : index
    %c0_36 = arith.constant 0 : index
    %37 = vector.load %arg2[%c4, %c0_35, %c0_36] : memref<16x32x128xf32, #tpu.memory_space<vmem>>, vector<1x32x128xf32>
    %38 = vector.shape_cast %37 : vector<1x32x128xf32> to vector<32x128xf32>
    %cst_37 = arith.constant dense<0.000000e+00> : vector<32x16xf32>
    %39 = tpu.matmul %38, %7, %cst_37 {dimension_numbers = #tpu.dot_dimension_numbers<[1], [0], [0], [1], [0, 0, 1, 1], [], []>} : vector<32x128xf32>, vector<128x16xf32>, vector<32x16xf32> -> vector<32x16xf32>
    %c4_38 = arith.constant 4 : index
    %c0_39 = arith.constant 0 : index
    %c0_40 = arith.constant 0 : index
    %40 = vector.load %arg3[%c4_38, %c0_39, %c0_40] : memref<16x16x32xf32, #tpu.memory_space<vmem>>, vector<1x16x32xf32>
    %41 = vector.shape_cast %40 : vector<1x16x32xf32> to vector<16x32xf32>
    %cst_41 = arith.constant dense<0.000000e+00> : vector<32x32xf32>
    %42 = tpu.matmul %39, %41, %cst_41 {dimension_numbers = #tpu.dot_dimension_numbers<[1], [0], [0], [1], [0, 0, 1, 1], [], []>} : vector<32x16xf32>, vector<16x32xf32>, vector<32x32xf32> -> vector<32x32xf32>
    %43 = arith.addf %36, %42 : vector<32x32xf32>
    %c5 = arith.constant 5 : index
    %c0_42 = arith.constant 0 : index
    %c0_43 = arith.constant 0 : index
    %44 = vector.load %arg2[%c5, %c0_42, %c0_43] : memref<16x32x128xf32, #tpu.memory_space<vmem>>, vector<1x32x128xf32>
    %45 = vector.shape_cast %44 : vector<1x32x128xf32> to vector<32x128xf32>
    %cst_44 = arith.constant dense<0.000000e+00> : vector<32x16xf32>
    %46 = tpu.matmul %45, %7, %cst_44 {dimension_numbers = #tpu.dot_dimension_numbers<[1], [0], [0], [1], [0, 0, 1, 1], [], []>} : vector<32x128xf32>, vector<128x16xf32>, vector<32x16xf32> -> vector<32x16xf32>
    %c5_45 = arith.constant 5 : index
    %c0_46 = arith.constant 0 : index
    %c0_47 = arith.constant 0 : index
    %47 = vector.load %arg3[%c5_45, %c0_46, %c0_47] : memref<16x16x32xf32, #tpu.memory_space<vmem>>, vector<1x16x32xf32>
    %48 = vector.shape_cast %47 : vector<1x16x32xf32> to vector<16x32xf32>
    %cst_48 = arith.constant dense<0.000000e+00> : vector<32x32xf32>
    %49 = tpu.matmul %46, %48, %cst_48 {dimension_numbers = #tpu.dot_dimension_numbers<[1], [0], [0], [1], [0, 0, 1, 1], [], []>} : vector<32x16xf32>, vector<16x32xf32>, vector<32x32xf32> -> vector<32x32xf32>
    %50 = arith.addf %43, %49 : vector<32x32xf32>
    %c6 = arith.constant 6 : index
    %c0_49 = arith.constant 0 : index
    %c0_50 = arith.constant 0 : index
    %51 = vector.load %arg2[%c6, %c0_49, %c0_50] : memref<16x32x128xf32, #tpu.memory_space<vmem>>, vector<1x32x128xf32>
    %52 = vector.shape_cast %51 : vector<1x32x128xf32> to vector<32x128xf32>
    %cst_51 = arith.constant dense<0.000000e+00> : vector<32x16xf32>
    %53 = tpu.matmul %52, %7, %cst_51 {dimension_numbers = #tpu.dot_dimension_numbers<[1], [0], [0], [1], [0, 0, 1, 1], [], []>} : vector<32x128xf32>, vector<128x16xf32>, vector<32x16xf32> -> vector<32x16xf32>
    %c6_52 = arith.constant 6 : index
    %c0_53 = arith.constant 0 : index
    %c0_54 = arith.constant 0 : index
    %54 = vector.load %arg3[%c6_52, %c0_53, %c0_54] : memref<16x16x32xf32, #tpu.memory_space<vmem>>, vector<1x16x32xf32>
    %55 = vector.shape_cast %54 : vector<1x16x32xf32> to vector<16x32xf32>
    %cst_55 = arith.constant dense<0.000000e+00> : vector<32x32xf32>
    %56 = tpu.matmul %53, %55, %cst_55 {dimension_numbers = #tpu.dot_dimension_numbers<[1], [0], [0], [1], [0, 0, 1, 1], [], []>} : vector<32x16xf32>, vector<16x32xf32>, vector<32x32xf32> -> vector<32x32xf32>
    %57 = arith.addf %50, %56 : vector<32x32xf32>
    %c7 = arith.constant 7 : index
    %c0_56 = arith.constant 0 : index
    %c0_57 = arith.constant 0 : index
    %58 = vector.load %arg2[%c7, %c0_56, %c0_57] : memref<16x32x128xf32, #tpu.memory_space<vmem>>, vector<1x32x128xf32>
    %59 = vector.shape_cast %58 : vector<1x32x128xf32> to vector<32x128xf32>
    %cst_58 = arith.constant dense<0.000000e+00> : vector<32x16xf32>
    %60 = tpu.matmul %59, %7, %cst_58 {dimension_numbers = #tpu.dot_dimension_numbers<[1], [0], [0], [1], [0, 0, 1, 1], [], []>} : vector<32x128xf32>, vector<128x16xf32>, vector<32x16xf32> -> vector<32x16xf32>
    %c7_59 = arith.constant 7 : index
    %c0_60 = arith.constant 0 : index
    %c0_61 = arith.constant 0 : index
    %61 = vector.load %arg3[%c7_59, %c0_60, %c0_61] : memref<16x16x32xf32, #tpu.memory_space<vmem>>, vector<1x16x32xf32>
    %62 = vector.shape_cast %61 : vector<1x16x32xf32> to vector<16x32xf32>
    %cst_62 = arith.constant dense<0.000000e+00> : vector<32x32xf32>
    %63 = tpu.matmul %60, %62, %cst_62 {dimension_numbers = #tpu.dot_dimension_numbers<[1], [0], [0], [1], [0, 0, 1, 1], [], []>} : vector<32x16xf32>, vector<16x32xf32>, vector<32x32xf32> -> vector<32x32xf32>
    %64 = arith.addf %57, %63 : vector<32x32xf32>
    %c8 = arith.constant 8 : index
    %c0_63 = arith.constant 0 : index
    %c0_64 = arith.constant 0 : index
    %65 = vector.load %arg2[%c8, %c0_63, %c0_64] : memref<16x32x128xf32, #tpu.memory_space<vmem>>, vector<1x32x128xf32>
    %66 = vector.shape_cast %65 : vector<1x32x128xf32> to vector<32x128xf32>
    %cst_65 = arith.constant dense<0.000000e+00> : vector<32x16xf32>
    %67 = tpu.matmul %66, %7, %cst_65 {dimension_numbers = #tpu.dot_dimension_numbers<[1], [0], [0], [1], [0, 0, 1, 1], [], []>} : vector<32x128xf32>, vector<128x16xf32>, vector<32x16xf32> -> vector<32x16xf32>
    %c8_66 = arith.constant 8 : index
    %c0_67 = arith.constant 0 : index
    %c0_68 = arith.constant 0 : index
    %68 = vector.load %arg3[%c8_66, %c0_67, %c0_68] : memref<16x16x32xf32, #tpu.memory_space<vmem>>, vector<1x16x32xf32>
    %69 = vector.shape_cast %68 : vector<1x16x32xf32> to vector<16x32xf32>
    %cst_69 = arith.constant dense<0.000000e+00> : vector<32x32xf32>
    %70 = tpu.matmul %67, %69, %cst_69 {dimension_numbers = #tpu.dot_dimension_numbers<[1], [0], [0], [1], [0, 0, 1, 1], [], []>} : vector<32x16xf32>, vector<16x32xf32>, vector<32x32xf32> -> vector<32x32xf32>
    %71 = arith.addf %64, %70 : vector<32x32xf32>
    %c9 = arith.constant 9 : index
    %c0_70 = arith.constant 0 : index
    %c0_71 = arith.constant 0 : index
    %72 = vector.load %arg2[%c9, %c0_70, %c0_71] : memref<16x32x128xf32, #tpu.memory_space<vmem>>, vector<1x32x128xf32>
    %73 = vector.shape_cast %72 : vector<1x32x128xf32> to vector<32x128xf32>
    %cst_72 = arith.constant dense<0.000000e+00> : vector<32x16xf32>
    %74 = tpu.matmul %73, %7, %cst_72 {dimension_numbers = #tpu.dot_dimension_numbers<[1], [0], [0], [1], [0, 0, 1, 1], [], []>} : vector<32x128xf32>, vector<128x16xf32>, vector<32x16xf32> -> vector<32x16xf32>
    %c9_73 = arith.constant 9 : index
    %c0_74 = arith.constant 0 : index
    %c0_75 = arith.constant 0 : index
    %75 = vector.load %arg3[%c9_73, %c0_74, %c0_75] : memref<16x16x32xf32, #tpu.memory_space<vmem>>, vector<1x16x32xf32>
    %76 = vector.shape_cast %75 : vector<1x16x32xf32> to vector<16x32xf32>
    %cst_76 = arith.constant dense<0.000000e+00> : vector<32x32xf32>
    %77 = tpu.matmul %74, %76, %cst_76 {dimension_numbers = #tpu.dot_dimension_numbers<[1], [0], [0], [1], [0, 0, 1, 1], [], []>} : vector<32x16xf32>, vector<16x32xf32>, vector<32x32xf32> -> vector<32x32xf32>
    %78 = arith.addf %71, %77 : vector<32x32xf32>
    %c10 = arith.constant 10 : index
    %c0_77 = arith.constant 0 : index
    %c0_78 = arith.constant 0 : index
    %79 = vector.load %arg2[%c10, %c0_77, %c0_78] : memref<16x32x128xf32, #tpu.memory_space<vmem>>, vector<1x32x128xf32>
    %80 = vector.shape_cast %79 : vector<1x32x128xf32> to vector<32x128xf32>
    %cst_79 = arith.constant dense<0.000000e+00> : vector<32x16xf32>
    %81 = tpu.matmul %80, %7, %cst_79 {dimension_numbers = #tpu.dot_dimension_numbers<[1], [0], [0], [1], [0, 0, 1, 1], [], []>} : vector<32x128xf32>, vector<128x16xf32>, vector<32x16xf32> -> vector<32x16xf32>
    %c10_80 = arith.constant 10 : index
    %c0_81 = arith.constant 0 : index
    %c0_82 = arith.constant 0 : index
    %82 = vector.load %arg3[%c10_80, %c0_81, %c0_82] : memref<16x16x32xf32, #tpu.memory_space<vmem>>, vector<1x16x32xf32>
    %83 = vector.shape_cast %82 : vector<1x16x32xf32> to vector<16x32xf32>
    %cst_83 = arith.constant dense<0.000000e+00> : vector<32x32xf32>
    %84 = tpu.matmul %81, %83, %cst_83 {dimension_numbers = #tpu.dot_dimension_numbers<[1], [0], [0], [1], [0, 0, 1, 1], [], []>} : vector<32x16xf32>, vector<16x32xf32>, vector<32x32xf32> -> vector<32x32xf32>
    %85 = arith.addf %78, %84 : vector<32x32xf32>
    %c11 = arith.constant 11 : index
    %c0_84 = arith.constant 0 : index
    %c0_85 = arith.constant 0 : index
    %86 = vector.load %arg2[%c11, %c0_84, %c0_85] : memref<16x32x128xf32, #tpu.memory_space<vmem>>, vector<1x32x128xf32>
    %87 = vector.shape_cast %86 : vector<1x32x128xf32> to vector<32x128xf32>
    %cst_86 = arith.constant dense<0.000000e+00> : vector<32x16xf32>
    %88 = tpu.matmul %87, %7, %cst_86 {dimension_numbers = #tpu.dot_dimension_numbers<[1], [0], [0], [1], [0, 0, 1, 1], [], []>} : vector<32x128xf32>, vector<128x16xf32>, vector<32x16xf32> -> vector<32x16xf32>
    %c11_87 = arith.constant 11 : index
    %c0_88 = arith.constant 0 : index
    %c0_89 = arith.constant 0 : index
    %89 = vector.load %arg3[%c11_87, %c0_88, %c0_89] : memref<16x16x32xf32, #tpu.memory_space<vmem>>, vector<1x16x32xf32>
    %90 = vector.shape_cast %89 : vector<1x16x32xf32> to vector<16x32xf32>
    %cst_90 = arith.constant dense<0.000000e+00> : vector<32x32xf32>
    %91 = tpu.matmul %88, %90, %cst_90 {dimension_numbers = #tpu.dot_dimension_numbers<[1], [0], [0], [1], [0, 0, 1, 1], [], []>} : vector<32x16xf32>, vector<16x32xf32>, vector<32x32xf32> -> vector<32x32xf32>
    %92 = arith.addf %85, %91 : vector<32x32xf32>
    %c12 = arith.constant 12 : index
    %c0_91 = arith.constant 0 : index
    %c0_92 = arith.constant 0 : index
    %93 = vector.load %arg2[%c12, %c0_91, %c0_92] : memref<16x32x128xf32, #tpu.memory_space<vmem>>, vector<1x32x128xf32>
    %94 = vector.shape_cast %93 : vector<1x32x128xf32> to vector<32x128xf32>
    %cst_93 = arith.constant dense<0.000000e+00> : vector<32x16xf32>
    %95 = tpu.matmul %94, %7, %cst_93 {dimension_numbers = #tpu.dot_dimension_numbers<[1], [0], [0], [1], [0, 0, 1, 1], [], []>} : vector<32x128xf32>, vector<128x16xf32>, vector<32x16xf32> -> vector<32x16xf32>
    %c12_94 = arith.constant 12 : index
    %c0_95 = arith.constant 0 : index
    %c0_96 = arith.constant 0 : index
    %96 = vector.load %arg3[%c12_94, %c0_95, %c0_96] : memref<16x16x32xf32, #tpu.memory_space<vmem>>, vector<1x16x32xf32>
    %97 = vector.shape_cast %96 : vector<1x16x32xf32> to vector<16x32xf32>
    %cst_97 = arith.constant dense<0.000000e+00> : vector<32x32xf32>
    %98 = tpu.matmul %95, %97, %cst_97 {dimension_numbers = #tpu.dot_dimension_numbers<[1], [0], [0], [1], [0, 0, 1, 1], [], []>} : vector<32x16xf32>, vector<16x32xf32>, vector<32x32xf32> -> vector<32x32xf32>
    %99 = arith.addf %92, %98 : vector<32x32xf32>
    %c13 = arith.constant 13 : index
    %c0_98 = arith.constant 0 : index
    %c0_99 = arith.constant 0 : index
    %100 = vector.load %arg2[%c13, %c0_98, %c0_99] : memref<16x32x128xf32, #tpu.memory_space<vmem>>, vector<1x32x128xf32>
    %101 = vector.shape_cast %100 : vector<1x32x128xf32> to vector<32x128xf32>
    %cst_100 = arith.constant dense<0.000000e+00> : vector<32x16xf32>
    %102 = tpu.matmul %101, %7, %cst_100 {dimension_numbers = #tpu.dot_dimension_numbers<[1], [0], [0], [1], [0, 0, 1, 1], [], []>} : vector<32x128xf32>, vector<128x16xf32>, vector<32x16xf32> -> vector<32x16xf32>
    %c13_101 = arith.constant 13 : index
    %c0_102 = arith.constant 0 : index
    %c0_103 = arith.constant 0 : index
    %103 = vector.load %arg3[%c13_101, %c0_102, %c0_103] : memref<16x16x32xf32, #tpu.memory_space<vmem>>, vector<1x16x32xf32>
    %104 = vector.shape_cast %103 : vector<1x16x32xf32> to vector<16x32xf32>
    %cst_104 = arith.constant dense<0.000000e+00> : vector<32x32xf32>
    %105 = tpu.matmul %102, %104, %cst_104 {dimension_numbers = #tpu.dot_dimension_numbers<[1], [0], [0], [1], [0, 0, 1, 1], [], []>} : vector<32x16xf32>, vector<16x32xf32>, vector<32x32xf32> -> vector<32x32xf32>
    %106 = arith.addf %99, %105 : vector<32x32xf32>
    %c14 = arith.constant 14 : index
    %c0_105 = arith.constant 0 : index
    %c0_106 = arith.constant 0 : index
    %107 = vector.load %arg2[%c14, %c0_105, %c0_106] : memref<16x32x128xf32, #tpu.memory_space<vmem>>, vector<1x32x128xf32>
    %108 = vector.shape_cast %107 : vector<1x32x128xf32> to vector<32x128xf32>
    %cst_107 = arith.constant dense<0.000000e+00> : vector<32x16xf32>
    %109 = tpu.matmul %108, %7, %cst_107 {dimension_numbers = #tpu.dot_dimension_numbers<[1], [0], [0], [1], [0, 0, 1, 1], [], []>} : vector<32x128xf32>, vector<128x16xf32>, vector<32x16xf32> -> vector<32x16xf32>
    %c14_108 = arith.constant 14 : index
    %c0_109 = arith.constant 0 : index
    %c0_110 = arith.constant 0 : index
    %110 = vector.load %arg3[%c14_108, %c0_109, %c0_110] : memref<16x16x32xf32, #tpu.memory_space<vmem>>, vector<1x16x32xf32>
    %111 = vector.shape_cast %110 : vector<1x16x32xf32> to vector<16x32xf32>
    %cst_111 = arith.constant dense<0.000000e+00> : vector<32x32xf32>
    %112 = tpu.matmul %109, %111, %cst_111 {dimension_numbers = #tpu.dot_dimension_numbers<[1], [0], [0], [1], [0, 0, 1, 1], [], []>} : vector<32x16xf32>, vector<16x32xf32>, vector<32x32xf32> -> vector<32x32xf32>
    %113 = arith.addf %106, %112 : vector<32x32xf32>
    %c15 = arith.constant 15 : index
    %c0_112 = arith.constant 0 : index
    %c0_113 = arith.constant 0 : index
    %114 = vector.load %arg2[%c15, %c0_112, %c0_113] : memref<16x32x128xf32, #tpu.memory_space<vmem>>, vector<1x32x128xf32>
    %115 = vector.shape_cast %114 : vector<1x32x128xf32> to vector<32x128xf32>
    %cst_114 = arith.constant dense<0.000000e+00> : vector<32x16xf32>
    %116 = tpu.matmul %115, %7, %cst_114 {dimension_numbers = #tpu.dot_dimension_numbers<[1], [0], [0], [1], [0, 0, 1, 1], [], []>} : vector<32x128xf32>, vector<128x16xf32>, vector<32x16xf32> -> vector<32x16xf32>
    %c15_115 = arith.constant 15 : index
    %c0_116 = arith.constant 0 : index
    %c0_117 = arith.constant 0 : index
    %117 = vector.load %arg3[%c15_115, %c0_116, %c0_117] : memref<16x16x32xf32, #tpu.memory_space<vmem>>, vector<1x16x32xf32>
    %118 = vector.shape_cast %117 : vector<1x16x32xf32> to vector<16x32xf32>
    %cst_118 = arith.constant dense<0.000000e+00> : vector<32x32xf32>
    %119 = tpu.matmul %116, %118, %cst_118 {dimension_numbers = #tpu.dot_dimension_numbers<[1], [0], [0], [1], [0, 0, 1, 1], [], []>} : vector<32x16xf32>, vector<16x32xf32>, vector<32x32xf32> -> vector<32x32xf32>
    %120 = arith.addf %113, %119 : vector<32x32xf32>
    %cst_119 = arith.constant dense<0.000000e+00> : vector<32xf32>
    %121 = vector.multi_reduction <add>, %120, %cst_119 [0] : vector<32x32xf32> to vector<32xf32>
    %122 = vector.shape_cast %121 : vector<32xf32> to vector<1x32xf32>
    %cst_120 = arith.constant 3.200000e+01 : f32
    %123 = vector.broadcast %cst_120 : f32 to vector<1x32xf32>
    %124 = arith.divf %122, %123 : vector<1x32xf32>
    %125 = vector.broadcast %124 : vector<1x32xf32> to vector<32x32xf32>
    %126 = arith.subf %120, %125 : vector<32x32xf32>
    %127 = arith.mulf %126, %126 : vector<32x32xf32>
    %cst_121 = arith.constant dense<0.000000e+00> : vector<32xf32>
    %128 = vector.multi_reduction <add>, %127, %cst_121 [0] : vector<32x32xf32> to vector<32xf32>
    %129 = vector.shape_cast %128 : vector<32xf32> to vector<1x32xf32>
    %cst_122 = arith.constant 3.200000e+01 : f32
    %130 = vector.broadcast %cst_122 : f32 to vector<1x32xf32>
    %131 = arith.divf %129, %130 : vector<1x32xf32>
    %132 = vector.broadcast %124 : vector<1x32xf32> to vector<32x32xf32>
    %133 = arith.subf %120, %132 : vector<32x32xf32>
    %cst_123 = arith.constant 9.99999974E-6 : f32
    %134 = vector.broadcast %cst_123 : f32 to vector<1x32xf32>
    %135 = arith.addf %131, %134 : vector<1x32xf32>
    %136 = math.rsqrt %135 : vector<1x32xf32>
    %137 = vector.broadcast %136 : vector<1x32xf32> to vector<32x32xf32>
    %138 = arith.mulf %133, %137 : vector<32x32xf32>
    %c0_124 = arith.constant 0 : index
    %c0_125 = arith.constant 0 : index
    %139 = vector.load %arg4[%c0_124, %c0_125] : memref<1x32xf32, #tpu.memory_space<vmem>>, vector<1x32xf32>
    %140 = vector.broadcast %139 : vector<1x32xf32> to vector<32x32xf32>
    %141 = arith.mulf %138, %140 : vector<32x32xf32>
    %c0_126 = arith.constant 0 : index
    %c0_127 = arith.constant 0 : index
    %142 = vector.load %arg5[%c0_126, %c0_127] : memref<1x32xf32, #tpu.memory_space<vmem>>, vector<1x32xf32>
    %143 = vector.broadcast %142 : vector<1x32xf32> to vector<32x32xf32>
    %144 = arith.addf %141, %143 : vector<32x32xf32>
    %cst_128 = arith.constant 0.000000e+00 : f32
    %145 = vector.broadcast %cst_128 : f32 to vector<32x32xf32>
    %146 = arith.cmpf ogt, %144, %145 : vector<32x32xf32>
    %cst_129 = arith.constant 2.000000e-01 : f32
    %147 = vector.broadcast %cst_129 : f32 to vector<32x32xf32>
    %148 = arith.mulf %147, %144 : vector<32x32xf32>
    %149 = arith.select %146, %144, %148 : vector<32x32xi1>, vector<32x32xf32>
    %cst_130 = arith.constant 0.000000e+00 : f32
    %150 = vector.broadcast %cst_130 : f32 to vector<8x64xf32>
    %c0_131 = arith.constant 0 : index
    %c0_132 = arith.constant 0 : index
    %c0_133 = arith.constant 0 : index
    %151 = vector.load %arg6[%c0_131, %c0_132, %c0_133] : memref<16x8x32xf32, #tpu.memory_space<vmem>>, vector<1x8x32xf32>
    %152 = vector.shape_cast %151 : vector<1x8x32xf32> to vector<8x32xf32>
    %cst_134 = arith.constant dense<0.000000e+00> : vector<8x32xf32>
    %153 = tpu.matmul %152, %149, %cst_134 {dimension_numbers = #tpu.dot_dimension_numbers<[1], [0], [0], [1], [0, 0, 1, 1], [], []>} : vector<8x32xf32>, vector<32x32xf32>, vector<8x32xf32> -> vector<8x32xf32>
    %c0_135 = arith.constant 0 : index
    %c0_136 = arith.constant 0 : index
    %c0_137 = arith.constant 0 : index
    %154 = vector.load %arg7[%c0_135, %c0_136, %c0_137] : memref<16x32x64xf32, #tpu.memory_space<vmem>>, vector<1x32x64xf32>
    %155 = vector.shape_cast %154 : vector<1x32x64xf32> to vector<32x64xf32>
    %cst_138 = arith.constant dense<0.000000e+00> : vector<8x64xf32>
    %156 = tpu.matmul %153, %155, %cst_138 {dimension_numbers = #tpu.dot_dimension_numbers<[1], [0], [0], [1], [0, 0, 1, 1], [], []>} : vector<8x32xf32>, vector<32x64xf32>, vector<8x64xf32> -> vector<8x64xf32>
    %157 = arith.addf %150, %156 : vector<8x64xf32>
    %c1_139 = arith.constant 1 : index
    %c0_140 = arith.constant 0 : index
    %c0_141 = arith.constant 0 : index
    %158 = vector.load %arg6[%c1_139, %c0_140, %c0_141] : memref<16x8x32xf32, #tpu.memory_space<vmem>>, vector<1x8x32xf32>
    %159 = vector.shape_cast %158 : vector<1x8x32xf32> to vector<8x32xf32>
    %cst_142 = arith.constant dense<0.000000e+00> : vector<8x32xf32>
    %160 = tpu.matmul %159, %149, %cst_142 {dimension_numbers = #tpu.dot_dimension_numbers<[1], [0], [0], [1], [0, 0, 1, 1], [], []>} : vector<8x32xf32>, vector<32x32xf32>, vector<8x32xf32> -> vector<8x32xf32>
    %c1_143 = arith.constant 1 : index
    %c0_144 = arith.constant 0 : index
    %c0_145 = arith.constant 0 : index
    %161 = vector.load %arg7[%c1_143, %c0_144, %c0_145] : memref<16x32x64xf32, #tpu.memory_space<vmem>>, vector<1x32x64xf32>
    %162 = vector.shape_cast %161 : vector<1x32x64xf32> to vector<32x64xf32>
    %cst_146 = arith.constant dense<0.000000e+00> : vector<8x64xf32>
    %163 = tpu.matmul %160, %162, %cst_146 {dimension_numbers = #tpu.dot_dimension_numbers<[1], [0], [0], [1], [0, 0, 1, 1], [], []>} : vector<8x32xf32>, vector<32x64xf32>, vector<8x64xf32> -> vector<8x64xf32>
    %164 = arith.addf %157, %163 : vector<8x64xf32>
    %c2_147 = arith.constant 2 : index
    %c0_148 = arith.constant 0 : index
    %c0_149 = arith.constant 0 : index
    %165 = vector.load %arg6[%c2_147, %c0_148, %c0_149] : memref<16x8x32xf32, #tpu.memory_space<vmem>>, vector<1x8x32xf32>
    %166 = vector.shape_cast %165 : vector<1x8x32xf32> to vector<8x32xf32>
    %cst_150 = arith.constant dense<0.000000e+00> : vector<8x32xf32>
    %167 = tpu.matmul %166, %149, %cst_150 {dimension_numbers = #tpu.dot_dimension_numbers<[1], [0], [0], [1], [0, 0, 1, 1], [], []>} : vector<8x32xf32>, vector<32x32xf32>, vector<8x32xf32> -> vector<8x32xf32>
    %c2_151 = arith.constant 2 : index
    %c0_152 = arith.constant 0 : index
    %c0_153 = arith.constant 0 : index
    %168 = vector.load %arg7[%c2_151, %c0_152, %c0_153] : memref<16x32x64xf32, #tpu.memory_space<vmem>>, vector<1x32x64xf32>
    %169 = vector.shape_cast %168 : vector<1x32x64xf32> to vector<32x64xf32>
    %cst_154 = arith.constant dense<0.000000e+00> : vector<8x64xf32>
    %170 = tpu.matmul %167, %169, %cst_154 {dimension_numbers = #tpu.dot_dimension_numbers<[1], [0], [0], [1], [0, 0, 1, 1], [], []>} : vector<8x32xf32>, vector<32x64xf32>, vector<8x64xf32> -> vector<8x64xf32>
    %171 = arith.addf %164, %170 : vector<8x64xf32>
    %c3_155 = arith.constant 3 : index
    %c0_156 = arith.constant 0 : index
    %c0_157 = arith.constant 0 : index
    %172 = vector.load %arg6[%c3_155, %c0_156, %c0_157] : memref<16x8x32xf32, #tpu.memory_space<vmem>>, vector<1x8x32xf32>
    %173 = vector.shape_cast %172 : vector<1x8x32xf32> to vector<8x32xf32>
    %cst_158 = arith.constant dense<0.000000e+00> : vector<8x32xf32>
    %174 = tpu.matmul %173, %149, %cst_158 {dimension_numbers = #tpu.dot_dimension_numbers<[1], [0], [0], [1], [0, 0, 1, 1], [], []>} : vector<8x32xf32>, vector<32x32xf32>, vector<8x32xf32> -> vector<8x32xf32>
    %c3_159 = arith.constant 3 : index
    %c0_160 = arith.constant 0 : index
    %c0_161 = arith.constant 0 : index
    %175 = vector.load %arg7[%c3_159, %c0_160, %c0_161] : memref<16x32x64xf32, #tpu.memory_space<vmem>>, vector<1x32x64xf32>
    %176 = vector.shape_cast %175 : vector<1x32x64xf32> to vector<32x64xf32>
    %cst_162 = arith.constant dense<0.000000e+00> : vector<8x64xf32>
    %177 = tpu.matmul %174, %176, %cst_162 {dimension_numbers = #tpu.dot_dimension_numbers<[1], [0], [0], [1], [0, 0, 1, 1], [], []>} : vector<8x32xf32>, vector<32x64xf32>, vector<8x64xf32> -> vector<8x64xf32>
    %178 = arith.addf %171, %177 : vector<8x64xf32>
    %c4_163 = arith.constant 4 : index
    %c0_164 = arith.constant 0 : index
    %c0_165 = arith.constant 0 : index
    %179 = vector.load %arg6[%c4_163, %c0_164, %c0_165] : memref<16x8x32xf32, #tpu.memory_space<vmem>>, vector<1x8x32xf32>
    %180 = vector.shape_cast %179 : vector<1x8x32xf32> to vector<8x32xf32>
    %cst_166 = arith.constant dense<0.000000e+00> : vector<8x32xf32>
    %181 = tpu.matmul %180, %149, %cst_166 {dimension_numbers = #tpu.dot_dimension_numbers<[1], [0], [0], [1], [0, 0, 1, 1], [], []>} : vector<8x32xf32>, vector<32x32xf32>, vector<8x32xf32> -> vector<8x32xf32>
    %c4_167 = arith.constant 4 : index
    %c0_168 = arith.constant 0 : index
    %c0_169 = arith.constant 0 : index
    %182 = vector.load %arg7[%c4_167, %c0_168, %c0_169] : memref<16x32x64xf32, #tpu.memory_space<vmem>>, vector<1x32x64xf32>
    %183 = vector.shape_cast %182 : vector<1x32x64xf32> to vector<32x64xf32>
    %cst_170 = arith.constant dense<0.000000e+00> : vector<8x64xf32>
    %184 = tpu.matmul %181, %183, %cst_170 {dimension_numbers = #tpu.dot_dimension_numbers<[1], [0], [0], [1], [0, 0, 1, 1], [], []>} : vector<8x32xf32>, vector<32x64xf32>, vector<8x64xf32> -> vector<8x64xf32>
    %185 = arith.addf %178, %184 : vector<8x64xf32>
    %c5_171 = arith.constant 5 : index
    %c0_172 = arith.constant 0 : index
    %c0_173 = arith.constant 0 : index
    %186 = vector.load %arg6[%c5_171, %c0_172, %c0_173] : memref<16x8x32xf32, #tpu.memory_space<vmem>>, vector<1x8x32xf32>
    %187 = vector.shape_cast %186 : vector<1x8x32xf32> to vector<8x32xf32>
    %cst_174 = arith.constant dense<0.000000e+00> : vector<8x32xf32>
    %188 = tpu.matmul %187, %149, %cst_174 {dimension_numbers = #tpu.dot_dimension_numbers<[1], [0], [0], [1], [0, 0, 1, 1], [], []>} : vector<8x32xf32>, vector<32x32xf32>, vector<8x32xf32> -> vector<8x32xf32>
    %c5_175 = arith.constant 5 : index
    %c0_176 = arith.constant 0 : index
    %c0_177 = arith.constant 0 : index
    %189 = vector.load %arg7[%c5_175, %c0_176, %c0_177] : memref<16x32x64xf32, #tpu.memory_space<vmem>>, vector<1x32x64xf32>
    %190 = vector.shape_cast %189 : vector<1x32x64xf32> to vector<32x64xf32>
    %cst_178 = arith.constant dense<0.000000e+00> : vector<8x64xf32>
    %191 = tpu.matmul %188, %190, %cst_178 {dimension_numbers = #tpu.dot_dimension_numbers<[1], [0], [0], [1], [0, 0, 1, 1], [], []>} : vector<8x32xf32>, vector<32x64xf32>, vector<8x64xf32> -> vector<8x64xf32>
    %192 = arith.addf %185, %191 : vector<8x64xf32>
    %c6_179 = arith.constant 6 : index
    %c0_180 = arith.constant 0 : index
    %c0_181 = arith.constant 0 : index
    %193 = vector.load %arg6[%c6_179, %c0_180, %c0_181] : memref<16x8x32xf32, #tpu.memory_space<vmem>>, vector<1x8x32xf32>
    %194 = vector.shape_cast %193 : vector<1x8x32xf32> to vector<8x32xf32>
    %cst_182 = arith.constant dense<0.000000e+00> : vector<8x32xf32>
    %195 = tpu.matmul %194, %149, %cst_182 {dimension_numbers = #tpu.dot_dimension_numbers<[1], [0], [0], [1], [0, 0, 1, 1], [], []>} : vector<8x32xf32>, vector<32x32xf32>, vector<8x32xf32> -> vector<8x32xf32>
    %c6_183 = arith.constant 6 : index
    %c0_184 = arith.constant 0 : index
    %c0_185 = arith.constant 0 : index
    %196 = vector.load %arg7[%c6_183, %c0_184, %c0_185] : memref<16x32x64xf32, #tpu.memory_space<vmem>>, vector<1x32x64xf32>
    %197 = vector.shape_cast %196 : vector<1x32x64xf32> to vector<32x64xf32>
    %cst_186 = arith.constant dense<0.000000e+00> : vector<8x64xf32>
    %198 = tpu.matmul %195, %197, %cst_186 {dimension_numbers = #tpu.dot_dimension_numbers<[1], [0], [0], [1], [0, 0, 1, 1], [], []>} : vector<8x32xf32>, vector<32x64xf32>, vector<8x64xf32> -> vector<8x64xf32>
    %199 = arith.addf %192, %198 : vector<8x64xf32>
    %c7_187 = arith.constant 7 : index
    %c0_188 = arith.constant 0 : index
    %c0_189 = arith.constant 0 : index
    %200 = vector.load %arg6[%c7_187, %c0_188, %c0_189] : memref<16x8x32xf32, #tpu.memory_space<vmem>>, vector<1x8x32xf32>
    %201 = vector.shape_cast %200 : vector<1x8x32xf32> to vector<8x32xf32>
    %cst_190 = arith.constant dense<0.000000e+00> : vector<8x32xf32>
    %202 = tpu.matmul %201, %149, %cst_190 {dimension_numbers = #tpu.dot_dimension_numbers<[1], [0], [0], [1], [0, 0, 1, 1], [], []>} : vector<8x32xf32>, vector<32x32xf32>, vector<8x32xf32> -> vector<8x32xf32>
    %c7_191 = arith.constant 7 : index
    %c0_192 = arith.constant 0 : index
    %c0_193 = arith.constant 0 : index
    %203 = vector.load %arg7[%c7_191, %c0_192, %c0_193] : memref<16x32x64xf32, #tpu.memory_space<vmem>>, vector<1x32x64xf32>
    %204 = vector.shape_cast %203 : vector<1x32x64xf32> to vector<32x64xf32>
    %cst_194 = arith.constant dense<0.000000e+00> : vector<8x64xf32>
    %205 = tpu.matmul %202, %204, %cst_194 {dimension_numbers = #tpu.dot_dimension_numbers<[1], [0], [0], [1], [0, 0, 1, 1], [], []>} : vector<8x32xf32>, vector<32x64xf32>, vector<8x64xf32> -> vector<8x64xf32>
    %206 = arith.addf %199, %205 : vector<8x64xf32>
    %c8_195 = arith.constant 8 : index
    %c0_196 = arith.constant 0 : index
    %c0_197 = arith.constant 0 : index
    %207 = vector.load %arg6[%c8_195, %c0_196, %c0_197] : memref<16x8x32xf32, #tpu.memory_space<vmem>>, vector<1x8x32xf32>
    %208 = vector.shape_cast %207 : vector<1x8x32xf32> to vector<8x32xf32>
    %cst_198 = arith.constant dense<0.000000e+00> : vector<8x32xf32>
    %209 = tpu.matmul %208, %149, %cst_198 {dimension_numbers = #tpu.dot_dimension_numbers<[1], [0], [0], [1], [0, 0, 1, 1], [], []>} : vector<8x32xf32>, vector<32x32xf32>, vector<8x32xf32> -> vector<8x32xf32>
    %c8_199 = arith.constant 8 : index
    %c0_200 = arith.constant 0 : index
    %c0_201 = arith.constant 0 : index
    %210 = vector.load %arg7[%c8_199, %c0_200, %c0_201] : memref<16x32x64xf32, #tpu.memory_space<vmem>>, vector<1x32x64xf32>
    %211 = vector.shape_cast %210 : vector<1x32x64xf32> to vector<32x64xf32>
    %cst_202 = arith.constant dense<0.000000e+00> : vector<8x64xf32>
    %212 = tpu.matmul %209, %211, %cst_202 {dimension_numbers = #tpu.dot_dimension_numbers<[1], [0], [0], [1], [0, 0, 1, 1], [], []>} : vector<8x32xf32>, vector<32x64xf32>, vector<8x64xf32> -> vector<8x64xf32>
    %213 = arith.addf %206, %212 : vector<8x64xf32>
    %c9_203 = arith.constant 9 : index
    %c0_204 = arith.constant 0 : index
    %c0_205 = arith.constant 0 : index
    %214 = vector.load %arg6[%c9_203, %c0_204, %c0_205] : memref<16x8x32xf32, #tpu.memory_space<vmem>>, vector<1x8x32xf32>
    %215 = vector.shape_cast %214 : vector<1x8x32xf32> to vector<8x32xf32>
    %cst_206 = arith.constant dense<0.000000e+00> : vector<8x32xf32>
    %216 = tpu.matmul %215, %149, %cst_206 {dimension_numbers = #tpu.dot_dimension_numbers<[1], [0], [0], [1], [0, 0, 1, 1], [], []>} : vector<8x32xf32>, vector<32x32xf32>, vector<8x32xf32> -> vector<8x32xf32>
    %c9_207 = arith.constant 9 : index
    %c0_208 = arith.constant 0 : index
    %c0_209 = arith.constant 0 : index
    %217 = vector.load %arg7[%c9_207, %c0_208, %c0_209] : memref<16x32x64xf32, #tpu.memory_space<vmem>>, vector<1x32x64xf32>
    %218 = vector.shape_cast %217 : vector<1x32x64xf32> to vector<32x64xf32>
    %cst_210 = arith.constant dense<0.000000e+00> : vector<8x64xf32>
    %219 = tpu.matmul %216, %218, %cst_210 {dimension_numbers = #tpu.dot_dimension_numbers<[1], [0], [0], [1], [0, 0, 1, 1], [], []>} : vector<8x32xf32>, vector<32x64xf32>, vector<8x64xf32> -> vector<8x64xf32>
    %220 = arith.addf %213, %219 : vector<8x64xf32>
    %c10_211 = arith.constant 10 : index
    %c0_212 = arith.constant 0 : index
    %c0_213 = arith.constant 0 : index
    %221 = vector.load %arg6[%c10_211, %c0_212, %c0_213] : memref<16x8x32xf32, #tpu.memory_space<vmem>>, vector<1x8x32xf32>
    %222 = vector.shape_cast %221 : vector<1x8x32xf32> to vector<8x32xf32>
    %cst_214 = arith.constant dense<0.000000e+00> : vector<8x32xf32>
    %223 = tpu.matmul %222, %149, %cst_214 {dimension_numbers = #tpu.dot_dimension_numbers<[1], [0], [0], [1], [0, 0, 1, 1], [], []>} : vector<8x32xf32>, vector<32x32xf32>, vector<8x32xf32> -> vector<8x32xf32>
    %c10_215 = arith.constant 10 : index
    %c0_216 = arith.constant 0 : index
    %c0_217 = arith.constant 0 : index
    %224 = vector.load %arg7[%c10_215, %c0_216, %c0_217] : memref<16x32x64xf32, #tpu.memory_space<vmem>>, vector<1x32x64xf32>
    %225 = vector.shape_cast %224 : vector<1x32x64xf32> to vector<32x64xf32>
    %cst_218 = arith.constant dense<0.000000e+00> : vector<8x64xf32>
    %226 = tpu.matmul %223, %225, %cst_218 {dimension_numbers = #tpu.dot_dimension_numbers<[1], [0], [0], [1], [0, 0, 1, 1], [], []>} : vector<8x32xf32>, vector<32x64xf32>, vector<8x64xf32> -> vector<8x64xf32>
    %227 = arith.addf %220, %226 : vector<8x64xf32>
    %c11_219 = arith.constant 11 : index
    %c0_220 = arith.constant 0 : index
    %c0_221 = arith.constant 0 : index
    %228 = vector.load %arg6[%c11_219, %c0_220, %c0_221] : memref<16x8x32xf32, #tpu.memory_space<vmem>>, vector<1x8x32xf32>
    %229 = vector.shape_cast %228 : vector<1x8x32xf32> to vector<8x32xf32>
    %cst_222 = arith.constant dense<0.000000e+00> : vector<8x32xf32>
    %230 = tpu.matmul %229, %149, %cst_222 {dimension_numbers = #tpu.dot_dimension_numbers<[1], [0], [0], [1], [0, 0, 1, 1], [], []>} : vector<8x32xf32>, vector<32x32xf32>, vector<8x32xf32> -> vector<8x32xf32>
    %c11_223 = arith.constant 11 : index
    %c0_224 = arith.constant 0 : index
    %c0_225 = arith.constant 0 : index
    %231 = vector.load %arg7[%c11_223, %c0_224, %c0_225] : memref<16x32x64xf32, #tpu.memory_space<vmem>>, vector<1x32x64xf32>
    %232 = vector.shape_cast %231 : vector<1x32x64xf32> to vector<32x64xf32>
    %cst_226 = arith.constant dense<0.000000e+00> : vector<8x64xf32>
    %233 = tpu.matmul %230, %232, %cst_226 {dimension_numbers = #tpu.dot_dimension_numbers<[1], [0], [0], [1], [0, 0, 1, 1], [], []>} : vector<8x32xf32>, vector<32x64xf32>, vector<8x64xf32> -> vector<8x64xf32>
    %234 = arith.addf %227, %233 : vector<8x64xf32>
    %c12_227 = arith.constant 12 : index
    %c0_228 = arith.constant 0 : index
    %c0_229 = arith.constant 0 : index
    %235 = vector.load %arg6[%c12_227, %c0_228, %c0_229] : memref<16x8x32xf32, #tpu.memory_space<vmem>>, vector<1x8x32xf32>
    %236 = vector.shape_cast %235 : vector<1x8x32xf32> to vector<8x32xf32>
    %cst_230 = arith.constant dense<0.000000e+00> : vector<8x32xf32>
    %237 = tpu.matmul %236, %149, %cst_230 {dimension_numbers = #tpu.dot_dimension_numbers<[1], [0], [0], [1], [0, 0, 1, 1], [], []>} : vector<8x32xf32>, vector<32x32xf32>, vector<8x32xf32> -> vector<8x32xf32>
    %c12_231 = arith.constant 12 : index
    %c0_232 = arith.constant 0 : index
    %c0_233 = arith.constant 0 : index
    %238 = vector.load %arg7[%c12_231, %c0_232, %c0_233] : memref<16x32x64xf32, #tpu.memory_space<vmem>>, vector<1x32x64xf32>
    %239 = vector.shape_cast %238 : vector<1x32x64xf32> to vector<32x64xf32>
    %cst_234 = arith.constant dense<0.000000e+00> : vector<8x64xf32>
    %240 = tpu.matmul %237, %239, %cst_234 {dimension_numbers = #tpu.dot_dimension_numbers<[1], [0], [0], [1], [0, 0, 1, 1], [], []>} : vector<8x32xf32>, vector<32x64xf32>, vector<8x64xf32> -> vector<8x64xf32>
    %241 = arith.addf %234, %240 : vector<8x64xf32>
    %c13_235 = arith.constant 13 : index
    %c0_236 = arith.constant 0 : index
    %c0_237 = arith.constant 0 : index
    %242 = vector.load %arg6[%c13_235, %c0_236, %c0_237] : memref<16x8x32xf32, #tpu.memory_space<vmem>>, vector<1x8x32xf32>
    %243 = vector.shape_cast %242 : vector<1x8x32xf32> to vector<8x32xf32>
    %cst_238 = arith.constant dense<0.000000e+00> : vector<8x32xf32>
    %244 = tpu.matmul %243, %149, %cst_238 {dimension_numbers = #tpu.dot_dimension_numbers<[1], [0], [0], [1], [0, 0, 1, 1], [], []>} : vector<8x32xf32>, vector<32x32xf32>, vector<8x32xf32> -> vector<8x32xf32>
    %c13_239 = arith.constant 13 : index
    %c0_240 = arith.constant 0 : index
    %c0_241 = arith.constant 0 : index
    %245 = vector.load %arg7[%c13_239, %c0_240, %c0_241] : memref<16x32x64xf32, #tpu.memory_space<vmem>>, vector<1x32x64xf32>
    %246 = vector.shape_cast %245 : vector<1x32x64xf32> to vector<32x64xf32>
    %cst_242 = arith.constant dense<0.000000e+00> : vector<8x64xf32>
    %247 = tpu.matmul %244, %246, %cst_242 {dimension_numbers = #tpu.dot_dimension_numbers<[1], [0], [0], [1], [0, 0, 1, 1], [], []>} : vector<8x32xf32>, vector<32x64xf32>, vector<8x64xf32> -> vector<8x64xf32>
    %248 = arith.addf %241, %247 : vector<8x64xf32>
    %c14_243 = arith.constant 14 : index
    %c0_244 = arith.constant 0 : index
    %c0_245 = arith.constant 0 : index
    %249 = vector.load %arg6[%c14_243, %c0_244, %c0_245] : memref<16x8x32xf32, #tpu.memory_space<vmem>>, vector<1x8x32xf32>
    %250 = vector.shape_cast %249 : vector<1x8x32xf32> to vector<8x32xf32>
    %cst_246 = arith.constant dense<0.000000e+00> : vector<8x32xf32>
    %251 = tpu.matmul %250, %149, %cst_246 {dimension_numbers = #tpu.dot_dimension_numbers<[1], [0], [0], [1], [0, 0, 1, 1], [], []>} : vector<8x32xf32>, vector<32x32xf32>, vector<8x32xf32> -> vector<8x32xf32>
    %c14_247 = arith.constant 14 : index
    %c0_248 = arith.constant 0 : index
    %c0_249 = arith.constant 0 : index
    %252 = vector.load %arg7[%c14_247, %c0_248, %c0_249] : memref<16x32x64xf32, #tpu.memory_space<vmem>>, vector<1x32x64xf32>
    %253 = vector.shape_cast %252 : vector<1x32x64xf32> to vector<32x64xf32>
    %cst_250 = arith.constant dense<0.000000e+00> : vector<8x64xf32>
    %254 = tpu.matmul %251, %253, %cst_250 {dimension_numbers = #tpu.dot_dimension_numbers<[1], [0], [0], [1], [0, 0, 1, 1], [], []>} : vector<8x32xf32>, vector<32x64xf32>, vector<8x64xf32> -> vector<8x64xf32>
    %255 = arith.addf %248, %254 : vector<8x64xf32>
    %c15_251 = arith.constant 15 : index
    %c0_252 = arith.constant 0 : index
    %c0_253 = arith.constant 0 : index
    %256 = vector.load %arg6[%c15_251, %c0_252, %c0_253] : memref<16x8x32xf32, #tpu.memory_space<vmem>>, vector<1x8x32xf32>
    %257 = vector.shape_cast %256 : vector<1x8x32xf32> to vector<8x32xf32>
    %cst_254 = arith.constant dense<0.000000e+00> : vector<8x32xf32>
    %258 = tpu.matmul %257, %149, %cst_254 {dimension_numbers = #tpu.dot_dimension_numbers<[1], [0], [0], [1], [0, 0, 1, 1], [], []>} : vector<8x32xf32>, vector<32x32xf32>, vector<8x32xf32> -> vector<8x32xf32>
    %c15_255 = arith.constant 15 : index
    %c0_256 = arith.constant 0 : index
    %c0_257 = arith.constant 0 : index
    %259 = vector.load %arg7[%c15_255, %c0_256, %c0_257] : memref<16x32x64xf32, #tpu.memory_space<vmem>>, vector<1x32x64xf32>
    %260 = vector.shape_cast %259 : vector<1x32x64xf32> to vector<32x64xf32>
    %cst_258 = arith.constant dense<0.000000e+00> : vector<8x64xf32>
    %261 = tpu.matmul %258, %260, %cst_258 {dimension_numbers = #tpu.dot_dimension_numbers<[1], [0], [0], [1], [0, 0, 1, 1], [], []>} : vector<8x32xf32>, vector<32x64xf32>, vector<8x64xf32> -> vector<8x64xf32>
    %262 = arith.addf %255, %261 : vector<8x64xf32>
    %cst_259 = arith.constant dense<0.000000e+00> : vector<64xf32>
    %263 = vector.multi_reduction <add>, %262, %cst_259 [0] : vector<8x64xf32> to vector<64xf32>
    %264 = vector.shape_cast %263 : vector<64xf32> to vector<1x64xf32>
    %cst_260 = arith.constant 8.000000e+00 : f32
    %265 = vector.broadcast %cst_260 : f32 to vector<1x64xf32>
    %266 = arith.divf %264, %265 : vector<1x64xf32>
    %267 = vector.broadcast %266 : vector<1x64xf32> to vector<8x64xf32>
    %268 = arith.subf %262, %267 : vector<8x64xf32>
    %269 = arith.mulf %268, %268 : vector<8x64xf32>
    %cst_261 = arith.constant dense<0.000000e+00> : vector<64xf32>
    %270 = vector.multi_reduction <add>, %269, %cst_261 [0] : vector<8x64xf32> to vector<64xf32>
    %271 = vector.shape_cast %270 : vector<64xf32> to vector<1x64xf32>
    %cst_262 = arith.constant 8.000000e+00 : f32
    %272 = vector.broadcast %cst_262 : f32 to vector<1x64xf32>
    %273 = arith.divf %271, %272 : vector<1x64xf32>
    %274 = vector.broadcast %266 : vector<1x64xf32> to vector<8x64xf32>
    %275 = arith.subf %262, %274 : vector<8x64xf32>
    %cst_263 = arith.constant 9.99999974E-6 : f32
    %276 = vector.broadcast %cst_263 : f32 to vector<1x64xf32>
    %277 = arith.addf %273, %276 : vector<1x64xf32>
    %278 = math.rsqrt %277 : vector<1x64xf32>
    %279 = vector.broadcast %278 : vector<1x64xf32> to vector<8x64xf32>
    %280 = arith.mulf %275, %279 : vector<8x64xf32>
    %c0_264 = arith.constant 0 : index
    %c0_265 = arith.constant 0 : index
    %281 = vector.load %arg8[%c0_264, %c0_265] : memref<1x64xf32, #tpu.memory_space<vmem>>, vector<1x64xf32>
    %282 = vector.broadcast %281 : vector<1x64xf32> to vector<8x64xf32>
    %283 = arith.mulf %280, %282 : vector<8x64xf32>
    %c0_266 = arith.constant 0 : index
    %c0_267 = arith.constant 0 : index
    %284 = vector.load %arg9[%c0_266, %c0_267] : memref<1x64xf32, #tpu.memory_space<vmem>>, vector<1x64xf32>
    %285 = vector.broadcast %284 : vector<1x64xf32> to vector<8x64xf32>
    %286 = arith.addf %283, %285 : vector<8x64xf32>
    %cst_268 = arith.constant 0.000000e+00 : f32
    %287 = vector.broadcast %cst_268 : f32 to vector<8x64xf32>
    %288 = arith.cmpf ogt, %286, %287 : vector<8x64xf32>
    %cst_269 = arith.constant 2.000000e-01 : f32
    %289 = vector.broadcast %cst_269 : f32 to vector<8x64xf32>
    %290 = arith.mulf %289, %286 : vector<8x64xf32>
    %291 = arith.select %288, %286, %290 : vector<8x64xi1>, vector<8x64xf32>
    %cst_270 = arith.constant 0.000000e+00 : f32
    %292 = vector.broadcast %cst_270 : f32 to vector<2x128xf32>
    %c0_271 = arith.constant 0 : index
    %c0_272 = arith.constant 0 : index
    %c0_273 = arith.constant 0 : index
    %293 = vector.load %arg10[%c0_271, %c0_272, %c0_273] : memref<16x2x8xf32, #tpu.memory_space<vmem>>, vector<1x2x8xf32>
    %294 = vector.shape_cast %293 : vector<1x2x8xf32> to vector<2x8xf32>
    %cst_274 = arith.constant dense<0.000000e+00> : vector<2x64xf32>
    %295 = tpu.matmul %294, %291, %cst_274 {dimension_numbers = #tpu.dot_dimension_numbers<[1], [0], [0], [1], [0, 0, 1, 1], [], []>} : vector<2x8xf32>, vector<8x64xf32>, vector<2x64xf32> -> vector<2x64xf32>
    %c0_275 = arith.constant 0 : index
    %c0_276 = arith.constant 0 : index
    %c0_277 = arith.constant 0 : index
    %296 = vector.load %arg11[%c0_275, %c0_276, %c0_277] : memref<16x64x128xf32, #tpu.memory_space<vmem>>, vector<1x64x128xf32>
    %297 = vector.shape_cast %296 : vector<1x64x128xf32> to vector<64x128xf32>
    %cst_278 = arith.constant dense<0.000000e+00> : vector<2x128xf32>
    %298 = tpu.matmul %295, %297, %cst_278 {dimension_numbers = #tpu.dot_dimension_numbers<[1], [0], [0], [1], [0, 0, 1, 1], [], []>} : vector<2x64xf32>, vector<64x128xf32>, vector<2x128xf32> -> vector<2x128xf32>
    %299 = arith.addf %292, %298 : vector<2x128xf32>
    %c1_279 = arith.constant 1 : index
    %c0_280 = arith.constant 0 : index
    %c0_281 = arith.constant 0 : index
    %300 = vector.load %arg10[%c1_279, %c0_280, %c0_281] : memref<16x2x8xf32, #tpu.memory_space<vmem>>, vector<1x2x8xf32>
    %301 = vector.shape_cast %300 : vector<1x2x8xf32> to vector<2x8xf32>
    %cst_282 = arith.constant dense<0.000000e+00> : vector<2x64xf32>
    %302 = tpu.matmul %301, %291, %cst_282 {dimension_numbers = #tpu.dot_dimension_numbers<[1], [0], [0], [1], [0, 0, 1, 1], [], []>} : vector<2x8xf32>, vector<8x64xf32>, vector<2x64xf32> -> vector<2x64xf32>
    %c1_283 = arith.constant 1 : index
    %c0_284 = arith.constant 0 : index
    %c0_285 = arith.constant 0 : index
    %303 = vector.load %arg11[%c1_283, %c0_284, %c0_285] : memref<16x64x128xf32, #tpu.memory_space<vmem>>, vector<1x64x128xf32>
    %304 = vector.shape_cast %303 : vector<1x64x128xf32> to vector<64x128xf32>
    %cst_286 = arith.constant dense<0.000000e+00> : vector<2x128xf32>
    %305 = tpu.matmul %302, %304, %cst_286 {dimension_numbers = #tpu.dot_dimension_numbers<[1], [0], [0], [1], [0, 0, 1, 1], [], []>} : vector<2x64xf32>, vector<64x128xf32>, vector<2x128xf32> -> vector<2x128xf32>
    %306 = arith.addf %299, %305 : vector<2x128xf32>
    %c2_287 = arith.constant 2 : index
    %c0_288 = arith.constant 0 : index
    %c0_289 = arith.constant 0 : index
    %307 = vector.load %arg10[%c2_287, %c0_288, %c0_289] : memref<16x2x8xf32, #tpu.memory_space<vmem>>, vector<1x2x8xf32>
    %308 = vector.shape_cast %307 : vector<1x2x8xf32> to vector<2x8xf32>
    %cst_290 = arith.constant dense<0.000000e+00> : vector<2x64xf32>
    %309 = tpu.matmul %308, %291, %cst_290 {dimension_numbers = #tpu.dot_dimension_numbers<[1], [0], [0], [1], [0, 0, 1, 1], [], []>} : vector<2x8xf32>, vector<8x64xf32>, vector<2x64xf32> -> vector<2x64xf32>
    %c2_291 = arith.constant 2 : index
    %c0_292 = arith.constant 0 : index
    %c0_293 = arith.constant 0 : index
    %310 = vector.load %arg11[%c2_291, %c0_292, %c0_293] : memref<16x64x128xf32, #tpu.memory_space<vmem>>, vector<1x64x128xf32>
    %311 = vector.shape_cast %310 : vector<1x64x128xf32> to vector<64x128xf32>
    %cst_294 = arith.constant dense<0.000000e+00> : vector<2x128xf32>
    %312 = tpu.matmul %309, %311, %cst_294 {dimension_numbers = #tpu.dot_dimension_numbers<[1], [0], [0], [1], [0, 0, 1, 1], [], []>} : vector<2x64xf32>, vector<64x128xf32>, vector<2x128xf32> -> vector<2x128xf32>
    %313 = arith.addf %306, %312 : vector<2x128xf32>
    %c3_295 = arith.constant 3 : index
    %c0_296 = arith.constant 0 : index
    %c0_297 = arith.constant 0 : index
    %314 = vector.load %arg10[%c3_295, %c0_296, %c0_297] : memref<16x2x8xf32, #tpu.memory_space<vmem>>, vector<1x2x8xf32>
    %315 = vector.shape_cast %314 : vector<1x2x8xf32> to vector<2x8xf32>
    %cst_298 = arith.constant dense<0.000000e+00> : vector<2x64xf32>
    %316 = tpu.matmul %315, %291, %cst_298 {dimension_numbers = #tpu.dot_dimension_numbers<[1], [0], [0], [1], [0, 0, 1, 1], [], []>} : vector<2x8xf32>, vector<8x64xf32>, vector<2x64xf32> -> vector<2x64xf32>
    %c3_299 = arith.constant 3 : index
    %c0_300 = arith.constant 0 : index
    %c0_301 = arith.constant 0 : index
    %317 = vector.load %arg11[%c3_299, %c0_300, %c0_301] : memref<16x64x128xf32, #tpu.memory_space<vmem>>, vector<1x64x128xf32>
    %318 = vector.shape_cast %317 : vector<1x64x128xf32> to vector<64x128xf32>
    %cst_302 = arith.constant dense<0.000000e+00> : vector<2x128xf32>
    %319 = tpu.matmul %316, %318, %cst_302 {dimension_numbers = #tpu.dot_dimension_numbers<[1], [0], [0], [1], [0, 0, 1, 1], [], []>} : vector<2x64xf32>, vector<64x128xf32>, vector<2x128xf32> -> vector<2x128xf32>
    %320 = arith.addf %313, %319 : vector<2x128xf32>
    %c4_303 = arith.constant 4 : index
    %c0_304 = arith.constant 0 : index
    %c0_305 = arith.constant 0 : index
    %321 = vector.load %arg10[%c4_303, %c0_304, %c0_305] : memref<16x2x8xf32, #tpu.memory_space<vmem>>, vector<1x2x8xf32>
    %322 = vector.shape_cast %321 : vector<1x2x8xf32> to vector<2x8xf32>
    %cst_306 = arith.constant dense<0.000000e+00> : vector<2x64xf32>
    %323 = tpu.matmul %322, %291, %cst_306 {dimension_numbers = #tpu.dot_dimension_numbers<[1], [0], [0], [1], [0, 0, 1, 1], [], []>} : vector<2x8xf32>, vector<8x64xf32>, vector<2x64xf32> -> vector<2x64xf32>
    %c4_307 = arith.constant 4 : index
    %c0_308 = arith.constant 0 : index
    %c0_309 = arith.constant 0 : index
    %324 = vector.load %arg11[%c4_307, %c0_308, %c0_309] : memref<16x64x128xf32, #tpu.memory_space<vmem>>, vector<1x64x128xf32>
    %325 = vector.shape_cast %324 : vector<1x64x128xf32> to vector<64x128xf32>
    %cst_310 = arith.constant dense<0.000000e+00> : vector<2x128xf32>
    %326 = tpu.matmul %323, %325, %cst_310 {dimension_numbers = #tpu.dot_dimension_numbers<[1], [0], [0], [1], [0, 0, 1, 1], [], []>} : vector<2x64xf32>, vector<64x128xf32>, vector<2x128xf32> -> vector<2x128xf32>
    %327 = arith.addf %320, %326 : vector<2x128xf32>
    %c5_311 = arith.constant 5 : index
    %c0_312 = arith.constant 0 : index
    %c0_313 = arith.constant 0 : index
    %328 = vector.load %arg10[%c5_311, %c0_312, %c0_313] : memref<16x2x8xf32, #tpu.memory_space<vmem>>, vector<1x2x8xf32>
    %329 = vector.shape_cast %328 : vector<1x2x8xf32> to vector<2x8xf32>
    %cst_314 = arith.constant dense<0.000000e+00> : vector<2x64xf32>
    %330 = tpu.matmul %329, %291, %cst_314 {dimension_numbers = #tpu.dot_dimension_numbers<[1], [0], [0], [1], [0, 0, 1, 1], [], []>} : vector<2x8xf32>, vector<8x64xf32>, vector<2x64xf32> -> vector<2x64xf32>
    %c5_315 = arith.constant 5 : index
    %c0_316 = arith.constant 0 : index
    %c0_317 = arith.constant 0 : index
    %331 = vector.load %arg11[%c5_315, %c0_316, %c0_317] : memref<16x64x128xf32, #tpu.memory_space<vmem>>, vector<1x64x128xf32>
    %332 = vector.shape_cast %331 : vector<1x64x128xf32> to vector<64x128xf32>
    %cst_318 = arith.constant dense<0.000000e+00> : vector<2x128xf32>
    %333 = tpu.matmul %330, %332, %cst_318 {dimension_numbers = #tpu.dot_dimension_numbers<[1], [0], [0], [1], [0, 0, 1, 1], [], []>} : vector<2x64xf32>, vector<64x128xf32>, vector<2x128xf32> -> vector<2x128xf32>
    %334 = arith.addf %327, %333 : vector<2x128xf32>
    %c6_319 = arith.constant 6 : index
    %c0_320 = arith.constant 0 : index
    %c0_321 = arith.constant 0 : index
    %335 = vector.load %arg10[%c6_319, %c0_320, %c0_321] : memref<16x2x8xf32, #tpu.memory_space<vmem>>, vector<1x2x8xf32>
    %336 = vector.shape_cast %335 : vector<1x2x8xf32> to vector<2x8xf32>
    %cst_322 = arith.constant dense<0.000000e+00> : vector<2x64xf32>
    %337 = tpu.matmul %336, %291, %cst_322 {dimension_numbers = #tpu.dot_dimension_numbers<[1], [0], [0], [1], [0, 0, 1, 1], [], []>} : vector<2x8xf32>, vector<8x64xf32>, vector<2x64xf32> -> vector<2x64xf32>
    %c6_323 = arith.constant 6 : index
    %c0_324 = arith.constant 0 : index
    %c0_325 = arith.constant 0 : index
    %338 = vector.load %arg11[%c6_323, %c0_324, %c0_325] : memref<16x64x128xf32, #tpu.memory_space<vmem>>, vector<1x64x128xf32>
    %339 = vector.shape_cast %338 : vector<1x64x128xf32> to vector<64x128xf32>
    %cst_326 = arith.constant dense<0.000000e+00> : vector<2x128xf32>
    %340 = tpu.matmul %337, %339, %cst_326 {dimension_numbers = #tpu.dot_dimension_numbers<[1], [0], [0], [1], [0, 0, 1, 1], [], []>} : vector<2x64xf32>, vector<64x128xf32>, vector<2x128xf32> -> vector<2x128xf32>
    %341 = arith.addf %334, %340 : vector<2x128xf32>
    %c7_327 = arith.constant 7 : index
    %c0_328 = arith.constant 0 : index
    %c0_329 = arith.constant 0 : index
    %342 = vector.load %arg10[%c7_327, %c0_328, %c0_329] : memref<16x2x8xf32, #tpu.memory_space<vmem>>, vector<1x2x8xf32>
    %343 = vector.shape_cast %342 : vector<1x2x8xf32> to vector<2x8xf32>
    %cst_330 = arith.constant dense<0.000000e+00> : vector<2x64xf32>
    %344 = tpu.matmul %343, %291, %cst_330 {dimension_numbers = #tpu.dot_dimension_numbers<[1], [0], [0], [1], [0, 0, 1, 1], [], []>} : vector<2x8xf32>, vector<8x64xf32>, vector<2x64xf32> -> vector<2x64xf32>
    %c7_331 = arith.constant 7 : index
    %c0_332 = arith.constant 0 : index
    %c0_333 = arith.constant 0 : index
    %345 = vector.load %arg11[%c7_331, %c0_332, %c0_333] : memref<16x64x128xf32, #tpu.memory_space<vmem>>, vector<1x64x128xf32>
    %346 = vector.shape_cast %345 : vector<1x64x128xf32> to vector<64x128xf32>
    %cst_334 = arith.constant dense<0.000000e+00> : vector<2x128xf32>
    %347 = tpu.matmul %344, %346, %cst_334 {dimension_numbers = #tpu.dot_dimension_numbers<[1], [0], [0], [1], [0, 0, 1, 1], [], []>} : vector<2x64xf32>, vector<64x128xf32>, vector<2x128xf32> -> vector<2x128xf32>
    %348 = arith.addf %341, %347 : vector<2x128xf32>
    %c8_335 = arith.constant 8 : index
    %c0_336 = arith.constant 0 : index
    %c0_337 = arith.constant 0 : index
    %349 = vector.load %arg10[%c8_335, %c0_336, %c0_337] : memref<16x2x8xf32, #tpu.memory_space<vmem>>, vector<1x2x8xf32>
    %350 = vector.shape_cast %349 : vector<1x2x8xf32> to vector<2x8xf32>
    %cst_338 = arith.constant dense<0.000000e+00> : vector<2x64xf32>
    %351 = tpu.matmul %350, %291, %cst_338 {dimension_numbers = #tpu.dot_dimension_numbers<[1], [0], [0], [1], [0, 0, 1, 1], [], []>} : vector<2x8xf32>, vector<8x64xf32>, vector<2x64xf32> -> vector<2x64xf32>
    %c8_339 = arith.constant 8 : index
    %c0_340 = arith.constant 0 : index
    %c0_341 = arith.constant 0 : index
    %352 = vector.load %arg11[%c8_339, %c0_340, %c0_341] : memref<16x64x128xf32, #tpu.memory_space<vmem>>, vector<1x64x128xf32>
    %353 = vector.shape_cast %352 : vector<1x64x128xf32> to vector<64x128xf32>
    %cst_342 = arith.constant dense<0.000000e+00> : vector<2x128xf32>
    %354 = tpu.matmul %351, %353, %cst_342 {dimension_numbers = #tpu.dot_dimension_numbers<[1], [0], [0], [1], [0, 0, 1, 1], [], []>} : vector<2x64xf32>, vector<64x128xf32>, vector<2x128xf32> -> vector<2x128xf32>
    %355 = arith.addf %348, %354 : vector<2x128xf32>
    %c9_343 = arith.constant 9 : index
    %c0_344 = arith.constant 0 : index
    %c0_345 = arith.constant 0 : index
    %356 = vector.load %arg10[%c9_343, %c0_344, %c0_345] : memref<16x2x8xf32, #tpu.memory_space<vmem>>, vector<1x2x8xf32>
    %357 = vector.shape_cast %356 : vector<1x2x8xf32> to vector<2x8xf32>
    %cst_346 = arith.constant dense<0.000000e+00> : vector<2x64xf32>
    %358 = tpu.matmul %357, %291, %cst_346 {dimension_numbers = #tpu.dot_dimension_numbers<[1], [0], [0], [1], [0, 0, 1, 1], [], []>} : vector<2x8xf32>, vector<8x64xf32>, vector<2x64xf32> -> vector<2x64xf32>
    %c9_347 = arith.constant 9 : index
    %c0_348 = arith.constant 0 : index
    %c0_349 = arith.constant 0 : index
    %359 = vector.load %arg11[%c9_347, %c0_348, %c0_349] : memref<16x64x128xf32, #tpu.memory_space<vmem>>, vector<1x64x128xf32>
    %360 = vector.shape_cast %359 : vector<1x64x128xf32> to vector<64x128xf32>
    %cst_350 = arith.constant dense<0.000000e+00> : vector<2x128xf32>
    %361 = tpu.matmul %358, %360, %cst_350 {dimension_numbers = #tpu.dot_dimension_numbers<[1], [0], [0], [1], [0, 0, 1, 1], [], []>} : vector<2x64xf32>, vector<64x128xf32>, vector<2x128xf32> -> vector<2x128xf32>
    %362 = arith.addf %355, %361 : vector<2x128xf32>
    %c10_351 = arith.constant 10 : index
    %c0_352 = arith.constant 0 : index
    %c0_353 = arith.constant 0 : index
    %363 = vector.load %arg10[%c10_351, %c0_352, %c0_353] : memref<16x2x8xf32, #tpu.memory_space<vmem>>, vector<1x2x8xf32>
    %364 = vector.shape_cast %363 : vector<1x2x8xf32> to vector<2x8xf32>
    %cst_354 = arith.constant dense<0.000000e+00> : vector<2x64xf32>
    %365 = tpu.matmul %364, %291, %cst_354 {dimension_numbers = #tpu.dot_dimension_numbers<[1], [0], [0], [1], [0, 0, 1, 1], [], []>} : vector<2x8xf32>, vector<8x64xf32>, vector<2x64xf32> -> vector<2x64xf32>
    %c10_355 = arith.constant 10 : index
    %c0_356 = arith.constant 0 : index
    %c0_357 = arith.constant 0 : index
    %366 = vector.load %arg11[%c10_355, %c0_356, %c0_357] : memref<16x64x128xf32, #tpu.memory_space<vmem>>, vector<1x64x128xf32>
    %367 = vector.shape_cast %366 : vector<1x64x128xf32> to vector<64x128xf32>
    %cst_358 = arith.constant dense<0.000000e+00> : vector<2x128xf32>
    %368 = tpu.matmul %365, %367, %cst_358 {dimension_numbers = #tpu.dot_dimension_numbers<[1], [0], [0], [1], [0, 0, 1, 1], [], []>} : vector<2x64xf32>, vector<64x128xf32>, vector<2x128xf32> -> vector<2x128xf32>
    %369 = arith.addf %362, %368 : vector<2x128xf32>
    %c11_359 = arith.constant 11 : index
    %c0_360 = arith.constant 0 : index
    %c0_361 = arith.constant 0 : index
    %370 = vector.load %arg10[%c11_359, %c0_360, %c0_361] : memref<16x2x8xf32, #tpu.memory_space<vmem>>, vector<1x2x8xf32>
    %371 = vector.shape_cast %370 : vector<1x2x8xf32> to vector<2x8xf32>
    %cst_362 = arith.constant dense<0.000000e+00> : vector<2x64xf32>
    %372 = tpu.matmul %371, %291, %cst_362 {dimension_numbers = #tpu.dot_dimension_numbers<[1], [0], [0], [1], [0, 0, 1, 1], [], []>} : vector<2x8xf32>, vector<8x64xf32>, vector<2x64xf32> -> vector<2x64xf32>
    %c11_363 = arith.constant 11 : index
    %c0_364 = arith.constant 0 : index
    %c0_365 = arith.constant 0 : index
    %373 = vector.load %arg11[%c11_363, %c0_364, %c0_365] : memref<16x64x128xf32, #tpu.memory_space<vmem>>, vector<1x64x128xf32>
    %374 = vector.shape_cast %373 : vector<1x64x128xf32> to vector<64x128xf32>
    %cst_366 = arith.constant dense<0.000000e+00> : vector<2x128xf32>
    %375 = tpu.matmul %372, %374, %cst_366 {dimension_numbers = #tpu.dot_dimension_numbers<[1], [0], [0], [1], [0, 0, 1, 1], [], []>} : vector<2x64xf32>, vector<64x128xf32>, vector<2x128xf32> -> vector<2x128xf32>
    %376 = arith.addf %369, %375 : vector<2x128xf32>
    %c12_367 = arith.constant 12 : index
    %c0_368 = arith.constant 0 : index
    %c0_369 = arith.constant 0 : index
    %377 = vector.load %arg10[%c12_367, %c0_368, %c0_369] : memref<16x2x8xf32, #tpu.memory_space<vmem>>, vector<1x2x8xf32>
    %378 = vector.shape_cast %377 : vector<1x2x8xf32> to vector<2x8xf32>
    %cst_370 = arith.constant dense<0.000000e+00> : vector<2x64xf32>
    %379 = tpu.matmul %378, %291, %cst_370 {dimension_numbers = #tpu.dot_dimension_numbers<[1], [0], [0], [1], [0, 0, 1, 1], [], []>} : vector<2x8xf32>, vector<8x64xf32>, vector<2x64xf32> -> vector<2x64xf32>
    %c12_371 = arith.constant 12 : index
    %c0_372 = arith.constant 0 : index
    %c0_373 = arith.constant 0 : index
    %380 = vector.load %arg11[%c12_371, %c0_372, %c0_373] : memref<16x64x128xf32, #tpu.memory_space<vmem>>, vector<1x64x128xf32>
    %381 = vector.shape_cast %380 : vector<1x64x128xf32> to vector<64x128xf32>
    %cst_374 = arith.constant dense<0.000000e+00> : vector<2x128xf32>
    %382 = tpu.matmul %379, %381, %cst_374 {dimension_numbers = #tpu.dot_dimension_numbers<[1], [0], [0], [1], [0, 0, 1, 1], [], []>} : vector<2x64xf32>, vector<64x128xf32>, vector<2x128xf32> -> vector<2x128xf32>
    %383 = arith.addf %376, %382 : vector<2x128xf32>
    %c13_375 = arith.constant 13 : index
    %c0_376 = arith.constant 0 : index
    %c0_377 = arith.constant 0 : index
    %384 = vector.load %arg10[%c13_375, %c0_376, %c0_377] : memref<16x2x8xf32, #tpu.memory_space<vmem>>, vector<1x2x8xf32>
    %385 = vector.shape_cast %384 : vector<1x2x8xf32> to vector<2x8xf32>
    %cst_378 = arith.constant dense<0.000000e+00> : vector<2x64xf32>
    %386 = tpu.matmul %385, %291, %cst_378 {dimension_numbers = #tpu.dot_dimension_numbers<[1], [0], [0], [1], [0, 0, 1, 1], [], []>} : vector<2x8xf32>, vector<8x64xf32>, vector<2x64xf32> -> vector<2x64xf32>
    %c13_379 = arith.constant 13 : index
    %c0_380 = arith.constant 0 : index
    %c0_381 = arith.constant 0 : index
    %387 = vector.load %arg11[%c13_379, %c0_380, %c0_381] : memref<16x64x128xf32, #tpu.memory_space<vmem>>, vector<1x64x128xf32>
    %388 = vector.shape_cast %387 : vector<1x64x128xf32> to vector<64x128xf32>
    %cst_382 = arith.constant dense<0.000000e+00> : vector<2x128xf32>
    %389 = tpu.matmul %386, %388, %cst_382 {dimension_numbers = #tpu.dot_dimension_numbers<[1], [0], [0], [1], [0, 0, 1, 1], [], []>} : vector<2x64xf32>, vector<64x128xf32>, vector<2x128xf32> -> vector<2x128xf32>
    %390 = arith.addf %383, %389 : vector<2x128xf32>
    %c14_383 = arith.constant 14 : index
    %c0_384 = arith.constant 0 : index
    %c0_385 = arith.constant 0 : index
    %391 = vector.load %arg10[%c14_383, %c0_384, %c0_385] : memref<16x2x8xf32, #tpu.memory_space<vmem>>, vector<1x2x8xf32>
    %392 = vector.shape_cast %391 : vector<1x2x8xf32> to vector<2x8xf32>
    %cst_386 = arith.constant dense<0.000000e+00> : vector<2x64xf32>
    %393 = tpu.matmul %392, %291, %cst_386 {dimension_numbers = #tpu.dot_dimension_numbers<[1], [0], [0], [1], [0, 0, 1, 1], [], []>} : vector<2x8xf32>, vector<8x64xf32>, vector<2x64xf32> -> vector<2x64xf32>
    %c14_387 = arith.constant 14 : index
    %c0_388 = arith.constant 0 : index
    %c0_389 = arith.constant 0 : index
    %394 = vector.load %arg11[%c14_387, %c0_388, %c0_389] : memref<16x64x128xf32, #tpu.memory_space<vmem>>, vector<1x64x128xf32>
    %395 = vector.shape_cast %394 : vector<1x64x128xf32> to vector<64x128xf32>
    %cst_390 = arith.constant dense<0.000000e+00> : vector<2x128xf32>
    %396 = tpu.matmul %393, %395, %cst_390 {dimension_numbers = #tpu.dot_dimension_numbers<[1], [0], [0], [1], [0, 0, 1, 1], [], []>} : vector<2x64xf32>, vector<64x128xf32>, vector<2x128xf32> -> vector<2x128xf32>
    %397 = arith.addf %390, %396 : vector<2x128xf32>
    %c15_391 = arith.constant 15 : index
    %c0_392 = arith.constant 0 : index
    %c0_393 = arith.constant 0 : index
    %398 = vector.load %arg10[%c15_391, %c0_392, %c0_393] : memref<16x2x8xf32, #tpu.memory_space<vmem>>, vector<1x2x8xf32>
    %399 = vector.shape_cast %398 : vector<1x2x8xf32> to vector<2x8xf32>
    %cst_394 = arith.constant dense<0.000000e+00> : vector<2x64xf32>
    %400 = tpu.matmul %399, %291, %cst_394 {dimension_numbers = #tpu.dot_dimension_numbers<[1], [0], [0], [1], [0, 0, 1, 1], [], []>} : vector<2x8xf32>, vector<8x64xf32>, vector<2x64xf32> -> vector<2x64xf32>
    %c15_395 = arith.constant 15 : index
    %c0_396 = arith.constant 0 : index
    %c0_397 = arith.constant 0 : index
    %401 = vector.load %arg11[%c15_395, %c0_396, %c0_397] : memref<16x64x128xf32, #tpu.memory_space<vmem>>, vector<1x64x128xf32>
    %402 = vector.shape_cast %401 : vector<1x64x128xf32> to vector<64x128xf32>
    %cst_398 = arith.constant dense<0.000000e+00> : vector<2x128xf32>
    %403 = tpu.matmul %400, %402, %cst_398 {dimension_numbers = #tpu.dot_dimension_numbers<[1], [0], [0], [1], [0, 0, 1, 1], [], []>} : vector<2x64xf32>, vector<64x128xf32>, vector<2x128xf32> -> vector<2x128xf32>
    %404 = arith.addf %397, %403 : vector<2x128xf32>
    %cst_399 = arith.constant dense<0.000000e+00> : vector<128xf32>
    %405 = vector.multi_reduction <add>, %404, %cst_399 [0] : vector<2x128xf32> to vector<128xf32>
    %406 = vector.shape_cast %405 : vector<128xf32> to vector<1x128xf32>
    %cst_400 = arith.constant 2.000000e+00 : f32
    %407 = vector.broadcast %cst_400 : f32 to vector<1x128xf32>
    %408 = arith.divf %406, %407 : vector<1x128xf32>
    %409 = vector.broadcast %408 : vector<1x128xf32> to vector<2x128xf32>
    %410 = arith.subf %404, %409 : vector<2x128xf32>
    %411 = arith.mulf %410, %410 : vector<2x128xf32>
    %cst_401 = arith.constant dense<0.000000e+00> : vector<128xf32>
    %412 = vector.multi_reduction <add>, %411, %cst_401 [0] : vector<2x128xf32> to vector<128xf32>
    %413 = vector.shape_cast %412 : vector<128xf32> to vector<1x128xf32>
    %cst_402 = arith.constant 2.000000e+00 : f32
    %414 = vector.broadcast %cst_402 : f32 to vector<1x128xf32>
    %415 = arith.divf %413, %414 : vector<1x128xf32>
    %416 = vector.broadcast %408 : vector<1x128xf32> to vector<2x128xf32>
    %417 = arith.subf %404, %416 : vector<2x128xf32>
    %cst_403 = arith.constant 9.99999974E-6 : f32
    %418 = vector.broadcast %cst_403 : f32 to vector<1x128xf32>
    %419 = arith.addf %415, %418 : vector<1x128xf32>
    %420 = math.rsqrt %419 : vector<1x128xf32>
    %421 = vector.broadcast %420 : vector<1x128xf32> to vector<2x128xf32>
    %422 = arith.mulf %417, %421 : vector<2x128xf32>
    %c0_404 = arith.constant 0 : index
    %c0_405 = arith.constant 0 : index
    %423 = vector.load %arg12[%c0_404, %c0_405] : memref<1x128xf32, #tpu.memory_space<vmem>>, vector<1x128xf32>
    %424 = vector.broadcast %423 : vector<1x128xf32> to vector<2x128xf32>
    %425 = arith.mulf %422, %424 : vector<2x128xf32>
    %c0_406 = arith.constant 0 : index
    %c0_407 = arith.constant 0 : index
    %426 = vector.load %arg13[%c0_406, %c0_407] : memref<1x128xf32, #tpu.memory_space<vmem>>, vector<1x128xf32>
    %427 = vector.broadcast %426 : vector<1x128xf32> to vector<2x128xf32>
    %428 = arith.addf %425, %427 : vector<2x128xf32>
    %cst_408 = arith.constant 0.000000e+00 : f32
    %429 = vector.broadcast %cst_408 : f32 to vector<2x128xf32>
    %430 = arith.cmpf ogt, %428, %429 : vector<2x128xf32>
    %cst_409 = arith.constant 2.000000e-01 : f32
    %431 = vector.broadcast %cst_409 : f32 to vector<2x128xf32>
    %432 = arith.mulf %431, %428 : vector<2x128xf32>
    %433 = arith.select %430, %428, %432 : vector<2x128xi1>, vector<2x128xf32>
    %c0_410 = arith.constant 0 : index
    %c0_411 = arith.constant 0 : index
    %434 = vector.load %arg14[%c0_410, %c0_411] : memref<128x8xf32, #tpu.memory_space<vmem>>, vector<128x8xf32>
    %cst_412 = arith.constant dense<0.000000e+00> : vector<2x8xf32>
    %435 = tpu.matmul %433, %434, %cst_412 {dimension_numbers = #tpu.dot_dimension_numbers<[1], [0], [0], [1], [0, 0, 1, 1], [], []>} : vector<2x128xf32>, vector<128x8xf32>, vector<2x8xf32> -> vector<2x8xf32>
    %c0_413 = arith.constant 0 : index
    %c0_414 = arith.constant 0 : index
    %436 = vector.load %arg15[%c0_413, %c0_414] : memref<1x8xf32, #tpu.memory_space<vmem>>, vector<1x8xf32>
    %437 = vector.broadcast %436 : vector<1x8xf32> to vector<2x8xf32>
    %438 = arith.addf %435, %437 : vector<2x8xf32>
    %c0_415 = arith.constant 0 : index
    %c0_416 = arith.constant 0 : index
    %439 = vector.load %arg16[%c0_415, %c0_416] : memref<2x8xf32, #tpu.memory_space<vmem>>, vector<2x8xf32>
    tpu.vector_store %arg16[%c0_415, %c0_416], %438 {strides = array<i32>} : memref<2x8xf32, #tpu.memory_space<vmem>>, vector<2x8xf32>,
    return
  }
}

</mosaic_0001>

<llo_original>
// kernel: encoder_forward.1
$region0: #{encoder_forward.1}
  #allocation0 [shape = 'u32[]', space=smem, size = 0x4, offset = 0x4, fixed_abs, tag = 'smem constant byte address 0x4 - core index']
  #allocation1 [shape = 'u32[144,128]{1,0:T(1,128)}', space=vmem, size = 0x12000, scoped, tag = 'internal scratch']
  %s0 = inlined_call_operand.vmem [shape: f32[128,16], index: 0, kind: input, shape index: {}]
  %s1 = inlined_call_operand.vmem [shape: f32[16,16], index: 1, kind: input, shape index: {}]
  %s2 = inlined_call_operand.vmem [shape: f32[16,32,128], index: 2, kind: input, shape index: {}]
  %s3 = inlined_call_operand.vmem [shape: f32[16,16,32], index: 3, kind: input, shape index: {}]
  %s4 = inlined_call_operand.vmem [shape: f32[1,32], index: 4, kind: input, shape index: {}]
  %s5 = inlined_call_operand.vmem [shape: f32[1,32], index: 5, kind: input, shape index: {}]
  %s6 = inlined_call_operand.vmem [shape: f32[16,8,32], index: 6, kind: input, shape index: {}]
  %s7 = inlined_call_operand.vmem [shape: f32[16,32,64], index: 7, kind: input, shape index: {}]
  %s8 = inlined_call_operand.vmem [shape: f32[1,64], index: 8, kind: input, shape index: {}]
  %s9 = inlined_call_operand.vmem [shape: f32[1,64], index: 9, kind: input, shape index: {}]
  %s10 = inlined_call_operand.vmem [shape: f32[16,2,8], index: 10, kind: input, shape index: {}]
  %s11 = inlined_call_operand.vmem [shape: f32[16,64,128], index: 11, kind: input, shape index: {}]
  %s12 = inlined_call_operand.vmem [shape: f32[1,128], index: 12, kind: input, shape index: {}]
  %s13 = inlined_call_operand.vmem [shape: f32[1,128], index: 13, kind: input, shape index: {}]
  %s14 = inlined_call_operand.vmem [shape: f32[128,8], index: 14, kind: input, shape index: {}]
  %s15 = inlined_call_operand.vmem [shape: f32[1,8], index: 15, kind: input, shape index: {}]
  %s16 = inlined_call_operand.hbm [shape: f32[2,8], index: 16, kind: output, shape index: {}]
  %s17 = sld [smem:[#allocation0]]
  $region74: #{encoder_forward.1} parent=0
    _
  %s19 = ssub.s32 1, %s17
  %s20 = scalar_select 0, %s19, %s17
  $region1: #{encoder_forward.1} parent=0
    #allocation2 [shape = 'u8[1024]{0}', space=vmem, size = 0x400, scoped, tag = 'output window, operand 0, single buffered']
    #allocation3 [shape = 's32[1]{0}', space=sflag, size = 0x4, scoped, tag = 'scoped memory for encoder_forward.1']
    %21 = vsyncpa [#allocation3], 0
    // Predicated region
    $region2: #{encoder_forward.1} parent=1 // pred_check
      _
    $region3: #{encoder_forward.1} parent=1 // pred_check_branch
      %23 = sbr.rel (0) target = $region5
    $region4: #{encoder_forward.1} parent=1 // pred_region
      _
    $region5: #{encoder_forward.1} parent=1 // pred_fallthru
      _
    // Predicated region
    $region6: #{encoder_forward.1} parent=1 // pred_check
      _
    $region7: #{encoder_forward.1} parent=1 // pred_check_branch
      %25 = sbr.rel (0) target = $region9
    $region8: #{encoder_forward.1} parent=1 // pred_region
      _
    $region9: #{encoder_forward.1} parent=1 // pred_fallthru
      _
    // Predicated region
    $region10: #{encoder_forward.1} parent=1 // pred_check
      _
    $region11: #{encoder_forward.1} parent=1 // pred_check_branch
      %27 = sbr.rel (0) target = $region13
    $region12: #{encoder_forward.1} parent=1 // pred_region
      _
    $region13: #{encoder_forward.1} parent=1 // pred_fallthru
      _
    // Predicated region
    $region14: #{encoder_forward.1} parent=1 // pred_check
      _
    $region15: #{encoder_forward.1} parent=1 // pred_check_branch
      %29 = sbr.rel (0) target = $region17
    $region16: #{encoder_forward.1} parent=1 // pred_region
      _
    $region17: #{encoder_forward.1} parent=1 // pred_fallthru
      _
    // Predicated region
    $region18: #{encoder_forward.1} parent=1 // pred_check
      _
    $region19: #{encoder_forward.1} parent=1 // pred_check_branch
      %31 = sbr.rel (0) target = $region21
    $region20: #{encoder_forward.1} parent=1 // pred_region
      _
    $region21: #{encoder_forward.1} parent=1 // pred_fallthru
      _
    // Predicated region
    $region22: #{encoder_forward.1} parent=1 // pred_check
      _
    $region23: #{encoder_forward.1} parent=1 // pred_check_branch
      %33 = sbr.rel (0) target = $region25
    $region24: #{encoder_forward.1} parent=1 // pred_region
      _
    $region25: #{encoder_forward.1} parent=1 // pred_fallthru
      _
    // Predicated region
    $region26: #{encoder_forward.1} parent=1 // pred_check
      _
    $region27: #{encoder_forward.1} parent=1 // pred_check_branch
      %35 = sbr.rel (0) target = $region29
    $region28: #{encoder_forward.1} parent=1 // pred_region
      _
    $region29: #{encoder_forward.1} parent=1 // pred_fallthru
      _
    // Predicated region
    $region30: #{encoder_forward.1} parent=1 // pred_check
      _
    $region31: #{encoder_forward.1} parent=1 // pred_check_branch
      %37 = sbr.rel (0) target = $region33
    $region32: #{encoder_forward.1} parent=1 // pred_region
      _
    $region33: #{encoder_forward.1} parent=1 // pred_fallthru
      _
    // Predicated region
    $region34: #{encoder_forward.1} parent=1 // pred_check
      _
    $region35: #{encoder_forward.1} parent=1 // pred_check_branch
      %39 = sbr.rel (0) target = $region37
    $region36: #{encoder_forward.1} parent=1 // pred_region
      _
    $region37: #{encoder_forward.1} parent=1 // pred_fallthru
      _
    // Predicated region
    $region38: #{encoder_forward.1} parent=1 // pred_check
      _
    $region39: #{encoder_forward.1} parent=1 // pred_check_branch
      %41 = sbr.rel (0) target = $region41
    $region40: #{encoder_forward.1} parent=1 // pred_region
      _
    $region41: #{encoder_forward.1} parent=1 // pred_fallthru
      _
    // Predicated region
    $region42: #{encoder_forward.1} parent=1 // pred_check
      _
    $region43: #{encoder_forward.1} parent=1 // pred_check_branch
      %43 = sbr.rel (0) target = $region45
    $region44: #{encoder_forward.1} parent=1 // pred_region
      _
    $region45: #{encoder_forward.1} parent=1 // pred_fallthru
      _
    // Predicated region
    $region46: #{encoder_forward.1} parent=1 // pred_check
      _
    $region47: #{encoder_forward.1} parent=1 // pred_check_branch
      %45 = sbr.rel (0) target = $region49
    $region48: #{encoder_forward.1} parent=1 // pred_region
      _
    $region49: #{encoder_forward.1} parent=1 // pred_fallthru
      _
    // Predicated region
    $region50: #{encoder_forward.1} parent=1 // pred_check
      _
    $region51: #{encoder_forward.1} parent=1 // pred_check_branch
      %47 = sbr.rel (0) target = $region53
    $region52: #{encoder_forward.1} parent=1 // pred_region
      _
    $region53: #{encoder_forward.1} parent=1 // pred_fallthru
      _
    // Predicated region
    $region54: #{encoder_forward.1} parent=1 // pred_check
      _
    $region55: #{encoder_forward.1} parent=1 // pred_check_branch
      %49 = sbr.rel (0) target = $region57
    $region56: #{encoder_forward.1} parent=1 // pred_region
      _
    $region57: #{encoder_forward.1} parent=1 // pred_fallthru
      _
    // Predicated region
    $region58: #{encoder_forward.1} parent=1 // pred_check
      _
    $region59: #{encoder_forward.1} parent=1 // pred_check_branch
      %51 = sbr.rel (0) target = $region61
    $region60: #{encoder_forward.1} parent=1 // pred_region
      _
    $region61: #{encoder_forward.1} parent=1 // pred_fallthru
      _
    // Predicated region
    $region62: #{encoder_forward.1} parent=1 // pred_check
      _
    $region63: #{encoder_forward.1} parent=1 // pred_check_branch
      %53 = sbr.rel (0) target = $region65
    $region64: #{encoder_forward.1} parent=1 // pred_region
      _
    $region65: #{encoder_forward.1} parent=1 // pred_fallthru
      _
    %v54 = vld [vmem:[%s0] sm:$0xff]
    %v55 = vld [vmem:[%s0 + $0x8] sm:$0xff]
    %v56 = vld [vmem:[%s0 + $0x10] sm:$0xff]
    %v57 = vld [vmem:[%s0 + $0x18] sm:$0xff]
    %v58 = vld [vmem:[%s0 + $0x20] sm:$0xff]
    %v59 = vld [vmem:[%s0 + $0x28] sm:$0xff]
    %v60 = vld [vmem:[%s0 + $0x30] sm:$0xff]
    %v61 = vld [vmem:[%s0 + $0x38] sm:$0xff]
    %v62 = vld [vmem:[%s0 + $0x40] sm:$0xff]
    %v63 = vld [vmem:[%s0 + $0x48] sm:$0xff]
    %v64 = vld [vmem:[%s0 + $0x50] sm:$0xff]
    %v65 = vld [vmem:[%s0 + $0x58] sm:$0xff]
    %v66 = vld [vmem:[%s0 + $0x60] sm:$0xff]
    %v67 = vld [vmem:[%s0 + $0x68] sm:$0xff]
    %v68 = vld [vmem:[%s0 + $0x70] sm:$0xff]
    %v69 = vld [vmem:[%s0 + $0x78] sm:$0xff]
    %v70 = vld [vmem:[%s1] sm:$0xff]
    %v71 = vld [vmem:[%s1 + $0x8] sm:$0xff]
    %vm72 = vcmask 130048
    %v74 = vsel %vm72, %v54, 0
    %v77 = vsel %vm72, %v55, 0
    %v80 = vsel %vm72, %v56, 0
    %v83 = vsel %vm72, %v57, 0
    %v86 = vsel %vm72, %v58, 0
    %v89 = vsel %vm72, %v59, 0
    %v92 = vsel %vm72, %v60, 0
    %v95 = vsel %vm72, %v61, 0
    %v98 = vsel %vm72, %v62, 0
    %v101 = vsel %vm72, %v63, 0
    %v104 = vsel %vm72, %v64, 0
    %v107 = vsel %vm72, %v65, 0
    %v110 = vsel %vm72, %v66, 0
    %v113 = vsel %vm72, %v67, 0
    %v116 = vsel %vm72, %v68, 0
    %v119 = vsel %vm72, %v69, 0
    %121 = vmatprep.subr.mxu0 0.0
    %122 = vmatpush1.msra.mxu0 0.0
    %123 = vmatprep.subr.mxu0 0.0
    %124 = vmatpush1.msra.mxu0 0.0
    %125 = vmatprep.subr.mxu0 0.0
    %126 = vmatpush1.msra.mxu0 0.0
    %127 = vmatprep.subr.mxu0 0.0
    %128 = vmatpush1.msra.mxu0 0.0
    %129 = vmatprep.subr.mxu0 0.0
    %130 = vmatpush1.msra.mxu0 0.0
    %131 = vmatprep.subr.mxu0 0.0
    %132 = vmatpush1.msra.mxu0 0.0
    %133 = vmatprep.subr.mxu0 0.0
    %134 = vmatpush1.msra.mxu0 0.0
    %135 = vmatprep.subr.mxu0 0.0
    %136 = vmatpush1.msra.mxu0 0.0
    %137 = vmatprep.subr.mxu0 0.0
    %138 = vmatpush1.msra.mxu0 0.0
    %139 = vmatprep.subr.mxu0 0.0
    %140 = vmatpush1.msra.mxu0 0.0
    %141 = vmatprep.subr.mxu0 0.0
    %142 = vmatpush1.msra.mxu0 0.0
    %143 = vmatprep.subr.mxu0 0.0
    %144 = vmatpush1.msra.mxu0 0.0
    %145 = vmatprep.subr.mxu0 0.0
    %146 = vmatpush1.msra.mxu0 0.0
    %147 = vmatprep.subr.mxu0 0.0
    %148 = vmatpush1.msra.mxu0 0.0
    %149 = vmatprep.subr.mxu0 0.0
    %150 = vmatpush1.msra.mxu0 %v71
    %151 = vmatprep.subr.mxu0 0.0
    %152 = vmatpush1.msra.mxu0 %v70
    %153 = vmatprep.subr.mxu0 0.0
    %154 = vmatpush2.msra.mxu0 0.0
    %155 = vmatprep.subr.mxu0 0.0
    %156 = vmatpush2.msra.mxu0 0.0
    %157 = vmatprep.subr.mxu0 0.0
    %158 = vmatpush2.msra.mxu0 0.0
    %159 = vmatprep.subr.mxu0 0.0
    %160 = vmatpush2.msra.mxu0 0.0
    %161 = vmatprep.subr.mxu0 0.0
    %162 = vmatpush2.msra.mxu0 0.0
    %163 = vmatprep.subr.mxu0 0.0
    %164 = vmatpush2.msra.mxu0 0.0
    %165 = vmatprep.subr.mxu0 0.0
    %166 = vmatpush2.msra.mxu0 0.0
    %167 = vmatprep.subr.mxu0 0.0
    %168 = vmatpush2.msra.mxu0 0.0
    %169 = vmatprep.subr.mxu0 0.0
    %170 = vmatpush2.msra.mxu0 0.0
    %171 = vmatprep.subr.mxu0 0.0
    %172 = vmatpush2.msra.mxu0 0.0
    %173 = vmatprep.subr.mxu0 0.0
    %174 = vmatpush2.msra.mxu0 0.0
    %175 = vmatprep.subr.mxu0 0.0
    %176 = vmatpush2.msra.mxu0 0.0
    %177 = vmatprep.subr.mxu0 0.0
    %178 = vmatpush2.msra.mxu0 0.0
    %179 = vmatprep.subr.mxu0 0.0
    %180 = vmatpush2.msra.mxu0 0.0
    %181 = vmatprep.subr.mxu0 0.0
    %182 = vmatpush2.msra.mxu0 0.0
    %183 = vmatprep.subr.mxu0 0.0
    %184 = vmatpush2.msra.mxu0 0.0
    %185 = vmatprep.mubr.f32.mxu0 0.0
    %186 = vmatmul.mubr.f32.gmra.mxu0 %v74
    %v187 = vpop.f32.mrf.mxu0
    %v188 = vadd.f32 0.0, %v187
    %v189 = vpop.f32.mrf.mxu0
    %190 = vmatprep.mubr.f32.mxu0 0.0
    %191 = vmatmul.mubr.f32.gmra.mxu0 %v77
    %v192 = vpop.f32.mrf.mxu0
    %v193 = vadd.f32 0.0, %v192
    %v194 = vpop.f32.mrf.mxu0
    %195 = vmatprep.mubr.f32.mxu0 0.0
    %196 = vmatmul.mubr.f32.gmra.mxu0 %v80
    %v197 = vpop.f32.mrf.mxu0
    %v198 = vadd.f32 0.0, %v197
    %v199 = vpop.f32.mrf.mxu0
    %200 = vmatprep.mubr.f32.mxu0 0.0
    %201 = vmatmul.mubr.f32.gmra.mxu0 %v83
    %v202 = vpop.f32.mrf.mxu0
    %v203 = vadd.f32 0.0, %v202
    %v204 = vpop.f32.mrf.mxu0
    %205 = vmatprep.mubr.f32.mxu0 0.0
    %206 = vmatmul.mubr.f32.gmra.mxu0 %v86
    %v207 = vpop.f32.mrf.mxu0
    %v208 = vadd.f32 0.0, %v207
    %v209 = vpop.f32.mrf.mxu0
    %210 = vmatprep.mubr.f32.mxu0 0.0
    %211 = vmatmul.mubr.f32.gmra.mxu0 %v89
    %v212 = vpop.f32.mrf.mxu0
    %v213 = vadd.f32 0.0, %v212
    %v214 = vpop.f32.mrf.mxu0
    %215 = vmatprep.mubr.f32.mxu0 0.0
    %216 = vmatmul.mubr.f32.gmra.mxu0 %v92
    %v217 = vpop.f32.mrf.mxu0
    %v218 = vadd.f32 0.0, %v217
    %v219 = vpop.f32.mrf.mxu0
    %220 = vmatprep.mubr.f32.mxu0 0.0
    %221 = vmatmul.mubr.f32.gmra.mxu0 %v95
    %v222 = vpop.f32.mrf.mxu0
    %v223 = vadd.f32 0.0, %v222
    %v224 = vpop.f32.mrf.mxu0
    %225 = vmatprep.mubr.f32.mxu0 0.0
    %226 = vmatmul.mubr.f32.gmra.mxu0 %v98
    %v227 = vpop.f32.mrf.mxu0
    %v228 = vadd.f32 0.0, %v227
    %v229 = vpop.f32.mrf.mxu0
    %230 = vmatprep.mubr.f32.mxu0 0.0
    %231 = vmatmul.mubr.f32.gmra.mxu0 %v101
    %v232 = vpop.f32.mrf.mxu0
    %v233 = vadd.f32 0.0, %v232
    %v234 = vpop.f32.mrf.mxu0
    %235 = vmatprep.mubr.f32.mxu0 0.0
    %236 = vmatmul.mubr.f32.gmra.mxu0 %v104
    %v237 = vpop.f32.mrf.mxu0
    %v238 = vadd.f32 0.0, %v237
    %v239 = vpop.f32.mrf.mxu0
    %240 = vmatprep.mubr.f32.mxu0 0.0
    %241 = vmatmul.mubr.f32.gmra.mxu0 %v107
    %v242 = vpop.f32.mrf.mxu0
    %v243 = vadd.f32 0.0, %v242
    %v244 = vpop.f32.mrf.mxu0
    %245 = vmatprep.mubr.f32.mxu0 0.0
    %246 = vmatmul.mubr.f32.gmra.mxu0 %v110
    %v247 = vpop.f32.mrf.mxu0
    %v248 = vadd.f32 0.0, %v247
    %v249 = vpop.f32.mrf.mxu0
    %250 = vmatprep.mubr.f32.mxu0 0.0
    %251 = vmatmul.mubr.f32.gmra.mxu0 %v113
    %v252 = vpop.f32.mrf.mxu0
    %v253 = vadd.f32 0.0, %v252
    %v254 = vpop.f32.mrf.mxu0
    %255 = vmatprep.mubr.f32.mxu0 0.0
    %256 = vmatmul.mubr.f32.gmra.mxu0 %v116
    %v257 = vpop.f32.mrf.mxu0
    %v258 = vadd.f32 0.0, %v257
    %v259 = vpop.f32.mrf.mxu0
    %260 = vmatprep.mubr.f32.mxu0 0.0
    %261 = vmatmul.mubr.f32.gmra.mxu0 %v119
    %v262 = vpop.f32.mrf.mxu0
    %v263 = vadd.f32 0.0, %v262
    %v264 = vpop.f32.mrf.mxu0
    %265 = vdwg.mxu0
    %vm266 = vcmp.gt.f32.partialorder %v188, 0.0
    %vm267 = vcmp.gt.f32.partialorder %v193, 0.0
    %vm268 = vcmp.gt.f32.partialorder %v198, 0.0
    %vm269 = vcmp.gt.f32.partialorder %v203, 0.0
    %vm270 = vcmp.gt.f32.partialorder %v208, 0.0
    %vm271 = vcmp.gt.f32.partialorder %v213, 0.0
    %vm272 = vcmp.gt.f32.partialorder %v218, 0.0
    %vm273 = vcmp.gt.f32.partialorder %v223, 0.0
    %vm274 = vcmp.gt.f32.partialorder %v228, 0.0
    %vm275 = vcmp.gt.f32.partialorder %v233, 0.0
    %vm276 = vcmp.gt.f32.partialorder %v238, 0.0
    %vm277 = vcmp.gt.f32.partialorder %v243, 0.0
    %vm278 = vcmp.gt.f32.partialorder %v248, 0.0
    %vm279 = vcmp.gt.f32.partialorder %v253, 0.0
    %vm280 = vcmp.gt.f32.partialorder %v258, 0.0
    %vm281 = vcmp.gt.f32.partialorder %v263, 0.0
    %v282 = vmul.f32 %v188, 0.2
    %v283 = vmul.f32 %v193, 0.2
    %v284 = vmul.f32 %v198, 0.2
    %v285 = vmul.f32 %v203, 0.2
    %v286 = vmul.f32 %v208, 0.2
    %v287 = vmul.f32 %v213, 0.2
    %v288 = vmul.f32 %v218, 0.2
    %v289 = vmul.f32 %v223, 0.2
    %v290 = vmul.f32 %v228, 0.2
    %v291 = vmul.f32 %v233, 0.2
    %v292 = vmul.f32 %v238, 0.2
    %v293 = vmul.f32 %v243, 0.2
    %v294 = vmul.f32 %v248, 0.2
    %v295 = vmul.f32 %v253, 0.2
    %v296 = vmul.f32 %v258, 0.2
    %v297 = vmul.f32 %v263, 0.2
    %v298 = vsel %vm266, %v188, %v282
    %v299 = vsel %vm267, %v193, %v283
    %v300 = vsel %vm268, %v198, %v284
    %v301 = vsel %vm269, %v203, %v285
    %v302 = vsel %vm270, %v208, %v286
    %v303 = vsel %vm271, %v213, %v287
    %v304 = vsel %vm272, %v218, %v288
    %v305 = vsel %vm273, %v223, %v289
    %v306 = vsel %vm274, %v228, %v290
    %v307 = vsel %vm275, %v233, %v291
    %v308 = vsel %vm276, %v238, %v292
    %v309 = vsel %vm277, %v243, %v293
    %v310 = vsel %vm278, %v248, %v294
    %v311 = vsel %vm279, %v253, %v295
    %v312 = vsel %vm280, %v258, %v296
    %v313 = vsel %vm281, %v263, %v297
    %v314 = vld [vmem:[%s2] sm:$0xff]
    %v315 = vld [vmem:[%s2 + $0x8] sm:$0xff]
    %v316 = vld [vmem:[%s2 + $0x10] sm:$0xff]
    %v317 = vld [vmem:[%s2 + $0x18] sm:$0xff]
    %318 = vmatprep.subr.mxu0 0.0
    %319 = vmatpush1.msra.mxu0 %v313
    %320 = vmatprep.subr.mxu0 0.0
    %321 = vmatpush1.msra.mxu0 %v312
    %322 = vmatprep.subr.mxu0 0.0
    %323 = vmatpush1.msra.mxu0 %v311
    %324 = vmatprep.subr.mxu0 0.0
    %325 = vmatpush1.msra.mxu0 %v310
    %326 = vmatprep.subr.mxu0 0.0
    %327 = vmatpush1.msra.mxu0 %v309
    %328 = vmatprep.subr.mxu0 0.0
    %329 = vmatpush1.msra.mxu0 %v308
    %330 = vmatprep.subr.mxu0 0.0
    %331 = vmatpush1.msra.mxu0 %v307
    %332 = vmatprep.subr.mxu0 0.0
    %333 = vmatpush1.msra.mxu0 %v306
    %334 = vmatprep.subr.mxu0 0.0
    %335 = vmatpush1.msra.mxu0 %v305
    %336 = vmatprep.subr.mxu0 0.0
    %337 = vmatpush1.msra.mxu0 %v304
    %338 = vmatprep.subr.mxu0 0.0
    %339 = vmatpush1.msra.mxu0 %v303
    %340 = vmatprep.subr.mxu0 0.0
    %341 = vmatpush1.msra.mxu0 %v302
    %342 = vmatprep.subr.mxu0 0.0
    %343 = vmatpush1.msra.mxu0 %v301
    %344 = vmatprep.subr.mxu0 0.0
    %345 = vmatpush1.msra.mxu0 %v300
    %346 = vmatprep.subr.mxu0 0.0
    %347 = vmatpush1.msra.mxu0 %v299
    %348 = vmatprep.subr.mxu0 0.0
    %349 = vmatpush1.msra.mxu0 %v298
    %350 = vmatprep.subr.mxu0 0.0
    %351 = vmatpush2.msra.mxu0 0.0
    %352 = vmatprep.subr.mxu0 0.0
    %353 = vmatpush2.msra.mxu0 0.0
    %354 = vmatprep.subr.mxu0 0.0
    %355 = vmatpush2.msra.mxu0 0.0
    %356 = vmatprep.subr.mxu0 0.0
    %357 = vmatpush2.msra.mxu0 0.0
    %358 = vmatprep.subr.mxu0 0.0
    %359 = vmatpush2.msra.mxu0 0.0
    %360 = vmatprep.subr.mxu0 0.0
    %361 = vmatpush2.msra.mxu0 0.0
    %362 = vmatprep.subr.mxu0 0.0
    %363 = vmatpush2.msra.mxu0 0.0
    %364 = vmatprep.subr.mxu0 0.0
    %365 = vmatpush2.msra.mxu0 0.0
    %366 = vmatprep.subr.mxu0 0.0
    %367 = vmatpush2.msra.mxu0 0.0
    %368 = vmatprep.subr.mxu0 0.0
    %369 = vmatpush2.msra.mxu0 0.0
    %370 = vmatprep.subr.mxu0 0.0
    %371 = vmatpush2.msra.mxu0 0.0
    %372 = vmatprep.subr.mxu0 0.0
    %373 = vmatpush2.msra.mxu0 0.0
    %374 = vmatprep.subr.mxu0 0.0
    %375 = vmatpush2.msra.mxu0 0.0
    %376 = vmatprep.subr.mxu0 0.0
    %377 = vmatpush2.msra.mxu0 0.0
    %378 = vmatprep.subr.mxu0 0.0
    %379 = vmatpush2.msra.mxu0 0.0
    %380 = vmatprep.subr.mxu0 0.0
    %381 = vmatpush2.msra.mxu0 0.0
    %382 = vmatprep.mubr.f32.mxu0 0.0
    %383 = vmatmul.mubr.f32.gmra.mxu0 %v314
    %v384 = vpop.f32.mrf.mxu0
    %v385 = vadd.f32 0.0, %v384
    %v386 = vpop.f32.mrf.mxu0
    %387 = vmatprep.mubr.f32.mxu0 0.0
    %388 = vmatmul.mubr.f32.gmra.mxu0 %v315
    %v389 = vpop.f32.mrf.mxu0
    %v390 = vadd.f32 0.0, %v389
    %v391 = vpop.f32.mrf.mxu0
    %392 = vmatprep.mubr.f32.mxu0 0.0
    %393 = vmatmul.mubr.f32.gmra.mxu0 %v316
    %v394 = vpop.f32.mrf.mxu0
    %v395 = vadd.f32 0.0, %v394
    %v396 = vpop.f32.mrf.mxu0
    %397 = vmatprep.mubr.f32.mxu0 0.0
    %398 = vmatmul.mubr.f32.gmra.mxu0 %v317
    %v399 = vpop.f32.mrf.mxu0
    %v400 = vadd.f32 0.0, %v399
    %v401 = vpop.f32.mrf.mxu0
    %402 = vdwg.mxu0
    %v403 = vld [vmem:[%s3] sm:$0xff]
    %v404 = vld [vmem:[%s3 + $0x8] sm:$0xff]
    %s405 = scalar_lea.vmem %s2, 32
    %v406 = vld [vmem:[%s405] sm:$0xff]
    %v407 = vld [vmem:[%s405 + $0x8] sm:$0xff]
    %v408 = vld [vmem:[%s405 + $0x10] sm:$0xff]
    %v409 = vld [vmem:[%s405 + $0x18] sm:$0xff]
    %410 = vmatprep.subr.mxu0 0.0
    %411 = vmatpush1.msra.mxu0 %v313
    %412 = vmatprep.subr.mxu0 0.0
    %413 = vmatpush1.msra.mxu0 %v312
    %414 = vmatprep.subr.mxu0 0.0
    %415 = vmatpush1.msra.mxu0 %v311
    %416 = vmatprep.subr.mxu0 0.0
    %417 = vmatpush1.msra.mxu0 %v310
    %418 = vmatprep.subr.mxu0 0.0
    %419 = vmatpush1.msra.mxu0 %v309
    %420 = vmatprep.subr.mxu0 0.0
    %421 = vmatpush1.msra.mxu0 %v308
    %422 = vmatprep.subr.mxu0 0.0
    %423 = vmatpush1.msra.mxu0 %v307
    %424 = vmatprep.subr.mxu0 0.0
    %425 = vmatpush1.msra.mxu0 %v306
    %426 = vmatprep.subr.mxu0 0.0
    %427 = vmatpush1.msra.mxu0 %v305
    %428 = vmatprep.subr.mxu0 0.0
    %429 = vmatpush1.msra.mxu0 %v304
    %430 = vmatprep.subr.mxu0 0.0
    %431 = vmatpush1.msra.mxu0 %v303
    %432 = vmatprep.subr.mxu0 0.0
    %433 = vmatpush1.msra.mxu0 %v302
    %434 = vmatprep.subr.mxu0 0.0
    %435 = vmatpush1.msra.mxu0 %v301
    %436 = vmatprep.subr.mxu0 0.0
    %437 = vmatpush1.msra.mxu0 %v300
    %438 = vmatprep.subr.mxu0 0.0
    %439 = vmatpush1.msra.mxu0 %v299
    %440 = vmatprep.subr.mxu0 0.0
    %441 = vmatpush1.msra.mxu0 %v298
    %442 = vmatprep.subr.mxu0 0.0
    %443 = vmatpush2.msra.mxu0 0.0
    %444 = vmatprep.subr.mxu0 0.0
    %445 = vmatpush2.msra.mxu0 0.0
    %446 = vmatprep.subr.mxu0 0.0
    %447 = vmatpush2.msra.mxu0 0.0
    %448 = vmatprep.subr.mxu0 0.0
    %449 = vmatpush2.msra.mxu0 0.0
    %450 = vmatprep.subr.mxu0 0.0
    %451 = vmatpush2.msra.mxu0 0.0
    %452 = vmatprep.subr.mxu0 0.0
    %453 = vmatpush2.msra.mxu0 0.0
    %454 = vmatprep.subr.mxu0 0.0
    %455 = vmatpush2.msra.mxu0 0.0
    %456 = vmatprep.subr.mxu0 0.0
    %457 = vmatpush2.msra.mxu0 0.0
    %458 = vmatprep.subr.mxu0 0.0
    %459 = vmatpush2.msra.mxu0 0.0
    %460 = vmatprep.subr.mxu0 0.0
    %461 = vmatpush2.msra.mxu0 0.0
    %462 = vmatprep.subr.mxu0 0.0
    %463 = vmatpush2.msra.mxu0 0.0
    %464 = vmatprep.subr.mxu0 0.0
    %465 = vmatpush2.msra.mxu0 0.0
    %466 = vmatprep.subr.mxu0 0.0
    %467 = vmatpush2.msra.mxu0 0.0
    %468 = vmatprep.subr.mxu0 0.0
    %469 = vmatpush2.msra.mxu0 0.0
    %470 = vmatprep.subr.mxu0 0.0
    %471 = vmatpush2.msra.mxu0 0.0
    %472 = vmatprep.subr.mxu0 0.0
    %473 = vmatpush2.msra.mxu0 0.0
    %474 = vmatprep.mubr.f32.mxu0 0.0
    %475 = vmatmul.mubr.f32.gmra.mxu0 %v406
    %v476 = vpop.f32.mrf.mxu0
    %v477 = vadd.f32 0.0, %v476
    %v478 = vpop.f32.mrf.mxu0
    %479 = vmatprep.mubr.f32.mxu0 0.0
    %480 = vmatmul.mubr.f32.gmra.mxu0 %v407
    %v481 = vpop.f32.mrf.mxu0
    %v482 = vadd.f32 0.0, %v481
    %v483 = vpop.f32.mrf.mxu0
    %484 = vmatprep.mubr.f32.mxu0 0.0
    %485 = vmatmul.mubr.f32.gmra.mxu0 %v408
    %v486 = vpop.f32.mrf.mxu0
    %v487 = vadd.f32 0.0, %v486
    %v488 = vpop.f32.mrf.mxu0
    %489 = vmatprep.mubr.f32.mxu0 0.0
    %490 = vmatmul.mubr.f32.gmra.mxu0 %v409
    %v491 = vpop.f32.mrf.mxu0
    %v492 = vadd.f32 0.0, %v491
    %v493 = vpop.f32.mrf.mxu0
    %494 = vdwg.mxu0
    %s495 = scalar_lea.vmem %s3, 16
    %v496 = vld [vmem:[%s495] sm:$0xff]
    %v497 = vld [vmem:[%s495 + $0x8] sm:$0xff]
    %v499 = vsel %vm72, %v477, 0
    %v502 = vsel %vm72, %v482, 0
    %v505 = vsel %vm72, %v487, 0
    %v508 = vsel %vm72, %v492, 0
    %510 = vmatprep.subr.mxu0 0.0
    %511 = vmatpush1.msra.mxu0 0.0
    %512 = vmatprep.subr.mxu0 0.0
    %513 = vmatpush1.msra.mxu0 0.0
    %514 = vmatprep.subr.mxu0 0.0
    %515 = vmatpush1.msra.mxu0 0.0
    %516 = vmatprep.subr.mxu0 0.0
    %517 = vmatpush1.msra.mxu0 0.0
    %518 = vmatprep.subr.mxu0 0.0
    %519 = vmatpush1.msra.mxu0 0.0
    %520 = vmatprep.subr.mxu0 0.0
    %521 = vmatpush1.msra.mxu0 0.0
    %522 = vmatprep.subr.mxu0 0.0
    %523 = vmatpush1.msra.mxu0 0.0
    %524 = vmatprep.subr.mxu0 0.0
    %525 = vmatpush1.msra.mxu0 0.0
    %526 = vmatprep.subr.mxu0 0.0
    %527 = vmatpush1.msra.mxu0 0.0
    %528 = vmatprep.subr.mxu0 0.0
    %529 = vmatpush1.msra.mxu0 0.0
    %530 = vmatprep.subr.mxu0 0.0
    %531 = vmatpush1.msra.mxu0 0.0
    %532 = vmatprep.subr.mxu0 0.0
    %533 = vmatpush1.msra.mxu0 0.0
    %534 = vmatprep.subr.mxu0 0.0
    %535 = vmatpush1.msra.mxu0 0.0
    %536 = vmatprep.subr.mxu0 0.0
    %537 = vmatpush1.msra.mxu0 0.0
    %538 = vmatprep.subr.mxu0 0.0
    %539 = vmatpush1.msra.mxu0 %v497
    %540 = vmatprep.subr.mxu0 0.0
    %541 = vmatpush1.msra.mxu0 %v496
    %542 = vmatprep.subr.mxu0 0.0
    %543 = vmatpush2.msra.mxu0 0.0
    %544 = vmatprep.subr.mxu0 0.0
    %545 = vmatpush2.msra.mxu0 0.0
    %546 = vmatprep.subr.mxu0 0.0
    %547 = vmatpush2.msra.mxu0 0.0
    %548 = vmatprep.subr.mxu0 0.0
    %549 = vmatpush2.msra.mxu0 0.0
    %550 = vmatprep.subr.mxu0 0.0
    %551 = vmatpush2.msra.mxu0 0.0
    %552 = vmatprep.subr.mxu0 0.0
    %553 = vmatpush2.msra.mxu0 0.0
    %554 = vmatprep.subr.mxu0 0.0
    %555 = vmatpush2.msra.mxu0 0.0
    %556 = vmatprep.subr.mxu0 0.0
    %557 = vmatpush2.msra.mxu0 0.0
    %558 = vmatprep.subr.mxu0 0.0
    %559 = vmatpush2.msra.mxu0 0.0
    %560 = vmatprep.subr.mxu0 0.0
    %561 = vmatpush2.msra.mxu0 0.0
    %562 = vmatprep.subr.mxu0 0.0
    %563 = vmatpush2.msra.mxu0 0.0
    %564 = vmatprep.subr.mxu0 0.0
    %565 = vmatpush2.msra.mxu0 0.0
    %566 = vmatprep.subr.mxu0 0.0
    %567 = vmatpush2.msra.mxu0 0.0
    %568 = vmatprep.subr.mxu0 0.0
    %569 = vmatpush2.msra.mxu0 0.0
    %570 = vmatprep.subr.mxu0 0.0
    %571 = vmatpush2.msra.mxu0 0.0
    %572 = vmatprep.subr.mxu0 0.0
    %573 = vmatpush2.msra.mxu0 0.0
    %574 = vmatprep.mubr.f32.mxu0 0.0
    %575 = vmatmul.mubr.f32.gmra.mxu0 %v499
    %v576 = vpop.f32.mrf.mxu0
    %v577 = vadd.f32 0.0, %v576
    %v578 = vpop.f32.mrf.mxu0
    %579 = vmatprep.mubr.f32.mxu0 0.0
    %580 = vmatmul.mubr.f32.gmra.mxu0 %v502
    %v581 = vpop.f32.mrf.mxu0
    %v582 = vadd.f32 0.0, %v581
    %v583 = vpop.f32.mrf.mxu0
    %584 = vmatprep.mubr.f32.mxu0 0.0
    %585 = vmatmul.mubr.f32.gmra.mxu0 %v505
    %v586 = vpop.f32.mrf.mxu0
    %v587 = vadd.f32 0.0, %v586
    %v588 = vpop.f32.mrf.mxu0
    %589 = vmatprep.mubr.f32.mxu0 0.0
    %590 = vmatmul.mubr.f32.gmra.mxu0 %v508
    %v591 = vpop.f32.mrf.mxu0
    %v592 = vadd.f32 0.0, %v591
    %v593 = vpop.f32.mrf.mxu0
    %594 = vdwg.mxu0
    %v596 = vsel %vm72, %v385, 0
    %v599 = vsel %vm72, %v390, 0
    %v602 = vsel %vm72, %v395, 0
    %v605 = vsel %vm72, %v400, 0
    %607 = vmatprep.subr.mxu0 0.0
    %608 = vmatpush1.msra.mxu0 0.0
    %609 = vmatprep.subr.mxu0 0.0
    %610 = vmatpush1.msra.mxu0 0.0
    %611 = vmatprep.subr.mxu0 0.0
    %612 = vmatpush1.msra.mxu0 0.0
    %613 = vmatprep.subr.mxu0 0.0
    %614 = vmatpush1.msra.mxu0 0.0
    %615 = vmatprep.subr.mxu0 0.0
    %616 = vmatpush1.msra.mxu0 0.0
    %617 = vmatprep.subr.mxu0 0.0
    %618 = vmatpush1.msra.mxu0 0.0
    %619 = vmatprep.subr.mxu0 0.0
    %620 = vmatpush1.msra.mxu0 0.0
    %621 = vmatprep.subr.mxu0 0.0
    %622 = vmatpush1.msra.mxu0 0.0
    %623 = vmatprep.subr.mxu0 0.0
    %624 = vmatpush1.msra.mxu0 0.0
    %625 = vmatprep.subr.mxu0 0.0
    %626 = vmatpush1.msra.mxu0 0.0
    %627 = vmatprep.subr.mxu0 0.0
    %628 = vmatpush1.msra.mxu0 0.0
    %629 = vmatprep.subr.mxu0 0.0
    %630 = vmatpush1.msra.mxu0 0.0
    %631 = vmatprep.subr.mxu0 0.0
    %632 = vmatpush1.msra.mxu0 0.0
    %633 = vmatprep.subr.mxu0 0.0
    %634 = vmatpush1.msra.mxu0 0.0
    %635 = vmatprep.subr.mxu0 0.0
    %636 = vmatpush1.msra.mxu0 %v404
    %637 = vmatprep.subr.mxu0 0.0
    %638 = vmatpush1.msra.mxu0 %v403
    %639 = vmatprep.subr.mxu0 0.0
    %640 = vmatpush2.msra.mxu0 0.0
    %641 = vmatprep.subr.mxu0 0.0
    %642 = vmatpush2.msra.mxu0 0.0
    %643 = vmatprep.subr.mxu0 0.0
    %644 = vmatpush2.msra.mxu0 0.0
    %645 = vmatprep.subr.mxu0 0.0
    %646 = vmatpush2.msra.mxu0 0.0
    %647 = vmatprep.subr.mxu0 0.0
    %648 = vmatpush2.msra.mxu0 0.0
    %649 = vmatprep.subr.mxu0 0.0
    %650 = vmatpush2.msra.mxu0 0.0
    %651 = vmatprep.subr.mxu0 0.0
    %652 = vmatpush2.msra.mxu0 0.0
    %653 = vmatprep.subr.mxu0 0.0
    %654 = vmatpush2.msra.mxu0 0.0
    %655 = vmatprep.subr.mxu0 0.0
    %656 = vmatpush2.msra.mxu0 0.0
    %657 = vmatprep.subr.mxu0 0.0
    %658 = vmatpush2.msra.mxu0 0.0
    %659 = vmatprep.subr.mxu0 0.0
    %660 = vmatpush2.msra.mxu0 0.0
    %661 = vmatprep.subr.mxu0 0.0
    %662 = vmatpush2.msra.mxu0 0.0
    %663 = vmatprep.subr.mxu0 0.0
    %664 = vmatpush2.msra.mxu0 0.0
    %665 = vmatprep.subr.mxu0 0.0
    %666 = vmatpush2.msra.mxu0 0.0
    %667 = vmatprep.subr.mxu0 0.0
    %668 = vmatpush2.msra.mxu0 0.0
    %669 = vmatprep.subr.mxu0 0.0
    %670 = vmatpush2.msra.mxu0 0.0
    %671 = vmatprep.mubr.f32.mxu0 0.0
    %672 = vmatmul.mubr.f32.gmra.mxu0 %v596
    %v673 = vpop.f32.mrf.mxu0
    %v674 = vadd.f32 %v577, %v673
    %v675 = vpop.f32.mrf.mxu0
    %676 = vmatprep.mubr.f32.mxu0 0.0
    %677 = vmatmul.mubr.f32.gmra.mxu0 %v599
    %v678 = vpop.f32.mrf.mxu0
    %v679 = vadd.f32 %v582, %v678
    %v680 = vpop.f32.mrf.mxu0
    %681 = vmatprep.mubr.f32.mxu0 0.0
    %682 = vmatmul.mubr.f32.gmra.mxu0 %v602
    %v683 = vpop.f32.mrf.mxu0
    %v684 = vadd.f32 %v587, %v683
    %v685 = vpop.f32.mrf.mxu0
    %686 = vmatprep.mubr.f32.mxu0 0.0
    %687 = vmatmul.mubr.f32.gmra.mxu0 %v605
    %v688 = vpop.f32.mrf.mxu0
    %v689 = vadd.f32 %v592, %v688
    %v690 = vpop.f32.mrf.mxu0
    %691 = vdwg.mxu0
    %s692 = scalar_lea.vmem %s2, 64
    %v693 = vld [vmem:[%s692] sm:$0xff]
    %v694 = vld [vmem:[%s692 + $0x8] sm:$0xff]
    %v695 = vld [vmem:[%s692 + $0x10] sm:$0xff]
    %v696 = vld [vmem:[%s692 + $0x18] sm:$0xff]
    %697 = vmatprep.subr.mxu0 0.0
    %698 = vmatpush1.msra.mxu0 %v313
    %699 = vmatprep.subr.mxu0 0.0
    %700 = vmatpush1.msra.mxu0 %v312
    %701 = vmatprep.subr.mxu0 0.0
    %702 = vmatpush1.msra.mxu0 %v311
    %703 = vmatprep.subr.mxu0 0.0
    %704 = vmatpush1.msra.mxu0 %v310
    %705 = vmatprep.subr.mxu0 0.0
    %706 = vmatpush1.msra.mxu0 %v309
    %707 = vmatprep.subr.mxu0 0.0
    %708 = vmatpush1.msra.mxu0 %v308
    %709 = vmatprep.subr.mxu0 0.0
    %710 = vmatpush1.msra.mxu0 %v307
    %711 = vmatprep.subr.mxu0 0.0
    %712 = vmatpush1.msra.mxu0 %v306
    %713 = vmatprep.subr.mxu0 0.0
    %714 = vmatpush1.msra.mxu0 %v305
    %715 = vmatprep.subr.mxu0 0.0
    %716 = vmatpush1.msra.mxu0 %v304
    %717 = vmatprep.subr.mxu0 0.0
    %718 = vmatpush1.msra.mxu0 %v303
    %719 = vmatprep.subr.mxu0 0.0
    %720 = vmatpush1.msra.mxu0 %v302
    %721 = vmatprep.subr.mxu0 0.0
    %722 = vmatpush1.msra.mxu0 %v301
    %723 = vmatprep.subr.mxu0 0.0
    %724 = vmatpush1.msra.mxu0 %v300
    %725 = vmatprep.subr.mxu0 0.0
    %726 = vmatpush1.msra.mxu0 %v299
    %727 = vmatprep.subr.mxu0 0.0
    %728 = vmatpush1.msra.mxu0 %v298
    %729 = vmatprep.subr.mxu0 0.0
    %730 = vmatpush2.msra.mxu0 0.0
    %731 = vmatprep.subr.mxu0 0.0
    %732 = vmatpush2.msra.mxu0 0.0
    %733 = vmatprep.subr.mxu0 0.0
    %734 = vmatpush2.msra.mxu0 0.0
    %735 = vmatprep.subr.mxu0 0.0
    %736 = vmatpush2.msra.mxu0 0.0
    %737 = vmatprep.subr.mxu0 0.0
    %738 = vmatpush2.msra.mxu0 0.0
    %739 = vmatprep.subr.mxu0 0.0
    %740 = vmatpush2.msra.mxu0 0.0
    %741 = vmatprep.subr.mxu0 0.0
    %742 = vmatpush2.msra.mxu0 0.0
    %743 = vmatprep.subr.mxu0 0.0
    %744 = vmatpush2.msra.mxu0 0.0
    %745 = vmatprep.subr.mxu0 0.0
    %746 = vmatpush2.msra.mxu0 0.0
    %747 = vmatprep.subr.mxu0 0.0
    %748 = vmatpush2.msra.mxu0 0.0
    %749 = vmatprep.subr.mxu0 0.0
    %750 = vmatpush2.msra.mxu0 0.0
    %751 = vmatprep.subr.mxu0 0.0
    %752 = vmatpush2.msra.mxu0 0.0
    %753 = vmatprep.subr.mxu0 0.0
    %754 = vmatpush2.msra.mxu0 0.0
    %755 = vmatprep.subr.mxu0 0.0
    %756 = vmatpush2.msra.mxu0 0.0
    %757 = vmatprep.subr.mxu0 0.0
    %758 = vmatpush2.msra.mxu0 0.0
    %759 = vmatprep.subr.mxu0 0.0
    %760 = vmatpush2.msra.mxu0 0.0
    %761 = vmatprep.mubr.f32.mxu0 0.0
    %762 = vmatmul.mubr.f32.gmra.mxu0 %v693
    %v763 = vpop.f32.mrf.mxu0
    %v764 = vadd.f32 0.0, %v763
    %v765 = vpop.f32.mrf.mxu0
    %766 = vmatprep.mubr.f32.mxu0 0.0
    %767 = vmatmul.mubr.f32.gmra.mxu0 %v694
    %v768 = vpop.f32.mrf.mxu0
    %v769 = vadd.f32 0.0, %v768
    %v770 = vpop.f32.mrf.mxu0
    %771 = vmatprep.mubr.f32.mxu0 0.0
    %772 = vmatmul.mubr.f32.gmra.mxu0 %v695
    %v773 = vpop.f32.mrf.mxu0
    %v774 = vadd.f32 0.0, %v773
    %v775 = vpop.f32.mrf.mxu0
    %776 = vmatprep.mubr.f32.mxu0 0.0
    %777 = vmatmul.mubr.f32.gmra.mxu0 %v696
    %v778 = vpop.f32.mrf.mxu0
    %v779 = vadd.f32 0.0, %v778
    %v780 = vpop.f32.mrf.mxu0
    %781 = vdwg.mxu0
    %s782 = scalar_lea.vmem %s3, 32
    %v783 = vld [vmem:[%s782] sm:$0xff]
    %v784 = vld [vmem:[%s782 + $0x8] sm:$0xff]
    %v786 = vsel %vm72, %v764, 0
    %v789 = vsel %vm72, %v769, 0
    %v792 = vsel %vm72, %v774, 0
    %v795 = vsel %vm72, %v779, 0
    %797 = vmatprep.subr.mxu0 0.0
    %798 = vmatpush1.msra.mxu0 0.0
    %799 = vmatprep.subr.mxu0 0.0
    %800 = vmatpush1.msra.mxu0 0.0
    %801 = vmatprep.subr.mxu0 0.0
    %802 = vmatpush1.msra.mxu0 0.0
    %803 = vmatprep.subr.mxu0 0.0
    %804 = vmatpush1.msra.mxu0 0.0
    %805 = vmatprep.subr.mxu0 0.0
    %806 = vmatpush1.msra.mxu0 0.0
    %807 = vmatprep.subr.mxu0 0.0
    %808 = vmatpush1.msra.mxu0 0.0
    %809 = vmatprep.subr.mxu0 0.0
    %810 = vmatpush1.msra.mxu0 0.0
    %811 = vmatprep.subr.mxu0 0.0
    %812 = vmatpush1.msra.mxu0 0.0
    %813 = vmatprep.subr.mxu0 0.0
    %814 = vmatpush1.msra.mxu0 0.0
    %815 = vmatprep.subr.mxu0 0.0
    %816 = vmatpush1.msra.mxu0 0.0
    %817 = vmatprep.subr.mxu0 0.0
    %818 = vmatpush1.msra.mxu0 0.0
    %819 = vmatprep.subr.mxu0 0.0
    %820 = vmatpush1.msra.mxu0 0.0
    %821 = vmatprep.subr.mxu0 0.0
    %822 = vmatpush1.msra.mxu0 0.0
    %823 = vmatprep.subr.mxu0 0.0
    %824 = vmatpush1.msra.mxu0 0.0
    %825 = vmatprep.subr.mxu0 0.0
    %826 = vmatpush1.msra.mxu0 %v784
    %827 = vmatprep.subr.mxu0 0.0
    %828 = vmatpush1.msra.mxu0 %v783
    %829 = vmatprep.subr.mxu0 0.0
    %830 = vmatpush2.msra.mxu0 0.0
    %831 = vmatprep.subr.mxu0 0.0
    %832 = vmatpush2.msra.mxu0 0.0
    %833 = vmatprep.subr.mxu0 0.0
    %834 = vmatpush2.msra.mxu0 0.0
    %835 = vmatprep.subr.mxu0 0.0
    %836 = vmatpush2.msra.mxu0 0.0
    %837 = vmatprep.subr.mxu0 0.0
    %838 = vmatpush2.msra.mxu0 0.0
    %839 = vmatprep.subr.mxu0 0.0
    %840 = vmatpush2.msra.mxu0 0.0
    %841 = vmatprep.subr.mxu0 0.0
    %842 = vmatpush2.msra.mxu0 0.0
    %843 = vmatprep.subr.mxu0 0.0
    %844 = vmatpush2.msra.mxu0 0.0
    %845 = vmatprep.subr.mxu0 0.0
    %846 = vmatpush2.msra.mxu0 0.0
    %847 = vmatprep.subr.mxu0 0.0
    %848 = vmatpush2.msra.mxu0 0.0
    %849 = vmatprep.subr.mxu0 0.0
    %850 = vmatpush2.msra.mxu0 0.0
    %851 = vmatprep.subr.mxu0 0.0
    %852 = vmatpush2.msra.mxu0 0.0
    %853 = vmatprep.subr.mxu0 0.0
    %854 = vmatpush2.msra.mxu0 0.0
    %855 = vmatprep.subr.mxu0 0.0
    %856 = vmatpush2.msra.mxu0 0.0
    %857 = vmatprep.subr.mxu0 0.0
    %858 = vmatpush2.msra.mxu0 0.0
    %859 = vmatprep.subr.mxu0 0.0
    %860 = vmatpush2.msra.mxu0 0.0
    %861 = vmatprep.mubr.f32.mxu0 0.0
    %862 = vmatmul.mubr.f32.gmra.mxu0 %v786
    %v863 = vpop.f32.mrf.mxu0
    %v864 = vadd.f32 0.0, %v863
    %v865 = vpop.f32.mrf.mxu0
    %866 = vmatprep.mubr.f32.mxu0 0.0
    %867 = vmatmul.mubr.f32.gmra.mxu0 %v789
    %v868 = vpop.f32.mrf.mxu0
    %v869 = vadd.f32 0.0, %v868
    %v870 = vpop.f32.mrf.mxu0
    %871 = vmatprep.mubr.f32.mxu0 0.0
    %872 = vmatmul.mubr.f32.gmra.mxu0 %v792
    %v873 = vpop.f32.mrf.mxu0
    %v874 = vadd.f32 0.0, %v873
    %v875 = vpop.f32.mrf.mxu0
    %876 = vmatprep.mubr.f32.mxu0 0.0
    %877 = vmatmul.mubr.f32.gmra.mxu0 %v795
    %v878 = vpop.f32.mrf.mxu0
    %v879 = vadd.f32 0.0, %v878
    %v880 = vpop.f32.mrf.mxu0
    %881 = vdwg.mxu0
    %v882 = vadd.f32 %v674, %v864
    %v883 = vadd.f32 %v679, %v869
    %v884 = vadd.f32 %v684, %v874
    %v885 = vadd.f32 %v689, %v879
    %s886 = scalar_lea.vmem %s2, 96
    %v887 = vld [vmem:[%s886] sm:$0xff]
    %v888 = vld [vmem:[%s886 + $0x8] sm:$0xff]
    %v889 = vld [vmem:[%s886 + $0x10] sm:$0xff]
    %v890 = vld [vmem:[%s886 + $0x18] sm:$0xff]
    %891 = vmatprep.subr.mxu0 0.0
    %892 = vmatpush1.msra.mxu0 %v313
    %893 = vmatprep.subr.mxu0 0.0
    %894 = vmatpush1.msra.mxu0 %v312
    %895 = vmatprep.subr.mxu0 0.0
    %896 = vmatpush1.msra.mxu0 %v311
    %897 = vmatprep.subr.mxu0 0.0
    %898 = vmatpush1.msra.mxu0 %v310
    %899 = vmatprep.subr.mxu0 0.0
    %900 = vmatpush1.msra.mxu0 %v309
    %901 = vmatprep.subr.mxu0 0.0
    %902 = vmatpush1.msra.mxu0 %v308
    %903 = vmatprep.subr.mxu0 0.0
    %904 = vmatpush1.msra.mxu0 %v307
    %905 = vmatprep.subr.mxu0 0.0
    %906 = vmatpush1.msra.mxu0 %v306
    %907 = vmatprep.subr.mxu0 0.0
    %908 = vmatpush1.msra.mxu0 %v305
    %909 = vmatprep.subr.mxu0 0.0
    %910 = vmatpush1.msra.mxu0 %v304
    %911 = vmatprep.subr.mxu0 0.0
    %912 = vmatpush1.msra.mxu0 %v303
    %913 = vmatprep.subr.mxu0 0.0
    %914 = vmatpush1.msra.mxu0 %v302
    %915 = vmatprep.subr.mxu0 0.0
    %916 = vmatpush1.msra.mxu0 %v301
    %917 = vmatprep.subr.mxu0 0.0
    %918 = vmatpush1.msra.mxu0 %v300
    %919 = vmatprep.subr.mxu0 0.0
    %920 = vmatpush1.msra.mxu0 %v299
    %921 = vmatprep.subr.mxu0 0.0
    %922 = vmatpush1.msra.mxu0 %v298
    %923 = vmatprep.subr.mxu0 0.0
    %924 = vmatpush2.msra.mxu0 0.0
    %925 = vmatprep.subr.mxu0 0.0
    %926 = vmatpush2.msra.mxu0 0.0
    %927 = vmatprep.subr.mxu0 0.0
    %928 = vmatpush2.msra.mxu0 0.0
    %929 = vmatprep.subr.mxu0 0.0
    %930 = vmatpush2.msra.mxu0 0.0
    %931 = vmatprep.subr.mxu0 0.0
    %932 = vmatpush2.msra.mxu0 0.0
    %933 = vmatprep.subr.mxu0 0.0
    %934 = vmatpush2.msra.mxu0 0.0
    %935 = vmatprep.subr.mxu0 0.0
    %936 = vmatpush2.msra.mxu0 0.0
    %937 = vmatprep.subr.mxu0 0.0
    %938 = vmatpush2.msra.mxu0 0.0
    %939 = vmatprep.subr.mxu0 0.0
    %940 = vmatpush2.msra.mxu0 0.0
    %941 = vmatprep.subr.mxu0 0.0
    %942 = vmatpush2.msra.mxu0 0.0
    %943 = vmatprep.subr.mxu0 0.0
    %944 = vmatpush2.msra.mxu0 0.0
    %945 = vmatprep.subr.mxu0 0.0
    %946 = vmatpush2.msra.mxu0 0.0
    %947 = vmatprep.subr.mxu0 0.0
    %948 = vmatpush2.msra.mxu0 0.0
    %949 = vmatprep.subr.mxu0 0.0
    %950 = vmatpush2.msra.mxu0 0.0
    %951 = vmatprep.subr.mxu0 0.0
    %952 = vmatpush2.msra.mxu0 0.0
    %953 = vmatprep.subr.mxu0 0.0
    %954 = vmatpush2.msra.mxu0 0.0
    %955 = vmatprep.mubr.f32.mxu0 0.0
    %956 = vmatmul.mubr.f32.gmra.mxu0 %v887
    %v957 = vpop.f32.mrf.mxu0
    %v958 = vadd.f32 0.0, %v957
    %v959 = vpop.f32.mrf.mxu0
    %960 = vmatprep.mubr.f32.mxu0 0.0
    %961 = vmatmul.mubr.f32.gmra.mxu0 %v888
    %v962 = vpop.f32.mrf.mxu0
    %v963 = vadd.f32 0.0, %v962
    %v964 = vpop.f32.mrf.mxu0
    %965 = vmatprep.mubr.f32.mxu0 0.0
    %966 = vmatmul.mubr.f32.gmra.mxu0 %v889
    %v967 = vpop.f32.mrf.mxu0
    %v968 = vadd.f32 0.0, %v967
    %v969 = vpop.f32.mrf.mxu0
    %970 = vmatprep.mubr.f32.mxu0 0.0
    %971 = vmatmul.mubr.f32.gmra.mxu0 %v890
    %v972 = vpop.f32.mrf.mxu0
    %v973 = vadd.f32 0.0, %v972
    %v974 = vpop.f32.mrf.mxu0
    %975 = vdwg.mxu0
    %s976 = scalar_lea.vmem %s3, 48
    %v977 = vld [vmem:[%s976] sm:$0xff]
    %v978 = vld [vmem:[%s976 + $0x8] sm:$0xff]
    %v980 = vsel %vm72, %v958, 0
    %v983 = vsel %vm72, %v963, 0
    %v986 = vsel %vm72, %v968, 0
    %v989 = vsel %vm72, %v973, 0
    %991 = vmatprep.subr.mxu0 0.0
    %992 = vmatpush1.msra.mxu0 0.0
    %993 = vmatprep.subr.mxu0 0.0
    %994 = vmatpush1.msra.mxu0 0.0
    %995 = vmatprep.subr.mxu0 0.0
    %996 = vmatpush1.msra.mxu0 0.0
    %997 = vmatprep.subr.mxu0 0.0
    %998 = vmatpush1.msra.mxu0 0.0
    %999 = vmatprep.subr.mxu0 0.0
    %1000 = vmatpush1.msra.mxu0 0.0
    %1001 = vmatprep.subr.mxu0 0.0
    %1002 = vmatpush1.msra.mxu0 0.0
    %1003 = vmatprep.subr.mxu0 0.0
    %1004 = vmatpush1.msra.mxu0 0.0
    %1005 = vmatprep.subr.mxu0 0.0
    %1006 = vmatpush1.msra.mxu0 0.0
    %1007 = vmatprep.subr.mxu0 0.0
    %1008 = vmatpush1.msra.mxu0 0.0
    %1009 = vmatprep.subr.mxu0 0.0
    %1010 = vmatpush1.msra.mxu0 0.0
    %1011 = vmatprep.subr.mxu0 0.0
    %1012 = vmatpush1.msra.mxu0 0.0
    %1013 = vmatprep.subr.mxu0 0.0
    %1014 = vmatpush1.msra.mxu0 0.0
    %1015 = vmatprep.subr.mxu0 0.0
    %1016 = vmatpush1.msra.mxu0 0.0
    %1017 = vmatprep.subr.mxu0 0.0
    %1018 = vmatpush1.msra.mxu0 0.0
    %1019 = vmatprep.subr.mxu0 0.0
    %1020 = vmatpush1.msra.mxu0 %v978
    %1021 = vmatprep.subr.mxu0 0.0
    %1022 = vmatpush1.msra.mxu0 %v977
    %1023 = vmatprep.subr.mxu0 0.0
    %1024 = vmatpush2.msra.mxu0 0.0
    %1025 = vmatprep.subr.mxu0 0.0
    %1026 = vmatpush2.msra.mxu0 0.0
    %1027 = vmatprep.subr.mxu0 0.0
    %1028 = vmatpush2.msra.mxu0 0.0
    %1029 = vmatprep.subr.mxu0 0.0
    %1030 = vmatpush2.msra.mxu0 0.0
    %1031 = vmatprep.subr.mxu0 0.0
    %1032 = vmatpush2.msra.mxu0 0.0
    %1033 = vmatprep.subr.mxu0 0.0
    %1034 = vmatpush2.msra.mxu0 0.0
    %1035 = vmatprep.subr.mxu0 0.0
    %1036 = vmatpush2.msra.mxu0 0.0
    %1037 = vmatprep.subr.mxu0 0.0
    %1038 = vmatpush2.msra.mxu0 0.0
    %1039 = vmatprep.subr.mxu0 0.0
    %1040 = vmatpush2.msra.mxu0 0.0
    %1041 = vmatprep.subr.mxu0 0.0
    %1042 = vmatpush2.msra.mxu0 0.0
    %1043 = vmatprep.subr.mxu0 0.0
    %1044 = vmatpush2.msra.mxu0 0.0
    %1045 = vmatprep.subr.mxu0 0.0
    %1046 = vmatpush2.msra.mxu0 0.0
    %1047 = vmatprep.subr.mxu0 0.0
    %1048 = vmatpush2.msra.mxu0 0.0
    %1049 = vmatprep.subr.mxu0 0.0
    %1050 = vmatpush2.msra.mxu0 0.0
    %1051 = vmatprep.subr.mxu0 0.0
    %1052 = vmatpush2.msra.mxu0 0.0
    %1053 = vmatprep.subr.mxu0 0.0
    %1054 = vmatpush2.msra.mxu0 0.0
    %1055 = vmatprep.mubr.f32.mxu0 0.0
    %1056 = vmatmul.mubr.f32.gmra.mxu0 %v980
    %v1057 = vpop.f32.mrf.mxu0
    %v1058 = vadd.f32 0.0, %v1057
    %v1059 = vpop.f32.mrf.mxu0
    %1060 = vmatprep.mubr.f32.mxu0 0.0
    %1061 = vmatmul.mubr.f32.gmra.mxu0 %v983
    %v1062 = vpop.f32.mrf.mxu0
    %v1063 = vadd.f32 0.0, %v1062
    %v1064 = vpop.f32.mrf.mxu0
    %1065 = vmatprep.mubr.f32.mxu0 0.0
    %1066 = vmatmul.mubr.f32.gmra.mxu0 %v986
    %v1067 = vpop.f32.mrf.mxu0
    %v1068 = vadd.f32 0.0, %v1067
    %v1069 = vpop.f32.mrf.mxu0
    %1070 = vmatprep.mubr.f32.mxu0 0.0
    %1071 = vmatmul.mubr.f32.gmra.mxu0 %v989
    %v1072 = vpop.f32.mrf.mxu0
    %v1073 = vadd.f32 0.0, %v1072
    %v1074 = vpop.f32.mrf.mxu0
    %1075 = vdwg.mxu0
    %v1076 = vadd.f32 %v882, %v1058
    %v1077 = vadd.f32 %v883, %v1063
    %v1078 = vadd.f32 %v884, %v1068
    %v1079 = vadd.f32 %v885, %v1073
    %s1080 = scalar_lea.vmem %s2, 128
    %v1081 = vld [vmem:[%s1080] sm:$0xff]
    %v1082 = vld [vmem:[%s1080 + $0x8] sm:$0xff]
    %v1083 = vld [vmem:[%s1080 + $0x10] sm:$0xff]
    %v1084 = vld [vmem:[%s1080 + $0x18] sm:$0xff]
    %1085 = vmatprep.subr.mxu0 0.0
    %1086 = vmatpush1.msra.mxu0 %v313
    %1087 = vmatprep.subr.mxu0 0.0
    %1088 = vmatpush1.msra.mxu0 %v312
    %1089 = vmatprep.subr.mxu0 0.0
    %1090 = vmatpush1.msra.mxu0 %v311
    %1091 = vmatprep.subr.mxu0 0.0
    %1092 = vmatpush1.msra.mxu0 %v310
    %1093 = vmatprep.subr.mxu0 0.0
    %1094 = vmatpush1.msra.mxu0 %v309
    %1095 = vmatprep.subr.mxu0 0.0
    %1096 = vmatpush1.msra.mxu0 %v308
    %1097 = vmatprep.subr.mxu0 0.0
    %1098 = vmatpush1.msra.mxu0 %v307
    %1099 = vmatprep.subr.mxu0 0.0
    %1100 = vmatpush1.msra.mxu0 %v306
    %1101 = vmatprep.subr.mxu0 0.0
    %1102 = vmatpush1.msra.mxu0 %v305
    %1103 = vmatprep.subr.mxu0 0.0
    %1104 = vmatpush1.msra.mxu0 %v304
    %1105 = vmatprep.subr.mxu0 0.0
    %1106 = vmatpush1.msra.mxu0 %v303
    %1107 = vmatprep.subr.mxu0 0.0
    %1108 = vmatpush1.msra.mxu0 %v302
    %1109 = vmatprep.subr.mxu0 0.0
    %1110 = vmatpush1.msra.mxu0 %v301
    %1111 = vmatprep.subr.mxu0 0.0
    %1112 = vmatpush1.msra.mxu0 %v300
    %1113 = vmatprep.subr.mxu0 0.0
    %1114 = vmatpush1.msra.mxu0 %v299
    %1115 = vmatprep.subr.mxu0 0.0
    %1116 = vmatpush1.msra.mxu0 %v298
    %1117 = vmatprep.subr.mxu0 0.0
    %1118 = vmatpush2.msra.mxu0 0.0
    %1119 = vmatprep.subr.mxu0 0.0
    %1120 = vmatpush2.msra.mxu0 0.0
    %1121 = vmatprep.subr.mxu0 0.0
    %1122 = vmatpush2.msra.mxu0 0.0
    %1123 = vmatprep.subr.mxu0 0.0
    %1124 = vmatpush2.msra.mxu0 0.0
    %1125 = vmatprep.subr.mxu0 0.0
    %1126 = vmatpush2.msra.mxu0 0.0
    %1127 = vmatprep.subr.mxu0 0.0
    %1128 = vmatpush2.msra.mxu0 0.0
    %1129 = vmatprep.subr.mxu0 0.0
    %1130 = vmatpush2.msra.mxu0 0.0
    %1131 = vmatprep.subr.mxu0 0.0
    %1132 = vmatpush2.msra.mxu0 0.0
    %1133 = vmatprep.subr.mxu0 0.0
    %1134 = vmatpush2.msra.mxu0 0.0
    %1135 = vmatprep.subr.mxu0 0.0
    %1136 = vmatpush2.msra.mxu0 0.0
    %1137 = vmatprep.subr.mxu0 0.0
    %1138 = vmatpush2.msra.mxu0 0.0
    %1139 = vmatprep.subr.mxu0 0.0
    %1140 = vmatpush2.msra.mxu0 0.0
    %1141 = vmatprep.subr.mxu0 0.0
    %1142 = vmatpush2.msra.mxu0 0.0
    %1143 = vmatprep.subr.mxu0 0.0
    %1144 = vmatpush2.msra.mxu0 0.0
    %1145 = vmatprep.subr.mxu0 0.0
    %1146 = vmatpush2.msra.mxu0 0.0
    %1147 = vmatprep.subr.mxu0 0.0
    %1148 = vmatpush2.msra.mxu0 0.0
    %1149 = vmatprep.mubr.f32.mxu0 0.0
    %1150 = vmatmul.mubr.f32.gmra.mxu0 %v1081
    %v1151 = vpop.f32.mrf.mxu0
    %v1152 = vadd.f32 0.0, %v1151
    %v1153 = vpop.f32.mrf.mxu0
    %1154 = vmatprep.mubr.f32.mxu0 0.0
    %1155 = vmatmul.mubr.f32.gmra.mxu0 %v1082
    %v1156 = vpop.f32.mrf.mxu0
    %v1157 = vadd.f32 0.0, %v1156
    %v1158 = vpop.f32.mrf.mxu0
    %1159 = vmatprep.mubr.f32.mxu0 0.0
    %1160 = vmatmul.mubr.f32.gmra.mxu0 %v1083
    %v1161 = vpop.f32.mrf.mxu0
    %v1162 = vadd.f32 0.0, %v1161
    %v1163 = vpop.f32.mrf.mxu0
    %1164 = vmatprep.mubr.f32.mxu0 0.0
    %1165 = vmatmul.mubr.f32.gmra.mxu0 %v1084
    %v1166 = vpop.f32.mrf.mxu0
    %v1167 = vadd.f32 0.0, %v1166
    %v1168 = vpop.f32.mrf.mxu0
    %1169 = vdwg.mxu0
    %s1170 = scalar_lea.vmem %s3, 64
    %v1171 = vld [vmem:[%s1170] sm:$0xff]
    %v1172 = vld [vmem:[%s1170 + $0x8] sm:$0xff]
    %v1174 = vsel %vm72, %v1152, 0
    %v1177 = vsel %vm72, %v1157, 0
    %v1180 = vsel %vm72, %v1162, 0
    %v1183 = vsel %vm72, %v1167, 0
    %1185 = vmatprep.subr.mxu0 0.0
    %1186 = vmatpush1.msra.mxu0 0.0
    %1187 = vmatprep.subr.mxu0 0.0
    %1188 = vmatpush1.msra.mxu0 0.0
    %1189 = vmatprep.subr.mxu0 0.0
    %1190 = vmatpush1.msra.mxu0 0.0
    %1191 = vmatprep.subr.mxu0 0.0
    %1192 = vmatpush1.msra.mxu0 0.0
    %1193 = vmatprep.subr.mxu0 0.0
    %1194 = vmatpush1.msra.mxu0 0.0
    %1195 = vmatprep.subr.mxu0 0.0
    %1196 = vmatpush1.msra.mxu0 0.0
    %1197 = vmatprep.subr.mxu0 0.0
    %1198 = vmatpush1.msra.mxu0 0.0
    %1199 = vmatprep.subr.mxu0 0.0
    %1200 = vmatpush1.msra.mxu0 0.0
    %1201 = vmatprep.subr.mxu0 0.0
    %1202 = vmatpush1.msra.mxu0 0.0
    %1203 = vmatprep.subr.mxu0 0.0
    %1204 = vmatpush1.msra.mxu0 0.0
    %1205 = vmatprep.subr.mxu0 0.0
    %1206 = vmatpush1.msra.mxu0 0.0
    %1207 = vmatprep.subr.mxu0 0.0
    %1208 = vmatpush1.msra.mxu0 0.0
    %1209 = vmatprep.subr.mxu0 0.0
    %1210 = vmatpush1.msra.mxu0 0.0
    %1211 = vmatprep.subr.mxu0 0.0
    %1212 = vmatpush1.msra.mxu0 0.0
    %1213 = vmatprep.subr.mxu0 0.0
    %1214 = vmatpush1.msra.mxu0 %v1172
    %1215 = vmatprep.subr.mxu0 0.0
    %1216 = vmatpush1.msra.mxu0 %v1171
    %1217 = vmatprep.subr.mxu0 0.0
    %1218 = vmatpush2.msra.mxu0 0.0
    %1219 = vmatprep.subr.mxu0 0.0
    %1220 = vmatpush2.msra.mxu0 0.0
    %1221 = vmatprep.subr.mxu0 0.0
    %1222 = vmatpush2.msra.mxu0 0.0
    %1223 = vmatprep.subr.mxu0 0.0
    %1224 = vmatpush2.msra.mxu0 0.0
    %1225 = vmatprep.subr.mxu0 0.0
    %1226 = vmatpush2.msra.mxu0 0.0
    %1227 = vmatprep.subr.mxu0 0.0
    %1228 = vmatpush2.msra.mxu0 0.0
    %1229 = vmatprep.subr.mxu0 0.0
    %1230 = vmatpush2.msra.mxu0 0.0
    %1231 = vmatprep.subr.mxu0 0.0
    %1232 = vmatpush2.msra.mxu0 0.0
    %1233 = vmatprep.subr.mxu0 0.0
    %1234 = vmatpush2.msra.mxu0 0.0
    %1235 = vmatprep.subr.mxu0 0.0
    %1236 = vmatpush2.msra.mxu0 0.0
    %1237 = vmatprep.subr.mxu0 0.0
    %1238 = vmatpush2.msra.mxu0 0.0
    %1239 = vmatprep.subr.mxu0 0.0
    %1240 = vmatpush2.msra.mxu0 0.0
    %1241 = vmatprep.subr.mxu0 0.0
    %1242 = vmatpush2.msra.mxu0 0.0
    %1243 = vmatprep.subr.mxu0 0.0
    %1244 = vmatpush2.msra.mxu0 0.0
    %1245 = vmatprep.subr.mxu0 0.0
    %1246 = vmatpush2.msra.mxu0 0.0
    %1247 = vmatprep.subr.mxu0 0.0
    %1248 = vmatpush2.msra.mxu0 0.0
    %1249 = vmatprep.mubr.f32.mxu0 0.0
    %1250 = vmatmul.mubr.f32.gmra.mxu0 %v1174
    %v1251 = vpop.f32.mrf.mxu0
    %v1252 = vadd.f32 0.0, %v1251
    %v1253 = vpop.f32.mrf.mxu0
    %1254 = vmatprep.mubr.f32.mxu0 0.0
    %1255 = vmatmul.mubr.f32.gmra.mxu0 %v1177
    %v1256 = vpop.f32.mrf.mxu0
    %v1257 = vadd.f32 0.0, %v1256
    %v1258 = vpop.f32.mrf.mxu0
    %1259 = vmatprep.mubr.f32.mxu0 0.0
    %1260 = vmatmul.mubr.f32.gmra.mxu0 %v1180
    %v1261 = vpop.f32.mrf.mxu0
    %v1262 = vadd.f32 0.0, %v1261
    %v1263 = vpop.f32.mrf.mxu0
    %1264 = vmatprep.mubr.f32.mxu0 0.0
    %1265 = vmatmul.mubr.f32.gmra.mxu0 %v1183
    %v1266 = vpop.f32.mrf.mxu0
    %v1267 = vadd.f32 0.0, %v1266
    %v1268 = vpop.f32.mrf.mxu0
    %1269 = vdwg.mxu0
    %v1270 = vadd.f32 %v1076, %v1252
    %v1271 = vadd.f32 %v1077, %v1257
    %v1272 = vadd.f32 %v1078, %v1262
    %v1273 = vadd.f32 %v1079, %v1267
    %s1274 = scalar_lea.vmem %s2, 160
    %v1275 = vld [vmem:[%s1274] sm:$0xff]
    %v1276 = vld [vmem:[%s1274 + $0x8] sm:$0xff]
    %v1277 = vld [vmem:[%s1274 + $0x10] sm:$0xff]
    %v1278 = vld [vmem:[%s1274 + $0x18] sm:$0xff]
    %1279 = vmatprep.subr.mxu0 0.0
    %1280 = vmatpush1.msra.mxu0 %v313
    %1281 = vmatprep.subr.mxu0 0.0
    %1282 = vmatpush1.msra.mxu0 %v312
    %1283 = vmatprep.subr.mxu0 0.0
    %1284 = vmatpush1.msra.mxu0 %v311
    %1285 = vmatprep.subr.mxu0 0.0
    %1286 = vmatpush1.msra.mxu0 %v310
    %1287 = vmatprep.subr.mxu0 0.0
    %1288 = vmatpush1.msra.mxu0 %v309
    %1289 = vmatprep.subr.mxu0 0.0
    %1290 = vmatpush1.msra.mxu0 %v308
    %1291 = vmatprep.subr.mxu0 0.0
    %1292 = vmatpush1.msra.mxu0 %v307
    %1293 = vmatprep.subr.mxu0 0.0
    %1294 = vmatpush1.msra.mxu0 %v306
    %1295 = vmatprep.subr.mxu0 0.0
    %1296 = vmatpush1.msra.mxu0 %v305
    %1297 = vmatprep.subr.mxu0 0.0
    %1298 = vmatpush1.msra.mxu0 %v304
    %1299 = vmatprep.subr.mxu0 0.0
    %1300 = vmatpush1.msra.mxu0 %v303
    %1301 = vmatprep.subr.mxu0 0.0
    %1302 = vmatpush1.msra.mxu0 %v302
    %1303 = vmatprep.subr.mxu0 0.0
    %1304 = vmatpush1.msra.mxu0 %v301
    %1305 = vmatprep.subr.mxu0 0.0
    %1306 = vmatpush1.msra.mxu0 %v300
    %1307 = vmatprep.subr.mxu0 0.0
    %1308 = vmatpush1.msra.mxu0 %v299
    %1309 = vmatprep.subr.mxu0 0.0
    %1310 = vmatpush1.msra.mxu0 %v298
    %1311 = vmatprep.subr.mxu0 0.0
    %1312 = vmatpush2.msra.mxu0 0.0
    %1313 = vmatprep.subr.mxu0 0.0
    %1314 = vmatpush2.msra.mxu0 0.0
    %1315 = vmatprep.subr.mxu0 0.0
    %1316 = vmatpush2.msra.mxu0 0.0
    %1317 = vmatprep.subr.mxu0 0.0
    %1318 = vmatpush2.msra.mxu0 0.0
    %1319 = vmatprep.subr.mxu0 0.0
    %1320 = vmatpush2.msra.mxu0 0.0
    %1321 = vmatprep.subr.mxu0 0.0
    %1322 = vmatpush2.msra.mxu0 0.0
    %1323 = vmatprep.subr.mxu0 0.0
    %1324 = vmatpush2.msra.mxu0 0.0
    %1325 = vmatprep.subr.mxu0 0.0
    %1326 = vmatpush2.msra.mxu0 0.0
    %1327 = vmatprep.subr.mxu0 0.0
    %1328 = vmatpush2.msra.mxu0 0.0
    %1329 = vmatprep.subr.mxu0 0.0
    %1330 = vmatpush2.msra.mxu0 0.0
    %1331 = vmatprep.subr.mxu0 0.0
    %1332 = vmatpush2.msra.mxu0 0.0
    %1333 = vmatprep.subr.mxu0 0.0
    %1334 = vmatpush2.msra.mxu0 0.0
    %1335 = vmatprep.subr.mxu0 0.0
    %1336 = vmatpush2.msra.mxu0 0.0
    %1337 = vmatprep.subr.mxu0 0.0
    %1338 = vmatpush2.msra.mxu0 0.0
    %1339 = vmatprep.subr.mxu0 0.0
    %1340 = vmatpush2.msra.mxu0 0.0
    %1341 = vmatprep.subr.mxu0 0.0
    %1342 = vmatpush2.msra.mxu0 0.0
    %1343 = vmatprep.mubr.f32.mxu0 0.0
    %1344 = vmatmul.mubr.f32.gmra.mxu0 %v1275
    %v1345 = vpop.f32.mrf.mxu0
    %v1346 = vadd.f32 0.0, %v1345
    %v1347 = vpop.f32.mrf.mxu0
    %1348 = vmatprep.mubr.f32.mxu0 0.0
    %1349 = vmatmul.mubr.f32.gmra.mxu0 %v1276
    %v1350 = vpop.f32.mrf.mxu0
    %v1351 = vadd.f32 0.0, %v1350
    %v1352 = vpop.f32.mrf.mxu0
    %1353 = vmatprep.mubr.f32.mxu0 0.0
    %1354 = vmatmul.mubr.f32.gmra.mxu0 %v1277
    %v1355 = vpop.f32.mrf.mxu0
    %v1356 = vadd.f32 0.0, %v1355
    %v1357 = vpop.f32.mrf.mxu0
    %1358 = vmatprep.mubr.f32.mxu0 0.0
    %1359 = vmatmul.mubr.f32.gmra.mxu0 %v1278
    %v1360 = vpop.f32.mrf.mxu0
    %v1361 = vadd.f32 0.0, %v1360
    %v1362 = vpop.f32.mrf.mxu0
    %1363 = vdwg.mxu0
    %s1364 = scalar_lea.vmem %s3, 80
    %v1365 = vld [vmem:[%s1364] sm:$0xff]
    %v1366 = vld [vmem:[%s1364 + $0x8] sm:$0xff]
    %v1368 = vsel %vm72, %v1346, 0
    %v1371 = vsel %vm72, %v1351, 0
    %v1374 = vsel %vm72, %v1356, 0
    %v1377 = vsel %vm72, %v1361, 0
    %1379 = vmatprep.subr.mxu0 0.0
    %1380 = vmatpush1.msra.mxu0 0.0
    %1381 = vmatprep.subr.mxu0 0.0
    %1382 = vmatpush1.msra.mxu0 0.0
    %1383 = vmatprep.subr.mxu0 0.0
    %1384 = vmatpush1.msra.mxu0 0.0
    %1385 = vmatprep.subr.mxu0 0.0
    %1386 = vmatpush1.msra.mxu0 0.0
    %1387 = vmatprep.subr.mxu0 0.0
    %1388 = vmatpush1.msra.mxu0 0.0
    %1389 = vmatprep.subr.mxu0 0.0
    %1390 = vmatpush1.msra.mxu0 0.0
    %1391 = vmatprep.subr.mxu0 0.0
    %1392 = vmatpush1.msra.mxu0 0.0
    %1393 = vmatprep.subr.mxu0 0.0
    %1394 = vmatpush1.msra.mxu0 0.0
    %1395 = vmatprep.subr.mxu0 0.0
    %1396 = vmatpush1.msra.mxu0 0.0
    %1397 = vmatprep.subr.mxu0 0.0
    %1398 = vmatpush1.msra.mxu0 0.0
    %1399 = vmatprep.subr.mxu0 0.0
    %1400 = vmatpush1.msra.mxu0 0.0
    %1401 = vmatprep.subr.mxu0 0.0
    %1402 = vmatpush1.msra.mxu0 0.0
    %1403 = vmatprep.subr.mxu0 0.0
    %1404 = vmatpush1.msra.mxu0 0.0
    %1405 = vmatprep.subr.mxu0 0.0
    %1406 = vmatpush1.msra.mxu0 0.0
    %1407 = vmatprep.subr.mxu0 0.0
    %1408 = vmatpush1.msra.mxu0 %v1366
    %1409 = vmatprep.subr.mxu0 0.0
    %1410 = vmatpush1.msra.mxu0 %v1365
    %1411 = vmatprep.subr.mxu0 0.0
    %1412 = vmatpush2.msra.mxu0 0.0
    %1413 = vmatprep.subr.mxu0 0.0
    %1414 = vmatpush2.msra.mxu0 0.0
    %1415 = vmatprep.subr.mxu0 0.0
    %1416 = vmatpush2.msra.mxu0 0.0
    %1417 = vmatprep.subr.mxu0 0.0
    %1418 = vmatpush2.msra.mxu0 0.0
    %1419 = vmatprep.subr.mxu0 0.0
    %1420 = vmatpush2.msra.mxu0 0.0
    %1421 = vmatprep.subr.mxu0 0.0
    %1422 = vmatpush2.msra.mxu0 0.0
    %1423 = vmatprep.subr.mxu0 0.0
    %1424 = vmatpush2.msra.mxu0 0.0
    %1425 = vmatprep.subr.mxu0 0.0
    %1426 = vmatpush2.msra.mxu0 0.0
    %1427 = vmatprep.subr.mxu0 0.0
    %1428 = vmatpush2.msra.mxu0 0.0
    %1429 = vmatprep.subr.mxu0 0.0
    %1430 = vmatpush2.msra.mxu0 0.0
    %1431 = vmatprep.subr.mxu0 0.0
    %1432 = vmatpush2.msra.mxu0 0.0
    %1433 = vmatprep.subr.mxu0 0.0
    %1434 = vmatpush2.msra.mxu0 0.0
    %1435 = vmatprep.subr.mxu0 0.0
    %1436 = vmatpush2.msra.mxu0 0.0
    %1437 = vmatprep.subr.mxu0 0.0
    %1438 = vmatpush2.msra.mxu0 0.0
    %1439 = vmatprep.subr.mxu0 0.0
    %1440 = vmatpush2.msra.mxu0 0.0
    %1441 = vmatprep.subr.mxu0 0.0
    %1442 = vmatpush2.msra.mxu0 0.0
    %1443 = vmatprep.mubr.f32.mxu0 0.0
    %1444 = vmatmul.mubr.f32.gmra.mxu0 %v1368
    %v1445 = vpop.f32.mrf.mxu0
    %v1446 = vadd.f32 0.0, %v1445
    %v1447 = vpop.f32.mrf.mxu0
    %1448 = vmatprep.mubr.f32.mxu0 0.0
    %1449 = vmatmul.mubr.f32.gmra.mxu0 %v1371
    %v1450 = vpop.f32.mrf.mxu0
    %v1451 = vadd.f32 0.0, %v1450
    %v1452 = vpop.f32.mrf.mxu0
    %1453 = vmatprep.mubr.f32.mxu0 0.0
    %1454 = vmatmul.mubr.f32.gmra.mxu0 %v1374
    %v1455 = vpop.f32.mrf.mxu0
    %v1456 = vadd.f32 0.0, %v1455
    %v1457 = vpop.f32.mrf.mxu0
    %1458 = vmatprep.mubr.f32.mxu0 0.0
    %1459 = vmatmul.mubr.f32.gmra.mxu0 %v1377
    %v1460 = vpop.f32.mrf.mxu0
    %v1461 = vadd.f32 0.0, %v1460
    %v1462 = vpop.f32.mrf.mxu0
    %1463 = vdwg.mxu0
    %v1464 = vadd.f32 %v1270, %v1446
    %v1465 = vadd.f32 %v1271, %v1451
    %v1466 = vadd.f32 %v1272, %v1456
    %v1467 = vadd.f32 %v1273, %v1461
    %s1468 = scalar_lea.vmem %s2, 192
    %v1469 = vld [vmem:[%s1468] sm:$0xff]
    %v1470 = vld [vmem:[%s1468 + $0x8] sm:$0xff]
    %v1471 = vld [vmem:[%s1468 + $0x10] sm:$0xff]
    %v1472 = vld [vmem:[%s1468 + $0x18] sm:$0xff]
    %1473 = vmatprep.subr.mxu0 0.0
    %1474 = vmatpush1.msra.mxu0 %v313
    %1475 = vmatprep.subr.mxu0 0.0
    %1476 = vmatpush1.msra.mxu0 %v312
    %1477 = vmatprep.subr.mxu0 0.0
    %1478 = vmatpush1.msra.mxu0 %v311
    %1479 = vmatprep.subr.mxu0 0.0
    %1480 = vmatpush1.msra.mxu0 %v310
    %1481 = vmatprep.subr.mxu0 0.0
    %1482 = vmatpush1.msra.mxu0 %v309
    %1483 = vmatprep.subr.mxu0 0.0
    %1484 = vmatpush1.msra.mxu0 %v308
    %1485 = vmatprep.subr.mxu0 0.0
    %1486 = vmatpush1.msra.mxu0 %v307
    %1487 = vmatprep.subr.mxu0 0.0
    %1488 = vmatpush1.msra.mxu0 %v306
    %1489 = vmatprep.subr.mxu0 0.0
    %1490 = vmatpush1.msra.mxu0 %v305
    %1491 = vmatprep.subr.mxu0 0.0
    %1492 = vmatpush1.msra.mxu0 %v304
    %1493 = vmatprep.subr.mxu0 0.0
    %1494 = vmatpush1.msra.mxu0 %v303
    %1495 = vmatprep.subr.mxu0 0.0
    %1496 = vmatpush1.msra.mxu0 %v302
    %1497 = vmatprep.subr.mxu0 0.0
    %1498 = vmatpush1.msra.mxu0 %v301
    %1499 = vmatprep.subr.mxu0 0.0
    %1500 = vmatpush1.msra.mxu0 %v300
    %1501 = vmatprep.subr.mxu0 0.0
    %1502 = vmatpush1.msra.mxu0 %v299
    %1503 = vmatprep.subr.mxu0 0.0
    %1504 = vmatpush1.msra.mxu0 %v298
    %1505 = vmatprep.subr.mxu0 0.0
    %1506 = vmatpush2.msra.mxu0 0.0
    %1507 = vmatprep.subr.mxu0 0.0
    %1508 = vmatpush2.msra.mxu0 0.0
    %1509 = vmatprep.subr.mxu0 0.0
    %1510 = vmatpush2.msra.mxu0 0.0
    %1511 = vmatprep.subr.mxu0 0.0
    %1512 = vmatpush2.msra.mxu0 0.0
    %1513 = vmatprep.subr.mxu0 0.0
    %1514 = vmatpush2.msra.mxu0 0.0
    %1515 = vmatprep.subr.mxu0 0.0
    %1516 = vmatpush2.msra.mxu0 0.0
    %1517 = vmatprep.subr.mxu0 0.0
    %1518 = vmatpush2.msra.mxu0 0.0
    %1519 = vmatprep.subr.mxu0 0.0
    %1520 = vmatpush2.msra.mxu0 0.0
    %1521 = vmatprep.subr.mxu0 0.0
    %1522 = vmatpush2.msra.mxu0 0.0
    %1523 = vmatprep.subr.mxu0 0.0
    %1524 = vmatpush2.msra.mxu0 0.0
    %1525 = vmatprep.subr.mxu0 0.0
    %1526 = vmatpush2.msra.mxu0 0.0
    %1527 = vmatprep.subr.mxu0 0.0
    %1528 = vmatpush2.msra.mxu0 0.0
    %1529 = vmatprep.subr.mxu0 0.0
    %1530 = vmatpush2.msra.mxu0 0.0
    %1531 = vmatprep.subr.mxu0 0.0
    %1532 = vmatpush2.msra.mxu0 0.0
    %1533 = vmatprep.subr.mxu0 0.0
    %1534 = vmatpush2.msra.mxu0 0.0
    %1535 = vmatprep.subr.mxu0 0.0
    %1536 = vmatpush2.msra.mxu0 0.0
    %1537 = vmatprep.mubr.f32.mxu0 0.0
    %1538 = vmatmul.mubr.f32.gmra.mxu0 %v1469
    %v1539 = vpop.f32.mrf.mxu0
    %v1540 = vadd.f32 0.0, %v1539
    %v1541 = vpop.f32.mrf.mxu0
    %1542 = vmatprep.mubr.f32.mxu0 0.0
    %1543 = vmatmul.mubr.f32.gmra.mxu0 %v1470
    %v1544 = vpop.f32.mrf.mxu0
    %v1545 = vadd.f32 0.0, %v1544
    %v1546 = vpop.f32.mrf.mxu0
    %1547 = vmatprep.mubr.f32.mxu0 0.0
    %1548 = vmatmul.mubr.f32.gmra.mxu0 %v1471
    %v1549 = vpop.f32.mrf.mxu0
    %v1550 = vadd.f32 0.0, %v1549
    %v1551 = vpop.f32.mrf.mxu0
    %1552 = vmatprep.mubr.f32.mxu0 0.0
    %1553 = vmatmul.mubr.f32.gmra.mxu0 %v1472
    %v1554 = vpop.f32.mrf.mxu0
    %v1555 = vadd.f32 0.0, %v1554
    %v1556 = vpop.f32.mrf.mxu0
    %1557 = vdwg.mxu0
    %s1558 = scalar_lea.vmem %s3, 96
    %v1559 = vld [vmem:[%s1558] sm:$0xff]
    %v1560 = vld [vmem:[%s1558 + $0x8] sm:$0xff]
    %v1562 = vsel %vm72, %v1540, 0
    %v1565 = vsel %vm72, %v1545, 0
    %v1568 = vsel %vm72, %v1550, 0
    %v1571 = vsel %vm72, %v1555, 0
    %1573 = vmatprep.subr.mxu0 0.0
    %1574 = vmatpush1.msra.mxu0 0.0
    %1575 = vmatprep.subr.mxu0 0.0
    %1576 = vmatpush1.msra.mxu0 0.0
    %1577 = vmatprep.subr.mxu0 0.0
    %1578 = vmatpush1.msra.mxu0 0.0
    %1579 = vmatprep.subr.mxu0 0.0
    %1580 = vmatpush1.msra.mxu0 0.0
    %1581 = vmatprep.subr.mxu0 0.0
    %1582 = vmatpush1.msra.mxu0 0.0
    %1583 = vmatprep.subr.mxu0 0.0
    %1584 = vmatpush1.msra.mxu0 0.0
    %1585 = vmatprep.subr.mxu0 0.0
    %1586 = vmatpush1.msra.mxu0 0.0
    %1587 = vmatprep.subr.mxu0 0.0
    %1588 = vmatpush1.msra.mxu0 0.0
    %1589 = vmatprep.subr.mxu0 0.0
    %1590 = vmatpush1.msra.mxu0 0.0
    %1591 = vmatprep.subr.mxu0 0.0
    %1592 = vmatpush1.msra.mxu0 0.0
    %1593 = vmatprep.subr.mxu0 0.0
    %1594 = vmatpush1.msra.mxu0 0.0
    %1595 = vmatprep.subr.mxu0 0.0
    %1596 = vmatpush1.msra.mxu0 0.0
    %1597 = vmatprep.subr.mxu0 0.0
    %1598 = vmatpush1.msra.mxu0 0.0
    %1599 = vmatprep.subr.mxu0 0.0
    %1600 = vmatpush1.msra.mxu0 0.0
    %1601 = vmatprep.subr.mxu0 0.0
    %1602 = vmatpush1.msra.mxu0 %v1560
    %1603 = vmatprep.subr.mxu0 0.0
    %1604 = vmatpush1.msra.mxu0 %v1559
    %1605 = vmatprep.subr.mxu0 0.0
    %1606 = vmatpush2.msra.mxu0 0.0
    %1607 = vmatprep.subr.mxu0 0.0
    %1608 = vmatpush2.msra.mxu0 0.0
    %1609 = vmatprep.subr.mxu0 0.0
    %1610 = vmatpush2.msra.mxu0 0.0
    %1611 = vmatprep.subr.mxu0 0.0
    %1612 = vmatpush2.msra.mxu0 0.0
    %1613 = vmatprep.subr.mxu0 0.0
    %1614 = vmatpush2.msra.mxu0 0.0
    %1615 = vmatprep.subr.mxu0 0.0
    %1616 = vmatpush2.msra.mxu0 0.0
    %1617 = vmatprep.subr.mxu0 0.0
    %1618 = vmatpush2.msra.mxu0 0.0
    %1619 = vmatprep.subr.mxu0 0.0
    %1620 = vmatpush2.msra.mxu0 0.0
    %1621 = vmatprep.subr.mxu0 0.0
    %1622 = vmatpush2.msra.mxu0 0.0
    %1623 = vmatprep.subr.mxu0 0.0
    %1624 = vmatpush2.msra.mxu0 0.0
    %1625 = vmatprep.subr.mxu0 0.0
    %1626 = vmatpush2.msra.mxu0 0.0
    %1627 = vmatprep.subr.mxu0 0.0
    %1628 = vmatpush2.msra.mxu0 0.0
    %1629 = vmatprep.subr.mxu0 0.0
    %1630 = vmatpush2.msra.mxu0 0.0
    %1631 = vmatprep.subr.mxu0 0.0
    %1632 = vmatpush2.msra.mxu0 0.0
    %1633 = vmatprep.subr.mxu0 0.0
    %1634 = vmatpush2.msra.mxu0 0.0
    %1635 = vmatprep.subr.mxu0 0.0
    %1636 = vmatpush2.msra.mxu0 0.0
    %1637 = vmatprep.mubr.f32.mxu0 0.0
    %1638 = vmatmul.mubr.f32.gmra.mxu0 %v1562
    %v1639 = vpop.f32.mrf.mxu0
    %v1640 = vadd.f32 0.0, %v1639
    %v1641 = vpop.f32.mrf.mxu0
    %1642 = vmatprep.mubr.f32.mxu0 0.0
    %1643 = vmatmul.mubr.f32.gmra.mxu0 %v1565
    %v1644 = vpop.f32.mrf.mxu0
    %v1645 = vadd.f32 0.0, %v1644
    %v1646 = vpop.f32.mrf.mxu0
    %1647 = vmatprep.mubr.f32.mxu0 0.0
    %1648 = vmatmul.mubr.f32.gmra.mxu0 %v1568
    %v1649 = vpop.f32.mrf.mxu0
    %v1650 = vadd.f32 0.0, %v1649
    %v1651 = vpop.f32.mrf.mxu0
    %1652 = vmatprep.mubr.f32.mxu0 0.0
    %1653 = vmatmul.mubr.f32.gmra.mxu0 %v1571
    %v1654 = vpop.f32.mrf.mxu0
    %v1655 = vadd.f32 0.0, %v1654
    %v1656 = vpop.f32.mrf.mxu0
    %1657 = vdwg.mxu0
    %v1658 = vadd.f32 %v1464, %v1640
    %v1659 = vadd.f32 %v1465, %v1645
    %v1660 = vadd.f32 %v1466, %v1650
    %v1661 = vadd.f32 %v1467, %v1655
    %s1662 = scalar_lea.vmem %s2, 224
    %v1663 = vld [vmem:[%s1662] sm:$0xff]
    %v1664 = vld [vmem:[%s1662 + $0x8] sm:$0xff]
    %v1665 = vld [vmem:[%s1662 + $0x10] sm:$0xff]
    %v1666 = vld [vmem:[%s1662 + $0x18] sm:$0xff]
    %1667 = vmatprep.subr.mxu0 0.0
    %1668 = vmatpush1.msra.mxu0 %v313
    %1669 = vmatprep.subr.mxu0 0.0
    %1670 = vmatpush1.msra.mxu0 %v312
    %1671 = vmatprep.subr.mxu0 0.0
    %1672 = vmatpush1.msra.mxu0 %v311
    %1673 = vmatprep.subr.mxu0 0.0
    %1674 = vmatpush1.msra.mxu0 %v310
    %1675 = vmatprep.subr.mxu0 0.0
    %1676 = vmatpush1.msra.mxu0 %v309
    %1677 = vmatprep.subr.mxu0 0.0
    %1678 = vmatpush1.msra.mxu0 %v308
    %1679 = vmatprep.subr.mxu0 0.0
    %1680 = vmatpush1.msra.mxu0 %v307
    %1681 = vmatprep.subr.mxu0 0.0
    %1682 = vmatpush1.msra.mxu0 %v306
    %1683 = vmatprep.subr.mxu0 0.0
    %1684 = vmatpush1.msra.mxu0 %v305
    %1685 = vmatprep.subr.mxu0 0.0
    %1686 = vmatpush1.msra.mxu0 %v304
    %1687 = vmatprep.subr.mxu0 0.0
    %1688 = vmatpush1.msra.mxu0 %v303
    %1689 = vmatprep.subr.mxu0 0.0
    %1690 = vmatpush1.msra.mxu0 %v302
    %1691 = vmatprep.subr.mxu0 0.0
    %1692 = vmatpush1.msra.mxu0 %v301
    %1693 = vmatprep.subr.mxu0 0.0
    %1694 = vmatpush1.msra.mxu0 %v300
    %1695 = vmatprep.subr.mxu0 0.0
    %1696 = vmatpush1.msra.mxu0 %v299
    %1697 = vmatprep.subr.mxu0 0.0
    %1698 = vmatpush1.msra.mxu0 %v298
    %1699 = vmatprep.subr.mxu0 0.0
    %1700 = vmatpush2.msra.mxu0 0.0
    %1701 = vmatprep.subr.mxu0 0.0
    %1702 = vmatpush2.msra.mxu0 0.0
    %1703 = vmatprep.subr.mxu0 0.0
    %1704 = vmatpush2.msra.mxu0 0.0
    %1705 = vmatprep.subr.mxu0 0.0
    %1706 = vmatpush2.msra.mxu0 0.0
    %1707 = vmatprep.subr.mxu0 0.0
    %1708 = vmatpush2.msra.mxu0 0.0
    %1709 = vmatprep.subr.mxu0 0.0
    %1710 = vmatpush2.msra.mxu0 0.0
    %1711 = vmatprep.subr.mxu0 0.0
    %1712 = vmatpush2.msra.mxu0 0.0
    %1713 = vmatprep.subr.mxu0 0.0
    %1714 = vmatpush2.msra.mxu0 0.0
    %1715 = vmatprep.subr.mxu0 0.0
    %1716 = vmatpush2.msra.mxu0 0.0
    %1717 = vmatprep.subr.mxu0 0.0
    %1718 = vmatpush2.msra.mxu0 0.0
    %1719 = vmatprep.subr.mxu0 0.0
    %1720 = vmatpush2.msra.mxu0 0.0
    %1721 = vmatprep.subr.mxu0 0.0
    %1722 = vmatpush2.msra.mxu0 0.0
    %1723 = vmatprep.subr.mxu0 0.0
    %1724 = vmatpush2.msra.mxu0 0.0
    %1725 = vmatprep.subr.mxu0 0.0
    %1726 = vmatpush2.msra.mxu0 0.0
    %1727 = vmatprep.subr.mxu0 0.0
    %1728 = vmatpush2.msra.mxu0 0.0
    %1729 = vmatprep.subr.mxu0 0.0
    %1730 = vmatpush2.msra.mxu0 0.0
    %1731 = vmatprep.mubr.f32.mxu0 0.0
    %1732 = vmatmul.mubr.f32.gmra.mxu0 %v1663
    %v1733 = vpop.f32.mrf.mxu0
    %v1734 = vadd.f32 0.0, %v1733
    %v1735 = vpop.f32.mrf.mxu0
    %1736 = vmatprep.mubr.f32.mxu0 0.0
    %1737 = vmatmul.mubr.f32.gmra.mxu0 %v1664
    %v1738 = vpop.f32.mrf.mxu0
    %v1739 = vadd.f32 0.0, %v1738
    %v1740 = vpop.f32.mrf.mxu0
    %1741 = vmatprep.mubr.f32.mxu0 0.0
    %1742 = vmatmul.mubr.f32.gmra.mxu0 %v1665
    %v1743 = vpop.f32.mrf.mxu0
    %v1744 = vadd.f32 0.0, %v1743
    %v1745 = vpop.f32.mrf.mxu0
    %1746 = vmatprep.mubr.f32.mxu0 0.0
    %1747 = vmatmul.mubr.f32.gmra.mxu0 %v1666
    %v1748 = vpop.f32.mrf.mxu0
    %v1749 = vadd.f32 0.0, %v1748
    %v1750 = vpop.f32.mrf.mxu0
    %1751 = vdwg.mxu0
    %s1752 = scalar_lea.vmem %s3, 112
    %v1753 = vld [vmem:[%s1752] sm:$0xff]
    %v1754 = vld [vmem:[%s1752 + $0x8] sm:$0xff]
    %v1756 = vsel %vm72, %v1734, 0
    %v1759 = vsel %vm72, %v1739, 0
    %v1762 = vsel %vm72, %v1744, 0
    %v1765 = vsel %vm72, %v1749, 0
    %1767 = vmatprep.subr.mxu0 0.0
    %1768 = vmatpush1.msra.mxu0 0.0
    %1769 = vmatprep.subr.mxu0 0.0
    %1770 = vmatpush1.msra.mxu0 0.0
    %1771 = vmatprep.subr.mxu0 0.0
    %1772 = vmatpush1.msra.mxu0 0.0
    %1773 = vmatprep.subr.mxu0 0.0
    %1774 = vmatpush1.msra.mxu0 0.0
    %1775 = vmatprep.subr.mxu0 0.0
    %1776 = vmatpush1.msra.mxu0 0.0
    %1777 = vmatprep.subr.mxu0 0.0
    %1778 = vmatpush1.msra.mxu0 0.0
    %1779 = vmatprep.subr.mxu0 0.0
    %1780 = vmatpush1.msra.mxu0 0.0
    %1781 = vmatprep.subr.mxu0 0.0
    %1782 = vmatpush1.msra.mxu0 0.0
    %1783 = vmatprep.subr.mxu0 0.0
    %1784 = vmatpush1.msra.mxu0 0.0
    %1785 = vmatprep.subr.mxu0 0.0
    %1786 = vmatpush1.msra.mxu0 0.0
    %1787 = vmatprep.subr.mxu0 0.0
    %1788 = vmatpush1.msra.mxu0 0.0
    %1789 = vmatprep.subr.mxu0 0.0
    %1790 = vmatpush1.msra.mxu0 0.0
    %1791 = vmatprep.subr.mxu0 0.0
    %1792 = vmatpush1.msra.mxu0 0.0
    %1793 = vmatprep.subr.mxu0 0.0
    %1794 = vmatpush1.msra.mxu0 0.0
    %1795 = vmatprep.subr.mxu0 0.0
    %1796 = vmatpush1.msra.mxu0 %v1754
    %1797 = vmatprep.subr.mxu0 0.0
    %1798 = vmatpush1.msra.mxu0 %v1753
    %1799 = vmatprep.subr.mxu0 0.0
    %1800 = vmatpush2.msra.mxu0 0.0
    %1801 = vmatprep.subr.mxu0 0.0
    %1802 = vmatpush2.msra.mxu0 0.0
    %1803 = vmatprep.subr.mxu0 0.0
    %1804 = vmatpush2.msra.mxu0 0.0
    %1805 = vmatprep.subr.mxu0 0.0
    %1806 = vmatpush2.msra.mxu0 0.0
    %1807 = vmatprep.subr.mxu0 0.0
    %1808 = vmatpush2.msra.mxu0 0.0
    %1809 = vmatprep.subr.mxu0 0.0
    %1810 = vmatpush2.msra.mxu0 0.0
    %1811 = vmatprep.subr.mxu0 0.0
    %1812 = vmatpush2.msra.mxu0 0.0
    %1813 = vmatprep.subr.mxu0 0.0
    %1814 = vmatpush2.msra.mxu0 0.0
    %1815 = vmatprep.subr.mxu0 0.0
    %1816 = vmatpush2.msra.mxu0 0.0
    %1817 = vmatprep.subr.mxu0 0.0
    %1818 = vmatpush2.msra.mxu0 0.0
    %1819 = vmatprep.subr.mxu0 0.0
    %1820 = vmatpush2.msra.mxu0 0.0
    %1821 = vmatprep.subr.mxu0 0.0
    %1822 = vmatpush2.msra.mxu0 0.0
    %1823 = vmatprep.subr.mxu0 0.0
    %1824 = vmatpush2.msra.mxu0 0.0
    %1825 = vmatprep.subr.mxu0 0.0
    %1826 = vmatpush2.msra.mxu0 0.0
    %1827 = vmatprep.subr.mxu0 0.0
    %1828 = vmatpush2.msra.mxu0 0.0
    %1829 = vmatprep.subr.mxu0 0.0
    %1830 = vmatpush2.msra.mxu0 0.0
    %1831 = vmatprep.mubr.f32.mxu0 0.0
    %1832 = vmatmul.mubr.f32.gmra.mxu0 %v1756
    %v1833 = vpop.f32.mrf.mxu0
    %v1834 = vadd.f32 0.0, %v1833
    %v1835 = vpop.f32.mrf.mxu0
    %1836 = vmatprep.mubr.f32.mxu0 0.0
    %1837 = vmatmul.mubr.f32.gmra.mxu0 %v1759
    %v1838 = vpop.f32.mrf.mxu0
    %v1839 = vadd.f32 0.0, %v1838
    %v1840 = vpop.f32.mrf.mxu0
    %1841 = vmatprep.mubr.f32.mxu0 0.0
    %1842 = vmatmul.mubr.f32.gmra.mxu0 %v1762
    %v1843 = vpop.f32.mrf.mxu0
    %v1844 = vadd.f32 0.0, %v1843
    %v1845 = vpop.f32.mrf.mxu0
    %1846 = vmatprep.mubr.f32.mxu0 0.0
    %1847 = vmatmul.mubr.f32.gmra.mxu0 %v1765
    %v1848 = vpop.f32.mrf.mxu0
    %v1849 = vadd.f32 0.0, %v1848
    %v1850 = vpop.f32.mrf.mxu0
    %1851 = vdwg.mxu0
    %v1852 = vadd.f32 %v1658, %v1834
    %v1853 = vadd.f32 %v1659, %v1839
    %v1854 = vadd.f32 %v1660, %v1844
    %v1855 = vadd.f32 %v1661, %v1849
    %s1856 = scalar_lea.vmem %s2, 256
    %v1857 = vld [vmem:[%s1856] sm:$0xff]
    %v1858 = vld [vmem:[%s1856 + $0x8] sm:$0xff]
    %v1859 = vld [vmem:[%s1856 + $0x10] sm:$0xff]
    %v1860 = vld [vmem:[%s1856 + $0x18] sm:$0xff]
    %1861 = vmatprep.subr.mxu0 0.0
    %1862 = vmatpush1.msra.mxu0 %v313
    %1863 = vmatprep.subr.mxu0 0.0
    %1864 = vmatpush1.msra.mxu0 %v312
    %1865 = vmatprep.subr.mxu0 0.0
    %1866 = vmatpush1.msra.mxu0 %v311
    %1867 = vmatprep.subr.mxu0 0.0
    %1868 = vmatpush1.msra.mxu0 %v310
    %1869 = vmatprep.subr.mxu0 0.0
    %1870 = vmatpush1.msra.mxu0 %v309
    %1871 = vmatprep.subr.mxu0 0.0
    %1872 = vmatpush1.msra.mxu0 %v308
    %1873 = vmatprep.subr.mxu0 0.0
    %1874 = vmatpush1.msra.mxu0 %v307
    %1875 = vmatprep.subr.mxu0 0.0
    %1876 = vmatpush1.msra.mxu0 %v306
    %1877 = vmatprep.subr.mxu0 0.0
    %1878 = vmatpush1.msra.mxu0 %v305
    %1879 = vmatprep.subr.mxu0 0.0
    %1880 = vmatpush1.msra.mxu0 %v304
    %1881 = vmatprep.subr.mxu0 0.0
    %1882 = vmatpush1.msra.mxu0 %v303
    %1883 = vmatprep.subr.mxu0 0.0
    %1884 = vmatpush1.msra.mxu0 %v302
    %1885 = vmatprep.subr.mxu0 0.0
    %1886 = vmatpush1.msra.mxu0 %v301
    %1887 = vmatprep.subr.mxu0 0.0
    %1888 = vmatpush1.msra.mxu0 %v300
    %1889 = vmatprep.subr.mxu0 0.0
    %1890 = vmatpush1.msra.mxu0 %v299
    %1891 = vmatprep.subr.mxu0 0.0
    %1892 = vmatpush1.msra.mxu0 %v298
    %1893 = vmatprep.subr.mxu0 0.0
    %1894 = vmatpush2.msra.mxu0 0.0
    %1895 = vmatprep.subr.mxu0 0.0
    %1896 = vmatpush2.msra.mxu0 0.0
    %1897 = vmatprep.subr.mxu0 0.0
    %1898 = vmatpush2.msra.mxu0 0.0
    %1899 = vmatprep.subr.mxu0 0.0
    %1900 = vmatpush2.msra.mxu0 0.0
    %1901 = vmatprep.subr.mxu0 0.0
    %1902 = vmatpush2.msra.mxu0 0.0
    %1903 = vmatprep.subr.mxu0 0.0
    %1904 = vmatpush2.msra.mxu0 0.0
    %1905 = vmatprep.subr.mxu0 0.0
    %1906 = vmatpush2.msra.mxu0 0.0
    %1907 = vmatprep.subr.mxu0 0.0
    %1908 = vmatpush2.msra.mxu0 0.0
    %1909 = vmatprep.subr.mxu0 0.0
    %1910 = vmatpush2.msra.mxu0 0.0
    %1911 = vmatprep.subr.mxu0 0.0
    %1912 = vmatpush2.msra.mxu0 0.0
    %1913 = vmatprep.subr.mxu0 0.0
    %1914 = vmatpush2.msra.mxu0 0.0
    %1915 = vmatprep.subr.mxu0 0.0
    %1916 = vmatpush2.msra.mxu0 0.0
    %1917 = vmatprep.subr.mxu0 0.0
    %1918 = vmatpush2.msra.mxu0 0.0
    %1919 = vmatprep.subr.mxu0 0.0
    %1920 = vmatpush2.msra.mxu0 0.0
    %1921 = vmatprep.subr.mxu0 0.0
    %1922 = vmatpush2.msra.mxu0 0.0
    %1923 = vmatprep.subr.mxu0 0.0
    %1924 = vmatpush2.msra.mxu0 0.0
    %1925 = vmatprep.mubr.f32.mxu0 0.0
    %1926 = vmatmul.mubr.f32.gmra.mxu0 %v1857
    %v1927 = vpop.f32.mrf.mxu0
    %v1928 = vadd.f32 0.0, %v1927
    %v1929 = vpop.f32.mrf.mxu0
    %1930 = vmatprep.mubr.f32.mxu0 0.0
    %1931 = vmatmul.mubr.f32.gmra.mxu0 %v1858
    %v1932 = vpop.f32.mrf.mxu0
    %v1933 = vadd.f32 0.0, %v1932
    %v1934 = vpop.f32.mrf.mxu0
    %1935 = vmatprep.mubr.f32.mxu0 0.0
    %1936 = vmatmul.mubr.f32.gmra.mxu0 %v1859
    %v1937 = vpop.f32.mrf.mxu0
    %v1938 = vadd.f32 0.0, %v1937
    %v1939 = vpop.f32.mrf.mxu0
    %1940 = vmatprep.mubr.f32.mxu0 0.0
    %1941 = vmatmul.mubr.f32.gmra.mxu0 %v1860
    %v1942 = vpop.f32.mrf.mxu0
    %v1943 = vadd.f32 0.0, %v1942
    %v1944 = vpop.f32.mrf.mxu0
    %1945 = vdwg.mxu0
    %s1946 = scalar_lea.vmem %s3, 128
    %v1947 = vld [vmem:[%s1946] sm:$0xff]
    %v1948 = vld [vmem:[%s1946 + $0x8] sm:$0xff]
    %v1950 = vsel %vm72, %v1928, 0
    %v1953 = vsel %vm72, %v1933, 0
    %v1956 = vsel %vm72, %v1938, 0
    %v1959 = vsel %vm72, %v1943, 0
    %1961 = vmatprep.subr.mxu0 0.0
    %1962 = vmatpush1.msra.mxu0 0.0
    %1963 = vmatprep.subr.mxu0 0.0
    %1964 = vmatpush1.msra.mxu0 0.0
    %1965 = vmatprep.subr.mxu0 0.0
    %1966 = vmatpush1.msra.mxu0 0.0
    %1967 = vmatprep.subr.mxu0 0.0
    %1968 = vmatpush1.msra.mxu0 0.0
    %1969 = vmatprep.subr.mxu0 0.0
    %1970 = vmatpush1.msra.mxu0 0.0
    %1971 = vmatprep.subr.mxu0 0.0
    %1972 = vmatpush1.msra.mxu0 0.0
    %1973 = vmatprep.subr.mxu0 0.0
    %1974 = vmatpush1.msra.mxu0 0.0
    %1975 = vmatprep.subr.mxu0 0.0
    %1976 = vmatpush1.msra.mxu0 0.0
    %1977 = vmatprep.subr.mxu0 0.0
    %1978 = vmatpush1.msra.mxu0 0.0
    %1979 = vmatprep.subr.mxu0 0.0
    %1980 = vmatpush1.msra.mxu0 0.0
    %1981 = vmatprep.subr.mxu0 0.0
    %1982 = vmatpush1.msra.mxu0 0.0
    %1983 = vmatprep.subr.mxu0 0.0
    %1984 = vmatpush1.msra.mxu0 0.0
    %1985 = vmatprep.subr.mxu0 0.0
    %1986 = vmatpush1.msra.mxu0 0.0
    %1987 = vmatprep.subr.mxu0 0.0
    %1988 = vmatpush1.msra.mxu0 0.0
    %1989 = vmatprep.subr.mxu0 0.0
    %1990 = vmatpush1.msra.mxu0 %v1948
    %1991 = vmatprep.subr.mxu0 0.0
    %1992 = vmatpush1.msra.mxu0 %v1947
    %1993 = vmatprep.subr.mxu0 0.0
    %1994 = vmatpush2.msra.mxu0 0.0
    %1995 = vmatprep.subr.mxu0 0.0
    %1996 = vmatpush2.msra.mxu0 0.0
    %1997 = vmatprep.subr.mxu0 0.0
    %1998 = vmatpush2.msra.mxu0 0.0
    %1999 = vmatprep.subr.mxu0 0.0
    %2000 = vmatpush2.msra.mxu0 0.0
    %2001 = vmatprep.subr.mxu0 0.0
    %2002 = vmatpush2.msra.mxu0 0.0
    %2003 = vmatprep.subr.mxu0 0.0
    %2004 = vmatpush2.msra.mxu0 0.0
    %2005 = vmatprep.subr.mxu0 0.0
    %2006 = vmatpush2.msra.mxu0 0.0
    %2007 = vmatprep.subr.mxu0 0.0
    %2008 = vmatpush2.msra.mxu0 0.0
    %2009 = vmatprep.subr.mxu0 0.0
    %2010 = vmatpush2.msra.mxu0 0.0
    %2011 = vmatprep.subr.mxu0 0.0
    %2012 = vmatpush2.msra.mxu0 0.0
    %2013 = vmatprep.subr.mxu0 0.0
    %2014 = vmatpush2.msra.mxu0 0.0
    %2015 = vmatprep.subr.mxu0 0.0
    %2016 = vmatpush2.msra.mxu0 0.0
    %2017 = vmatprep.subr.mxu0 0.0
    %2018 = vmatpush2.msra.mxu0 0.0
    %2019 = vmatprep.subr.mxu0 0.0
    %2020 = vmatpush2.msra.mxu0 0.0
    %2021 = vmatprep.subr.mxu0 0.0
    %2022 = vmatpush2.msra.mxu0 0.0
    %2023 = vmatprep.subr.mxu0 0.0
    %2024 = vmatpush2.msra.mxu0 0.0
    %2025 = vmatprep.mubr.f32.mxu0 0.0
    %2026 = vmatmul.mubr.f32.gmra.mxu0 %v1950
    %v2027 = vpop.f32.mrf.mxu0
    %v2028 = vadd.f32 0.0, %v2027
    %v2029 = vpop.f32.mrf.mxu0
    %2030 = vmatprep.mubr.f32.mxu0 0.0
    %2031 = vmatmul.mubr.f32.gmra.mxu0 %v1953
    %v2032 = vpop.f32.mrf.mxu0
    %v2033 = vadd.f32 0.0, %v2032
    %v2034 = vpop.f32.mrf.mxu0
    %2035 = vmatprep.mubr.f32.mxu0 0.0
    %2036 = vmatmul.mubr.f32.gmra.mxu0 %v1956
    %v2037 = vpop.f32.mrf.mxu0
    %v2038 = vadd.f32 0.0, %v2037
    %v2039 = vpop.f32.mrf.mxu0
    %2040 = vmatprep.mubr.f32.mxu0 0.0
    %2041 = vmatmul.mubr.f32.gmra.mxu0 %v1959
    %v2042 = vpop.f32.mrf.mxu0
    %v2043 = vadd.f32 0.0, %v2042
    %v2044 = vpop.f32.mrf.mxu0
    %2045 = vdwg.mxu0
    %v2046 = vadd.f32 %v1852, %v2028
    %v2047 = vadd.f32 %v1853, %v2033
    %v2048 = vadd.f32 %v1854, %v2038
    %v2049 = vadd.f32 %v1855, %v2043
    %s2050 = scalar_lea.vmem %s2, 288
    %v2051 = vld [vmem:[%s2050] sm:$0xff]
    %v2052 = vld [vmem:[%s2050 + $0x8] sm:$0xff]
    %v2053 = vld [vmem:[%s2050 + $0x10] sm:$0xff]
    %v2054 = vld [vmem:[%s2050 + $0x18] sm:$0xff]
    %2055 = vmatprep.subr.mxu0 0.0
    %2056 = vmatpush1.msra.mxu0 %v313
    %2057 = vmatprep.subr.mxu0 0.0
    %2058 = vmatpush1.msra.mxu0 %v312
    %2059 = vmatprep.subr.mxu0 0.0
    %2060 = vmatpush1.msra.mxu0 %v311
    %2061 = vmatprep.subr.mxu0 0.0
    %2062 = vmatpush1.msra.mxu0 %v310
    %2063 = vmatprep.subr.mxu0 0.0
    %2064 = vmatpush1.msra.mxu0 %v309
    %2065 = vmatprep.subr.mxu0 0.0
    %2066 = vmatpush1.msra.mxu0 %v308
    %2067 = vmatprep.subr.mxu0 0.0
    %2068 = vmatpush1.msra.mxu0 %v307
    %2069 = vmatprep.subr.mxu0 0.0
    %2070 = vmatpush1.msra.mxu0 %v306
    %2071 = vmatprep.subr.mxu0 0.0
    %2072 = vmatpush1.msra.mxu0 %v305
    %2073 = vmatprep.subr.mxu0 0.0
    %2074 = vmatpush1.msra.mxu0 %v304
    %2075 = vmatprep.subr.mxu0 0.0
    %2076 = vmatpush1.msra.mxu0 %v303
    %2077 = vmatprep.subr.mxu0 0.0
    %2078 = vmatpush1.msra.mxu0 %v302
    %2079 = vmatprep.subr.mxu0 0.0
    %2080 = vmatpush1.msra.mxu0 %v301
    %2081 = vmatprep.subr.mxu0 0.0
    %2082 = vmatpush1.msra.mxu0 %v300
    %2083 = vmatprep.subr.mxu0 0.0
    %2084 = vmatpush1.msra.mxu0 %v299
    %2085 = vmatprep.subr.mxu0 0.0
    %2086 = vmatpush1.msra.mxu0 %v298
    %2087 = vmatprep.subr.mxu0 0.0
    %2088 = vmatpush2.msra.mxu0 0.0
    %2089 = vmatprep.subr.mxu0 0.0
    %2090 = vmatpush2.msra.mxu0 0.0
    %2091 = vmatprep.subr.mxu0 0.0
    %2092 = vmatpush2.msra.mxu0 0.0
    %2093 = vmatprep.subr.mxu0 0.0
    %2094 = vmatpush2.msra.mxu0 0.0
    %2095 = vmatprep.subr.mxu0 0.0
    %2096 = vmatpush2.msra.mxu0 0.0
    %2097 = vmatprep.subr.mxu0 0.0
    %2098 = vmatpush2.msra.mxu0 0.0
    %2099 = vmatprep.subr.mxu0 0.0
    %2100 = vmatpush2.msra.mxu0 0.0
    %2101 = vmatprep.subr.mxu0 0.0
    %2102 = vmatpush2.msra.mxu0 0.0
    %2103 = vmatprep.subr.mxu0 0.0
    %2104 = vmatpush2.msra.mxu0 0.0
    %2105 = vmatprep.subr.mxu0 0.0
    %2106 = vmatpush2.msra.mxu0 0.0
    %2107 = vmatprep.subr.mxu0 0.0
    %2108 = vmatpush2.msra.mxu0 0.0
    %2109 = vmatprep.subr.mxu0 0.0
    %2110 = vmatpush2.msra.mxu0 0.0
    %2111 = vmatprep.subr.mxu0 0.0
    %2112 = vmatpush2.msra.mxu0 0.0
    %2113 = vmatprep.subr.mxu0 0.0
    %2114 = vmatpush2.msra.mxu0 0.0
    %2115 = vmatprep.subr.mxu0 0.0
    %2116 = vmatpush2.msra.mxu0 0.0
    %2117 = vmatprep.subr.mxu0 0.0
    %2118 = vmatpush2.msra.mxu0 0.0
    %2119 = vmatprep.mubr.f32.mxu0 0.0
    %2120 = vmatmul.mubr.f32.gmra.mxu0 %v2051
    %v2121 = vpop.f32.mrf.mxu0
    %v2122 = vadd.f32 0.0, %v2121
    %v2123 = vpop.f32.mrf.mxu0
    %2124 = vmatprep.mubr.f32.mxu0 0.0
    %2125 = vmatmul.mubr.f32.gmra.mxu0 %v2052
    %v2126 = vpop.f32.mrf.mxu0
    %v2127 = vadd.f32 0.0, %v2126
    %v2128 = vpop.f32.mrf.mxu0
    %2129 = vmatprep.mubr.f32.mxu0 0.0
    %2130 = vmatmul.mubr.f32.gmra.mxu0 %v2053
    %v2131 = vpop.f32.mrf.mxu0
    %v2132 = vadd.f32 0.0, %v2131
    %v2133 = vpop.f32.mrf.mxu0
    %2134 = vmatprep.mubr.f32.mxu0 0.0
    %2135 = vmatmul.mubr.f32.gmra.mxu0 %v2054
    %v2136 = vpop.f32.mrf.mxu0
    %v2137 = vadd.f32 0.0, %v2136
    %v2138 = vpop.f32.mrf.mxu0
    %2139 = vdwg.mxu0
    %s2140 = scalar_lea.vmem %s3, 144
    %v2141 = vld [vmem:[%s2140] sm:$0xff]
    %v2142 = vld [vmem:[%s2140 + $0x8] sm:$0xff]
    %v2144 = vsel %vm72, %v2122, 0
    %v2147 = vsel %vm72, %v2127, 0
    %v2150 = vsel %vm72, %v2132, 0
    %v2153 = vsel %vm72, %v2137, 0
    %2155 = vmatprep.subr.mxu0 0.0
    %2156 = vmatpush1.msra.mxu0 0.0
    %2157 = vmatprep.subr.mxu0 0.0
    %2158 = vmatpush1.msra.mxu0 0.0
    %2159 = vmatprep.subr.mxu0 0.0
    %2160 = vmatpush1.msra.mxu0 0.0
    %2161 = vmatprep.subr.mxu0 0.0
    %2162 = vmatpush1.msra.mxu0 0.0
    %2163 = vmatprep.subr.mxu0 0.0
    %2164 = vmatpush1.msra.mxu0 0.0
    %2165 = vmatprep.subr.mxu0 0.0
    %2166 = vmatpush1.msra.mxu0 0.0
    %2167 = vmatprep.subr.mxu0 0.0
    %2168 = vmatpush1.msra.mxu0 0.0
    %2169 = vmatprep.subr.mxu0 0.0
    %2170 = vmatpush1.msra.mxu0 0.0
    %2171 = vmatprep.subr.mxu0 0.0
    %2172 = vmatpush1.msra.mxu0 0.0
    %2173 = vmatprep.subr.mxu0 0.0
    %2174 = vmatpush1.msra.mxu0 0.0
    %2175 = vmatprep.subr.mxu0 0.0
    %2176 = vmatpush1.msra.mxu0 0.0
    %2177 = vmatprep.subr.mxu0 0.0
    %2178 = vmatpush1.msra.mxu0 0.0
    %2179 = vmatprep.subr.mxu0 0.0
    %2180 = vmatpush1.msra.mxu0 0.0
    %2181 = vmatprep.subr.mxu0 0.0
    %2182 = vmatpush1.msra.mxu0 0.0
    %2183 = vmatprep.subr.mxu0 0.0
    %2184 = vmatpush1.msra.mxu0 %v2142
    %2185 = vmatprep.subr.mxu0 0.0
    %2186 = vmatpush1.msra.mxu0 %v2141
    %2187 = vmatprep.subr.mxu0 0.0
    %2188 = vmatpush2.msra.mxu0 0.0
    %2189 = vmatprep.subr.mxu0 0.0
    %2190 = vmatpush2.msra.mxu0 0.0
    %2191 = vmatprep.subr.mxu0 0.0
    %2192 = vmatpush2.msra.mxu0 0.0
    %2193 = vmatprep.subr.mxu0 0.0
    %2194 = vmatpush2.msra.mxu0 0.0
    %2195 = vmatprep.subr.mxu0 0.0
    %2196 = vmatpush2.msra.mxu0 0.0
    %2197 = vmatprep.subr.mxu0 0.0
    %2198 = vmatpush2.msra.mxu0 0.0
    %2199 = vmatprep.subr.mxu0 0.0
    %2200 = vmatpush2.msra.mxu0 0.0
    %2201 = vmatprep.subr.mxu0 0.0
    %2202 = vmatpush2.msra.mxu0 0.0
    %2203 = vmatprep.subr.mxu0 0.0
    %2204 = vmatpush2.msra.mxu0 0.0
    %2205 = vmatprep.subr.mxu0 0.0
    %2206 = vmatpush2.msra.mxu0 0.0
    %2207 = vmatprep.subr.mxu0 0.0
    %2208 = vmatpush2.msra.mxu0 0.0
    %2209 = vmatprep.subr.mxu0 0.0
    %2210 = vmatpush2.msra.mxu0 0.0
    %2211 = vmatprep.subr.mxu0 0.0
    %2212 = vmatpush2.msra.mxu0 0.0
    %2213 = vmatprep.subr.mxu0 0.0
    %2214 = vmatpush2.msra.mxu0 0.0
    %2215 = vmatprep.subr.mxu0 0.0
    %2216 = vmatpush2.msra.mxu0 0.0
    %2217 = vmatprep.subr.mxu0 0.0
    %2218 = vmatpush2.msra.mxu0 0.0
    %2219 = vmatprep.mubr.f32.mxu0 0.0
    %2220 = vmatmul.mubr.f32.gmra.mxu0 %v2144
    %v2221 = vpop.f32.mrf.mxu0
    %v2222 = vadd.f32 0.0, %v2221
    %v2223 = vpop.f32.mrf.mxu0
    %2224 = vmatprep.mubr.f32.mxu0 0.0
    %2225 = vmatmul.mubr.f32.gmra.mxu0 %v2147
    %v2226 = vpop.f32.mrf.mxu0
    %v2227 = vadd.f32 0.0, %v2226
    %v2228 = vpop.f32.mrf.mxu0
    %2229 = vmatprep.mubr.f32.mxu0 0.0
    %2230 = vmatmul.mubr.f32.gmra.mxu0 %v2150
    %v2231 = vpop.f32.mrf.mxu0
    %v2232 = vadd.f32 0.0, %v2231
    %v2233 = vpop.f32.mrf.mxu0
    %2234 = vmatprep.mubr.f32.mxu0 0.0
    %2235 = vmatmul.mubr.f32.gmra.mxu0 %v2153
    %v2236 = vpop.f32.mrf.mxu0
    %v2237 = vadd.f32 0.0, %v2236
    %v2238 = vpop.f32.mrf.mxu0
    %2239 = vdwg.mxu0
    %v2240 = vadd.f32 %v2046, %v2222
    %v2241 = vadd.f32 %v2047, %v2227
    %v2242 = vadd.f32 %v2048, %v2232
    %v2243 = vadd.f32 %v2049, %v2237
    %s2244 = scalar_lea.vmem %s2, 320
    %v2245 = vld [vmem:[%s2244] sm:$0xff]
    %v2246 = vld [vmem:[%s2244 + $0x8] sm:$0xff]
    %v2247 = vld [vmem:[%s2244 + $0x10] sm:$0xff]
    %v2248 = vld [vmem:[%s2244 + $0x18] sm:$0xff]
    %2249 = vmatprep.subr.mxu0 0.0
    %2250 = vmatpush1.msra.mxu0 %v313
    %2251 = vmatprep.subr.mxu0 0.0
    %2252 = vmatpush1.msra.mxu0 %v312
    %2253 = vmatprep.subr.mxu0 0.0
    %2254 = vmatpush1.msra.mxu0 %v311
    %2255 = vmatprep.subr.mxu0 0.0
    %2256 = vmatpush1.msra.mxu0 %v310
    %2257 = vmatprep.subr.mxu0 0.0
    %2258 = vmatpush1.msra.mxu0 %v309
    %2259 = vmatprep.subr.mxu0 0.0
    %2260 = vmatpush1.msra.mxu0 %v308
    %2261 = vmatprep.subr.mxu0 0.0
    %2262 = vmatpush1.msra.mxu0 %v307
    %2263 = vmatprep.subr.mxu0 0.0
    %2264 = vmatpush1.msra.mxu0 %v306
    %2265 = vmatprep.subr.mxu0 0.0
    %2266 = vmatpush1.msra.mxu0 %v305
    %2267 = vmatprep.subr.mxu0 0.0
    %2268 = vmatpush1.msra.mxu0 %v304
    %2269 = vmatprep.subr.mxu0 0.0
    %2270 = vmatpush1.msra.mxu0 %v303
    %2271 = vmatprep.subr.mxu0 0.0
    %2272 = vmatpush1.msra.mxu0 %v302
    %2273 = vmatprep.subr.mxu0 0.0
    %2274 = vmatpush1.msra.mxu0 %v301
    %2275 = vmatprep.subr.mxu0 0.0
    %2276 = vmatpush1.msra.mxu0 %v300
    %2277 = vmatprep.subr.mxu0 0.0
    %2278 = vmatpush1.msra.mxu0 %v299
    %2279 = vmatprep.subr.mxu0 0.0
    %2280 = vmatpush1.msra.mxu0 %v298
    %2281 = vmatprep.subr.mxu0 0.0
    %2282 = vmatpush2.msra.mxu0 0.0
    %2283 = vmatprep.subr.mxu0 0.0
    %2284 = vmatpush2.msra.mxu0 0.0
    %2285 = vmatprep.subr.mxu0 0.0
    %2286 = vmatpush2.msra.mxu0 0.0
    %2287 = vmatprep.subr.mxu0 0.0
    %2288 = vmatpush2.msra.mxu0 0.0
    %2289 = vmatprep.subr.mxu0 0.0
    %2290 = vmatpush2.msra.mxu0 0.0
    %2291 = vmatprep.subr.mxu0 0.0
    %2292 = vmatpush2.msra.mxu0 0.0
    %2293 = vmatprep.subr.mxu0 0.0
    %2294 = vmatpush2.msra.mxu0 0.0
    %2295 = vmatprep.subr.mxu0 0.0
    %2296 = vmatpush2.msra.mxu0 0.0
    %2297 = vmatprep.subr.mxu0 0.0
    %2298 = vmatpush2.msra.mxu0 0.0
    %2299 = vmatprep.subr.mxu0 0.0
    %2300 = vmatpush2.msra.mxu0 0.0
    %2301 = vmatprep.subr.mxu0 0.0
    %2302 = vmatpush2.msra.mxu0 0.0
    %2303 = vmatprep.subr.mxu0 0.0
    %2304 = vmatpush2.msra.mxu0 0.0
    %2305 = vmatprep.subr.mxu0 0.0
    %2306 = vmatpush2.msra.mxu0 0.0
    %2307 = vmatprep.subr.mxu0 0.0
    %2308 = vmatpush2.msra.mxu0 0.0
    %2309 = vmatprep.subr.mxu0 0.0
    %2310 = vmatpush2.msra.mxu0 0.0
    %2311 = vmatprep.subr.mxu0 0.0
    %2312 = vmatpush2.msra.mxu0 0.0
    %2313 = vmatprep.mubr.f32.mxu0 0.0
    %2314 = vmatmul.mubr.f32.gmra.mxu0 %v2245
    %v2315 = vpop.f32.mrf.mxu0
    %v2316 = vadd.f32 0.0, %v2315
    %v2317 = vpop.f32.mrf.mxu0
    %2318 = vmatprep.mubr.f32.mxu0 0.0
    %2319 = vmatmul.mubr.f32.gmra.mxu0 %v2246
    %v2320 = vpop.f32.mrf.mxu0
    %v2321 = vadd.f32 0.0, %v2320
    %v2322 = vpop.f32.mrf.mxu0
    %2323 = vmatprep.mubr.f32.mxu0 0.0
    %2324 = vmatmul.mubr.f32.gmra.mxu0 %v2247
    %v2325 = vpop.f32.mrf.mxu0
    %v2326 = vadd.f32 0.0, %v2325
    %v2327 = vpop.f32.mrf.mxu0
    %2328 = vmatprep.mubr.f32.mxu0 0.0
    %2329 = vmatmul.mubr.f32.gmra.mxu0 %v2248
    %v2330 = vpop.f32.mrf.mxu0
    %v2331 = vadd.f32 0.0, %v2330
    %v2332 = vpop.f32.mrf.mxu0
    %2333 = vdwg.mxu0
    %s2334 = scalar_lea.vmem %s3, 160
    %v2335 = vld [vmem:[%s2334] sm:$0xff]
    %v2336 = vld [vmem:[%s2334 + $0x8] sm:$0xff]
    %v2338 = vsel %vm72, %v2316, 0
    %v2341 = vsel %vm72, %v2321, 0
    %v2344 = vsel %vm72, %v2326, 0
    %v2347 = vsel %vm72, %v2331, 0
    %2349 = vmatprep.subr.mxu0 0.0
    %2350 = vmatpush1.msra.mxu0 0.0
    %2351 = vmatprep.subr.mxu0 0.0
    %2352 = vmatpush1.msra.mxu0 0.0
    %2353 = vmatprep.subr.mxu0 0.0
    %2354 = vmatpush1.msra.mxu0 0.0
    %2355 = vmatprep.subr.mxu0 0.0
    %2356 = vmatpush1.msra.mxu0 0.0
    %2357 = vmatprep.subr.mxu0 0.0
    %2358 = vmatpush1.msra.mxu0 0.0
    %2359 = vmatprep.subr.mxu0 0.0
    %2360 = vmatpush1.msra.mxu0 0.0
    %2361 = vmatprep.subr.mxu0 0.0
    %2362 = vmatpush1.msra.mxu0 0.0
    %2363 = vmatprep.subr.mxu0 0.0
    %2364 = vmatpush1.msra.mxu0 0.0
    %2365 = vmatprep.subr.mxu0 0.0
    %2366 = vmatpush1.msra.mxu0 0.0
    %2367 = vmatprep.subr.mxu0 0.0
    %2368 = vmatpush1.msra.mxu0 0.0
    %2369 = vmatprep.subr.mxu0 0.0
    %2370 = vmatpush1.msra.mxu0 0.0
    %2371 = vmatprep.subr.mxu0 0.0
    %2372 = vmatpush1.msra.mxu0 0.0
    %2373 = vmatprep.subr.mxu0 0.0
    %2374 = vmatpush1.msra.mxu0 0.0
    %2375 = vmatprep.subr.mxu0 0.0
    %2376 = vmatpush1.msra.mxu0 0.0
    %2377 = vmatprep.subr.mxu0 0.0
    %2378 = vmatpush1.msra.mxu0 %v2336
    %2379 = vmatprep.subr.mxu0 0.0
    %2380 = vmatpush1.msra.mxu0 %v2335
    %2381 = vmatprep.subr.mxu0 0.0
    %2382 = vmatpush2.msra.mxu0 0.0
    %2383 = vmatprep.subr.mxu0 0.0
    %2384 = vmatpush2.msra.mxu0 0.0
    %2385 = vmatprep.subr.mxu0 0.0
    %2386 = vmatpush2.msra.mxu0 0.0
    %2387 = vmatprep.subr.mxu0 0.0
    %2388 = vmatpush2.msra.mxu0 0.0
    %2389 = vmatprep.subr.mxu0 0.0
    %2390 = vmatpush2.msra.mxu0 0.0
    %2391 = vmatprep.subr.mxu0 0.0
    %2392 = vmatpush2.msra.mxu0 0.0
    %2393 = vmatprep.subr.mxu0 0.0
    %2394 = vmatpush2.msra.mxu0 0.0
    %2395 = vmatprep.subr.mxu0 0.0
    %2396 = vmatpush2.msra.mxu0 0.0
    %2397 = vmatprep.subr.mxu0 0.0
    %2398 = vmatpush2.msra.mxu0 0.0
    %2399 = vmatprep.subr.mxu0 0.0
    %2400 = vmatpush2.msra.mxu0 0.0
    %2401 = vmatprep.subr.mxu0 0.0
    %2402 = vmatpush2.msra.mxu0 0.0
    %2403 = vmatprep.subr.mxu0 0.0
    %2404 = vmatpush2.msra.mxu0 0.0
    %2405 = vmatprep.subr.mxu0 0.0
    %2406 = vmatpush2.msra.mxu0 0.0
    %2407 = vmatprep.subr.mxu0 0.0
    %2408 = vmatpush2.msra.mxu0 0.0
    %2409 = vmatprep.subr.mxu0 0.0
    %2410 = vmatpush2.msra.mxu0 0.0
    %2411 = vmatprep.subr.mxu0 0.0
    %2412 = vmatpush2.msra.mxu0 0.0
    %2413 = vmatprep.mubr.f32.mxu0 0.0
    %2414 = vmatmul.mubr.f32.gmra.mxu0 %v2338
    %v2415 = vpop.f32.mrf.mxu0
    %v2416 = vadd.f32 0.0, %v2415
    %v2417 = vpop.f32.mrf.mxu0
    %2418 = vmatprep.mubr.f32.mxu0 0.0
    %2419 = vmatmul.mubr.f32.gmra.mxu0 %v2341
    %v2420 = vpop.f32.mrf.mxu0
    %v2421 = vadd.f32 0.0, %v2420
    %v2422 = vpop.f32.mrf.mxu0
    %2423 = vmatprep.mubr.f32.mxu0 0.0
    %2424 = vmatmul.mubr.f32.gmra.mxu0 %v2344
    %v2425 = vpop.f32.mrf.mxu0
    %v2426 = vadd.f32 0.0, %v2425
    %v2427 = vpop.f32.mrf.mxu0
    %2428 = vmatprep.mubr.f32.mxu0 0.0
    %2429 = vmatmul.mubr.f32.gmra.mxu0 %v2347
    %v2430 = vpop.f32.mrf.mxu0
    %v2431 = vadd.f32 0.0, %v2430
    %v2432 = vpop.f32.mrf.mxu0
    %2433 = vdwg.mxu0
    %v2434 = vadd.f32 %v2240, %v2416
    %v2435 = vadd.f32 %v2241, %v2421
    %v2436 = vadd.f32 %v2242, %v2426
    %v2437 = vadd.f32 %v2243, %v2431
    %s2438 = scalar_lea.vmem %s2, 352
    %v2439 = vld [vmem:[%s2438] sm:$0xff]
    %v2440 = vld [vmem:[%s2438 + $0x8] sm:$0xff]
    %v2441 = vld [vmem:[%s2438 + $0x10] sm:$0xff]
    %v2442 = vld [vmem:[%s2438 + $0x18] sm:$0xff]
    %2443 = vmatprep.subr.mxu0 0.0
    %2444 = vmatpush1.msra.mxu0 %v313
    %2445 = vmatprep.subr.mxu0 0.0
    %2446 = vmatpush1.msra.mxu0 %v312
    %2447 = vmatprep.subr.mxu0 0.0
    %2448 = vmatpush1.msra.mxu0 %v311
    %2449 = vmatprep.subr.mxu0 0.0
    %2450 = vmatpush1.msra.mxu0 %v310
    %2451 = vmatprep.subr.mxu0 0.0
    %2452 = vmatpush1.msra.mxu0 %v309
    %2453 = vmatprep.subr.mxu0 0.0
    %2454 = vmatpush1.msra.mxu0 %v308
    %2455 = vmatprep.subr.mxu0 0.0
    %2456 = vmatpush1.msra.mxu0 %v307
    %2457 = vmatprep.subr.mxu0 0.0
    %2458 = vmatpush1.msra.mxu0 %v306
    %2459 = vmatprep.subr.mxu0 0.0
    %2460 = vmatpush1.msra.mxu0 %v305
    %2461 = vmatprep.subr.mxu0 0.0
    %2462 = vmatpush1.msra.mxu0 %v304
    %2463 = vmatprep.subr.mxu0 0.0
    %2464 = vmatpush1.msra.mxu0 %v303
    %2465 = vmatprep.subr.mxu0 0.0
    %2466 = vmatpush1.msra.mxu0 %v302
    %2467 = vmatprep.subr.mxu0 0.0
    %2468 = vmatpush1.msra.mxu0 %v301
    %2469 = vmatprep.subr.mxu0 0.0
    %2470 = vmatpush1.msra.mxu0 %v300
    %2471 = vmatprep.subr.mxu0 0.0
    %2472 = vmatpush1.msra.mxu0 %v299
    %2473 = vmatprep.subr.mxu0 0.0
    %2474 = vmatpush1.msra.mxu0 %v298
    %2475 = vmatprep.subr.mxu0 0.0
    %2476 = vmatpush2.msra.mxu0 0.0
    %2477 = vmatprep.subr.mxu0 0.0
    %2478 = vmatpush2.msra.mxu0 0.0
    %2479 = vmatprep.subr.mxu0 0.0
    %2480 = vmatpush2.msra.mxu0 0.0
    %2481 = vmatprep.subr.mxu0 0.0
    %2482 = vmatpush2.msra.mxu0 0.0
    %2483 = vmatprep.subr.mxu0 0.0
    %2484 = vmatpush2.msra.mxu0 0.0
    %2485 = vmatprep.subr.mxu0 0.0
    %2486 = vmatpush2.msra.mxu0 0.0
    %2487 = vmatprep.subr.mxu0 0.0
    %2488 = vmatpush2.msra.mxu0 0.0
    %2489 = vmatprep.subr.mxu0 0.0
    %2490 = vmatpush2.msra.mxu0 0.0
    %2491 = vmatprep.subr.mxu0 0.0
    %2492 = vmatpush2.msra.mxu0 0.0
    %2493 = vmatprep.subr.mxu0 0.0
    %2494 = vmatpush2.msra.mxu0 0.0
    %2495 = vmatprep.subr.mxu0 0.0
    %2496 = vmatpush2.msra.mxu0 0.0
    %2497 = vmatprep.subr.mxu0 0.0
    %2498 = vmatpush2.msra.mxu0 0.0
    %2499 = vmatprep.subr.mxu0 0.0
    %2500 = vmatpush2.msra.mxu0 0.0
    %2501 = vmatprep.subr.mxu0 0.0
    %2502 = vmatpush2.msra.mxu0 0.0
    %2503 = vmatprep.subr.mxu0 0.0
    %2504 = vmatpush2.msra.mxu0 0.0
    %2505 = vmatprep.subr.mxu0 0.0
    %2506 = vmatpush2.msra.mxu0 0.0
    %2507 = vmatprep.mubr.f32.mxu0 0.0
    %2508 = vmatmul.mubr.f32.gmra.mxu0 %v2439
    %v2509 = vpop.f32.mrf.mxu0
    %v2510 = vadd.f32 0.0, %v2509
    %v2511 = vpop.f32.mrf.mxu0
    %2512 = vmatprep.mubr.f32.mxu0 0.0
    %2513 = vmatmul.mubr.f32.gmra.mxu0 %v2440
    %v2514 = vpop.f32.mrf.mxu0
    %v2515 = vadd.f32 0.0, %v2514
    %v2516 = vpop.f32.mrf.mxu0
    %2517 = vmatprep.mubr.f32.mxu0 0.0
    %2518 = vmatmul.mubr.f32.gmra.mxu0 %v2441
    %v2519 = vpop.f32.mrf.mxu0
    %v2520 = vadd.f32 0.0, %v2519
    %v2521 = vpop.f32.mrf.mxu0
    %2522 = vmatprep.mubr.f32.mxu0 0.0
    %2523 = vmatmul.mubr.f32.gmra.mxu0 %v2442
    %v2524 = vpop.f32.mrf.mxu0
    %v2525 = vadd.f32 0.0, %v2524
    %v2526 = vpop.f32.mrf.mxu0
    %2527 = vdwg.mxu0
    %s2528 = scalar_lea.vmem %s3, 176
    %v2529 = vld [vmem:[%s2528] sm:$0xff]
    %v2530 = vld [vmem:[%s2528 + $0x8] sm:$0xff]
    %v2532 = vsel %vm72, %v2510, 0
    %v2535 = vsel %vm72, %v2515, 0
    %v2538 = vsel %vm72, %v2520, 0
    %v2541 = vsel %vm72, %v2525, 0
    %2543 = vmatprep.subr.mxu0 0.0
    %2544 = vmatpush1.msra.mxu0 0.0
    %2545 = vmatprep.subr.mxu0 0.0
    %2546 = vmatpush1.msra.mxu0 0.0
    %2547 = vmatprep.subr.mxu0 0.0
    %2548 = vmatpush1.msra.mxu0 0.0
    %2549 = vmatprep.subr.mxu0 0.0
    %2550 = vmatpush1.msra.mxu0 0.0
    %2551 = vmatprep.subr.mxu0 0.0
    %2552 = vmatpush1.msra.mxu0 0.0
    %2553 = vmatprep.subr.mxu0 0.0
    %2554 = vmatpush1.msra.mxu0 0.0
    %2555 = vmatprep.subr.mxu0 0.0
    %2556 = vmatpush1.msra.mxu0 0.0
    %2557 = vmatprep.subr.mxu0 0.0
    %2558 = vmatpush1.msra.mxu0 0.0
    %2559 = vmatprep.subr.mxu0 0.0
    %2560 = vmatpush1.msra.mxu0 0.0
    %2561 = vmatprep.subr.mxu0 0.0
    %2562 = vmatpush1.msra.mxu0 0.0
    %2563 = vmatprep.subr.mxu0 0.0
    %2564 = vmatpush1.msra.mxu0 0.0
    %2565 = vmatprep.subr.mxu0 0.0
    %2566 = vmatpush1.msra.mxu0 0.0
    %2567 = vmatprep.subr.mxu0 0.0
    %2568 = vmatpush1.msra.mxu0 0.0
    %2569 = vmatprep.subr.mxu0 0.0
    %2570 = vmatpush1.msra.mxu0 0.0
    %2571 = vmatprep.subr.mxu0 0.0
    %2572 = vmatpush1.msra.mxu0 %v2530
    %2573 = vmatprep.subr.mxu0 0.0
    %2574 = vmatpush1.msra.mxu0 %v2529
    %2575 = vmatprep.subr.mxu0 0.0
    %2576 = vmatpush2.msra.mxu0 0.0
    %2577 = vmatprep.subr.mxu0 0.0
    %2578 = vmatpush2.msra.mxu0 0.0
    %2579 = vmatprep.subr.mxu0 0.0
    %2580 = vmatpush2.msra.mxu0 0.0
    %2581 = vmatprep.subr.mxu0 0.0
    %2582 = vmatpush2.msra.mxu0 0.0
    %2583 = vmatprep.subr.mxu0 0.0
    %2584 = vmatpush2.msra.mxu0 0.0
    %2585 = vmatprep.subr.mxu0 0.0
    %2586 = vmatpush2.msra.mxu0 0.0
    %2587 = vmatprep.subr.mxu0 0.0
    %2588 = vmatpush2.msra.mxu0 0.0
    %2589 = vmatprep.subr.mxu0 0.0
    %2590 = vmatpush2.msra.mxu0 0.0
    %2591 = vmatprep.subr.mxu0 0.0
    %2592 = vmatpush2.msra.mxu0 0.0
    %2593 = vmatprep.subr.mxu0 0.0
    %2594 = vmatpush2.msra.mxu0 0.0
    %2595 = vmatprep.subr.mxu0 0.0
    %2596 = vmatpush2.msra.mxu0 0.0
    %2597 = vmatprep.subr.mxu0 0.0
    %2598 = vmatpush2.msra.mxu0 0.0
    %2599 = vmatprep.subr.mxu0 0.0
    %2600 = vmatpush2.msra.mxu0 0.0
    %2601 = vmatprep.subr.mxu0 0.0
    %2602 = vmatpush2.msra.mxu0 0.0
    %2603 = vmatprep.subr.mxu0 0.0
    %2604 = vmatpush2.msra.mxu0 0.0
    %2605 = vmatprep.subr.mxu0 0.0
    %2606 = vmatpush2.msra.mxu0 0.0
    %2607 = vmatprep.mubr.f32.mxu0 0.0
    %2608 = vmatmul.mubr.f32.gmra.mxu0 %v2532
    %v2609 = vpop.f32.mrf.mxu0
    %v2610 = vadd.f32 0.0, %v2609
    %v2611 = vpop.f32.mrf.mxu0
    %2612 = vmatprep.mubr.f32.mxu0 0.0
    %2613 = vmatmul.mubr.f32.gmra.mxu0 %v2535
    %v2614 = vpop.f32.mrf.mxu0
    %v2615 = vadd.f32 0.0, %v2614
    %v2616 = vpop.f32.mrf.mxu0
    %2617 = vmatprep.mubr.f32.mxu0 0.0
    %2618 = vmatmul.mubr.f32.gmra.mxu0 %v2538
    %v2619 = vpop.f32.mrf.mxu0
    %v2620 = vadd.f32 0.0, %v2619
    %v2621 = vpop.f32.mrf.mxu0
    %2622 = vmatprep.mubr.f32.mxu0 0.0
    %2623 = vmatmul.mubr.f32.gmra.mxu0 %v2541
    %v2624 = vpop.f32.mrf.mxu0
    %v2625 = vadd.f32 0.0, %v2624
    %v2626 = vpop.f32.mrf.mxu0
    %2627 = vdwg.mxu0
    %v2628 = vadd.f32 %v2434, %v2610
    %v2629 = vadd.f32 %v2435, %v2615
    %v2630 = vadd.f32 %v2436, %v2620
    %v2631 = vadd.f32 %v2437, %v2625
    %s2632 = scalar_lea.vmem %s2, 384
    %v2633 = vld [vmem:[%s2632] sm:$0xff]
    %v2634 = vld [vmem:[%s2632 + $0x8] sm:$0xff]
    %v2635 = vld [vmem:[%s2632 + $0x10] sm:$0xff]
    %v2636 = vld [vmem:[%s2632 + $0x18] sm:$0xff]
    %2637 = vmatprep.subr.mxu0 0.0
    %2638 = vmatpush1.msra.mxu0 %v313
    %2639 = vmatprep.subr.mxu0 0.0
    %2640 = vmatpush1.msra.mxu0 %v312
    %2641 = vmatprep.subr.mxu0 0.0
    %2642 = vmatpush1.msra.mxu0 %v311
    %2643 = vmatprep.subr.mxu0 0.0
    %2644 = vmatpush1.msra.mxu0 %v310
    %2645 = vmatprep.subr.mxu0 0.0
    %2646 = vmatpush1.msra.mxu0 %v309
    %2647 = vmatprep.subr.mxu0 0.0
    %2648 = vmatpush1.msra.mxu0 %v308
    %2649 = vmatprep.subr.mxu0 0.0
    %2650 = vmatpush1.msra.mxu0 %v307
    %2651 = vmatprep.subr.mxu0 0.0
    %2652 = vmatpush1.msra.mxu0 %v306
    %2653 = vmatprep.subr.mxu0 0.0
    %2654 = vmatpush1.msra.mxu0 %v305
    %2655 = vmatprep.subr.mxu0 0.0
    %2656 = vmatpush1.msra.mxu0 %v304
    %2657 = vmatprep.subr.mxu0 0.0
    %2658 = vmatpush1.msra.mxu0 %v303
    %2659 = vmatprep.subr.mxu0 0.0
    %2660 = vmatpush1.msra.mxu0 %v302
    %2661 = vmatprep.subr.mxu0 0.0
    %2662 = vmatpush1.msra.mxu0 %v301
    %2663 = vmatprep.subr.mxu0 0.0
    %2664 = vmatpush1.msra.mxu0 %v300
    %2665 = vmatprep.subr.mxu0 0.0
    %2666 = vmatpush1.msra.mxu0 %v299
    %2667 = vmatprep.subr.mxu0 0.0
    %2668 = vmatpush1.msra.mxu0 %v298
    %2669 = vmatprep.subr.mxu0 0.0
    %2670 = vmatpush2.msra.mxu0 0.0
    %2671 = vmatprep.subr.mxu0 0.0
    %2672 = vmatpush2.msra.mxu0 0.0
    %2673 = vmatprep.subr.mxu0 0.0
    %2674 = vmatpush2.msra.mxu0 0.0
    %2675 = vmatprep.subr.mxu0 0.0
    %2676 = vmatpush2.msra.mxu0 0.0
    %2677 = vmatprep.subr.mxu0 0.0
    %2678 = vmatpush2.msra.mxu0 0.0
    %2679 = vmatprep.subr.mxu0 0.0
    %2680 = vmatpush2.msra.mxu0 0.0
    %2681 = vmatprep.subr.mxu0 0.0
    %2682 = vmatpush2.msra.mxu0 0.0
    %2683 = vmatprep.subr.mxu0 0.0
    %2684 = vmatpush2.msra.mxu0 0.0
    %2685 = vmatprep.subr.mxu0 0.0
    %2686 = vmatpush2.msra.mxu0 0.0
    %2687 = vmatprep.subr.mxu0 0.0
    %2688 = vmatpush2.msra.mxu0 0.0
    %2689 = vmatprep.subr.mxu0 0.0
    %2690 = vmatpush2.msra.mxu0 0.0
    %2691 = vmatprep.subr.mxu0 0.0
    %2692 = vmatpush2.msra.mxu0 0.0
    %2693 = vmatprep.subr.mxu0 0.0
    %2694 = vmatpush2.msra.mxu0 0.0
    %2695 = vmatprep.subr.mxu0 0.0
    %2696 = vmatpush2.msra.mxu0 0.0
    %2697 = vmatprep.subr.mxu0 0.0
    %2698 = vmatpush2.msra.mxu0 0.0
    %2699 = vmatprep.subr.mxu0 0.0
    %2700 = vmatpush2.msra.mxu0 0.0
    %2701 = vmatprep.mubr.f32.mxu0 0.0
    %2702 = vmatmul.mubr.f32.gmra.mxu0 %v2633
    %v2703 = vpop.f32.mrf.mxu0
    %v2704 = vadd.f32 0.0, %v2703
    %v2705 = vpop.f32.mrf.mxu0
    %2706 = vmatprep.mubr.f32.mxu0 0.0
    %2707 = vmatmul.mubr.f32.gmra.mxu0 %v2634
    %v2708 = vpop.f32.mrf.mxu0
    %v2709 = vadd.f32 0.0, %v2708
    %v2710 = vpop.f32.mrf.mxu0
    %2711 = vmatprep.mubr.f32.mxu0 0.0
    %2712 = vmatmul.mubr.f32.gmra.mxu0 %v2635
    %v2713 = vpop.f32.mrf.mxu0
    %v2714 = vadd.f32 0.0, %v2713
    %v2715 = vpop.f32.mrf.mxu0
    %2716 = vmatprep.mubr.f32.mxu0 0.0
    %2717 = vmatmul.mubr.f32.gmra.mxu0 %v2636
    %v2718 = vpop.f32.mrf.mxu0
    %v2719 = vadd.f32 0.0, %v2718
    %v2720 = vpop.f32.mrf.mxu0
    %2721 = vdwg.mxu0
    %s2722 = scalar_lea.vmem %s3, 192
    %v2723 = vld [vmem:[%s2722] sm:$0xff]
    %v2724 = vld [vmem:[%s2722 + $0x8] sm:$0xff]
    %v2726 = vsel %vm72, %v2704, 0
    %v2729 = vsel %vm72, %v2709, 0
    %v2732 = vsel %vm72, %v2714, 0
    %v2735 = vsel %vm72, %v2719, 0
    %2737 = vmatprep.subr.mxu0 0.0
    %2738 = vmatpush1.msra.mxu0 0.0
    %2739 = vmatprep.subr.mxu0 0.0
    %2740 = vmatpush1.msra.mxu0 0.0
    %2741 = vmatprep.subr.mxu0 0.0
    %2742 = vmatpush1.msra.mxu0 0.0
    %2743 = vmatprep.subr.mxu0 0.0
    %2744 = vmatpush1.msra.mxu0 0.0
    %2745 = vmatprep.subr.mxu0 0.0
    %2746 = vmatpush1.msra.mxu0 0.0
    %2747 = vmatprep.subr.mxu0 0.0
    %2748 = vmatpush1.msra.mxu0 0.0
    %2749 = vmatprep.subr.mxu0 0.0
    %2750 = vmatpush1.msra.mxu0 0.0
    %2751 = vmatprep.subr.mxu0 0.0
    %2752 = vmatpush1.msra.mxu0 0.0
    %2753 = vmatprep.subr.mxu0 0.0
    %2754 = vmatpush1.msra.mxu0 0.0
    %2755 = vmatprep.subr.mxu0 0.0
    %2756 = vmatpush1.msra.mxu0 0.0
    %2757 = vmatprep.subr.mxu0 0.0
    %2758 = vmatpush1.msra.mxu0 0.0
    %2759 = vmatprep.subr.mxu0 0.0
    %2760 = vmatpush1.msra.mxu0 0.0
    %2761 = vmatprep.subr.mxu0 0.0
    %2762 = vmatpush1.msra.mxu0 0.0
    %2763 = vmatprep.subr.mxu0 0.0
    %2764 = vmatpush1.msra.mxu0 0.0
    %2765 = vmatprep.subr.mxu0 0.0
    %2766 = vmatpush1.msra.mxu0 %v2724
    %2767 = vmatprep.subr.mxu0 0.0
    %2768 = vmatpush1.msra.mxu0 %v2723
    %2769 = vmatprep.subr.mxu0 0.0
    %2770 = vmatpush2.msra.mxu0 0.0
    %2771 = vmatprep.subr.mxu0 0.0
    %2772 = vmatpush2.msra.mxu0 0.0
    %2773 = vmatprep.subr.mxu0 0.0
    %2774 = vmatpush2.msra.mxu0 0.0
    %2775 = vmatprep.subr.mxu0 0.0
    %2776 = vmatpush2.msra.mxu0 0.0
    %2777 = vmatprep.subr.mxu0 0.0
    %2778 = vmatpush2.msra.mxu0 0.0
    %2779 = vmatprep.subr.mxu0 0.0
    %2780 = vmatpush2.msra.mxu0 0.0
    %2781 = vmatprep.subr.mxu0 0.0
    %2782 = vmatpush2.msra.mxu0 0.0
    %2783 = vmatprep.subr.mxu0 0.0
    %2784 = vmatpush2.msra.mxu0 0.0
    %2785 = vmatprep.subr.mxu0 0.0
    %2786 = vmatpush2.msra.mxu0 0.0
    %2787 = vmatprep.subr.mxu0 0.0
    %2788 = vmatpush2.msra.mxu0 0.0
    %2789 = vmatprep.subr.mxu0 0.0
    %2790 = vmatpush2.msra.mxu0 0.0
    %2791 = vmatprep.subr.mxu0 0.0
    %2792 = vmatpush2.msra.mxu0 0.0
    %2793 = vmatprep.subr.mxu0 0.0
    %2794 = vmatpush2.msra.mxu0 0.0
    %2795 = vmatprep.subr.mxu0 0.0
    %2796 = vmatpush2.msra.mxu0 0.0
    %2797 = vmatprep.subr.mxu0 0.0
    %2798 = vmatpush2.msra.mxu0 0.0
    %2799 = vmatprep.subr.mxu0 0.0
    %2800 = vmatpush2.msra.mxu0 0.0
    %2801 = vmatprep.mubr.f32.mxu0 0.0
    %2802 = vmatmul.mubr.f32.gmra.mxu0 %v2726
    %v2803 = vpop.f32.mrf.mxu0
    %v2804 = vadd.f32 0.0, %v2803
    %v2805 = vpop.f32.mrf.mxu0
    %2806 = vmatprep.mubr.f32.mxu0 0.0
    %2807 = vmatmul.mubr.f32.gmra.mxu0 %v2729
    %v2808 = vpop.f32.mrf.mxu0
    %v2809 = vadd.f32 0.0, %v2808
    %v2810 = vpop.f32.mrf.mxu0
    %2811 = vmatprep.mubr.f32.mxu0 0.0
    %2812 = vmatmul.mubr.f32.gmra.mxu0 %v2732
    %v2813 = vpop.f32.mrf.mxu0
    %v2814 = vadd.f32 0.0, %v2813
    %v2815 = vpop.f32.mrf.mxu0
    %2816 = vmatprep.mubr.f32.mxu0 0.0
    %2817 = vmatmul.mubr.f32.gmra.mxu0 %v2735
    %v2818 = vpop.f32.mrf.mxu0
    %v2819 = vadd.f32 0.0, %v2818
    %v2820 = vpop.f32.mrf.mxu0
    %2821 = vdwg.mxu0
    %v2822 = vadd.f32 %v2628, %v2804
    %v2823 = vadd.f32 %v2629, %v2809
    %v2824 = vadd.f32 %v2630, %v2814
    %v2825 = vadd.f32 %v2631, %v2819
    %s2826 = scalar_lea.vmem %s2, 416
    %v2827 = vld [vmem:[%s2826] sm:$0xff]
    %v2828 = vld [vmem:[%s2826 + $0x8] sm:$0xff]
    %v2829 = vld [vmem:[%s2826 + $0x10] sm:$0xff]
    %v2830 = vld [vmem:[%s2826 + $0x18] sm:$0xff]
    %2831 = vmatprep.subr.mxu0 0.0
    %2832 = vmatpush1.msra.mxu0 %v313
    %2833 = vmatprep.subr.mxu0 0.0
    %2834 = vmatpush1.msra.mxu0 %v312
    %2835 = vmatprep.subr.mxu0 0.0
    %2836 = vmatpush1.msra.mxu0 %v311
    %2837 = vmatprep.subr.mxu0 0.0
    %2838 = vmatpush1.msra.mxu0 %v310
    %2839 = vmatprep.subr.mxu0 0.0
    %2840 = vmatpush1.msra.mxu0 %v309
    %2841 = vmatprep.subr.mxu0 0.0
    %2842 = vmatpush1.msra.mxu0 %v308
    %2843 = vmatprep.subr.mxu0 0.0
    %2844 = vmatpush1.msra.mxu0 %v307
    %2845 = vmatprep.subr.mxu0 0.0
    %2846 = vmatpush1.msra.mxu0 %v306
    %2847 = vmatprep.subr.mxu0 0.0
    %2848 = vmatpush1.msra.mxu0 %v305
    %2849 = vmatprep.subr.mxu0 0.0
    %2850 = vmatpush1.msra.mxu0 %v304
    %2851 = vmatprep.subr.mxu0 0.0
    %2852 = vmatpush1.msra.mxu0 %v303
    %2853 = vmatprep.subr.mxu0 0.0
    %2854 = vmatpush1.msra.mxu0 %v302
    %2855 = vmatprep.subr.mxu0 0.0
    %2856 = vmatpush1.msra.mxu0 %v301
    %2857 = vmatprep.subr.mxu0 0.0
    %2858 = vmatpush1.msra.mxu0 %v300
    %2859 = vmatprep.subr.mxu0 0.0
    %2860 = vmatpush1.msra.mxu0 %v299
    %2861 = vmatprep.subr.mxu0 0.0
    %2862 = vmatpush1.msra.mxu0 %v298
    %2863 = vmatprep.subr.mxu0 0.0
    %2864 = vmatpush2.msra.mxu0 0.0
    %2865 = vmatprep.subr.mxu0 0.0
    %2866 = vmatpush2.msra.mxu0 0.0
    %2867 = vmatprep.subr.mxu0 0.0
    %2868 = vmatpush2.msra.mxu0 0.0
    %2869 = vmatprep.subr.mxu0 0.0
    %2870 = vmatpush2.msra.mxu0 0.0
    %2871 = vmatprep.subr.mxu0 0.0
    %2872 = vmatpush2.msra.mxu0 0.0
    %2873 = vmatprep.subr.mxu0 0.0
    %2874 = vmatpush2.msra.mxu0 0.0
    %2875 = vmatprep.subr.mxu0 0.0
    %2876 = vmatpush2.msra.mxu0 0.0
    %2877 = vmatprep.subr.mxu0 0.0
    %2878 = vmatpush2.msra.mxu0 0.0
    %2879 = vmatprep.subr.mxu0 0.0
    %2880 = vmatpush2.msra.mxu0 0.0
    %2881 = vmatprep.subr.mxu0 0.0
    %2882 = vmatpush2.msra.mxu0 0.0
    %2883 = vmatprep.subr.mxu0 0.0
    %2884 = vmatpush2.msra.mxu0 0.0
    %2885 = vmatprep.subr.mxu0 0.0
    %2886 = vmatpush2.msra.mxu0 0.0
    %2887 = vmatprep.subr.mxu0 0.0
    %2888 = vmatpush2.msra.mxu0 0.0
    %2889 = vmatprep.subr.mxu0 0.0
    %2890 = vmatpush2.msra.mxu0 0.0
    %2891 = vmatprep.subr.mxu0 0.0
    %2892 = vmatpush2.msra.mxu0 0.0
    %2893 = vmatprep.subr.mxu0 0.0
    %2894 = vmatpush2.msra.mxu0 0.0
    %2895 = vmatprep.mubr.f32.mxu0 0.0
    %2896 = vmatmul.mubr.f32.gmra.mxu0 %v2827
    %v2897 = vpop.f32.mrf.mxu0
    %v2898 = vadd.f32 0.0, %v2897
    %v2899 = vpop.f32.mrf.mxu0
    %2900 = vmatprep.mubr.f32.mxu0 0.0
    %2901 = vmatmul.mubr.f32.gmra.mxu0 %v2828
    %v2902 = vpop.f32.mrf.mxu0
    %v2903 = vadd.f32 0.0, %v2902
    %v2904 = vpop.f32.mrf.mxu0
    %2905 = vmatprep.mubr.f32.mxu0 0.0
    %2906 = vmatmul.mubr.f32.gmra.mxu0 %v2829
    %v2907 = vpop.f32.mrf.mxu0
    %v2908 = vadd.f32 0.0, %v2907
    %v2909 = vpop.f32.mrf.mxu0
    %2910 = vmatprep.mubr.f32.mxu0 0.0
    %2911 = vmatmul.mubr.f32.gmra.mxu0 %v2830
    %v2912 = vpop.f32.mrf.mxu0
    %v2913 = vadd.f32 0.0, %v2912
    %v2914 = vpop.f32.mrf.mxu0
    %2915 = vdwg.mxu0
    %s2916 = scalar_lea.vmem %s3, 208
    %v2917 = vld [vmem:[%s2916] sm:$0xff]
    %v2918 = vld [vmem:[%s2916 + $0x8] sm:$0xff]
    %v2920 = vsel %vm72, %v2898, 0
    %v2923 = vsel %vm72, %v2903, 0
    %v2926 = vsel %vm72, %v2908, 0
    %v2929 = vsel %vm72, %v2913, 0
    %2931 = vmatprep.subr.mxu0 0.0
    %2932 = vmatpush1.msra.mxu0 0.0
    %2933 = vmatprep.subr.mxu0 0.0
    %2934 = vmatpush1.msra.mxu0 0.0
    %2935 = vmatprep.subr.mxu0 0.0
    %2936 = vmatpush1.msra.mxu0 0.0
    %2937 = vmatprep.subr.mxu0 0.0
    %2938 = vmatpush1.msra.mxu0 0.0
    %2939 = vmatprep.subr.mxu0 0.0
    %2940 = vmatpush1.msra.mxu0 0.0
    %2941 = vmatprep.subr.mxu0 0.0
    %2942 = vmatpush1.msra.mxu0 0.0
    %2943 = vmatprep.subr.mxu0 0.0
    %2944 = vmatpush1.msra.mxu0 0.0
    %2945 = vmatprep.subr.mxu0 0.0
    %2946 = vmatpush1.msra.mxu0 0.0
    %2947 = vmatprep.subr.mxu0 0.0
    %2948 = vmatpush1.msra.mxu0 0.0
    %2949 = vmatprep.subr.mxu0 0.0
    %2950 = vmatpush1.msra.mxu0 0.0
    %2951 = vmatprep.subr.mxu0 0.0
    %2952 = vmatpush1.msra.mxu0 0.0
    %2953 = vmatprep.subr.mxu0 0.0
    %2954 = vmatpush1.msra.mxu0 0.0
    %2955 = vmatprep.subr.mxu0 0.0
    %2956 = vmatpush1.msra.mxu0 0.0
    %2957 = vmatprep.subr.mxu0 0.0
    %2958 = vmatpush1.msra.mxu0 0.0
    %2959 = vmatprep.subr.mxu0 0.0
    %2960 = vmatpush1.msra.mxu0 %v2918
    %2961 = vmatprep.subr.mxu0 0.0
    %2962 = vmatpush1.msra.mxu0 %v2917
    %2963 = vmatprep.subr.mxu0 0.0
    %2964 = vmatpush2.msra.mxu0 0.0
    %2965 = vmatprep.subr.mxu0 0.0
    %2966 = vmatpush2.msra.mxu0 0.0
    %2967 = vmatprep.subr.mxu0 0.0
    %2968 = vmatpush2.msra.mxu0 0.0
    %2969 = vmatprep.subr.mxu0 0.0
    %2970 = vmatpush2.msra.mxu0 0.0
    %2971 = vmatprep.subr.mxu0 0.0
    %2972 = vmatpush2.msra.mxu0 0.0
    %2973 = vmatprep.subr.mxu0 0.0
    %2974 = vmatpush2.msra.mxu0 0.0
    %2975 = vmatprep.subr.mxu0 0.0
    %2976 = vmatpush2.msra.mxu0 0.0
    %2977 = vmatprep.subr.mxu0 0.0
    %2978 = vmatpush2.msra.mxu0 0.0
    %2979 = vmatprep.subr.mxu0 0.0
    %2980 = vmatpush2.msra.mxu0 0.0
    %2981 = vmatprep.subr.mxu0 0.0
    %2982 = vmatpush2.msra.mxu0 0.0
    %2983 = vmatprep.subr.mxu0 0.0
    %2984 = vmatpush2.msra.mxu0 0.0
    %2985 = vmatprep.subr.mxu0 0.0
    %2986 = vmatpush2.msra.mxu0 0.0
    %2987 = vmatprep.subr.mxu0 0.0
    %2988 = vmatpush2.msra.mxu0 0.0
    %2989 = vmatprep.subr.mxu0 0.0
    %2990 = vmatpush2.msra.mxu0 0.0
    %2991 = vmatprep.subr.mxu0 0.0
    %2992 = vmatpush2.msra.mxu0 0.0
    %2993 = vmatprep.subr.mxu0 0.0
    %2994 = vmatpush2.msra.mxu0 0.0
    %2995 = vmatprep.mubr.f32.mxu0 0.0
    %2996 = vmatmul.mubr.f32.gmra.mxu0 %v2920
    %v2997 = vpop.f32.mrf.mxu0
    %v2998 = vadd.f32 0.0, %v2997
    %v2999 = vpop.f32.mrf.mxu0
    %3000 = vmatprep.mubr.f32.mxu0 0.0
    %3001 = vmatmul.mubr.f32.gmra.mxu0 %v2923
    %v3002 = vpop.f32.mrf.mxu0
    %v3003 = vadd.f32 0.0, %v3002
    %v3004 = vpop.f32.mrf.mxu0
    %3005 = vmatprep.mubr.f32.mxu0 0.0
    %3006 = vmatmul.mubr.f32.gmra.mxu0 %v2926
    %v3007 = vpop.f32.mrf.mxu0
    %v3008 = vadd.f32 0.0, %v3007
    %v3009 = vpop.f32.mrf.mxu0
    %3010 = vmatprep.mubr.f32.mxu0 0.0
    %3011 = vmatmul.mubr.f32.gmra.mxu0 %v2929
    %v3012 = vpop.f32.mrf.mxu0
    %v3013 = vadd.f32 0.0, %v3012
    %v3014 = vpop.f32.mrf.mxu0
    %3015 = vdwg.mxu0
    %v3016 = vadd.f32 %v2822, %v2998
    %v3017 = vadd.f32 %v2823, %v3003
    %v3018 = vadd.f32 %v2824, %v3008
    %v3019 = vadd.f32 %v2825, %v3013
    %s3020 = scalar_lea.vmem %s2, 448
    %v3021 = vld [vmem:[%s3020] sm:$0xff]
    %v3022 = vld [vmem:[%s3020 + $0x8] sm:$0xff]
    %v3023 = vld [vmem:[%s3020 + $0x10] sm:$0xff]
    %v3024 = vld [vmem:[%s3020 + $0x18] sm:$0xff]
    %3025 = vmatprep.subr.mxu0 0.0
    %3026 = vmatpush1.msra.mxu0 %v313
    %3027 = vmatprep.subr.mxu0 0.0
    %3028 = vmatpush1.msra.mxu0 %v312
    %3029 = vmatprep.subr.mxu0 0.0
    %3030 = vmatpush1.msra.mxu0 %v311
    %3031 = vmatprep.subr.mxu0 0.0
    %3032 = vmatpush1.msra.mxu0 %v310
    %3033 = vmatprep.subr.mxu0 0.0
    %3034 = vmatpush1.msra.mxu0 %v309
    %3035 = vmatprep.subr.mxu0 0.0
    %3036 = vmatpush1.msra.mxu0 %v308
    %3037 = vmatprep.subr.mxu0 0.0
    %3038 = vmatpush1.msra.mxu0 %v307
    %3039 = vmatprep.subr.mxu0 0.0
    %3040 = vmatpush1.msra.mxu0 %v306
    %3041 = vmatprep.subr.mxu0 0.0
    %3042 = vmatpush1.msra.mxu0 %v305
    %3043 = vmatprep.subr.mxu0 0.0
    %3044 = vmatpush1.msra.mxu0 %v304
    %3045 = vmatprep.subr.mxu0 0.0
    %3046 = vmatpush1.msra.mxu0 %v303
    %3047 = vmatprep.subr.mxu0 0.0
    %3048 = vmatpush1.msra.mxu0 %v302
    %3049 = vmatprep.subr.mxu0 0.0
    %3050 = vmatpush1.msra.mxu0 %v301
    %3051 = vmatprep.subr.mxu0 0.0
    %3052 = vmatpush1.msra.mxu0 %v300
    %3053 = vmatprep.subr.mxu0 0.0
    %3054 = vmatpush1.msra.mxu0 %v299
    %3055 = vmatprep.subr.mxu0 0.0
    %3056 = vmatpush1.msra.mxu0 %v298
    %3057 = vmatprep.subr.mxu0 0.0
    %3058 = vmatpush2.msra.mxu0 0.0
    %3059 = vmatprep.subr.mxu0 0.0
    %3060 = vmatpush2.msra.mxu0 0.0
    %3061 = vmatprep.subr.mxu0 0.0
    %3062 = vmatpush2.msra.mxu0 0.0
    %3063 = vmatprep.subr.mxu0 0.0
    %3064 = vmatpush2.msra.mxu0 0.0
    %3065 = vmatprep.subr.mxu0 0.0
    %3066 = vmatpush2.msra.mxu0 0.0
    %3067 = vmatprep.subr.mxu0 0.0
    %3068 = vmatpush2.msra.mxu0 0.0
    %3069 = vmatprep.subr.mxu0 0.0
    %3070 = vmatpush2.msra.mxu0 0.0
    %3071 = vmatprep.subr.mxu0 0.0
    %3072 = vmatpush2.msra.mxu0 0.0
    %3073 = vmatprep.subr.mxu0 0.0
    %3074 = vmatpush2.msra.mxu0 0.0
    %3075 = vmatprep.subr.mxu0 0.0
    %3076 = vmatpush2.msra.mxu0 0.0
    %3077 = vmatprep.subr.mxu0 0.0
    %3078 = vmatpush2.msra.mxu0 0.0
    %3079 = vmatprep.subr.mxu0 0.0
    %3080 = vmatpush2.msra.mxu0 0.0
    %3081 = vmatprep.subr.mxu0 0.0
    %3082 = vmatpush2.msra.mxu0 0.0
    %3083 = vmatprep.subr.mxu0 0.0
    %3084 = vmatpush2.msra.mxu0 0.0
    %3085 = vmatprep.subr.mxu0 0.0
    %3086 = vmatpush2.msra.mxu0 0.0
    %3087 = vmatprep.subr.mxu0 0.0
    %3088 = vmatpush2.msra.mxu0 0.0
    %3089 = vmatprep.mubr.f32.mxu0 0.0
    %3090 = vmatmul.mubr.f32.gmra.mxu0 %v3021
    %v3091 = vpop.f32.mrf.mxu0
    %v3092 = vadd.f32 0.0, %v3091
    %v3093 = vpop.f32.mrf.mxu0
    %3094 = vmatprep.mubr.f32.mxu0 0.0
    %3095 = vmatmul.mubr.f32.gmra.mxu0 %v3022
    %v3096 = vpop.f32.mrf.mxu0
    %v3097 = vadd.f32 0.0, %v3096
    %v3098 = vpop.f32.mrf.mxu0
    %3099 = vmatprep.mubr.f32.mxu0 0.0
    %3100 = vmatmul.mubr.f32.gmra.mxu0 %v3023
    %v3101 = vpop.f32.mrf.mxu0
    %v3102 = vadd.f32 0.0, %v3101
    %v3103 = vpop.f32.mrf.mxu0
    %3104 = vmatprep.mubr.f32.mxu0 0.0
    %3105 = vmatmul.mubr.f32.gmra.mxu0 %v3024
    %v3106 = vpop.f32.mrf.mxu0
    %v3107 = vadd.f32 0.0, %v3106
    %v3108 = vpop.f32.mrf.mxu0
    %3109 = vdwg.mxu0
    %s3110 = scalar_lea.vmem %s3, 224
    %v3111 = vld [vmem:[%s3110] sm:$0xff]
    %v3112 = vld [vmem:[%s3110 + $0x8] sm:$0xff]
    %v3114 = vsel %vm72, %v3092, 0
    %v3117 = vsel %vm72, %v3097, 0
    %v3120 = vsel %vm72, %v3102, 0
    %v3123 = vsel %vm72, %v3107, 0
    %3125 = vmatprep.subr.mxu0 0.0
    %3126 = vmatpush1.msra.mxu0 0.0
    %3127 = vmatprep.subr.mxu0 0.0
    %3128 = vmatpush1.msra.mxu0 0.0
    %3129 = vmatprep.subr.mxu0 0.0
    %3130 = vmatpush1.msra.mxu0 0.0
    %3131 = vmatprep.subr.mxu0 0.0
    %3132 = vmatpush1.msra.mxu0 0.0
    %3133 = vmatprep.subr.mxu0 0.0
    %3134 = vmatpush1.msra.mxu0 0.0
    %3135 = vmatprep.subr.mxu0 0.0
    %3136 = vmatpush1.msra.mxu0 0.0
    %3137 = vmatprep.subr.mxu0 0.0
    %3138 = vmatpush1.msra.mxu0 0.0
    %3139 = vmatprep.subr.mxu0 0.0
    %3140 = vmatpush1.msra.mxu0 0.0
    %3141 = vmatprep.subr.mxu0 0.0
    %3142 = vmatpush1.msra.mxu0 0.0
    %3143 = vmatprep.subr.mxu0 0.0
    %3144 = vmatpush1.msra.mxu0 0.0
    %3145 = vmatprep.subr.mxu0 0.0
    %3146 = vmatpush1.msra.mxu0 0.0
    %3147 = vmatprep.subr.mxu0 0.0
    %3148 = vmatpush1.msra.mxu0 0.0
    %3149 = vmatprep.subr.mxu0 0.0
    %3150 = vmatpush1.msra.mxu0 0.0
    %3151 = vmatprep.subr.mxu0 0.0
    %3152 = vmatpush1.msra.mxu0 0.0
    %3153 = vmatprep.subr.mxu0 0.0
    %3154 = vmatpush1.msra.mxu0 %v3112
    %3155 = vmatprep.subr.mxu0 0.0
    %3156 = vmatpush1.msra.mxu0 %v3111
    %3157 = vmatprep.subr.mxu0 0.0
    %3158 = vmatpush2.msra.mxu0 0.0
    %3159 = vmatprep.subr.mxu0 0.0
    %3160 = vmatpush2.msra.mxu0 0.0
    %3161 = vmatprep.subr.mxu0 0.0
    %3162 = vmatpush2.msra.mxu0 0.0
    %3163 = vmatprep.subr.mxu0 0.0
    %3164 = vmatpush2.msra.mxu0 0.0
    %3165 = vmatprep.subr.mxu0 0.0
    %3166 = vmatpush2.msra.mxu0 0.0
    %3167 = vmatprep.subr.mxu0 0.0
    %3168 = vmatpush2.msra.mxu0 0.0
    %3169 = vmatprep.subr.mxu0 0.0
    %3170 = vmatpush2.msra.mxu0 0.0
    %3171 = vmatprep.subr.mxu0 0.0
    %3172 = vmatpush2.msra.mxu0 0.0
    %3173 = vmatprep.subr.mxu0 0.0
    %3174 = vmatpush2.msra.mxu0 0.0
    %3175 = vmatprep.subr.mxu0 0.0
    %3176 = vmatpush2.msra.mxu0 0.0
    %3177 = vmatprep.subr.mxu0 0.0
    %3178 = vmatpush2.msra.mxu0 0.0
    %3179 = vmatprep.subr.mxu0 0.0
    %3180 = vmatpush2.msra.mxu0 0.0
    %3181 = vmatprep.subr.mxu0 0.0
    %3182 = vmatpush2.msra.mxu0 0.0
    %3183 = vmatprep.subr.mxu0 0.0
    %3184 = vmatpush2.msra.mxu0 0.0
    %3185 = vmatprep.subr.mxu0 0.0
    %3186 = vmatpush2.msra.mxu0 0.0
    %3187 = vmatprep.subr.mxu0 0.0
    %3188 = vmatpush2.msra.mxu0 0.0
    %3189 = vmatprep.mubr.f32.mxu0 0.0
    %3190 = vmatmul.mubr.f32.gmra.mxu0 %v3114
    %v3191 = vpop.f32.mrf.mxu0
    %v3192 = vadd.f32 0.0, %v3191
    %v3193 = vpop.f32.mrf.mxu0
    %3194 = vmatprep.mubr.f32.mxu0 0.0
    %3195 = vmatmul.mubr.f32.gmra.mxu0 %v3117
    %v3196 = vpop.f32.mrf.mxu0
    %v3197 = vadd.f32 0.0, %v3196
    %v3198 = vpop.f32.mrf.mxu0
    %3199 = vmatprep.mubr.f32.mxu0 0.0
    %3200 = vmatmul.mubr.f32.gmra.mxu0 %v3120
    %v3201 = vpop.f32.mrf.mxu0
    %v3202 = vadd.f32 0.0, %v3201
    %v3203 = vpop.f32.mrf.mxu0
    %3204 = vmatprep.mubr.f32.mxu0 0.0
    %3205 = vmatmul.mubr.f32.gmra.mxu0 %v3123
    %v3206 = vpop.f32.mrf.mxu0
    %v3207 = vadd.f32 0.0, %v3206
    %v3208 = vpop.f32.mrf.mxu0
    %3209 = vdwg.mxu0
    %v3210 = vadd.f32 %v3016, %v3192
    %v3211 = vadd.f32 %v3017, %v3197
    %v3212 = vadd.f32 %v3018, %v3202
    %v3213 = vadd.f32 %v3019, %v3207
    %s3214 = scalar_lea.vmem %s2, 480
    %v3215 = vld [vmem:[%s3214] sm:$0xff]
    %v3216 = vld [vmem:[%s3214 + $0x8] sm:$0xff]
    %v3217 = vld [vmem:[%s3214 + $0x10] sm:$0xff]
    %v3218 = vld [vmem:[%s3214 + $0x18] sm:$0xff]
    %3219 = vmatprep.subr.mxu0 0.0
    %3220 = vmatpush1.msra.mxu0 %v313
    %3221 = vmatprep.subr.mxu0 0.0
    %3222 = vmatpush1.msra.mxu0 %v312
    %3223 = vmatprep.subr.mxu0 0.0
    %3224 = vmatpush1.msra.mxu0 %v311
    %3225 = vmatprep.subr.mxu0 0.0
    %3226 = vmatpush1.msra.mxu0 %v310
    %3227 = vmatprep.subr.mxu0 0.0
    %3228 = vmatpush1.msra.mxu0 %v309
    %3229 = vmatprep.subr.mxu0 0.0
    %3230 = vmatpush1.msra.mxu0 %v308
    %3231 = vmatprep.subr.mxu0 0.0
    %3232 = vmatpush1.msra.mxu0 %v307
    %3233 = vmatprep.subr.mxu0 0.0
    %3234 = vmatpush1.msra.mxu0 %v306
    %3235 = vmatprep.subr.mxu0 0.0
    %3236 = vmatpush1.msra.mxu0 %v305
    %3237 = vmatprep.subr.mxu0 0.0
    %3238 = vmatpush1.msra.mxu0 %v304
    %3239 = vmatprep.subr.mxu0 0.0
    %3240 = vmatpush1.msra.mxu0 %v303
    %3241 = vmatprep.subr.mxu0 0.0
    %3242 = vmatpush1.msra.mxu0 %v302
    %3243 = vmatprep.subr.mxu0 0.0
    %3244 = vmatpush1.msra.mxu0 %v301
    %3245 = vmatprep.subr.mxu0 0.0
    %3246 = vmatpush1.msra.mxu0 %v300
    %3247 = vmatprep.subr.mxu0 0.0
    %3248 = vmatpush1.msra.mxu0 %v299
    %3249 = vmatprep.subr.mxu0 0.0
    %3250 = vmatpush1.msra.mxu0 %v298
    %3251 = vmatprep.subr.mxu0 0.0
    %3252 = vmatpush2.msra.mxu0 0.0
    %3253 = vmatprep.subr.mxu0 0.0
    %3254 = vmatpush2.msra.mxu0 0.0
    %3255 = vmatprep.subr.mxu0 0.0
    %3256 = vmatpush2.msra.mxu0 0.0
    %3257 = vmatprep.subr.mxu0 0.0
    %3258 = vmatpush2.msra.mxu0 0.0
    %3259 = vmatprep.subr.mxu0 0.0
    %3260 = vmatpush2.msra.mxu0 0.0
    %3261 = vmatprep.subr.mxu0 0.0
    %3262 = vmatpush2.msra.mxu0 0.0
    %3263 = vmatprep.subr.mxu0 0.0
    %3264 = vmatpush2.msra.mxu0 0.0
    %3265 = vmatprep.subr.mxu0 0.0
    %3266 = vmatpush2.msra.mxu0 0.0
    %3267 = vmatprep.subr.mxu0 0.0
    %3268 = vmatpush2.msra.mxu0 0.0
    %3269 = vmatprep.subr.mxu0 0.0
    %3270 = vmatpush2.msra.mxu0 0.0
    %3271 = vmatprep.subr.mxu0 0.0
    %3272 = vmatpush2.msra.mxu0 0.0
    %3273 = vmatprep.subr.mxu0 0.0
    %3274 = vmatpush2.msra.mxu0 0.0
    %3275 = vmatprep.subr.mxu0 0.0
    %3276 = vmatpush2.msra.mxu0 0.0
    %3277 = vmatprep.subr.mxu0 0.0
    %3278 = vmatpush2.msra.mxu0 0.0
    %3279 = vmatprep.subr.mxu0 0.0
    %3280 = vmatpush2.msra.mxu0 0.0
    %3281 = vmatprep.subr.mxu0 0.0
    %3282 = vmatpush2.msra.mxu0 0.0
    %3283 = vmatprep.mubr.f32.mxu0 0.0
    %3284 = vmatmul.mubr.f32.gmra.mxu0 %v3215
    %v3285 = vpop.f32.mrf.mxu0
    %v3286 = vadd.f32 0.0, %v3285
    %v3287 = vpop.f32.mrf.mxu0
    %3288 = vmatprep.mubr.f32.mxu0 0.0
    %3289 = vmatmul.mubr.f32.gmra.mxu0 %v3216
    %v3290 = vpop.f32.mrf.mxu0
    %v3291 = vadd.f32 0.0, %v3290
    %v3292 = vpop.f32.mrf.mxu0
    %3293 = vmatprep.mubr.f32.mxu0 0.0
    %3294 = vmatmul.mubr.f32.gmra.mxu0 %v3217
    %v3295 = vpop.f32.mrf.mxu0
    %v3296 = vadd.f32 0.0, %v3295
    %v3297 = vpop.f32.mrf.mxu0
    %3298 = vmatprep.mubr.f32.mxu0 0.0
    %3299 = vmatmul.mubr.f32.gmra.mxu0 %v3218
    %v3300 = vpop.f32.mrf.mxu0
    %v3301 = vadd.f32 0.0, %v3300
    %v3302 = vpop.f32.mrf.mxu0
    %3303 = vdwg.mxu0
    %s3304 = scalar_lea.vmem %s3, 240
    %v3305 = vld [vmem:[%s3304] sm:$0xff]
    %v3306 = vld [vmem:[%s3304 + $0x8] sm:$0xff]
    %v3308 = vsel %vm72, %v3286, 0
    %v3311 = vsel %vm72, %v3291, 0
    %v3314 = vsel %vm72, %v3296, 0
    %v3317 = vsel %vm72, %v3301, 0
    %3319 = vmatprep.subr.mxu0 0.0
    %3320 = vmatpush1.msra.mxu0 0.0
    %3321 = vmatprep.subr.mxu0 0.0
    %3322 = vmatpush1.msra.mxu0 0.0
    %3323 = vmatprep.subr.mxu0 0.0
    %3324 = vmatpush1.msra.mxu0 0.0
    %3325 = vmatprep.subr.mxu0 0.0
    %3326 = vmatpush1.msra.mxu0 0.0
    %3327 = vmatprep.subr.mxu0 0.0
    %3328 = vmatpush1.msra.mxu0 0.0
    %3329 = vmatprep.subr.mxu0 0.0
    %3330 = vmatpush1.msra.mxu0 0.0
    %3331 = vmatprep.subr.mxu0 0.0
    %3332 = vmatpush1.msra.mxu0 0.0
    %3333 = vmatprep.subr.mxu0 0.0
    %3334 = vmatpush1.msra.mxu0 0.0
    %3335 = vmatprep.subr.mxu0 0.0
    %3336 = vmatpush1.msra.mxu0 0.0
    %3337 = vmatprep.subr.mxu0 0.0
    %3338 = vmatpush1.msra.mxu0 0.0
    %3339 = vmatprep.subr.mxu0 0.0
    %3340 = vmatpush1.msra.mxu0 0.0
    %3341 = vmatprep.subr.mxu0 0.0
    %3342 = vmatpush1.msra.mxu0 0.0
    %3343 = vmatprep.subr.mxu0 0.0
    %3344 = vmatpush1.msra.mxu0 0.0
    %3345 = vmatprep.subr.mxu0 0.0
    %3346 = vmatpush1.msra.mxu0 0.0
    %3347 = vmatprep.subr.mxu0 0.0
    %3348 = vmatpush1.msra.mxu0 %v3306
    %3349 = vmatprep.subr.mxu0 0.0
    %3350 = vmatpush1.msra.mxu0 %v3305
    %3351 = vmatprep.subr.mxu0 0.0
    %3352 = vmatpush2.msra.mxu0 0.0
    %3353 = vmatprep.subr.mxu0 0.0
    %3354 = vmatpush2.msra.mxu0 0.0
    %3355 = vmatprep.subr.mxu0 0.0
    %3356 = vmatpush2.msra.mxu0 0.0
    %3357 = vmatprep.subr.mxu0 0.0
    %3358 = vmatpush2.msra.mxu0 0.0
    %3359 = vmatprep.subr.mxu0 0.0
    %3360 = vmatpush2.msra.mxu0 0.0
    %3361 = vmatprep.subr.mxu0 0.0
    %3362 = vmatpush2.msra.mxu0 0.0
    %3363 = vmatprep.subr.mxu0 0.0
    %3364 = vmatpush2.msra.mxu0 0.0
    %3365 = vmatprep.subr.mxu0 0.0
    %3366 = vmatpush2.msra.mxu0 0.0
    %3367 = vmatprep.subr.mxu0 0.0
    %3368 = vmatpush2.msra.mxu0 0.0
    %3369 = vmatprep.subr.mxu0 0.0
    %3370 = vmatpush2.msra.mxu0 0.0
    %3371 = vmatprep.subr.mxu0 0.0
    %3372 = vmatpush2.msra.mxu0 0.0
    %3373 = vmatprep.subr.mxu0 0.0
    %3374 = vmatpush2.msra.mxu0 0.0
    %3375 = vmatprep.subr.mxu0 0.0
    %3376 = vmatpush2.msra.mxu0 0.0
    %3377 = vmatprep.subr.mxu0 0.0
    %3378 = vmatpush2.msra.mxu0 0.0
    %3379 = vmatprep.subr.mxu0 0.0
    %3380 = vmatpush2.msra.mxu0 0.0
    %3381 = vmatprep.subr.mxu0 0.0
    %3382 = vmatpush2.msra.mxu0 0.0
    %3383 = vmatprep.mubr.f32.mxu0 0.0
    %3384 = vmatmul.mubr.f32.gmra.mxu0 %v3308
    %v3385 = vpop.f32.mrf.mxu0
    %v3386 = vadd.f32 0.0, %v3385
    %v3387 = vpop.f32.mrf.mxu0
    %3388 = vmatprep.mubr.f32.mxu0 0.0
    %3389 = vmatmul.mubr.f32.gmra.mxu0 %v3311
    %v3390 = vpop.f32.mrf.mxu0
    %v3391 = vadd.f32 0.0, %v3390
    %v3392 = vpop.f32.mrf.mxu0
    %3393 = vmatprep.mubr.f32.mxu0 0.0
    %3394 = vmatmul.mubr.f32.gmra.mxu0 %v3314
    %v3395 = vpop.f32.mrf.mxu0
    %v3396 = vadd.f32 0.0, %v3395
    %v3397 = vpop.f32.mrf.mxu0
    %3398 = vmatprep.mubr.f32.mxu0 0.0
    %3399 = vmatmul.mubr.f32.gmra.mxu0 %v3317
    %v3400 = vpop.f32.mrf.mxu0
    %v3401 = vadd.f32 0.0, %v3400
    %v3402 = vpop.f32.mrf.mxu0
    %3403 = vdwg.mxu0
    %v3404 = vadd.f32 %v3210, %v3386
    %v3405 = vadd.f32 %v3211, %v3391
    %v3406 = vadd.f32 %v3212, %v3396
    %v3407 = vadd.f32 %v3213, %v3401
    %vm3408 = vcmask 261120
    %v3409 = vsel %vm3408, %v3404, 0.0
    %v3410 = vsel %vm3408, %v3405, 0.0
    %v3411 = vadd.f32 %v3409, %v3410
    %v3412 = vsel %vm3408, %v3406, 0.0
    %v3413 = vadd.f32 %v3411, %v3412
    %v3414 = vsel %vm3408, %v3407, 0.0
    %v3415 = vadd.f32 %v3413, %v3414
    %v3416 = vrot.slane %v3415, 4
    %v3417 = vadd.f32 %v3415, %v3416
    %v3418 = vrot.slane %v3417, 2
    %v3419 = vadd.f32 %v3417, %v3418
    %v3420 = vrot.slane %v3419, 1
    %v3421 = vadd.f32 %v3419, %v3420
    %v3422 = vrcp.pop 32.0
    %v3423 = vmul.f32 %v3421, %v3422
    %v3424 = vsub.f32 %v3404, %v3423
    %v3425 = vsub.f32 %v3405, %v3423
    %v3426 = vsub.f32 %v3406, %v3423
    %v3427 = vsub.f32 %v3407, %v3423
    %v3428 = vmul.f32 %v3424, %v3424
    %v3429 = vmul.f32 %v3425, %v3425
    %v3430 = vmul.f32 %v3426, %v3426
    %v3431 = vmul.f32 %v3427, %v3427
    %v3432 = vsel %vm3408, %v3428, 0.0
    %v3433 = vsel %vm3408, %v3429, 0.0
    %v3434 = vadd.f32 %v3432, %v3433
    %v3435 = vsel %vm3408, %v3430, 0.0
    %v3436 = vadd.f32 %v3434, %v3435
    %v3437 = vsel %vm3408, %v3431, 0.0
    %v3438 = vadd.f32 %v3436, %v3437
    %v3439 = vrot.slane %v3438, 4
    %v3440 = vadd.f32 %v3438, %v3439
    %v3441 = vrot.slane %v3440, 2
    %v3442 = vadd.f32 %v3440, %v3441
    %v3443 = vrot.slane %v3442, 1
    %v3444 = vadd.f32 %v3442, %v3443
    %v3445 = vmul.f32 %v3444, %v3422
    %v3446 = vadd.f32 %v3445, 1e-05
    %v3447 = vrsqrt.pop %v3446
    %v3448 = vmul.f32 %v3424, %v3447
    %v3449 = vmul.f32 %v3425, %v3447
    %v3450 = vmul.f32 %v3426, %v3447
    %v3451 = vmul.f32 %v3427, %v3447
    %v3452 = vld [vmem:[%s4] sm:$0x1]
    %v3454 = vlaneseq
    %v3455 = vshrl.u32 %v3454, 7
    %v3456 = vsub.s32 0, %v3455
    %v3457 = vrot.slane %v3452, %v3456
    %v3459 = vmul.f32 %v3448, %v3457
    %v3460 = vmul.f32 %v3449, %v3457
    %v3461 = vmul.f32 %v3450, %v3457
    %v3462 = vmul.f32 %v3451, %v3457
    %v3463 = vld [vmem:[%s5] sm:$0x1]
    %v3465 = vlaneseq
    %v3466 = vshrl.u32 %v3465, 7
    %v3467 = vsub.s32 0, %v3466
    %v3468 = vrot.slane %v3463, %v3467
    %v3470 = vadd.f32 %v3459, %v3468
    %v3471 = vadd.f32 %v3460, %v3468
    %v3472 = vadd.f32 %v3461, %v3468
    %v3473 = vadd.f32 %v3462, %v3468
    %vm3474 = vcmp.gt.f32.partialorder %v3470, 0.0
    %vm3475 = vcmp.gt.f32.partialorder %v3471, 0.0
    %vm3476 = vcmp.gt.f32.partialorder %v3472, 0.0
    %vm3477 = vcmp.gt.f32.partialorder %v3473, 0.0
    %v3478 = vmul.f32 %v3470, 0.2
    %v3479 = vmul.f32 %v3471, 0.2
    %v3480 = vmul.f32 %v3472, 0.2
    %v3481 = vmul.f32 %v3473, 0.2
    %v3482 = vsel %vm3474, %v3470, %v3478
    %v3483 = vsel %vm3475, %v3471, %v3479
    %v3484 = vsel %vm3476, %v3472, %v3480
    %v3485 = vsel %vm3477, %v3473, %v3481
    %v3486 = vld [vmem:[%s6] sm:$0xff]
    %v3488 = vsel %vm3408, %v3486, 0
    %3490 = vmatprep.subr.mxu0 0.0
    %3491 = vmatpush1.msra.mxu0 0.0
    %3492 = vmatprep.subr.mxu0 0.0
    %3493 = vmatpush1.msra.mxu0 0.0
    %3494 = vmatprep.subr.mxu0 0.0
    %3495 = vmatpush1.msra.mxu0 0.0
    %3496 = vmatprep.subr.mxu0 0.0
    %3497 = vmatpush1.msra.mxu0 0.0
    %3498 = vmatprep.subr.mxu0 0.0
    %3499 = vmatpush1.msra.mxu0 0.0
    %3500 = vmatprep.subr.mxu0 0.0
    %3501 = vmatpush1.msra.mxu0 0.0
    %3502 = vmatprep.subr.mxu0 0.0
    %3503 = vmatpush1.msra.mxu0 0.0
    %3504 = vmatprep.subr.mxu0 0.0
    %3505 = vmatpush1.msra.mxu0 0.0
    %3506 = vmatprep.subr.mxu0 0.0
    %3507 = vmatpush1.msra.mxu0 0.0
    %3508 = vmatprep.subr.mxu0 0.0
    %3509 = vmatpush1.msra.mxu0 0.0
    %3510 = vmatprep.subr.mxu0 0.0
    %3511 = vmatpush1.msra.mxu0 0.0
    %3512 = vmatprep.subr.mxu0 0.0
    %3513 = vmatpush1.msra.mxu0 0.0
    %3514 = vmatprep.subr.mxu0 0.0
    %3515 = vmatpush1.msra.mxu0 %v3485
    %3516 = vmatprep.subr.mxu0 0.0
    %3517 = vmatpush1.msra.mxu0 %v3484
    %3518 = vmatprep.subr.mxu0 0.0
    %3519 = vmatpush1.msra.mxu0 %v3483
    %3520 = vmatprep.subr.mxu0 0.0
    %3521 = vmatpush1.msra.mxu0 %v3482
    %3522 = vmatprep.subr.mxu0 0.0
    %3523 = vmatpush2.msra.mxu0 0.0
    %3524 = vmatprep.subr.mxu0 0.0
    %3525 = vmatpush2.msra.mxu0 0.0
    %3526 = vmatprep.subr.mxu0 0.0
    %3527 = vmatpush2.msra.mxu0 0.0
    %3528 = vmatprep.subr.mxu0 0.0
    %3529 = vmatpush2.msra.mxu0 0.0
    %3530 = vmatprep.subr.mxu0 0.0
    %3531 = vmatpush2.msra.mxu0 0.0
    %3532 = vmatprep.subr.mxu0 0.0
    %3533 = vmatpush2.msra.mxu0 0.0
    %3534 = vmatprep.subr.mxu0 0.0
    %3535 = vmatpush2.msra.mxu0 0.0
    %3536 = vmatprep.subr.mxu0 0.0
    %3537 = vmatpush2.msra.mxu0 0.0
    %3538 = vmatprep.subr.mxu0 0.0
    %3539 = vmatpush2.msra.mxu0 0.0
    %3540 = vmatprep.subr.mxu0 0.0
    %3541 = vmatpush2.msra.mxu0 0.0
    %3542 = vmatprep.subr.mxu0 0.0
    %3543 = vmatpush2.msra.mxu0 0.0
    %3544 = vmatprep.subr.mxu0 0.0
    %3545 = vmatpush2.msra.mxu0 0.0
    %3546 = vmatprep.subr.mxu0 0.0
    %3547 = vmatpush2.msra.mxu0 0.0
    %3548 = vmatprep.subr.mxu0 0.0
    %3549 = vmatpush2.msra.mxu0 0.0
    %3550 = vmatprep.subr.mxu0 0.0
    %3551 = vmatpush2.msra.mxu0 0.0
    %3552 = vmatprep.subr.mxu0 0.0
    %3553 = vmatpush2.msra.mxu0 0.0
    %3554 = vmatprep.mubr.f32.mxu0 0.0
    %3555 = vmatmul.mubr.f32.gmra.mxu0 %v3488
    %v3556 = vpop.f32.mrf.mxu0
    %v3557 = vadd.f32 0.0, %v3556
    %v3558 = vpop.f32.mrf.mxu0
    %3559 = vdwg.mxu0
    %v3560 = vld [vmem:[%s7] sm:$0xff]
    %v3561 = vld [vmem:[%s7 + $0x8] sm:$0xff]
    %v3562 = vld [vmem:[%s7 + $0x10] sm:$0xff]
    %v3563 = vld [vmem:[%s7 + $0x18] sm:$0xff]
    %s3564 = scalar_lea.vmem %s6, 8
    %v3565 = vld [vmem:[%s3564] sm:$0xff]
    %v3567 = vsel %vm3408, %v3565, 0
    %3569 = vmatprep.subr.mxu0 0.0
    %3570 = vmatpush1.msra.mxu0 0.0
    %3571 = vmatprep.subr.mxu0 0.0
    %3572 = vmatpush1.msra.mxu0 0.0
    %3573 = vmatprep.subr.mxu0 0.0
    %3574 = vmatpush1.msra.mxu0 0.0
    %3575 = vmatprep.subr.mxu0 0.0
    %3576 = vmatpush1.msra.mxu0 0.0
    %3577 = vmatprep.subr.mxu0 0.0
    %3578 = vmatpush1.msra.mxu0 0.0
    %3579 = vmatprep.subr.mxu0 0.0
    %3580 = vmatpush1.msra.mxu0 0.0
    %3581 = vmatprep.subr.mxu0 0.0
    %3582 = vmatpush1.msra.mxu0 0.0
    %3583 = vmatprep.subr.mxu0 0.0
    %3584 = vmatpush1.msra.mxu0 0.0
    %3585 = vmatprep.subr.mxu0 0.0
    %3586 = vmatpush1.msra.mxu0 0.0
    %3587 = vmatprep.subr.mxu0 0.0
    %3588 = vmatpush1.msra.mxu0 0.0
    %3589 = vmatprep.subr.mxu0 0.0
    %3590 = vmatpush1.msra.mxu0 0.0
    %3591 = vmatprep.subr.mxu0 0.0
    %3592 = vmatpush1.msra.mxu0 0.0
    %3593 = vmatprep.subr.mxu0 0.0
    %3594 = vmatpush1.msra.mxu0 %v3485
    %3595 = vmatprep.subr.mxu0 0.0
    %3596 = vmatpush1.msra.mxu0 %v3484
    %3597 = vmatprep.subr.mxu0 0.0
    %3598 = vmatpush1.msra.mxu0 %v3483
    %3599 = vmatprep.subr.mxu0 0.0
    %3600 = vmatpush1.msra.mxu0 %v3482
    %3601 = vmatprep.subr.mxu0 0.0
    %3602 = vmatpush2.msra.mxu0 0.0
    %3603 = vmatprep.subr.mxu0 0.0
    %3604 = vmatpush2.msra.mxu0 0.0
    %3605 = vmatprep.subr.mxu0 0.0
    %3606 = vmatpush2.msra.mxu0 0.0
    %3607 = vmatprep.subr.mxu0 0.0
    %3608 = vmatpush2.msra.mxu0 0.0
    %3609 = vmatprep.subr.mxu0 0.0
    %3610 = vmatpush2.msra.mxu0 0.0
    %3611 = vmatprep.subr.mxu0 0.0
    %3612 = vmatpush2.msra.mxu0 0.0
    %3613 = vmatprep.subr.mxu0 0.0
    %3614 = vmatpush2.msra.mxu0 0.0
    %3615 = vmatprep.subr.mxu0 0.0
    %3616 = vmatpush2.msra.mxu0 0.0
    %3617 = vmatprep.subr.mxu0 0.0
    %3618 = vmatpush2.msra.mxu0 0.0
    %3619 = vmatprep.subr.mxu0 0.0
    %3620 = vmatpush2.msra.mxu0 0.0
    %3621 = vmatprep.subr.mxu0 0.0
    %3622 = vmatpush2.msra.mxu0 0.0
    %3623 = vmatprep.subr.mxu0 0.0
    %3624 = vmatpush2.msra.mxu0 0.0
    %3625 = vmatprep.subr.mxu0 0.0
    %3626 = vmatpush2.msra.mxu0 0.0
    %3627 = vmatprep.subr.mxu0 0.0
    %3628 = vmatpush2.msra.mxu0 0.0
    %3629 = vmatprep.subr.mxu0 0.0
    %3630 = vmatpush2.msra.mxu0 0.0
    %3631 = vmatprep.subr.mxu0 0.0
    %3632 = vmatpush2.msra.mxu0 0.0
    %3633 = vmatprep.mubr.f32.mxu0 0.0
    %3634 = vmatmul.mubr.f32.gmra.mxu0 %v3567
    %v3635 = vpop.f32.mrf.mxu0
    %v3636 = vadd.f32 0.0, %v3635
    %v3637 = vpop.f32.mrf.mxu0
    %3638 = vdwg.mxu0
    %s3639 = scalar_lea.vmem %s7, 32
    %v3640 = vld [vmem:[%s3639] sm:$0xff]
    %v3641 = vld [vmem:[%s3639 + $0x8] sm:$0xff]
    %v3642 = vld [vmem:[%s3639 + $0x10] sm:$0xff]
    %v3643 = vld [vmem:[%s3639 + $0x18] sm:$0xff]
    %v3645 = vsel %vm3408, %v3636, 0
    %3647 = vmatprep.subr.mxu0 0.0
    %3648 = vmatpush1.msra.mxu0 0.0
    %3649 = vmatprep.subr.mxu0 0.0
    %3650 = vmatpush1.msra.mxu0 0.0
    %3651 = vmatprep.subr.mxu0 0.0
    %3652 = vmatpush1.msra.mxu0 0.0
    %3653 = vmatprep.subr.mxu0 0.0
    %3654 = vmatpush1.msra.mxu0 0.0
    %3655 = vmatprep.subr.mxu0 0.0
    %3656 = vmatpush1.msra.mxu0 0.0
    %3657 = vmatprep.subr.mxu0 0.0
    %3658 = vmatpush1.msra.mxu0 0.0
    %3659 = vmatprep.subr.mxu0 0.0
    %3660 = vmatpush1.msra.mxu0 0.0
    %3661 = vmatprep.subr.mxu0 0.0
    %3662 = vmatpush1.msra.mxu0 0.0
    %3663 = vmatprep.subr.mxu0 0.0
    %3664 = vmatpush1.msra.mxu0 0.0
    %3665 = vmatprep.subr.mxu0 0.0
    %3666 = vmatpush1.msra.mxu0 0.0
    %3667 = vmatprep.subr.mxu0 0.0
    %3668 = vmatpush1.msra.mxu0 0.0
    %3669 = vmatprep.subr.mxu0 0.0
    %3670 = vmatpush1.msra.mxu0 0.0
    %3671 = vmatprep.subr.mxu0 0.0
    %3672 = vmatpush1.msra.mxu0 %v3643
    %3673 = vmatprep.subr.mxu0 0.0
    %3674 = vmatpush1.msra.mxu0 %v3642
    %3675 = vmatprep.subr.mxu0 0.0
    %3676 = vmatpush1.msra.mxu0 %v3641
    %3677 = vmatprep.subr.mxu0 0.0
    %3678 = vmatpush1.msra.mxu0 %v3640
    %3679 = vmatprep.subr.mxu0 0.0
    %3680 = vmatpush2.msra.mxu0 0.0
    %3681 = vmatprep.subr.mxu0 0.0
    %3682 = vmatpush2.msra.mxu0 0.0
    %3683 = vmatprep.subr.mxu0 0.0
    %3684 = vmatpush2.msra.mxu0 0.0
    %3685 = vmatprep.subr.mxu0 0.0
    %3686 = vmatpush2.msra.mxu0 0.0
    %3687 = vmatprep.subr.mxu0 0.0
    %3688 = vmatpush2.msra.mxu0 0.0
    %3689 = vmatprep.subr.mxu0 0.0
    %3690 = vmatpush2.msra.mxu0 0.0
    %3691 = vmatprep.subr.mxu0 0.0
    %3692 = vmatpush2.msra.mxu0 0.0
    %3693 = vmatprep.subr.mxu0 0.0
    %3694 = vmatpush2.msra.mxu0 0.0
    %3695 = vmatprep.subr.mxu0 0.0
    %3696 = vmatpush2.msra.mxu0 0.0
    %3697 = vmatprep.subr.mxu0 0.0
    %3698 = vmatpush2.msra.mxu0 0.0
    %3699 = vmatprep.subr.mxu0 0.0
    %3700 = vmatpush2.msra.mxu0 0.0
    %3701 = vmatprep.subr.mxu0 0.0
    %3702 = vmatpush2.msra.mxu0 0.0
    %3703 = vmatprep.subr.mxu0 0.0
    %3704 = vmatpush2.msra.mxu0 0.0
    %3705 = vmatprep.subr.mxu0 0.0
    %3706 = vmatpush2.msra.mxu0 0.0
    %3707 = vmatprep.subr.mxu0 0.0
    %3708 = vmatpush2.msra.mxu0 0.0
    %3709 = vmatprep.subr.mxu0 0.0
    %3710 = vmatpush2.msra.mxu0 0.0
    %3711 = vmatprep.mubr.f32.mxu0 0.0
    %3712 = vmatmul.mubr.f32.gmra.mxu0 %v3645
    %v3713 = vpop.f32.mrf.mxu0
    %v3714 = vadd.f32 0.0, %v3713
    %v3715 = vpop.f32.mrf.mxu0
    %3716 = vdwg.mxu0
    %v3718 = vsel %vm3408, %v3557, 0
    %3720 = vmatprep.subr.mxu0 0.0
    %3721 = vmatpush1.msra.mxu0 0.0
    %3722 = vmatprep.subr.mxu0 0.0
    %3723 = vmatpush1.msra.mxu0 0.0
    %3724 = vmatprep.subr.mxu0 0.0
    %3725 = vmatpush1.msra.mxu0 0.0
    %3726 = vmatprep.subr.mxu0 0.0
    %3727 = vmatpush1.msra.mxu0 0.0
    %3728 = vmatprep.subr.mxu0 0.0
    %3729 = vmatpush1.msra.mxu0 0.0
    %3730 = vmatprep.subr.mxu0 0.0
    %3731 = vmatpush1.msra.mxu0 0.0
    %3732 = vmatprep.subr.mxu0 0.0
    %3733 = vmatpush1.msra.mxu0 0.0
    %3734 = vmatprep.subr.mxu0 0.0
    %3735 = vmatpush1.msra.mxu0 0.0
    %3736 = vmatprep.subr.mxu0 0.0
    %3737 = vmatpush1.msra.mxu0 0.0
    %3738 = vmatprep.subr.mxu0 0.0
    %3739 = vmatpush1.msra.mxu0 0.0
    %3740 = vmatprep.subr.mxu0 0.0
    %3741 = vmatpush1.msra.mxu0 0.0
    %3742 = vmatprep.subr.mxu0 0.0
    %3743 = vmatpush1.msra.mxu0 0.0
    %3744 = vmatprep.subr.mxu0 0.0
    %3745 = vmatpush1.msra.mxu0 %v3563
    %3746 = vmatprep.subr.mxu0 0.0
    %3747 = vmatpush1.msra.mxu0 %v3562
    %3748 = vmatprep.subr.mxu0 0.0
    %3749 = vmatpush1.msra.mxu0 %v3561
    %3750 = vmatprep.subr.mxu0 0.0
    %3751 = vmatpush1.msra.mxu0 %v3560
    %3752 = vmatprep.subr.mxu0 0.0
    %3753 = vmatpush2.msra.mxu0 0.0
    %3754 = vmatprep.subr.mxu0 0.0
    %3755 = vmatpush2.msra.mxu0 0.0
    %3756 = vmatprep.subr.mxu0 0.0
    %3757 = vmatpush2.msra.mxu0 0.0
    %3758 = vmatprep.subr.mxu0 0.0
    %3759 = vmatpush2.msra.mxu0 0.0
    %3760 = vmatprep.subr.mxu0 0.0
    %3761 = vmatpush2.msra.mxu0 0.0
    %3762 = vmatprep.subr.mxu0 0.0
    %3763 = vmatpush2.msra.mxu0 0.0
    %3764 = vmatprep.subr.mxu0 0.0
    %3765 = vmatpush2.msra.mxu0 0.0
    %3766 = vmatprep.subr.mxu0 0.0
    %3767 = vmatpush2.msra.mxu0 0.0
    %3768 = vmatprep.subr.mxu0 0.0
    %3769 = vmatpush2.msra.mxu0 0.0
    %3770 = vmatprep.subr.mxu0 0.0
    %3771 = vmatpush2.msra.mxu0 0.0
    %3772 = vmatprep.subr.mxu0 0.0
    %3773 = vmatpush2.msra.mxu0 0.0
    %3774 = vmatprep.subr.mxu0 0.0
    %3775 = vmatpush2.msra.mxu0 0.0
    %3776 = vmatprep.subr.mxu0 0.0
    %3777 = vmatpush2.msra.mxu0 0.0
    %3778 = vmatprep.subr.mxu0 0.0
    %3779 = vmatpush2.msra.mxu0 0.0
    %3780 = vmatprep.subr.mxu0 0.0
    %3781 = vmatpush2.msra.mxu0 0.0
    %3782 = vmatprep.subr.mxu0 0.0
    %3783 = vmatpush2.msra.mxu0 0.0
    %3784 = vmatprep.mubr.f32.mxu0 0.0
    %3785 = vmatmul.mubr.f32.gmra.mxu0 %v3718
    %v3786 = vpop.f32.mrf.mxu0
    %v3787 = vadd.f32 %v3714, %v3786
    %v3788 = vpop.f32.mrf.mxu0
    %3789 = vdwg.mxu0
    %s3790 = scalar_lea.vmem %s6, 16
    %v3791 = vld [vmem:[%s3790] sm:$0xff]
    %v3793 = vsel %vm3408, %v3791, 0
    %3795 = vmatprep.subr.mxu0 0.0
    %3796 = vmatpush1.msra.mxu0 0.0
    %3797 = vmatprep.subr.mxu0 0.0
    %3798 = vmatpush1.msra.mxu0 0.0
    %3799 = vmatprep.subr.mxu0 0.0
    %3800 = vmatpush1.msra.mxu0 0.0
    %3801 = vmatprep.subr.mxu0 0.0
    %3802 = vmatpush1.msra.mxu0 0.0
    %3803 = vmatprep.subr.mxu0 0.0
    %3804 = vmatpush1.msra.mxu0 0.0
    %3805 = vmatprep.subr.mxu0 0.0
    %3806 = vmatpush1.msra.mxu0 0.0
    %3807 = vmatprep.subr.mxu0 0.0
    %3808 = vmatpush1.msra.mxu0 0.0
    %3809 = vmatprep.subr.mxu0 0.0
    %3810 = vmatpush1.msra.mxu0 0.0
    %3811 = vmatprep.subr.mxu0 0.0
    %3812 = vmatpush1.msra.mxu0 0.0
    %3813 = vmatprep.subr.mxu0 0.0
    %3814 = vmatpush1.msra.mxu0 0.0
    %3815 = vmatprep.subr.mxu0 0.0
    %3816 = vmatpush1.msra.mxu0 0.0
    %3817 = vmatprep.subr.mxu0 0.0
    %3818 = vmatpush1.msra.mxu0 0.0
    %3819 = vmatprep.subr.mxu0 0.0
    %3820 = vmatpush1.msra.mxu0 %v3485
    %3821 = vmatprep.subr.mxu0 0.0
    %3822 = vmatpush1.msra.mxu0 %v3484
    %3823 = vmatprep.subr.mxu0 0.0
    %3824 = vmatpush1.msra.mxu0 %v3483
    %3825 = vmatprep.subr.mxu0 0.0
    %3826 = vmatpush1.msra.mxu0 %v3482
    %3827 = vmatprep.subr.mxu0 0.0
    %3828 = vmatpush2.msra.mxu0 0.0
    %3829 = vmatprep.subr.mxu0 0.0
    %3830 = vmatpush2.msra.mxu0 0.0
    %3831 = vmatprep.subr.mxu0 0.0
    %3832 = vmatpush2.msra.mxu0 0.0
    %3833 = vmatprep.subr.mxu0 0.0
    %3834 = vmatpush2.msra.mxu0 0.0
    %3835 = vmatprep.subr.mxu0 0.0
    %3836 = vmatpush2.msra.mxu0 0.0
    %3837 = vmatprep.subr.mxu0 0.0
    %3838 = vmatpush2.msra.mxu0 0.0
    %3839 = vmatprep.subr.mxu0 0.0
    %3840 = vmatpush2.msra.mxu0 0.0
    %3841 = vmatprep.subr.mxu0 0.0
    %3842 = vmatpush2.msra.mxu0 0.0
    %3843 = vmatprep.subr.mxu0 0.0
    %3844 = vmatpush2.msra.mxu0 0.0
    %3845 = vmatprep.subr.mxu0 0.0
    %3846 = vmatpush2.msra.mxu0 0.0
    %3847 = vmatprep.subr.mxu0 0.0
    %3848 = vmatpush2.msra.mxu0 0.0
    %3849 = vmatprep.subr.mxu0 0.0
    %3850 = vmatpush2.msra.mxu0 0.0
    %3851 = vmatprep.subr.mxu0 0.0
    %3852 = vmatpush2.msra.mxu0 0.0
    %3853 = vmatprep.subr.mxu0 0.0
    %3854 = vmatpush2.msra.mxu0 0.0
    %3855 = vmatprep.subr.mxu0 0.0
    %3856 = vmatpush2.msra.mxu0 0.0
    %3857 = vmatprep.subr.mxu0 0.0
    %3858 = vmatpush2.msra.mxu0 0.0
    %3859 = vmatprep.mubr.f32.mxu0 0.0
    %3860 = vmatmul.mubr.f32.gmra.mxu0 %v3793
    %v3861 = vpop.f32.mrf.mxu0
    %v3862 = vadd.f32 0.0, %v3861
    %v3863 = vpop.f32.mrf.mxu0
    %3864 = vdwg.mxu0
    %s3865 = scalar_lea.vmem %s7, 64
    %v3866 = vld [vmem:[%s3865] sm:$0xff]
    %v3867 = vld [vmem:[%s3865 + $0x8] sm:$0xff]
    %v3868 = vld [vmem:[%s3865 + $0x10] sm:$0xff]
    %v3869 = vld [vmem:[%s3865 + $0x18] sm:$0xff]
    %v3871 = vsel %vm3408, %v3862, 0
    %3873 = vmatprep.subr.mxu0 0.0
    %3874 = vmatpush1.msra.mxu0 0.0
    %3875 = vmatprep.subr.mxu0 0.0
    %3876 = vmatpush1.msra.mxu0 0.0
    %3877 = vmatprep.subr.mxu0 0.0
    %3878 = vmatpush1.msra.mxu0 0.0
    %3879 = vmatprep.subr.mxu0 0.0
    %3880 = vmatpush1.msra.mxu0 0.0
    %3881 = vmatprep.subr.mxu0 0.0
    %3882 = vmatpush1.msra.mxu0 0.0
    %3883 = vmatprep.subr.mxu0 0.0
    %3884 = vmatpush1.msra.mxu0 0.0
    %3885 = vmatprep.subr.mxu0 0.0
    %3886 = vmatpush1.msra.mxu0 0.0
    %3887 = vmatprep.subr.mxu0 0.0
    %3888 = vmatpush1.msra.mxu0 0.0
    %3889 = vmatprep.subr.mxu0 0.0
    %3890 = vmatpush1.msra.mxu0 0.0
    %3891 = vmatprep.subr.mxu0 0.0
    %3892 = vmatpush1.msra.mxu0 0.0
    %3893 = vmatprep.subr.mxu0 0.0
    %3894 = vmatpush1.msra.mxu0 0.0
    %3895 = vmatprep.subr.mxu0 0.0
    %3896 = vmatpush1.msra.mxu0 0.0
    %3897 = vmatprep.subr.mxu0 0.0
    %3898 = vmatpush1.msra.mxu0 %v3869
    %3899 = vmatprep.subr.mxu0 0.0
    %3900 = vmatpush1.msra.mxu0 %v3868
    %3901 = vmatprep.subr.mxu0 0.0
    %3902 = vmatpush1.msra.mxu0 %v3867
    %3903 = vmatprep.subr.mxu0 0.0
    %3904 = vmatpush1.msra.mxu0 %v3866
    %3905 = vmatprep.subr.mxu0 0.0
    %3906 = vmatpush2.msra.mxu0 0.0
    %3907 = vmatprep.subr.mxu0 0.0
    %3908 = vmatpush2.msra.mxu0 0.0
    %3909 = vmatprep.subr.mxu0 0.0
    %3910 = vmatpush2.msra.mxu0 0.0
    %3911 = vmatprep.subr.mxu0 0.0
    %3912 = vmatpush2.msra.mxu0 0.0
    %3913 = vmatprep.subr.mxu0 0.0
    %3914 = vmatpush2.msra.mxu0 0.0
    %3915 = vmatprep.subr.mxu0 0.0
    %3916 = vmatpush2.msra.mxu0 0.0
    %3917 = vmatprep.subr.mxu0 0.0
    %3918 = vmatpush2.msra.mxu0 0.0
    %3919 = vmatprep.subr.mxu0 0.0
    %3920 = vmatpush2.msra.mxu0 0.0
    %3921 = vmatprep.subr.mxu0 0.0
    %3922 = vmatpush2.msra.mxu0 0.0
    %3923 = vmatprep.subr.mxu0 0.0
    %3924 = vmatpush2.msra.mxu0 0.0
    %3925 = vmatprep.subr.mxu0 0.0
    %3926 = vmatpush2.msra.mxu0 0.0
    %3927 = vmatprep.subr.mxu0 0.0
    %3928 = vmatpush2.msra.mxu0 0.0
    %3929 = vmatprep.subr.mxu0 0.0
    %3930 = vmatpush2.msra.mxu0 0.0
    %3931 = vmatprep.subr.mxu0 0.0
    %3932 = vmatpush2.msra.mxu0 0.0
    %3933 = vmatprep.subr.mxu0 0.0
    %3934 = vmatpush2.msra.mxu0 0.0
    %3935 = vmatprep.subr.mxu0 0.0
    %3936 = vmatpush2.msra.mxu0 0.0
    %3937 = vmatprep.mubr.f32.mxu0 0.0
    %3938 = vmatmul.mubr.f32.gmra.mxu0 %v3871
    %v3939 = vpop.f32.mrf.mxu0
    %v3940 = vadd.f32 0.0, %v3939
    %v3941 = vpop.f32.mrf.mxu0
    %3942 = vdwg.mxu0
    %v3943 = vadd.f32 %v3787, %v3940
    %s3944 = scalar_lea.vmem %s6, 24
    %v3945 = vld [vmem:[%s3944] sm:$0xff]
    %v3947 = vsel %vm3408, %v3945, 0
    %3949 = vmatprep.subr.mxu0 0.0
    %3950 = vmatpush1.msra.mxu0 0.0
    %3951 = vmatprep.subr.mxu0 0.0
    %3952 = vmatpush1.msra.mxu0 0.0
    %3953 = vmatprep.subr.mxu0 0.0
    %3954 = vmatpush1.msra.mxu0 0.0
    %3955 = vmatprep.subr.mxu0 0.0
    %3956 = vmatpush1.msra.mxu0 0.0
    %3957 = vmatprep.subr.mxu0 0.0
    %3958 = vmatpush1.msra.mxu0 0.0
    %3959 = vmatprep.subr.mxu0 0.0
    %3960 = vmatpush1.msra.mxu0 0.0
    %3961 = vmatprep.subr.mxu0 0.0
    %3962 = vmatpush1.msra.mxu0 0.0
    %3963 = vmatprep.subr.mxu0 0.0
    %3964 = vmatpush1.msra.mxu0 0.0
    %3965 = vmatprep.subr.mxu0 0.0
    %3966 = vmatpush1.msra.mxu0 0.0
    %3967 = vmatprep.subr.mxu0 0.0
    %3968 = vmatpush1.msra.mxu0 0.0
    %3969 = vmatprep.subr.mxu0 0.0
    %3970 = vmatpush1.msra.mxu0 0.0
    %3971 = vmatprep.subr.mxu0 0.0
    %3972 = vmatpush1.msra.mxu0 0.0
    %3973 = vmatprep.subr.mxu0 0.0
    %3974 = vmatpush1.msra.mxu0 %v3485
    %3975 = vmatprep.subr.mxu0 0.0
    %3976 = vmatpush1.msra.mxu0 %v3484
    %3977 = vmatprep.subr.mxu0 0.0
    %3978 = vmatpush1.msra.mxu0 %v3483
    %3979 = vmatprep.subr.mxu0 0.0
    %3980 = vmatpush1.msra.mxu0 %v3482
    %3981 = vmatprep.subr.mxu0 0.0
    %3982 = vmatpush2.msra.mxu0 0.0
    %3983 = vmatprep.subr.mxu0 0.0
    %3984 = vmatpush2.msra.mxu0 0.0
    %3985 = vmatprep.subr.mxu0 0.0
    %3986 = vmatpush2.msra.mxu0 0.0
    %3987 = vmatprep.subr.mxu0 0.0
    %3988 = vmatpush2.msra.mxu0 0.0
    %3989 = vmatprep.subr.mxu0 0.0
    %3990 = vmatpush2.msra.mxu0 0.0
    %3991 = vmatprep.subr.mxu0 0.0
    %3992 = vmatpush2.msra.mxu0 0.0
    %3993 = vmatprep.subr.mxu0 0.0
    %3994 = vmatpush2.msra.mxu0 0.0
    %3995 = vmatprep.subr.mxu0 0.0
    %3996 = vmatpush2.msra.mxu0 0.0
    %3997 = vmatprep.subr.mxu0 0.0
    %3998 = vmatpush2.msra.mxu0 0.0
    %3999 = vmatprep.subr.mxu0 0.0
    %4000 = vmatpush2.msra.mxu0 0.0
    %4001 = vmatprep.subr.mxu0 0.0
    %4002 = vmatpush2.msra.mxu0 0.0
    %4003 = vmatprep.subr.mxu0 0.0
    %4004 = vmatpush2.msra.mxu0 0.0
    %4005 = vmatprep.subr.mxu0 0.0
    %4006 = vmatpush2.msra.mxu0 0.0
    %4007 = vmatprep.subr.mxu0 0.0
    %4008 = vmatpush2.msra.mxu0 0.0
    %4009 = vmatprep.subr.mxu0 0.0
    %4010 = vmatpush2.msra.mxu0 0.0
    %4011 = vmatprep.subr.mxu0 0.0
    %4012 = vmatpush2.msra.mxu0 0.0
    %4013 = vmatprep.mubr.f32.mxu0 0.0
    %4014 = vmatmul.mubr.f32.gmra.mxu0 %v3947
    %v4015 = vpop.f32.mrf.mxu0
    %v4016 = vadd.f32 0.0, %v4015
    %v4017 = vpop.f32.mrf.mxu0
    %4018 = vdwg.mxu0
    %s4019 = scalar_lea.vmem %s7, 96
    %v4020 = vld [vmem:[%s4019] sm:$0xff]
    %v4021 = vld [vmem:[%s4019 + $0x8] sm:$0xff]
    %v4022 = vld [vmem:[%s4019 + $0x10] sm:$0xff]
    %v4023 = vld [vmem:[%s4019 + $0x18] sm:$0xff]
    %v4025 = vsel %vm3408, %v4016, 0
    %4027 = vmatprep.subr.mxu0 0.0
    %4028 = vmatpush1.msra.mxu0 0.0
    %4029 = vmatprep.subr.mxu0 0.0
    %4030 = vmatpush1.msra.mxu0 0.0
    %4031 = vmatprep.subr.mxu0 0.0
    %4032 = vmatpush1.msra.mxu0 0.0
    %4033 = vmatprep.subr.mxu0 0.0
    %4034 = vmatpush1.msra.mxu0 0.0
    %4035 = vmatprep.subr.mxu0 0.0
    %4036 = vmatpush1.msra.mxu0 0.0
    %4037 = vmatprep.subr.mxu0 0.0
    %4038 = vmatpush1.msra.mxu0 0.0
    %4039 = vmatprep.subr.mxu0 0.0
    %4040 = vmatpush1.msra.mxu0 0.0
    %4041 = vmatprep.subr.mxu0 0.0
    %4042 = vmatpush1.msra.mxu0 0.0
    %4043 = vmatprep.subr.mxu0 0.0
    %4044 = vmatpush1.msra.mxu0 0.0
    %4045 = vmatprep.subr.mxu0 0.0
    %4046 = vmatpush1.msra.mxu0 0.0
    %4047 = vmatprep.subr.mxu0 0.0
    %4048 = vmatpush1.msra.mxu0 0.0
    %4049 = vmatprep.subr.mxu0 0.0
    %4050 = vmatpush1.msra.mxu0 0.0
    %4051 = vmatprep.subr.mxu0 0.0
    %4052 = vmatpush1.msra.mxu0 %v4023
    %4053 = vmatprep.subr.mxu0 0.0
    %4054 = vmatpush1.msra.mxu0 %v4022
    %4055 = vmatprep.subr.mxu0 0.0
    %4056 = vmatpush1.msra.mxu0 %v4021
    %4057 = vmatprep.subr.mxu0 0.0
    %4058 = vmatpush1.msra.mxu0 %v4020
    %4059 = vmatprep.subr.mxu0 0.0
    %4060 = vmatpush2.msra.mxu0 0.0
    %4061 = vmatprep.subr.mxu0 0.0
    %4062 = vmatpush2.msra.mxu0 0.0
    %4063 = vmatprep.subr.mxu0 0.0
    %4064 = vmatpush2.msra.mxu0 0.0
    %4065 = vmatprep.subr.mxu0 0.0
    %4066 = vmatpush2.msra.mxu0 0.0
    %4067 = vmatprep.subr.mxu0 0.0
    %4068 = vmatpush2.msra.mxu0 0.0
    %4069 = vmatprep.subr.mxu0 0.0
    %4070 = vmatpush2.msra.mxu0 0.0
    %4071 = vmatprep.subr.mxu0 0.0
    %4072 = vmatpush2.msra.mxu0 0.0
    %4073 = vmatprep.subr.mxu0 0.0
    %4074 = vmatpush2.msra.mxu0 0.0
    %4075 = vmatprep.subr.mxu0 0.0
    %4076 = vmatpush2.msra.mxu0 0.0
    %4077 = vmatprep.subr.mxu0 0.0
    %4078 = vmatpush2.msra.mxu0 0.0
    %4079 = vmatprep.subr.mxu0 0.0
    %4080 = vmatpush2.msra.mxu0 0.0
    %4081 = vmatprep.subr.mxu0 0.0
    %4082 = vmatpush2.msra.mxu0 0.0
    %4083 = vmatprep.subr.mxu0 0.0
    %4084 = vmatpush2.msra.mxu0 0.0
    %4085 = vmatprep.subr.mxu0 0.0
    %4086 = vmatpush2.msra.mxu0 0.0
    %4087 = vmatprep.subr.mxu0 0.0
    %4088 = vmatpush2.msra.mxu0 0.0
    %4089 = vmatprep.subr.mxu0 0.0
    %4090 = vmatpush2.msra.mxu0 0.0
    %4091 = vmatprep.mubr.f32.mxu0 0.0
    %4092 = vmatmul.mubr.f32.gmra.mxu0 %v4025
    %v4093 = vpop.f32.mrf.mxu0
    %v4094 = vadd.f32 0.0, %v4093
    %v4095 = vpop.f32.mrf.mxu0
    %4096 = vdwg.mxu0
    %v4097 = vadd.f32 %v3943, %v4094
    %s4098 = scalar_lea.vmem %s6, 32
    %v4099 = vld [vmem:[%s4098] sm:$0xff]
    %v4101 = vsel %vm3408, %v4099, 0
    %4103 = vmatprep.subr.mxu0 0.0
    %4104 = vmatpush1.msra.mxu0 0.0
    %4105 = vmatprep.subr.mxu0 0.0
    %4106 = vmatpush1.msra.mxu0 0.0
    %4107 = vmatprep.subr.mxu0 0.0
    %4108 = vmatpush1.msra.mxu0 0.0
    %4109 = vmatprep.subr.mxu0 0.0
    %4110 = vmatpush1.msra.mxu0 0.0
    %4111 = vmatprep.subr.mxu0 0.0
    %4112 = vmatpush1.msra.mxu0 0.0
    %4113 = vmatprep.subr.mxu0 0.0
    %4114 = vmatpush1.msra.mxu0 0.0
    %4115 = vmatprep.subr.mxu0 0.0
    %4116 = vmatpush1.msra.mxu0 0.0
    %4117 = vmatprep.subr.mxu0 0.0
    %4118 = vmatpush1.msra.mxu0 0.0
    %4119 = vmatprep.subr.mxu0 0.0
    %4120 = vmatpush1.msra.mxu0 0.0
    %4121 = vmatprep.subr.mxu0 0.0
    %4122 = vmatpush1.msra.mxu0 0.0
    %4123 = vmatprep.subr.mxu0 0.0
    %4124 = vmatpush1.msra.mxu0 0.0
    %4125 = vmatprep.subr.mxu0 0.0
    %4126 = vmatpush1.msra.mxu0 0.0
    %4127 = vmatprep.subr.mxu0 0.0
    %4128 = vmatpush1.msra.mxu0 %v3485
    %4129 = vmatprep.subr.mxu0 0.0
    %4130 = vmatpush1.msra.mxu0 %v3484
    %4131 = vmatprep.subr.mxu0 0.0
    %4132 = vmatpush1.msra.mxu0 %v3483
    %4133 = vmatprep.subr.mxu0 0.0
    %4134 = vmatpush1.msra.mxu0 %v3482
    %4135 = vmatprep.subr.mxu0 0.0
    %4136 = vmatpush2.msra.mxu0 0.0
    %4137 = vmatprep.subr.mxu0 0.0
    %4138 = vmatpush2.msra.mxu0 0.0
    %4139 = vmatprep.subr.mxu0 0.0
    %4140 = vmatpush2.msra.mxu0 0.0
    %4141 = vmatprep.subr.mxu0 0.0
    %4142 = vmatpush2.msra.mxu0 0.0
    %4143 = vmatprep.subr.mxu0 0.0
    %4144 = vmatpush2.msra.mxu0 0.0
    %4145 = vmatprep.subr.mxu0 0.0
    %4146 = vmatpush2.msra.mxu0 0.0
    %4147 = vmatprep.subr.mxu0 0.0
    %4148 = vmatpush2.msra.mxu0 0.0
    %4149 = vmatprep.subr.mxu0 0.0
    %4150 = vmatpush2.msra.mxu0 0.0
    %4151 = vmatprep.subr.mxu0 0.0
    %4152 = vmatpush2.msra.mxu0 0.0
    %4153 = vmatprep.subr.mxu0 0.0
    %4154 = vmatpush2.msra.mxu0 0.0
    %4155 = vmatprep.subr.mxu0 0.0
    %4156 = vmatpush2.msra.mxu0 0.0
    %4157 = vmatprep.subr.mxu0 0.0
    %4158 = vmatpush2.msra.mxu0 0.0
    %4159 = vmatprep.subr.mxu0 0.0
    %4160 = vmatpush2.msra.mxu0 0.0
    %4161 = vmatprep.subr.mxu0 0.0
    %4162 = vmatpush2.msra.mxu0 0.0
    %4163 = vmatprep.subr.mxu0 0.0
    %4164 = vmatpush2.msra.mxu0 0.0
    %4165 = vmatprep.subr.mxu0 0.0
    %4166 = vmatpush2.msra.mxu0 0.0
    %4167 = vmatprep.mubr.f32.mxu0 0.0
    %4168 = vmatmul.mubr.f32.gmra.mxu0 %v4101
    %v4169 = vpop.f32.mrf.mxu0
    %v4170 = vadd.f32 0.0, %v4169
    %v4171 = vpop.f32.mrf.mxu0
    %4172 = vdwg.mxu0
    %s4173 = scalar_lea.vmem %s7, 128
    %v4174 = vld [vmem:[%s4173] sm:$0xff]
    %v4175 = vld [vmem:[%s4173 + $0x8] sm:$0xff]
    %v4176 = vld [vmem:[%s4173 + $0x10] sm:$0xff]
    %v4177 = vld [vmem:[%s4173 + $0x18] sm:$0xff]
    %v4179 = vsel %vm3408, %v4170, 0
    %4181 = vmatprep.subr.mxu0 0.0
    %4182 = vmatpush1.msra.mxu0 0.0
    %4183 = vmatprep.subr.mxu0 0.0
    %4184 = vmatpush1.msra.mxu0 0.0
    %4185 = vmatprep.subr.mxu0 0.0
    %4186 = vmatpush1.msra.mxu0 0.0
    %4187 = vmatprep.subr.mxu0 0.0
    %4188 = vmatpush1.msra.mxu0 0.0
    %4189 = vmatprep.subr.mxu0 0.0
    %4190 = vmatpush1.msra.mxu0 0.0
    %4191 = vmatprep.subr.mxu0 0.0
    %4192 = vmatpush1.msra.mxu0 0.0
    %4193 = vmatprep.subr.mxu0 0.0
    %4194 = vmatpush1.msra.mxu0 0.0
    %4195 = vmatprep.subr.mxu0 0.0
    %4196 = vmatpush1.msra.mxu0 0.0
    %4197 = vmatprep.subr.mxu0 0.0
    %4198 = vmatpush1.msra.mxu0 0.0
    %4199 = vmatprep.subr.mxu0 0.0
    %4200 = vmatpush1.msra.mxu0 0.0
    %4201 = vmatprep.subr.mxu0 0.0
    %4202 = vmatpush1.msra.mxu0 0.0
    %4203 = vmatprep.subr.mxu0 0.0
    %4204 = vmatpush1.msra.mxu0 0.0
    %4205 = vmatprep.subr.mxu0 0.0
    %4206 = vmatpush1.msra.mxu0 %v4177
    %4207 = vmatprep.subr.mxu0 0.0
    %4208 = vmatpush1.msra.mxu0 %v4176
    %4209 = vmatprep.subr.mxu0 0.0
    %4210 = vmatpush1.msra.mxu0 %v4175
    %4211 = vmatprep.subr.mxu0 0.0
    %4212 = vmatpush1.msra.mxu0 %v4174
    %4213 = vmatprep.subr.mxu0 0.0
    %4214 = vmatpush2.msra.mxu0 0.0
    %4215 = vmatprep.subr.mxu0 0.0
    %4216 = vmatpush2.msra.mxu0 0.0
    %4217 = vmatprep.subr.mxu0 0.0
    %4218 = vmatpush2.msra.mxu0 0.0
    %4219 = vmatprep.subr.mxu0 0.0
    %4220 = vmatpush2.msra.mxu0 0.0
    %4221 = vmatprep.subr.mxu0 0.0
    %4222 = vmatpush2.msra.mxu0 0.0
    %4223 = vmatprep.subr.mxu0 0.0
    %4224 = vmatpush2.msra.mxu0 0.0
    %4225 = vmatprep.subr.mxu0 0.0
    %4226 = vmatpush2.msra.mxu0 0.0
    %4227 = vmatprep.subr.mxu0 0.0
    %4228 = vmatpush2.msra.mxu0 0.0
    %4229 = vmatprep.subr.mxu0 0.0
    %4230 = vmatpush2.msra.mxu0 0.0
    %4231 = vmatprep.subr.mxu0 0.0
    %4232 = vmatpush2.msra.mxu0 0.0
    %4233 = vmatprep.subr.mxu0 0.0
    %4234 = vmatpush2.msra.mxu0 0.0
    %4235 = vmatprep.subr.mxu0 0.0
    %4236 = vmatpush2.msra.mxu0 0.0
    %4237 = vmatprep.subr.mxu0 0.0
    %4238 = vmatpush2.msra.mxu0 0.0
    %4239 = vmatprep.subr.mxu0 0.0
    %4240 = vmatpush2.msra.mxu0 0.0
    %4241 = vmatprep.subr.mxu0 0.0
    %4242 = vmatpush2.msra.mxu0 0.0
    %4243 = vmatprep.subr.mxu0 0.0
    %4244 = vmatpush2.msra.mxu0 0.0
    %4245 = vmatprep.mubr.f32.mxu0 0.0
    %4246 = vmatmul.mubr.f32.gmra.mxu0 %v4179
    %v4247 = vpop.f32.mrf.mxu0
    %v4248 = vadd.f32 0.0, %v4247
    %v4249 = vpop.f32.mrf.mxu0
    %4250 = vdwg.mxu0
    %v4251 = vadd.f32 %v4097, %v4248
    %s4252 = scalar_lea.vmem %s6, 40
    %v4253 = vld [vmem:[%s4252] sm:$0xff]
    %v4255 = vsel %vm3408, %v4253, 0
    %4257 = vmatprep.subr.mxu0 0.0
    %4258 = vmatpush1.msra.mxu0 0.0
    %4259 = vmatprep.subr.mxu0 0.0
    %4260 = vmatpush1.msra.mxu0 0.0
    %4261 = vmatprep.subr.mxu0 0.0
    %4262 = vmatpush1.msra.mxu0 0.0
    %4263 = vmatprep.subr.mxu0 0.0
    %4264 = vmatpush1.msra.mxu0 0.0
    %4265 = vmatprep.subr.mxu0 0.0
    %4266 = vmatpush1.msra.mxu0 0.0
    %4267 = vmatprep.subr.mxu0 0.0
    %4268 = vmatpush1.msra.mxu0 0.0
    %4269 = vmatprep.subr.mxu0 0.0
    %4270 = vmatpush1.msra.mxu0 0.0
    %4271 = vmatprep.subr.mxu0 0.0
    %4272 = vmatpush1.msra.mxu0 0.0
    %4273 = vmatprep.subr.mxu0 0.0
    %4274 = vmatpush1.msra.mxu0 0.0
    %4275 = vmatprep.subr.mxu0 0.0
    %4276 = vmatpush1.msra.mxu0 0.0
    %4277 = vmatprep.subr.mxu0 0.0
    %4278 = vmatpush1.msra.mxu0 0.0
    %4279 = vmatprep.subr.mxu0 0.0
    %4280 = vmatpush1.msra.mxu0 0.0
    %4281 = vmatprep.subr.mxu0 0.0
    %4282 = vmatpush1.msra.mxu0 %v3485
    %4283 = vmatprep.subr.mxu0 0.0
    %4284 = vmatpush1.msra.mxu0 %v3484
    %4285 = vmatprep.subr.mxu0 0.0
    %4286 = vmatpush1.msra.mxu0 %v3483
    %4287 = vmatprep.subr.mxu0 0.0
    %4288 = vmatpush1.msra.mxu0 %v3482
    %4289 = vmatprep.subr.mxu0 0.0
    %4290 = vmatpush2.msra.mxu0 0.0
    %4291 = vmatprep.subr.mxu0 0.0
    %4292 = vmatpush2.msra.mxu0 0.0
    %4293 = vmatprep.subr.mxu0 0.0
    %4294 = vmatpush2.msra.mxu0 0.0
    %4295 = vmatprep.subr.mxu0 0.0
    %4296 = vmatpush2.msra.mxu0 0.0
    %4297 = vmatprep.subr.mxu0 0.0
    %4298 = vmatpush2.msra.mxu0 0.0
    %4299 = vmatprep.subr.mxu0 0.0
    %4300 = vmatpush2.msra.mxu0 0.0
    %4301 = vmatprep.subr.mxu0 0.0
    %4302 = vmatpush2.msra.mxu0 0.0
    %4303 = vmatprep.subr.mxu0 0.0
    %4304 = vmatpush2.msra.mxu0 0.0
    %4305 = vmatprep.subr.mxu0 0.0
    %4306 = vmatpush2.msra.mxu0 0.0
    %4307 = vmatprep.subr.mxu0 0.0
    %4308 = vmatpush2.msra.mxu0 0.0
    %4309 = vmatprep.subr.mxu0 0.0
    %4310 = vmatpush2.msra.mxu0 0.0
    %4311 = vmatprep.subr.mxu0 0.0
    %4312 = vmatpush2.msra.mxu0 0.0
    %4313 = vmatprep.subr.mxu0 0.0
    %4314 = vmatpush2.msra.mxu0 0.0
    %4315 = vmatprep.subr.mxu0 0.0
    %4316 = vmatpush2.msra.mxu0 0.0
    %4317 = vmatprep.subr.mxu0 0.0
    %4318 = vmatpush2.msra.mxu0 0.0
    %4319 = vmatprep.subr.mxu0 0.0
    %4320 = vmatpush2.msra.mxu0 0.0
    %4321 = vmatprep.mubr.f32.mxu0 0.0
    %4322 = vmatmul.mubr.f32.gmra.mxu0 %v4255
    %v4323 = vpop.f32.mrf.mxu0
    %v4324 = vadd.f32 0.0, %v4323
    %v4325 = vpop.f32.mrf.mxu0
    %4326 = vdwg.mxu0
    %s4327 = scalar_lea.vmem %s7, 160
    %v4328 = vld [vmem:[%s4327] sm:$0xff]
    %v4329 = vld [vmem:[%s4327 + $0x8] sm:$0xff]
    %v4330 = vld [vmem:[%s4327 + $0x10] sm:$0xff]
    %v4331 = vld [vmem:[%s4327 + $0x18] sm:$0xff]
    %v4333 = vsel %vm3408, %v4324, 0
    %4335 = vmatprep.subr.mxu0 0.0
    %4336 = vmatpush1.msra.mxu0 0.0
    %4337 = vmatprep.subr.mxu0 0.0
    %4338 = vmatpush1.msra.mxu0 0.0
    %4339 = vmatprep.subr.mxu0 0.0
    %4340 = vmatpush1.msra.mxu0 0.0
    %4341 = vmatprep.subr.mxu0 0.0
    %4342 = vmatpush1.msra.mxu0 0.0
    %4343 = vmatprep.subr.mxu0 0.0
    %4344 = vmatpush1.msra.mxu0 0.0
    %4345 = vmatprep.subr.mxu0 0.0
    %4346 = vmatpush1.msra.mxu0 0.0
    %4347 = vmatprep.subr.mxu0 0.0
    %4348 = vmatpush1.msra.mxu0 0.0
    %4349 = vmatprep.subr.mxu0 0.0
    %4350 = vmatpush1.msra.mxu0 0.0
    %4351 = vmatprep.subr.mxu0 0.0
    %4352 = vmatpush1.msra.mxu0 0.0
    %4353 = vmatprep.subr.mxu0 0.0
    %4354 = vmatpush1.msra.mxu0 0.0
    %4355 = vmatprep.subr.mxu0 0.0
    %4356 = vmatpush1.msra.mxu0 0.0
    %4357 = vmatprep.subr.mxu0 0.0
    %4358 = vmatpush1.msra.mxu0 0.0
    %4359 = vmatprep.subr.mxu0 0.0
    %4360 = vmatpush1.msra.mxu0 %v4331
    %4361 = vmatprep.subr.mxu0 0.0
    %4362 = vmatpush1.msra.mxu0 %v4330
    %4363 = vmatprep.subr.mxu0 0.0
    %4364 = vmatpush1.msra.mxu0 %v4329
    %4365 = vmatprep.subr.mxu0 0.0
    %4366 = vmatpush1.msra.mxu0 %v4328
    %4367 = vmatprep.subr.mxu0 0.0
    %4368 = vmatpush2.msra.mxu0 0.0
    %4369 = vmatprep.subr.mxu0 0.0
    %4370 = vmatpush2.msra.mxu0 0.0
    %4371 = vmatprep.subr.mxu0 0.0
    %4372 = vmatpush2.msra.mxu0 0.0
    %4373 = vmatprep.subr.mxu0 0.0
    %4374 = vmatpush2.msra.mxu0 0.0
    %4375 = vmatprep.subr.mxu0 0.0
    %4376 = vmatpush2.msra.mxu0 0.0
    %4377 = vmatprep.subr.mxu0 0.0
    %4378 = vmatpush2.msra.mxu0 0.0
    %4379 = vmatprep.subr.mxu0 0.0
    %4380 = vmatpush2.msra.mxu0 0.0
    %4381 = vmatprep.subr.mxu0 0.0
    %4382 = vmatpush2.msra.mxu0 0.0
    %4383 = vmatprep.subr.mxu0 0.0
    %4384 = vmatpush2.msra.mxu0 0.0
    %4385 = vmatprep.subr.mxu0 0.0
    %4386 = vmatpush2.msra.mxu0 0.0
    %4387 = vmatprep.subr.mxu0 0.0
    %4388 = vmatpush2.msra.mxu0 0.0
    %4389 = vmatprep.subr.mxu0 0.0
    %4390 = vmatpush2.msra.mxu0 0.0
    %4391 = vmatprep.subr.mxu0 0.0
    %4392 = vmatpush2.msra.mxu0 0.0
    %4393 = vmatprep.subr.mxu0 0.0
    %4394 = vmatpush2.msra.mxu0 0.0
    %4395 = vmatprep.subr.mxu0 0.0
    %4396 = vmatpush2.msra.mxu0 0.0
    %4397 = vmatprep.subr.mxu0 0.0
    %4398 = vmatpush2.msra.mxu0 0.0
    %4399 = vmatprep.mubr.f32.mxu0 0.0
    %4400 = vmatmul.mubr.f32.gmra.mxu0 %v4333
    %v4401 = vpop.f32.mrf.mxu0
    %v4402 = vadd.f32 0.0, %v4401
    %v4403 = vpop.f32.mrf.mxu0
    %4404 = vdwg.mxu0
    %v4405 = vadd.f32 %v4251, %v4402
    %s4406 = scalar_lea.vmem %s6, 48
    %v4407 = vld [vmem:[%s4406] sm:$0xff]
    %v4409 = vsel %vm3408, %v4407, 0
    %4411 = vmatprep.subr.mxu0 0.0
    %4412 = vmatpush1.msra.mxu0 0.0
    %4413 = vmatprep.subr.mxu0 0.0
    %4414 = vmatpush1.msra.mxu0 0.0
    %4415 = vmatprep.subr.mxu0 0.0
    %4416 = vmatpush1.msra.mxu0 0.0
    %4417 = vmatprep.subr.mxu0 0.0
    %4418 = vmatpush1.msra.mxu0 0.0
    %4419 = vmatprep.subr.mxu0 0.0
    %4420 = vmatpush1.msra.mxu0 0.0
    %4421 = vmatprep.subr.mxu0 0.0
    %4422 = vmatpush1.msra.mxu0 0.0
    %4423 = vmatprep.subr.mxu0 0.0
    %4424 = vmatpush1.msra.mxu0 0.0
    %4425 = vmatprep.subr.mxu0 0.0
    %4426 = vmatpush1.msra.mxu0 0.0
    %4427 = vmatprep.subr.mxu0 0.0
    %4428 = vmatpush1.msra.mxu0 0.0
    %4429 = vmatprep.subr.mxu0 0.0
    %4430 = vmatpush1.msra.mxu0 0.0
    %4431 = vmatprep.subr.mxu0 0.0
    %4432 = vmatpush1.msra.mxu0 0.0
    %4433 = vmatprep.subr.mxu0 0.0
    %4434 = vmatpush1.msra.mxu0 0.0
    %4435 = vmatprep.subr.mxu0 0.0
    %4436 = vmatpush1.msra.mxu0 %v3485
    %4437 = vmatprep.subr.mxu0 0.0
    %4438 = vmatpush1.msra.mxu0 %v3484
    %4439 = vmatprep.subr.mxu0 0.0
    %4440 = vmatpush1.msra.mxu0 %v3483
    %4441 = vmatprep.subr.mxu0 0.0
    %4442 = vmatpush1.msra.mxu0 %v3482
    %4443 = vmatprep.subr.mxu0 0.0
    %4444 = vmatpush2.msra.mxu0 0.0
    %4445 = vmatprep.subr.mxu0 0.0
    %4446 = vmatpush2.msra.mxu0 0.0
    %4447 = vmatprep.subr.mxu0 0.0
    %4448 = vmatpush2.msra.mxu0 0.0
    %4449 = vmatprep.subr.mxu0 0.0
    %4450 = vmatpush2.msra.mxu0 0.0
    %4451 = vmatprep.subr.mxu0 0.0
    %4452 = vmatpush2.msra.mxu0 0.0
    %4453 = vmatprep.subr.mxu0 0.0
    %4454 = vmatpush2.msra.mxu0 0.0
    %4455 = vmatprep.subr.mxu0 0.0
    %4456 = vmatpush2.msra.mxu0 0.0
    %4457 = vmatprep.subr.mxu0 0.0
    %4458 = vmatpush2.msra.mxu0 0.0
    %4459 = vmatprep.subr.mxu0 0.0
    %4460 = vmatpush2.msra.mxu0 0.0
    %4461 = vmatprep.subr.mxu0 0.0
    %4462 = vmatpush2.msra.mxu0 0.0
    %4463 = vmatprep.subr.mxu0 0.0
    %4464 = vmatpush2.msra.mxu0 0.0
    %4465 = vmatprep.subr.mxu0 0.0
    %4466 = vmatpush2.msra.mxu0 0.0
    %4467 = vmatprep.subr.mxu0 0.0
    %4468 = vmatpush2.msra.mxu0 0.0
    %4469 = vmatprep.subr.mxu0 0.0
    %4470 = vmatpush2.msra.mxu0 0.0
    %4471 = vmatprep.subr.mxu0 0.0
    %4472 = vmatpush2.msra.mxu0 0.0
    %4473 = vmatprep.subr.mxu0 0.0
    %4474 = vmatpush2.msra.mxu0 0.0
    %4475 = vmatprep.mubr.f32.mxu0 0.0
    %4476 = vmatmul.mubr.f32.gmra.mxu0 %v4409
    %v4477 = vpop.f32.mrf.mxu0
    %v4478 = vadd.f32 0.0, %v4477
    %v4479 = vpop.f32.mrf.mxu0
    %4480 = vdwg.mxu0
    %s4481 = scalar_lea.vmem %s7, 192
    %v4482 = vld [vmem:[%s4481] sm:$0xff]
    %v4483 = vld [vmem:[%s4481 + $0x8] sm:$0xff]
    %v4484 = vld [vmem:[%s4481 + $0x10] sm:$0xff]
    %v4485 = vld [vmem:[%s4481 + $0x18] sm:$0xff]
    %v4487 = vsel %vm3408, %v4478, 0
    %4489 = vmatprep.subr.mxu0 0.0
    %4490 = vmatpush1.msra.mxu0 0.0
    %4491 = vmatprep.subr.mxu0 0.0
    %4492 = vmatpush1.msra.mxu0 0.0
    %4493 = vmatprep.subr.mxu0 0.0
    %4494 = vmatpush1.msra.mxu0 0.0
    %4495 = vmatprep.subr.mxu0 0.0
    %4496 = vmatpush1.msra.mxu0 0.0
    %4497 = vmatprep.subr.mxu0 0.0
    %4498 = vmatpush1.msra.mxu0 0.0
    %4499 = vmatprep.subr.mxu0 0.0
    %4500 = vmatpush1.msra.mxu0 0.0
    %4501 = vmatprep.subr.mxu0 0.0
    %4502 = vmatpush1.msra.mxu0 0.0
    %4503 = vmatprep.subr.mxu0 0.0
    %4504 = vmatpush1.msra.mxu0 0.0
    %4505 = vmatprep.subr.mxu0 0.0
    %4506 = vmatpush1.msra.mxu0 0.0
    %4507 = vmatprep.subr.mxu0 0.0
    %4508 = vmatpush1.msra.mxu0 0.0
    %4509 = vmatprep.subr.mxu0 0.0
    %4510 = vmatpush1.msra.mxu0 0.0
    %4511 = vmatprep.subr.mxu0 0.0
    %4512 = vmatpush1.msra.mxu0 0.0
    %4513 = vmatprep.subr.mxu0 0.0
    %4514 = vmatpush1.msra.mxu0 %v4485
    %4515 = vmatprep.subr.mxu0 0.0
    %4516 = vmatpush1.msra.mxu0 %v4484
    %4517 = vmatprep.subr.mxu0 0.0
    %4518 = vmatpush1.msra.mxu0 %v4483
    %4519 = vmatprep.subr.mxu0 0.0
    %4520 = vmatpush1.msra.mxu0 %v4482
    %4521 = vmatprep.subr.mxu0 0.0
    %4522 = vmatpush2.msra.mxu0 0.0
    %4523 = vmatprep.subr.mxu0 0.0
    %4524 = vmatpush2.msra.mxu0 0.0
    %4525 = vmatprep.subr.mxu0 0.0
    %4526 = vmatpush2.msra.mxu0 0.0
    %4527 = vmatprep.subr.mxu0 0.0
    %4528 = vmatpush2.msra.mxu0 0.0
    %4529 = vmatprep.subr.mxu0 0.0
    %4530 = vmatpush2.msra.mxu0 0.0
    %4531 = vmatprep.subr.mxu0 0.0
    %4532 = vmatpush2.msra.mxu0 0.0
    %4533 = vmatprep.subr.mxu0 0.0
    %4534 = vmatpush2.msra.mxu0 0.0
    %4535 = vmatprep.subr.mxu0 0.0
    %4536 = vmatpush2.msra.mxu0 0.0
    %4537 = vmatprep.subr.mxu0 0.0
    %4538 = vmatpush2.msra.mxu0 0.0
    %4539 = vmatprep.subr.mxu0 0.0
    %4540 = vmatpush2.msra.mxu0 0.0
    %4541 = vmatprep.subr.mxu0 0.0
    %4542 = vmatpush2.msra.mxu0 0.0
    %4543 = vmatprep.subr.mxu0 0.0
    %4544 = vmatpush2.msra.mxu0 0.0
    %4545 = vmatprep.subr.mxu0 0.0
    %4546 = vmatpush2.msra.mxu0 0.0
    %4547 = vmatprep.subr.mxu0 0.0
    %4548 = vmatpush2.msra.mxu0 0.0
    %4549 = vmatprep.subr.mxu0 0.0
    %4550 = vmatpush2.msra.mxu0 0.0
    %4551 = vmatprep.subr.mxu0 0.0
    %4552 = vmatpush2.msra.mxu0 0.0
    %4553 = vmatprep.mubr.f32.mxu0 0.0
    %4554 = vmatmul.mubr.f32.gmra.mxu0 %v4487
    %v4555 = vpop.f32.mrf.mxu0
    %v4556 = vadd.f32 0.0, %v4555
    %v4557 = vpop.f32.mrf.mxu0
    %4558 = vdwg.mxu0
    %v4559 = vadd.f32 %v4405, %v4556
    %s4560 = scalar_lea.vmem %s6, 56
    %v4561 = vld [vmem:[%s4560] sm:$0xff]
    %v4563 = vsel %vm3408, %v4561, 0
    %4565 = vmatprep.subr.mxu0 0.0
    %4566 = vmatpush1.msra.mxu0 0.0
    %4567 = vmatprep.subr.mxu0 0.0
    %4568 = vmatpush1.msra.mxu0 0.0
    %4569 = vmatprep.subr.mxu0 0.0
    %4570 = vmatpush1.msra.mxu0 0.0
    %4571 = vmatprep.subr.mxu0 0.0
    %4572 = vmatpush1.msra.mxu0 0.0
    %4573 = vmatprep.subr.mxu0 0.0
    %4574 = vmatpush1.msra.mxu0 0.0
    %4575 = vmatprep.subr.mxu0 0.0
    %4576 = vmatpush1.msra.mxu0 0.0
    %4577 = vmatprep.subr.mxu0 0.0
    %4578 = vmatpush1.msra.mxu0 0.0
    %4579 = vmatprep.subr.mxu0 0.0
    %4580 = vmatpush1.msra.mxu0 0.0
    %4581 = vmatprep.subr.mxu0 0.0
    %4582 = vmatpush1.msra.mxu0 0.0
    %4583 = vmatprep.subr.mxu0 0.0
    %4584 = vmatpush1.msra.mxu0 0.0
    %4585 = vmatprep.subr.mxu0 0.0
    %4586 = vmatpush1.msra.mxu0 0.0
    %4587 = vmatprep.subr.mxu0 0.0
    %4588 = vmatpush1.msra.mxu0 0.0
    %4589 = vmatprep.subr.mxu0 0.0
    %4590 = vmatpush1.msra.mxu0 %v3485
    %4591 = vmatprep.subr.mxu0 0.0
    %4592 = vmatpush1.msra.mxu0 %v3484
    %4593 = vmatprep.subr.mxu0 0.0
    %4594 = vmatpush1.msra.mxu0 %v3483
    %4595 = vmatprep.subr.mxu0 0.0
    %4596 = vmatpush1.msra.mxu0 %v3482
    %4597 = vmatprep.subr.mxu0 0.0
    %4598 = vmatpush2.msra.mxu0 0.0
    %4599 = vmatprep.subr.mxu0 0.0
    %4600 = vmatpush2.msra.mxu0 0.0
    %4601 = vmatprep.subr.mxu0 0.0
    %4602 = vmatpush2.msra.mxu0 0.0
    %4603 = vmatprep.subr.mxu0 0.0
    %4604 = vmatpush2.msra.mxu0 0.0
    %4605 = vmatprep.subr.mxu0 0.0
    %4606 = vmatpush2.msra.mxu0 0.0
    %4607 = vmatprep.subr.mxu0 0.0
    %4608 = vmatpush2.msra.mxu0 0.0
    %4609 = vmatprep.subr.mxu0 0.0
    %4610 = vmatpush2.msra.mxu0 0.0
    %4611 = vmatprep.subr.mxu0 0.0
    %4612 = vmatpush2.msra.mxu0 0.0
    %4613 = vmatprep.subr.mxu0 0.0
    %4614 = vmatpush2.msra.mxu0 0.0
    %4615 = vmatprep.subr.mxu0 0.0
    %4616 = vmatpush2.msra.mxu0 0.0
    %4617 = vmatprep.subr.mxu0 0.0
    %4618 = vmatpush2.msra.mxu0 0.0
    %4619 = vmatprep.subr.mxu0 0.0
    %4620 = vmatpush2.msra.mxu0 0.0
    %4621 = vmatprep.subr.mxu0 0.0
    %4622 = vmatpush2.msra.mxu0 0.0
    %4623 = vmatprep.subr.mxu0 0.0
    %4624 = vmatpush2.msra.mxu0 0.0
    %4625 = vmatprep.subr.mxu0 0.0
    %4626 = vmatpush2.msra.mxu0 0.0
    %4627 = vmatprep.subr.mxu0 0.0
    %4628 = vmatpush2.msra.mxu0 0.0
    %4629 = vmatprep.mubr.f32.mxu0 0.0
    %4630 = vmatmul.mubr.f32.gmra.mxu0 %v4563
    %v4631 = vpop.f32.mrf.mxu0
    %v4632 = vadd.f32 0.0, %v4631
    %v4633 = vpop.f32.mrf.mxu0
    %4634 = vdwg.mxu0
    %s4635 = scalar_lea.vmem %s7, 224
    %v4636 = vld [vmem:[%s4635] sm:$0xff]
    %v4637 = vld [vmem:[%s4635 + $0x8] sm:$0xff]
    %v4638 = vld [vmem:[%s4635 + $0x10] sm:$0xff]
    %v4639 = vld [vmem:[%s4635 + $0x18] sm:$0xff]
    %v4641 = vsel %vm3408, %v4632, 0
    %4643 = vmatprep.subr.mxu0 0.0
    %4644 = vmatpush1.msra.mxu0 0.0
    %4645 = vmatprep.subr.mxu0 0.0
    %4646 = vmatpush1.msra.mxu0 0.0
    %4647 = vmatprep.subr.mxu0 0.0
    %4648 = vmatpush1.msra.mxu0 0.0
    %4649 = vmatprep.subr.mxu0 0.0
    %4650 = vmatpush1.msra.mxu0 0.0
    %4651 = vmatprep.subr.mxu0 0.0
    %4652 = vmatpush1.msra.mxu0 0.0
    %4653 = vmatprep.subr.mxu0 0.0
    %4654 = vmatpush1.msra.mxu0 0.0
    %4655 = vmatprep.subr.mxu0 0.0
    %4656 = vmatpush1.msra.mxu0 0.0
    %4657 = vmatprep.subr.mxu0 0.0
    %4658 = vmatpush1.msra.mxu0 0.0
    %4659 = vmatprep.subr.mxu0 0.0
    %4660 = vmatpush1.msra.mxu0 0.0
    %4661 = vmatprep.subr.mxu0 0.0
    %4662 = vmatpush1.msra.mxu0 0.0
    %4663 = vmatprep.subr.mxu0 0.0
    %4664 = vmatpush1.msra.mxu0 0.0
    %4665 = vmatprep.subr.mxu0 0.0
    %4666 = vmatpush1.msra.mxu0 0.0
    %4667 = vmatprep.subr.mxu0 0.0
    %4668 = vmatpush1.msra.mxu0 %v4639
    %4669 = vmatprep.subr.mxu0 0.0
    %4670 = vmatpush1.msra.mxu0 %v4638
    %4671 = vmatprep.subr.mxu0 0.0
    %4672 = vmatpush1.msra.mxu0 %v4637
    %4673 = vmatprep.subr.mxu0 0.0
    %4674 = vmatpush1.msra.mxu0 %v4636
    %4675 = vmatprep.subr.mxu0 0.0
    %4676 = vmatpush2.msra.mxu0 0.0
    %4677 = vmatprep.subr.mxu0 0.0
    %4678 = vmatpush2.msra.mxu0 0.0
    %4679 = vmatprep.subr.mxu0 0.0
    %4680 = vmatpush2.msra.mxu0 0.0
    %4681 = vmatprep.subr.mxu0 0.0
    %4682 = vmatpush2.msra.mxu0 0.0
    %4683 = vmatprep.subr.mxu0 0.0
    %4684 = vmatpush2.msra.mxu0 0.0
    %4685 = vmatprep.subr.mxu0 0.0
    %4686 = vmatpush2.msra.mxu0 0.0
    %4687 = vmatprep.subr.mxu0 0.0
    %4688 = vmatpush2.msra.mxu0 0.0
    %4689 = vmatprep.subr.mxu0 0.0
    %4690 = vmatpush2.msra.mxu0 0.0
    %4691 = vmatprep.subr.mxu0 0.0
    %4692 = vmatpush2.msra.mxu0 0.0
    %4693 = vmatprep.subr.mxu0 0.0
    %4694 = vmatpush2.msra.mxu0 0.0
    %4695 = vmatprep.subr.mxu0 0.0
    %4696 = vmatpush2.msra.mxu0 0.0
    %4697 = vmatprep.subr.mxu0 0.0
    %4698 = vmatpush2.msra.mxu0 0.0
    %4699 = vmatprep.subr.mxu0 0.0
    %4700 = vmatpush2.msra.mxu0 0.0
    %4701 = vmatprep.subr.mxu0 0.0
    %4702 = vmatpush2.msra.mxu0 0.0
    %4703 = vmatprep.subr.mxu0 0.0
    %4704 = vmatpush2.msra.mxu0 0.0
    %4705 = vmatprep.subr.mxu0 0.0
    %4706 = vmatpush2.msra.mxu0 0.0
    %4707 = vmatprep.mubr.f32.mxu0 0.0
    %4708 = vmatmul.mubr.f32.gmra.mxu0 %v4641
    %v4709 = vpop.f32.mrf.mxu0
    %v4710 = vadd.f32 0.0, %v4709
    %v4711 = vpop.f32.mrf.mxu0
    %4712 = vdwg.mxu0
    %v4713 = vadd.f32 %v4559, %v4710
    %s4714 = scalar_lea.vmem %s6, 64
    %v4715 = vld [vmem:[%s4714] sm:$0xff]
    %v4717 = vsel %vm3408, %v4715, 0
    %4719 = vmatprep.subr.mxu0 0.0
    %4720 = vmatpush1.msra.mxu0 0.0
    %4721 = vmatprep.subr.mxu0 0.0
    %4722 = vmatpush1.msra.mxu0 0.0
    %4723 = vmatprep.subr.mxu0 0.0
    %4724 = vmatpush1.msra.mxu0 0.0
    %4725 = vmatprep.subr.mxu0 0.0
    %4726 = vmatpush1.msra.mxu0 0.0
    %4727 = vmatprep.subr.mxu0 0.0
    %4728 = vmatpush1.msra.mxu0 0.0
    %4729 = vmatprep.subr.mxu0 0.0
    %4730 = vmatpush1.msra.mxu0 0.0
    %4731 = vmatprep.subr.mxu0 0.0
    %4732 = vmatpush1.msra.mxu0 0.0
    %4733 = vmatprep.subr.mxu0 0.0
    %4734 = vmatpush1.msra.mxu0 0.0
    %4735 = vmatprep.subr.mxu0 0.0
    %4736 = vmatpush1.msra.mxu0 0.0
    %4737 = vmatprep.subr.mxu0 0.0
    %4738 = vmatpush1.msra.mxu0 0.0
    %4739 = vmatprep.subr.mxu0 0.0
    %4740 = vmatpush1.msra.mxu0 0.0
    %4741 = vmatprep.subr.mxu0 0.0
    %4742 = vmatpush1.msra.mxu0 0.0
    %4743 = vmatprep.subr.mxu0 0.0
    %4744 = vmatpush1.msra.mxu0 %v3485
    %4745 = vmatprep.subr.mxu0 0.0
    %4746 = vmatpush1.msra.mxu0 %v3484
    %4747 = vmatprep.subr.mxu0 0.0
    %4748 = vmatpush1.msra.mxu0 %v3483
    %4749 = vmatprep.subr.mxu0 0.0
    %4750 = vmatpush1.msra.mxu0 %v3482
    %4751 = vmatprep.subr.mxu0 0.0
    %4752 = vmatpush2.msra.mxu0 0.0
    %4753 = vmatprep.subr.mxu0 0.0
    %4754 = vmatpush2.msra.mxu0 0.0
    %4755 = vmatprep.subr.mxu0 0.0
    %4756 = vmatpush2.msra.mxu0 0.0
    %4757 = vmatprep.subr.mxu0 0.0
    %4758 = vmatpush2.msra.mxu0 0.0
    %4759 = vmatprep.subr.mxu0 0.0
    %4760 = vmatpush2.msra.mxu0 0.0
    %4761 = vmatprep.subr.mxu0 0.0
    %4762 = vmatpush2.msra.mxu0 0.0
    %4763 = vmatprep.subr.mxu0 0.0
    %4764 = vmatpush2.msra.mxu0 0.0
    %4765 = vmatprep.subr.mxu0 0.0
    %4766 = vmatpush2.msra.mxu0 0.0
    %4767 = vmatprep.subr.mxu0 0.0
    %4768 = vmatpush2.msra.mxu0 0.0
    %4769 = vmatprep.subr.mxu0 0.0
    %4770 = vmatpush2.msra.mxu0 0.0
    %4771 = vmatprep.subr.mxu0 0.0
    %4772 = vmatpush2.msra.mxu0 0.0
    %4773 = vmatprep.subr.mxu0 0.0
    %4774 = vmatpush2.msra.mxu0 0.0
    %4775 = vmatprep.subr.mxu0 0.0
    %4776 = vmatpush2.msra.mxu0 0.0
    %4777 = vmatprep.subr.mxu0 0.0
    %4778 = vmatpush2.msra.mxu0 0.0
    %4779 = vmatprep.subr.mxu0 0.0
    %4780 = vmatpush2.msra.mxu0 0.0
    %4781 = vmatprep.subr.mxu0 0.0
    %4782 = vmatpush2.msra.mxu0 0.0
    %4783 = vmatprep.mubr.f32.mxu0 0.0
    %4784 = vmatmul.mubr.f32.gmra.mxu0 %v4717
    %v4785 = vpop.f32.mrf.mxu0
    %v4786 = vadd.f32 0.0, %v4785
    %v4787 = vpop.f32.mrf.mxu0
    %4788 = vdwg.mxu0
    %s4789 = scalar_lea.vmem %s7, 256
    %v4790 = vld [vmem:[%s4789] sm:$0xff]
    %v4791 = vld [vmem:[%s4789 + $0x8] sm:$0xff]
    %v4792 = vld [vmem:[%s4789 + $0x10] sm:$0xff]
    %v4793 = vld [vmem:[%s4789 + $0x18] sm:$0xff]
    %v4795 = vsel %vm3408, %v4786, 0
    %4797 = vmatprep.subr.mxu0 0.0
    %4798 = vmatpush1.msra.mxu0 0.0
    %4799 = vmatprep.subr.mxu0 0.0
    %4800 = vmatpush1.msra.mxu0 0.0
    %4801 = vmatprep.subr.mxu0 0.0
    %4802 = vmatpush1.msra.mxu0 0.0
    %4803 = vmatprep.subr.mxu0 0.0
    %4804 = vmatpush1.msra.mxu0 0.0
    %4805 = vmatprep.subr.mxu0 0.0
    %4806 = vmatpush1.msra.mxu0 0.0
    %4807 = vmatprep.subr.mxu0 0.0
    %4808 = vmatpush1.msra.mxu0 0.0
    %4809 = vmatprep.subr.mxu0 0.0
    %4810 = vmatpush1.msra.mxu0 0.0
    %4811 = vmatprep.subr.mxu0 0.0
    %4812 = vmatpush1.msra.mxu0 0.0
    %4813 = vmatprep.subr.mxu0 0.0
    %4814 = vmatpush1.msra.mxu0 0.0
    %4815 = vmatprep.subr.mxu0 0.0
    %4816 = vmatpush1.msra.mxu0 0.0
    %4817 = vmatprep.subr.mxu0 0.0
    %4818 = vmatpush1.msra.mxu0 0.0
    %4819 = vmatprep.subr.mxu0 0.0
    %4820 = vmatpush1.msra.mxu0 0.0
    %4821 = vmatprep.subr.mxu0 0.0
    %4822 = vmatpush1.msra.mxu0 %v4793
    %4823 = vmatprep.subr.mxu0 0.0
    %4824 = vmatpush1.msra.mxu0 %v4792
    %4825 = vmatprep.subr.mxu0 0.0
    %4826 = vmatpush1.msra.mxu0 %v4791
    %4827 = vmatprep.subr.mxu0 0.0
    %4828 = vmatpush1.msra.mxu0 %v4790
    %4829 = vmatprep.subr.mxu0 0.0
    %4830 = vmatpush2.msra.mxu0 0.0
    %4831 = vmatprep.subr.mxu0 0.0
    %4832 = vmatpush2.msra.mxu0 0.0
    %4833 = vmatprep.subr.mxu0 0.0
    %4834 = vmatpush2.msra.mxu0 0.0
    %4835 = vmatprep.subr.mxu0 0.0
    %4836 = vmatpush2.msra.mxu0 0.0
    %4837 = vmatprep.subr.mxu0 0.0
    %4838 = vmatpush2.msra.mxu0 0.0
    %4839 = vmatprep.subr.mxu0 0.0
    %4840 = vmatpush2.msra.mxu0 0.0
    %4841 = vmatprep.subr.mxu0 0.0
    %4842 = vmatpush2.msra.mxu0 0.0
    %4843 = vmatprep.subr.mxu0 0.0
    %4844 = vmatpush2.msra.mxu0 0.0
    %4845 = vmatprep.subr.mxu0 0.0
    %4846 = vmatpush2.msra.mxu0 0.0
    %4847 = vmatprep.subr.mxu0 0.0
    %4848 = vmatpush2.msra.mxu0 0.0
    %4849 = vmatprep.subr.mxu0 0.0
    %4850 = vmatpush2.msra.mxu0 0.0
    %4851 = vmatprep.subr.mxu0 0.0
    %4852 = vmatpush2.msra.mxu0 0.0
    %4853 = vmatprep.subr.mxu0 0.0
    %4854 = vmatpush2.msra.mxu0 0.0
    %4855 = vmatprep.subr.mxu0 0.0
    %4856 = vmatpush2.msra.mxu0 0.0
    %4857 = vmatprep.subr.mxu0 0.0
    %4858 = vmatpush2.msra.mxu0 0.0
    %4859 = vmatprep.subr.mxu0 0.0
    %4860 = vmatpush2.msra.mxu0 0.0
    %4861 = vmatprep.mubr.f32.mxu0 0.0
    %4862 = vmatmul.mubr.f32.gmra.mxu0 %v4795
    %v4863 = vpop.f32.mrf.mxu0
    %v4864 = vadd.f32 0.0, %v4863
    %v4865 = vpop.f32.mrf.mxu0
    %4866 = vdwg.mxu0
    %v4867 = vadd.f32 %v4713, %v4864
    %s4868 = scalar_lea.vmem %s6, 72
    %v4869 = vld [vmem:[%s4868] sm:$0xff]
    %v4871 = vsel %vm3408, %v4869, 0
    %4873 = vmatprep.subr.mxu0 0.0
    %4874 = vmatpush1.msra.mxu0 0.0
    %4875 = vmatprep.subr.mxu0 0.0
    %4876 = vmatpush1.msra.mxu0 0.0
    %4877 = vmatprep.subr.mxu0 0.0
    %4878 = vmatpush1.msra.mxu0 0.0
    %4879 = vmatprep.subr.mxu0 0.0
    %4880 = vmatpush1.msra.mxu0 0.0
    %4881 = vmatprep.subr.mxu0 0.0
    %4882 = vmatpush1.msra.mxu0 0.0
    %4883 = vmatprep.subr.mxu0 0.0
    %4884 = vmatpush1.msra.mxu0 0.0
    %4885 = vmatprep.subr.mxu0 0.0
    %4886 = vmatpush1.msra.mxu0 0.0
    %4887 = vmatprep.subr.mxu0 0.0
    %4888 = vmatpush1.msra.mxu0 0.0
    %4889 = vmatprep.subr.mxu0 0.0
    %4890 = vmatpush1.msra.mxu0 0.0
    %4891 = vmatprep.subr.mxu0 0.0
    %4892 = vmatpush1.msra.mxu0 0.0
    %4893 = vmatprep.subr.mxu0 0.0
    %4894 = vmatpush1.msra.mxu0 0.0
    %4895 = vmatprep.subr.mxu0 0.0
    %4896 = vmatpush1.msra.mxu0 0.0
    %4897 = vmatprep.subr.mxu0 0.0
    %4898 = vmatpush1.msra.mxu0 %v3485
    %4899 = vmatprep.subr.mxu0 0.0
    %4900 = vmatpush1.msra.mxu0 %v3484
    %4901 = vmatprep.subr.mxu0 0.0
    %4902 = vmatpush1.msra.mxu0 %v3483
    %4903 = vmatprep.subr.mxu0 0.0
    %4904 = vmatpush1.msra.mxu0 %v3482
    %4905 = vmatprep.subr.mxu0 0.0
    %4906 = vmatpush2.msra.mxu0 0.0
    %4907 = vmatprep.subr.mxu0 0.0
    %4908 = vmatpush2.msra.mxu0 0.0
    %4909 = vmatprep.subr.mxu0 0.0
    %4910 = vmatpush2.msra.mxu0 0.0
    %4911 = vmatprep.subr.mxu0 0.0
    %4912 = vmatpush2.msra.mxu0 0.0
    %4913 = vmatprep.subr.mxu0 0.0
    %4914 = vmatpush2.msra.mxu0 0.0
    %4915 = vmatprep.subr.mxu0 0.0
    %4916 = vmatpush2.msra.mxu0 0.0
    %4917 = vmatprep.subr.mxu0 0.0
    %4918 = vmatpush2.msra.mxu0 0.0
    %4919 = vmatprep.subr.mxu0 0.0
    %4920 = vmatpush2.msra.mxu0 0.0
    %4921 = vmatprep.subr.mxu0 0.0
    %4922 = vmatpush2.msra.mxu0 0.0
    %4923 = vmatprep.subr.mxu0 0.0
    %4924 = vmatpush2.msra.mxu0 0.0
    %4925 = vmatprep.subr.mxu0 0.0
    %4926 = vmatpush2.msra.mxu0 0.0
    %4927 = vmatprep.subr.mxu0 0.0
    %4928 = vmatpush2.msra.mxu0 0.0
    %4929 = vmatprep.subr.mxu0 0.0
    %4930 = vmatpush2.msra.mxu0 0.0
    %4931 = vmatprep.subr.mxu0 0.0
    %4932 = vmatpush2.msra.mxu0 0.0
    %4933 = vmatprep.subr.mxu0 0.0
    %4934 = vmatpush2.msra.mxu0 0.0
    %4935 = vmatprep.subr.mxu0 0.0
    %4936 = vmatpush2.msra.mxu0 0.0
    %4937 = vmatprep.mubr.f32.mxu0 0.0
    %4938 = vmatmul.mubr.f32.gmra.mxu0 %v4871
    %v4939 = vpop.f32.mrf.mxu0
    %v4940 = vadd.f32 0.0, %v4939
    %v4941 = vpop.f32.mrf.mxu0
    %4942 = vdwg.mxu0
    %s4943 = scalar_lea.vmem %s7, 288
    %v4944 = vld [vmem:[%s4943] sm:$0xff]
    %v4945 = vld [vmem:[%s4943 + $0x8] sm:$0xff]
    %v4946 = vld [vmem:[%s4943 + $0x10] sm:$0xff]
    %v4947 = vld [vmem:[%s4943 + $0x18] sm:$0xff]
    %v4949 = vsel %vm3408, %v4940, 0
    %4951 = vmatprep.subr.mxu0 0.0
    %4952 = vmatpush1.msra.mxu0 0.0
    %4953 = vmatprep.subr.mxu0 0.0
    %4954 = vmatpush1.msra.mxu0 0.0
    %4955 = vmatprep.subr.mxu0 0.0
    %4956 = vmatpush1.msra.mxu0 0.0
    %4957 = vmatprep.subr.mxu0 0.0
    %4958 = vmatpush1.msra.mxu0 0.0
    %4959 = vmatprep.subr.mxu0 0.0
    %4960 = vmatpush1.msra.mxu0 0.0
    %4961 = vmatprep.subr.mxu0 0.0
    %4962 = vmatpush1.msra.mxu0 0.0
    %4963 = vmatprep.subr.mxu0 0.0
    %4964 = vmatpush1.msra.mxu0 0.0
    %4965 = vmatprep.subr.mxu0 0.0
    %4966 = vmatpush1.msra.mxu0 0.0
    %4967 = vmatprep.subr.mxu0 0.0
    %4968 = vmatpush1.msra.mxu0 0.0
    %4969 = vmatprep.subr.mxu0 0.0
    %4970 = vmatpush1.msra.mxu0 0.0
    %4971 = vmatprep.subr.mxu0 0.0
    %4972 = vmatpush1.msra.mxu0 0.0
    %4973 = vmatprep.subr.mxu0 0.0
    %4974 = vmatpush1.msra.mxu0 0.0
    %4975 = vmatprep.subr.mxu0 0.0
    %4976 = vmatpush1.msra.mxu0 %v4947
    %4977 = vmatprep.subr.mxu0 0.0
    %4978 = vmatpush1.msra.mxu0 %v4946
    %4979 = vmatprep.subr.mxu0 0.0
    %4980 = vmatpush1.msra.mxu0 %v4945
    %4981 = vmatprep.subr.mxu0 0.0
    %4982 = vmatpush1.msra.mxu0 %v4944
    %4983 = vmatprep.subr.mxu0 0.0
    %4984 = vmatpush2.msra.mxu0 0.0
    %4985 = vmatprep.subr.mxu0 0.0
    %4986 = vmatpush2.msra.mxu0 0.0
    %4987 = vmatprep.subr.mxu0 0.0
    %4988 = vmatpush2.msra.mxu0 0.0
    %4989 = vmatprep.subr.mxu0 0.0
    %4990 = vmatpush2.msra.mxu0 0.0
    %4991 = vmatprep.subr.mxu0 0.0
    %4992 = vmatpush2.msra.mxu0 0.0
    %4993 = vmatprep.subr.mxu0 0.0
    %4994 = vmatpush2.msra.mxu0 0.0
    %4995 = vmatprep.subr.mxu0 0.0
    %4996 = vmatpush2.msra.mxu0 0.0
    %4997 = vmatprep.subr.mxu0 0.0
    %4998 = vmatpush2.msra.mxu0 0.0
    %4999 = vmatprep.subr.mxu0 0.0
    %5000 = vmatpush2.msra.mxu0 0.0
    %5001 = vmatprep.subr.mxu0 0.0
    %5002 = vmatpush2.msra.mxu0 0.0
    %5003 = vmatprep.subr.mxu0 0.0
    %5004 = vmatpush2.msra.mxu0 0.0
    %5005 = vmatprep.subr.mxu0 0.0
    %5006 = vmatpush2.msra.mxu0 0.0
    %5007 = vmatprep.subr.mxu0 0.0
    %5008 = vmatpush2.msra.mxu0 0.0
    %5009 = vmatprep.subr.mxu0 0.0
    %5010 = vmatpush2.msra.mxu0 0.0
    %5011 = vmatprep.subr.mxu0 0.0
    %5012 = vmatpush2.msra.mxu0 0.0
    %5013 = vmatprep.subr.mxu0 0.0
    %5014 = vmatpush2.msra.mxu0 0.0
    %5015 = vmatprep.mubr.f32.mxu0 0.0
    %5016 = vmatmul.mubr.f32.gmra.mxu0 %v4949
    %v5017 = vpop.f32.mrf.mxu0
    %v5018 = vadd.f32 0.0, %v5017
    %v5019 = vpop.f32.mrf.mxu0
    %5020 = vdwg.mxu0
    %v5021 = vadd.f32 %v4867, %v5018
    %s5022 = scalar_lea.vmem %s6, 80
    %v5023 = vld [vmem:[%s5022] sm:$0xff]
    %v5025 = vsel %vm3408, %v5023, 0
    %5027 = vmatprep.subr.mxu0 0.0
    %5028 = vmatpush1.msra.mxu0 0.0
    %5029 = vmatprep.subr.mxu0 0.0
    %5030 = vmatpush1.msra.mxu0 0.0
    %5031 = vmatprep.subr.mxu0 0.0
    %5032 = vmatpush1.msra.mxu0 0.0
    %5033 = vmatprep.subr.mxu0 0.0
    %5034 = vmatpush1.msra.mxu0 0.0
    %5035 = vmatprep.subr.mxu0 0.0
    %5036 = vmatpush1.msra.mxu0 0.0
    %5037 = vmatprep.subr.mxu0 0.0
    %5038 = vmatpush1.msra.mxu0 0.0
    %5039 = vmatprep.subr.mxu0 0.0
    %5040 = vmatpush1.msra.mxu0 0.0
    %5041 = vmatprep.subr.mxu0 0.0
    %5042 = vmatpush1.msra.mxu0 0.0
    %5043 = vmatprep.subr.mxu0 0.0
    %5044 = vmatpush1.msra.mxu0 0.0
    %5045 = vmatprep.subr.mxu0 0.0
    %5046 = vmatpush1.msra.mxu0 0.0
    %5047 = vmatprep.subr.mxu0 0.0
    %5048 = vmatpush1.msra.mxu0 0.0
    %5049 = vmatprep.subr.mxu0 0.0
    %5050 = vmatpush1.msra.mxu0 0.0
    %5051 = vmatprep.subr.mxu0 0.0
    %5052 = vmatpush1.msra.mxu0 %v3485
    %5053 = vmatprep.subr.mxu0 0.0
    %5054 = vmatpush1.msra.mxu0 %v3484
    %5055 = vmatprep.subr.mxu0 0.0
    %5056 = vmatpush1.msra.mxu0 %v3483
    %5057 = vmatprep.subr.mxu0 0.0
    %5058 = vmatpush1.msra.mxu0 %v3482
    %5059 = vmatprep.subr.mxu0 0.0
    %5060 = vmatpush2.msra.mxu0 0.0
    %5061 = vmatprep.subr.mxu0 0.0
    %5062 = vmatpush2.msra.mxu0 0.0
    %5063 = vmatprep.subr.mxu0 0.0
    %5064 = vmatpush2.msra.mxu0 0.0
    %5065 = vmatprep.subr.mxu0 0.0
    %5066 = vmatpush2.msra.mxu0 0.0
    %5067 = vmatprep.subr.mxu0 0.0
    %5068 = vmatpush2.msra.mxu0 0.0
    %5069 = vmatprep.subr.mxu0 0.0
    %5070 = vmatpush2.msra.mxu0 0.0
    %5071 = vmatprep.subr.mxu0 0.0
    %5072 = vmatpush2.msra.mxu0 0.0
    %5073 = vmatprep.subr.mxu0 0.0
    %5074 = vmatpush2.msra.mxu0 0.0
    %5075 = vmatprep.subr.mxu0 0.0
    %5076 = vmatpush2.msra.mxu0 0.0
    %5077 = vmatprep.subr.mxu0 0.0
    %5078 = vmatpush2.msra.mxu0 0.0
    %5079 = vmatprep.subr.mxu0 0.0
    %5080 = vmatpush2.msra.mxu0 0.0
    %5081 = vmatprep.subr.mxu0 0.0
    %5082 = vmatpush2.msra.mxu0 0.0
    %5083 = vmatprep.subr.mxu0 0.0
    %5084 = vmatpush2.msra.mxu0 0.0
    %5085 = vmatprep.subr.mxu0 0.0
    %5086 = vmatpush2.msra.mxu0 0.0
    %5087 = vmatprep.subr.mxu0 0.0
    %5088 = vmatpush2.msra.mxu0 0.0
    %5089 = vmatprep.subr.mxu0 0.0
    %5090 = vmatpush2.msra.mxu0 0.0
    %5091 = vmatprep.mubr.f32.mxu0 0.0
    %5092 = vmatmul.mubr.f32.gmra.mxu0 %v5025
    %v5093 = vpop.f32.mrf.mxu0
    %v5094 = vadd.f32 0.0, %v5093
    %v5095 = vpop.f32.mrf.mxu0
    %5096 = vdwg.mxu0
    %s5097 = scalar_lea.vmem %s7, 320
    %v5098 = vld [vmem:[%s5097] sm:$0xff]
    %v5099 = vld [vmem:[%s5097 + $0x8] sm:$0xff]
    %v5100 = vld [vmem:[%s5097 + $0x10] sm:$0xff]
    %v5101 = vld [vmem:[%s5097 + $0x18] sm:$0xff]
    %v5103 = vsel %vm3408, %v5094, 0
    %5105 = vmatprep.subr.mxu0 0.0
    %5106 = vmatpush1.msra.mxu0 0.0
    %5107 = vmatprep.subr.mxu0 0.0
    %5108 = vmatpush1.msra.mxu0 0.0
    %5109 = vmatprep.subr.mxu0 0.0
    %5110 = vmatpush1.msra.mxu0 0.0
    %5111 = vmatprep.subr.mxu0 0.0
    %5112 = vmatpush1.msra.mxu0 0.0
    %5113 = vmatprep.subr.mxu0 0.0
    %5114 = vmatpush1.msra.mxu0 0.0
    %5115 = vmatprep.subr.mxu0 0.0
    %5116 = vmatpush1.msra.mxu0 0.0
    %5117 = vmatprep.subr.mxu0 0.0
    %5118 = vmatpush1.msra.mxu0 0.0
    %5119 = vmatprep.subr.mxu0 0.0
    %5120 = vmatpush1.msra.mxu0 0.0
    %5121 = vmatprep.subr.mxu0 0.0
    %5122 = vmatpush1.msra.mxu0 0.0
    %5123 = vmatprep.subr.mxu0 0.0
    %5124 = vmatpush1.msra.mxu0 0.0
    %5125 = vmatprep.subr.mxu0 0.0
    %5126 = vmatpush1.msra.mxu0 0.0
    %5127 = vmatprep.subr.mxu0 0.0
    %5128 = vmatpush1.msra.mxu0 0.0
    %5129 = vmatprep.subr.mxu0 0.0
    %5130 = vmatpush1.msra.mxu0 %v5101
    %5131 = vmatprep.subr.mxu0 0.0
    %5132 = vmatpush1.msra.mxu0 %v5100
    %5133 = vmatprep.subr.mxu0 0.0
    %5134 = vmatpush1.msra.mxu0 %v5099
    %5135 = vmatprep.subr.mxu0 0.0
    %5136 = vmatpush1.msra.mxu0 %v5098
    %5137 = vmatprep.subr.mxu0 0.0
    %5138 = vmatpush2.msra.mxu0 0.0
    %5139 = vmatprep.subr.mxu0 0.0
    %5140 = vmatpush2.msra.mxu0 0.0
    %5141 = vmatprep.subr.mxu0 0.0
    %5142 = vmatpush2.msra.mxu0 0.0
    %5143 = vmatprep.subr.mxu0 0.0
    %5144 = vmatpush2.msra.mxu0 0.0
    %5145 = vmatprep.subr.mxu0 0.0
    %5146 = vmatpush2.msra.mxu0 0.0
    %5147 = vmatprep.subr.mxu0 0.0
    %5148 = vmatpush2.msra.mxu0 0.0
    %5149 = vmatprep.subr.mxu0 0.0
    %5150 = vmatpush2.msra.mxu0 0.0
    %5151 = vmatprep.subr.mxu0 0.0
    %5152 = vmatpush2.msra.mxu0 0.0
    %5153 = vmatprep.subr.mxu0 0.0
    %5154 = vmatpush2.msra.mxu0 0.0
    %5155 = vmatprep.subr.mxu0 0.0
    %5156 = vmatpush2.msra.mxu0 0.0
    %5157 = vmatprep.subr.mxu0 0.0
    %5158 = vmatpush2.msra.mxu0 0.0
    %5159 = vmatprep.subr.mxu0 0.0
    %5160 = vmatpush2.msra.mxu0 0.0
    %5161 = vmatprep.subr.mxu0 0.0
    %5162 = vmatpush2.msra.mxu0 0.0
    %5163 = vmatprep.subr.mxu0 0.0
    %5164 = vmatpush2.msra.mxu0 0.0
    %5165 = vmatprep.subr.mxu0 0.0
    %5166 = vmatpush2.msra.mxu0 0.0
    %5167 = vmatprep.subr.mxu0 0.0
    %5168 = vmatpush2.msra.mxu0 0.0
    %5169 = vmatprep.mubr.f32.mxu0 0.0
    %5170 = vmatmul.mubr.f32.gmra.mxu0 %v5103
    %v5171 = vpop.f32.mrf.mxu0
    %v5172 = vadd.f32 0.0, %v5171
    %v5173 = vpop.f32.mrf.mxu0
    %5174 = vdwg.mxu0
    %v5175 = vadd.f32 %v5021, %v5172
    %s5176 = scalar_lea.vmem %s6, 88
    %v5177 = vld [vmem:[%s5176] sm:$0xff]
    %v5179 = vsel %vm3408, %v5177, 0
    %5181 = vmatprep.subr.mxu0 0.0
    %5182 = vmatpush1.msra.mxu0 0.0
    %5183 = vmatprep.subr.mxu0 0.0
    %5184 = vmatpush1.msra.mxu0 0.0
    %5185 = vmatprep.subr.mxu0 0.0
    %5186 = vmatpush1.msra.mxu0 0.0
    %5187 = vmatprep.subr.mxu0 0.0
    %5188 = vmatpush1.msra.mxu0 0.0
    %5189 = vmatprep.subr.mxu0 0.0
    %5190 = vmatpush1.msra.mxu0 0.0
    %5191 = vmatprep.subr.mxu0 0.0
    %5192 = vmatpush1.msra.mxu0 0.0
    %5193 = vmatprep.subr.mxu0 0.0
    %5194 = vmatpush1.msra.mxu0 0.0
    %5195 = vmatprep.subr.mxu0 0.0
    %5196 = vmatpush1.msra.mxu0 0.0
    %5197 = vmatprep.subr.mxu0 0.0
    %5198 = vmatpush1.msra.mxu0 0.0
    %5199 = vmatprep.subr.mxu0 0.0
    %5200 = vmatpush1.msra.mxu0 0.0
    %5201 = vmatprep.subr.mxu0 0.0
    %5202 = vmatpush1.msra.mxu0 0.0
    %5203 = vmatprep.subr.mxu0 0.0
    %5204 = vmatpush1.msra.mxu0 0.0
    %5205 = vmatprep.subr.mxu0 0.0
    %5206 = vmatpush1.msra.mxu0 %v3485
    %5207 = vmatprep.subr.mxu0 0.0
    %5208 = vmatpush1.msra.mxu0 %v3484
    %5209 = vmatprep.subr.mxu0 0.0
    %5210 = vmatpush1.msra.mxu0 %v3483
    %5211 = vmatprep.subr.mxu0 0.0
    %5212 = vmatpush1.msra.mxu0 %v3482
    %5213 = vmatprep.subr.mxu0 0.0
    %5214 = vmatpush2.msra.mxu0 0.0
    %5215 = vmatprep.subr.mxu0 0.0
    %5216 = vmatpush2.msra.mxu0 0.0
    %5217 = vmatprep.subr.mxu0 0.0
    %5218 = vmatpush2.msra.mxu0 0.0
    %5219 = vmatprep.subr.mxu0 0.0
    %5220 = vmatpush2.msra.mxu0 0.0
    %5221 = vmatprep.subr.mxu0 0.0
    %5222 = vmatpush2.msra.mxu0 0.0
    %5223 = vmatprep.subr.mxu0 0.0
    %5224 = vmatpush2.msra.mxu0 0.0
    %5225 = vmatprep.subr.mxu0 0.0
    %5226 = vmatpush2.msra.mxu0 0.0
    %5227 = vmatprep.subr.mxu0 0.0
    %5228 = vmatpush2.msra.mxu0 0.0
    %5229 = vmatprep.subr.mxu0 0.0
    %5230 = vmatpush2.msra.mxu0 0.0
    %5231 = vmatprep.subr.mxu0 0.0
    %5232 = vmatpush2.msra.mxu0 0.0
    %5233 = vmatprep.subr.mxu0 0.0
    %5234 = vmatpush2.msra.mxu0 0.0
    %5235 = vmatprep.subr.mxu0 0.0
    %5236 = vmatpush2.msra.mxu0 0.0
    %5237 = vmatprep.subr.mxu0 0.0
    %5238 = vmatpush2.msra.mxu0 0.0
    %5239 = vmatprep.subr.mxu0 0.0
    %5240 = vmatpush2.msra.mxu0 0.0
    %5241 = vmatprep.subr.mxu0 0.0
    %5242 = vmatpush2.msra.mxu0 0.0
    %5243 = vmatprep.subr.mxu0 0.0
    %5244 = vmatpush2.msra.mxu0 0.0
    %5245 = vmatprep.mubr.f32.mxu0 0.0
    %5246 = vmatmul.mubr.f32.gmra.mxu0 %v5179
    %v5247 = vpop.f32.mrf.mxu0
    %v5248 = vadd.f32 0.0, %v5247
    %v5249 = vpop.f32.mrf.mxu0
    %5250 = vdwg.mxu0
    %s5251 = scalar_lea.vmem %s7, 352
    %v5252 = vld [vmem:[%s5251] sm:$0xff]
    %v5253 = vld [vmem:[%s5251 + $0x8] sm:$0xff]
    %v5254 = vld [vmem:[%s5251 + $0x10] sm:$0xff]
    %v5255 = vld [vmem:[%s5251 + $0x18] sm:$0xff]
    %v5257 = vsel %vm3408, %v5248, 0
    %5259 = vmatprep.subr.mxu0 0.0
    %5260 = vmatpush1.msra.mxu0 0.0
    %5261 = vmatprep.subr.mxu0 0.0
    %5262 = vmatpush1.msra.mxu0 0.0
    %5263 = vmatprep.subr.mxu0 0.0
    %5264 = vmatpush1.msra.mxu0 0.0
    %5265 = vmatprep.subr.mxu0 0.0
    %5266 = vmatpush1.msra.mxu0 0.0
    %5267 = vmatprep.subr.mxu0 0.0
    %5268 = vmatpush1.msra.mxu0 0.0
    %5269 = vmatprep.subr.mxu0 0.0
    %5270 = vmatpush1.msra.mxu0 0.0
    %5271 = vmatprep.subr.mxu0 0.0
    %5272 = vmatpush1.msra.mxu0 0.0
    %5273 = vmatprep.subr.mxu0 0.0
    %5274 = vmatpush1.msra.mxu0 0.0
    %5275 = vmatprep.subr.mxu0 0.0
    %5276 = vmatpush1.msra.mxu0 0.0
    %5277 = vmatprep.subr.mxu0 0.0
    %5278 = vmatpush1.msra.mxu0 0.0
    %5279 = vmatprep.subr.mxu0 0.0
    %5280 = vmatpush1.msra.mxu0 0.0
    %5281 = vmatprep.subr.mxu0 0.0
    %5282 = vmatpush1.msra.mxu0 0.0
    %5283 = vmatprep.subr.mxu0 0.0
    %5284 = vmatpush1.msra.mxu0 %v5255
    %5285 = vmatprep.subr.mxu0 0.0
    %5286 = vmatpush1.msra.mxu0 %v5254
    %5287 = vmatprep.subr.mxu0 0.0
    %5288 = vmatpush1.msra.mxu0 %v5253
    %5289 = vmatprep.subr.mxu0 0.0
    %5290 = vmatpush1.msra.mxu0 %v5252
    %5291 = vmatprep.subr.mxu0 0.0
    %5292 = vmatpush2.msra.mxu0 0.0
    %5293 = vmatprep.subr.mxu0 0.0
    %5294 = vmatpush2.msra.mxu0 0.0
    %5295 = vmatprep.subr.mxu0 0.0
    %5296 = vmatpush2.msra.mxu0 0.0
    %5297 = vmatprep.subr.mxu0 0.0
    %5298 = vmatpush2.msra.mxu0 0.0
    %5299 = vmatprep.subr.mxu0 0.0
    %5300 = vmatpush2.msra.mxu0 0.0
    %5301 = vmatprep.subr.mxu0 0.0
    %5302 = vmatpush2.msra.mxu0 0.0
    %5303 = vmatprep.subr.mxu0 0.0
    %5304 = vmatpush2.msra.mxu0 0.0
    %5305 = vmatprep.subr.mxu0 0.0
    %5306 = vmatpush2.msra.mxu0 0.0
    %5307 = vmatprep.subr.mxu0 0.0
    %5308 = vmatpush2.msra.mxu0 0.0
    %5309 = vmatprep.subr.mxu0 0.0
    %5310 = vmatpush2.msra.mxu0 0.0
    %5311 = vmatprep.subr.mxu0 0.0
    %5312 = vmatpush2.msra.mxu0 0.0
    %5313 = vmatprep.subr.mxu0 0.0
    %5314 = vmatpush2.msra.mxu0 0.0
    %5315 = vmatprep.subr.mxu0 0.0
    %5316 = vmatpush2.msra.mxu0 0.0
    %5317 = vmatprep.subr.mxu0 0.0
    %5318 = vmatpush2.msra.mxu0 0.0
    %5319 = vmatprep.subr.mxu0 0.0
    %5320 = vmatpush2.msra.mxu0 0.0
    %5321 = vmatprep.subr.mxu0 0.0
    %5322 = vmatpush2.msra.mxu0 0.0
    %5323 = vmatprep.mubr.f32.mxu0 0.0
    %5324 = vmatmul.mubr.f32.gmra.mxu0 %v5257
    %v5325 = vpop.f32.mrf.mxu0
    %v5326 = vadd.f32 0.0, %v5325
    %v5327 = vpop.f32.mrf.mxu0
    %5328 = vdwg.mxu0
    %v5329 = vadd.f32 %v5175, %v5326
    %s5330 = scalar_lea.vmem %s6, 96
    %v5331 = vld [vmem:[%s5330] sm:$0xff]
    %v5333 = vsel %vm3408, %v5331, 0
    %5335 = vmatprep.subr.mxu0 0.0
    %5336 = vmatpush1.msra.mxu0 0.0
    %5337 = vmatprep.subr.mxu0 0.0
    %5338 = vmatpush1.msra.mxu0 0.0
    %5339 = vmatprep.subr.mxu0 0.0
    %5340 = vmatpush1.msra.mxu0 0.0
    %5341 = vmatprep.subr.mxu0 0.0
    %5342 = vmatpush1.msra.mxu0 0.0
    %5343 = vmatprep.subr.mxu0 0.0
    %5344 = vmatpush1.msra.mxu0 0.0
    %5345 = vmatprep.subr.mxu0 0.0
    %5346 = vmatpush1.msra.mxu0 0.0
    %5347 = vmatprep.subr.mxu0 0.0
    %5348 = vmatpush1.msra.mxu0 0.0
    %5349 = vmatprep.subr.mxu0 0.0
    %5350 = vmatpush1.msra.mxu0 0.0
    %5351 = vmatprep.subr.mxu0 0.0
    %5352 = vmatpush1.msra.mxu0 0.0
    %5353 = vmatprep.subr.mxu0 0.0
    %5354 = vmatpush1.msra.mxu0 0.0
    %5355 = vmatprep.subr.mxu0 0.0
    %5356 = vmatpush1.msra.mxu0 0.0
    %5357 = vmatprep.subr.mxu0 0.0
    %5358 = vmatpush1.msra.mxu0 0.0
    %5359 = vmatprep.subr.mxu0 0.0
    %5360 = vmatpush1.msra.mxu0 %v3485
    %5361 = vmatprep.subr.mxu0 0.0
    %5362 = vmatpush1.msra.mxu0 %v3484
    %5363 = vmatprep.subr.mxu0 0.0
    %5364 = vmatpush1.msra.mxu0 %v3483
    %5365 = vmatprep.subr.mxu0 0.0
    %5366 = vmatpush1.msra.mxu0 %v3482
    %5367 = vmatprep.subr.mxu0 0.0
    %5368 = vmatpush2.msra.mxu0 0.0
    %5369 = vmatprep.subr.mxu0 0.0
    %5370 = vmatpush2.msra.mxu0 0.0
    %5371 = vmatprep.subr.mxu0 0.0
    %5372 = vmatpush2.msra.mxu0 0.0
    %5373 = vmatprep.subr.mxu0 0.0
    %5374 = vmatpush2.msra.mxu0 0.0
    %5375 = vmatprep.subr.mxu0 0.0
    %5376 = vmatpush2.msra.mxu0 0.0
    %5377 = vmatprep.subr.mxu0 0.0
    %5378 = vmatpush2.msra.mxu0 0.0
    %5379 = vmatprep.subr.mxu0 0.0
    %5380 = vmatpush2.msra.mxu0 0.0
    %5381 = vmatprep.subr.mxu0 0.0
    %5382 = vmatpush2.msra.mxu0 0.0
    %5383 = vmatprep.subr.mxu0 0.0
    %5384 = vmatpush2.msra.mxu0 0.0
    %5385 = vmatprep.subr.mxu0 0.0
    %5386 = vmatpush2.msra.mxu0 0.0
    %5387 = vmatprep.subr.mxu0 0.0
    %5388 = vmatpush2.msra.mxu0 0.0
    %5389 = vmatprep.subr.mxu0 0.0
    %5390 = vmatpush2.msra.mxu0 0.0
    %5391 = vmatprep.subr.mxu0 0.0
    %5392 = vmatpush2.msra.mxu0 0.0
    %5393 = vmatprep.subr.mxu0 0.0
    %5394 = vmatpush2.msra.mxu0 0.0
    %5395 = vmatprep.subr.mxu0 0.0
    %5396 = vmatpush2.msra.mxu0 0.0
    %5397 = vmatprep.subr.mxu0 0.0
    %5398 = vmatpush2.msra.mxu0 0.0
    %5399 = vmatprep.mubr.f32.mxu0 0.0
    %5400 = vmatmul.mubr.f32.gmra.mxu0 %v5333
    %v5401 = vpop.f32.mrf.mxu0
    %v5402 = vadd.f32 0.0, %v5401
    %v5403 = vpop.f32.mrf.mxu0
    %5404 = vdwg.mxu0
    %s5405 = scalar_lea.vmem %s7, 384
    %v5406 = vld [vmem:[%s5405] sm:$0xff]
    %v5407 = vld [vmem:[%s5405 + $0x8] sm:$0xff]
    %v5408 = vld [vmem:[%s5405 + $0x10] sm:$0xff]
    %v5409 = vld [vmem:[%s5405 + $0x18] sm:$0xff]
    %v5411 = vsel %vm3408, %v5402, 0
    %5413 = vmatprep.subr.mxu0 0.0
    %5414 = vmatpush1.msra.mxu0 0.0
    %5415 = vmatprep.subr.mxu0 0.0
    %5416 = vmatpush1.msra.mxu0 0.0
    %5417 = vmatprep.subr.mxu0 0.0
    %5418 = vmatpush1.msra.mxu0 0.0
    %5419 = vmatprep.subr.mxu0 0.0
    %5420 = vmatpush1.msra.mxu0 0.0
    %5421 = vmatprep.subr.mxu0 0.0
    %5422 = vmatpush1.msra.mxu0 0.0
    %5423 = vmatprep.subr.mxu0 0.0
    %5424 = vmatpush1.msra.mxu0 0.0
    %5425 = vmatprep.subr.mxu0 0.0
    %5426 = vmatpush1.msra.mxu0 0.0
    %5427 = vmatprep.subr.mxu0 0.0
    %5428 = vmatpush1.msra.mxu0 0.0
    %5429 = vmatprep.subr.mxu0 0.0
    %5430 = vmatpush1.msra.mxu0 0.0
    %5431 = vmatprep.subr.mxu0 0.0
    %5432 = vmatpush1.msra.mxu0 0.0
    %5433 = vmatprep.subr.mxu0 0.0
    %5434 = vmatpush1.msra.mxu0 0.0
    %5435 = vmatprep.subr.mxu0 0.0
    %5436 = vmatpush1.msra.mxu0 0.0
    %5437 = vmatprep.subr.mxu0 0.0
    %5438 = vmatpush1.msra.mxu0 %v5409
    %5439 = vmatprep.subr.mxu0 0.0
    %5440 = vmatpush1.msra.mxu0 %v5408
    %5441 = vmatprep.subr.mxu0 0.0
    %5442 = vmatpush1.msra.mxu0 %v5407
    %5443 = vmatprep.subr.mxu0 0.0
    %5444 = vmatpush1.msra.mxu0 %v5406
    %5445 = vmatprep.subr.mxu0 0.0
    %5446 = vmatpush2.msra.mxu0 0.0
    %5447 = vmatprep.subr.mxu0 0.0
    %5448 = vmatpush2.msra.mxu0 0.0
    %5449 = vmatprep.subr.mxu0 0.0
    %5450 = vmatpush2.msra.mxu0 0.0
    %5451 = vmatprep.subr.mxu0 0.0
    %5452 = vmatpush2.msra.mxu0 0.0
    %5453 = vmatprep.subr.mxu0 0.0
    %5454 = vmatpush2.msra.mxu0 0.0
    %5455 = vmatprep.subr.mxu0 0.0
    %5456 = vmatpush2.msra.mxu0 0.0
    %5457 = vmatprep.subr.mxu0 0.0
    %5458 = vmatpush2.msra.mxu0 0.0
    %5459 = vmatprep.subr.mxu0 0.0
    %5460 = vmatpush2.msra.mxu0 0.0
    %5461 = vmatprep.subr.mxu0 0.0
    %5462 = vmatpush2.msra.mxu0 0.0
    %5463 = vmatprep.subr.mxu0 0.0
    %5464 = vmatpush2.msra.mxu0 0.0
    %5465 = vmatprep.subr.mxu0 0.0
    %5466 = vmatpush2.msra.mxu0 0.0
    %5467 = vmatprep.subr.mxu0 0.0
    %5468 = vmatpush2.msra.mxu0 0.0
    %5469 = vmatprep.subr.mxu0 0.0
    %5470 = vmatpush2.msra.mxu0 0.0
    %5471 = vmatprep.subr.mxu0 0.0
    %5472 = vmatpush2.msra.mxu0 0.0
    %5473 = vmatprep.subr.mxu0 0.0
    %5474 = vmatpush2.msra.mxu0 0.0
    %5475 = vmatprep.subr.mxu0 0.0
    %5476 = vmatpush2.msra.mxu0 0.0
    %5477 = vmatprep.mubr.f32.mxu0 0.0
    %5478 = vmatmul.mubr.f32.gmra.mxu0 %v5411
    %v5479 = vpop.f32.mrf.mxu0
    %v5480 = vadd.f32 0.0, %v5479
    %v5481 = vpop.f32.mrf.mxu0
    %5482 = vdwg.mxu0
    %v5483 = vadd.f32 %v5329, %v5480
    %s5484 = scalar_lea.vmem %s6, 104
    %v5485 = vld [vmem:[%s5484] sm:$0xff]
    %v5487 = vsel %vm3408, %v5485, 0
    %5489 = vmatprep.subr.mxu0 0.0
    %5490 = vmatpush1.msra.mxu0 0.0
    %5491 = vmatprep.subr.mxu0 0.0
    %5492 = vmatpush1.msra.mxu0 0.0
    %5493 = vmatprep.subr.mxu0 0.0
    %5494 = vmatpush1.msra.mxu0 0.0
    %5495 = vmatprep.subr.mxu0 0.0
    %5496 = vmatpush1.msra.mxu0 0.0
    %5497 = vmatprep.subr.mxu0 0.0
    %5498 = vmatpush1.msra.mxu0 0.0
    %5499 = vmatprep.subr.mxu0 0.0
    %5500 = vmatpush1.msra.mxu0 0.0
    %5501 = vmatprep.subr.mxu0 0.0
    %5502 = vmatpush1.msra.mxu0 0.0
    %5503 = vmatprep.subr.mxu0 0.0
    %5504 = vmatpush1.msra.mxu0 0.0
    %5505 = vmatprep.subr.mxu0 0.0
    %5506 = vmatpush1.msra.mxu0 0.0
    %5507 = vmatprep.subr.mxu0 0.0
    %5508 = vmatpush1.msra.mxu0 0.0
    %5509 = vmatprep.subr.mxu0 0.0
    %5510 = vmatpush1.msra.mxu0 0.0
    %5511 = vmatprep.subr.mxu0 0.0
    %5512 = vmatpush1.msra.mxu0 0.0
    %5513 = vmatprep.subr.mxu0 0.0
    %5514 = vmatpush1.msra.mxu0 %v3485
    %5515 = vmatprep.subr.mxu0 0.0
    %5516 = vmatpush1.msra.mxu0 %v3484
    %5517 = vmatprep.subr.mxu0 0.0
    %5518 = vmatpush1.msra.mxu0 %v3483
    %5519 = vmatprep.subr.mxu0 0.0
    %5520 = vmatpush1.msra.mxu0 %v3482
    %5521 = vmatprep.subr.mxu0 0.0
    %5522 = vmatpush2.msra.mxu0 0.0
    %5523 = vmatprep.subr.mxu0 0.0
    %5524 = vmatpush2.msra.mxu0 0.0
    %5525 = vmatprep.subr.mxu0 0.0
    %5526 = vmatpush2.msra.mxu0 0.0
    %5527 = vmatprep.subr.mxu0 0.0
    %5528 = vmatpush2.msra.mxu0 0.0
    %5529 = vmatprep.subr.mxu0 0.0
    %5530 = vmatpush2.msra.mxu0 0.0
    %5531 = vmatprep.subr.mxu0 0.0
    %5532 = vmatpush2.msra.mxu0 0.0
    %5533 = vmatprep.subr.mxu0 0.0
    %5534 = vmatpush2.msra.mxu0 0.0
    %5535 = vmatprep.subr.mxu0 0.0
    %5536 = vmatpush2.msra.mxu0 0.0
    %5537 = vmatprep.subr.mxu0 0.0
    %5538 = vmatpush2.msra.mxu0 0.0
    %5539 = vmatprep.subr.mxu0 0.0
    %5540 = vmatpush2.msra.mxu0 0.0
    %5541 = vmatprep.subr.mxu0 0.0
    %5542 = vmatpush2.msra.mxu0 0.0
    %5543 = vmatprep.subr.mxu0 0.0
    %5544 = vmatpush2.msra.mxu0 0.0
    %5545 = vmatprep.subr.mxu0 0.0
    %5546 = vmatpush2.msra.mxu0 0.0
    %5547 = vmatprep.subr.mxu0 0.0
    %5548 = vmatpush2.msra.mxu0 0.0
    %5549 = vmatprep.subr.mxu0 0.0
    %5550 = vmatpush2.msra.mxu0 0.0
    %5551 = vmatprep.subr.mxu0 0.0
    %5552 = vmatpush2.msra.mxu0 0.0
    %5553 = vmatprep.mubr.f32.mxu0 0.0
    %5554 = vmatmul.mubr.f32.gmra.mxu0 %v5487
    %v5555 = vpop.f32.mrf.mxu0
    %v5556 = vadd.f32 0.0, %v5555
    %v5557 = vpop.f32.mrf.mxu0
    %5558 = vdwg.mxu0
    %s5559 = scalar_lea.vmem %s7, 416
    %v5560 = vld [vmem:[%s5559] sm:$0xff]
    %v5561 = vld [vmem:[%s5559 + $0x8] sm:$0xff]
    %v5562 = vld [vmem:[%s5559 + $0x10] sm:$0xff]
    %v5563 = vld [vmem:[%s5559 + $0x18] sm:$0xff]
    %v5565 = vsel %vm3408, %v5556, 0
    %5567 = vmatprep.subr.mxu0 0.0
    %5568 = vmatpush1.msra.mxu0 0.0
    %5569 = vmatprep.subr.mxu0 0.0
    %5570 = vmatpush1.msra.mxu0 0.0
    %5571 = vmatprep.subr.mxu0 0.0
    %5572 = vmatpush1.msra.mxu0 0.0
    %5573 = vmatprep.subr.mxu0 0.0
    %5574 = vmatpush1.msra.mxu0 0.0
    %5575 = vmatprep.subr.mxu0 0.0
    %5576 = vmatpush1.msra.mxu0 0.0
    %5577 = vmatprep.subr.mxu0 0.0
    %5578 = vmatpush1.msra.mxu0 0.0
    %5579 = vmatprep.subr.mxu0 0.0
    %5580 = vmatpush1.msra.mxu0 0.0
    %5581 = vmatprep.subr.mxu0 0.0
    %5582 = vmatpush1.msra.mxu0 0.0
    %5583 = vmatprep.subr.mxu0 0.0
    %5584 = vmatpush1.msra.mxu0 0.0
    %5585 = vmatprep.subr.mxu0 0.0
    %5586 = vmatpush1.msra.mxu0 0.0
    %5587 = vmatprep.subr.mxu0 0.0
    %5588 = vmatpush1.msra.mxu0 0.0
    %5589 = vmatprep.subr.mxu0 0.0
    %5590 = vmatpush1.msra.mxu0 0.0
    %5591 = vmatprep.subr.mxu0 0.0
    %5592 = vmatpush1.msra.mxu0 %v5563
    %5593 = vmatprep.subr.mxu0 0.0
    %5594 = vmatpush1.msra.mxu0 %v5562
    %5595 = vmatprep.subr.mxu0 0.0
    %5596 = vmatpush1.msra.mxu0 %v5561
    %5597 = vmatprep.subr.mxu0 0.0
    %5598 = vmatpush1.msra.mxu0 %v5560
    %5599 = vmatprep.subr.mxu0 0.0
    %5600 = vmatpush2.msra.mxu0 0.0
    %5601 = vmatprep.subr.mxu0 0.0
    %5602 = vmatpush2.msra.mxu0 0.0
    %5603 = vmatprep.subr.mxu0 0.0
    %5604 = vmatpush2.msra.mxu0 0.0
    %5605 = vmatprep.subr.mxu0 0.0
    %5606 = vmatpush2.msra.mxu0 0.0
    %5607 = vmatprep.subr.mxu0 0.0
    %5608 = vmatpush2.msra.mxu0 0.0
    %5609 = vmatprep.subr.mxu0 0.0
    %5610 = vmatpush2.msra.mxu0 0.0
    %5611 = vmatprep.subr.mxu0 0.0
    %5612 = vmatpush2.msra.mxu0 0.0
    %5613 = vmatprep.subr.mxu0 0.0
    %5614 = vmatpush2.msra.mxu0 0.0
    %5615 = vmatprep.subr.mxu0 0.0
    %5616 = vmatpush2.msra.mxu0 0.0
    %5617 = vmatprep.subr.mxu0 0.0
    %5618 = vmatpush2.msra.mxu0 0.0
    %5619 = vmatprep.subr.mxu0 0.0
    %5620 = vmatpush2.msra.mxu0 0.0
    %5621 = vmatprep.subr.mxu0 0.0
    %5622 = vmatpush2.msra.mxu0 0.0
    %5623 = vmatprep.subr.mxu0 0.0
    %5624 = vmatpush2.msra.mxu0 0.0
    %5625 = vmatprep.subr.mxu0 0.0
    %5626 = vmatpush2.msra.mxu0 0.0
    %5627 = vmatprep.subr.mxu0 0.0
    %5628 = vmatpush2.msra.mxu0 0.0
    %5629 = vmatprep.subr.mxu0 0.0
    %5630 = vmatpush2.msra.mxu0 0.0
    %5631 = vmatprep.mubr.f32.mxu0 0.0
    %5632 = vmatmul.mubr.f32.gmra.mxu0 %v5565
    %v5633 = vpop.f32.mrf.mxu0
    %v5634 = vadd.f32 0.0, %v5633
    %v5635 = vpop.f32.mrf.mxu0
    %5636 = vdwg.mxu0
    %v5637 = vadd.f32 %v5483, %v5634
    %s5638 = scalar_lea.vmem %s6, 112
    %v5639 = vld [vmem:[%s5638] sm:$0xff]
    %v5641 = vsel %vm3408, %v5639, 0
    %5643 = vmatprep.subr.mxu0 0.0
    %5644 = vmatpush1.msra.mxu0 0.0
    %5645 = vmatprep.subr.mxu0 0.0
    %5646 = vmatpush1.msra.mxu0 0.0
    %5647 = vmatprep.subr.mxu0 0.0
    %5648 = vmatpush1.msra.mxu0 0.0
    %5649 = vmatprep.subr.mxu0 0.0
    %5650 = vmatpush1.msra.mxu0 0.0
    %5651 = vmatprep.subr.mxu0 0.0
    %5652 = vmatpush1.msra.mxu0 0.0
    %5653 = vmatprep.subr.mxu0 0.0
    %5654 = vmatpush1.msra.mxu0 0.0
    %5655 = vmatprep.subr.mxu0 0.0
    %5656 = vmatpush1.msra.mxu0 0.0
    %5657 = vmatprep.subr.mxu0 0.0
    %5658 = vmatpush1.msra.mxu0 0.0
    %5659 = vmatprep.subr.mxu0 0.0
    %5660 = vmatpush1.msra.mxu0 0.0
    %5661 = vmatprep.subr.mxu0 0.0
    %5662 = vmatpush1.msra.mxu0 0.0
    %5663 = vmatprep.subr.mxu0 0.0
    %5664 = vmatpush1.msra.mxu0 0.0
    %5665 = vmatprep.subr.mxu0 0.0
    %5666 = vmatpush1.msra.mxu0 0.0
    %5667 = vmatprep.subr.mxu0 0.0
    %5668 = vmatpush1.msra.mxu0 %v3485
    %5669 = vmatprep.subr.mxu0 0.0
    %5670 = vmatpush1.msra.mxu0 %v3484
    %5671 = vmatprep.subr.mxu0 0.0
    %5672 = vmatpush1.msra.mxu0 %v3483
    %5673 = vmatprep.subr.mxu0 0.0
    %5674 = vmatpush1.msra.mxu0 %v3482
    %5675 = vmatprep.subr.mxu0 0.0
    %5676 = vmatpush2.msra.mxu0 0.0
    %5677 = vmatprep.subr.mxu0 0.0
    %5678 = vmatpush2.msra.mxu0 0.0
    %5679 = vmatprep.subr.mxu0 0.0
    %5680 = vmatpush2.msra.mxu0 0.0
    %5681 = vmatprep.subr.mxu0 0.0
    %5682 = vmatpush2.msra.mxu0 0.0
    %5683 = vmatprep.subr.mxu0 0.0
    %5684 = vmatpush2.msra.mxu0 0.0
    %5685 = vmatprep.subr.mxu0 0.0
    %5686 = vmatpush2.msra.mxu0 0.0
    %5687 = vmatprep.subr.mxu0 0.0
    %5688 = vmatpush2.msra.mxu0 0.0
    %5689 = vmatprep.subr.mxu0 0.0
    %5690 = vmatpush2.msra.mxu0 0.0
    %5691 = vmatprep.subr.mxu0 0.0
    %5692 = vmatpush2.msra.mxu0 0.0
    %5693 = vmatprep.subr.mxu0 0.0
    %5694 = vmatpush2.msra.mxu0 0.0
    %5695 = vmatprep.subr.mxu0 0.0
    %5696 = vmatpush2.msra.mxu0 0.0
    %5697 = vmatprep.subr.mxu0 0.0
    %5698 = vmatpush2.msra.mxu0 0.0
    %5699 = vmatprep.subr.mxu0 0.0
    %5700 = vmatpush2.msra.mxu0 0.0
    %5701 = vmatprep.subr.mxu0 0.0
    %5702 = vmatpush2.msra.mxu0 0.0
    %5703 = vmatprep.subr.mxu0 0.0
    %5704 = vmatpush2.msra.mxu0 0.0
    %5705 = vmatprep.subr.mxu0 0.0
    %5706 = vmatpush2.msra.mxu0 0.0
    %5707 = vmatprep.mubr.f32.mxu0 0.0
    %5708 = vmatmul.mubr.f32.gmra.mxu0 %v5641
    %v5709 = vpop.f32.mrf.mxu0
    %v5710 = vadd.f32 0.0, %v5709
    %v5711 = vpop.f32.mrf.mxu0
    %5712 = vdwg.mxu0
    %s5713 = scalar_lea.vmem %s7, 448
    %v5714 = vld [vmem:[%s5713] sm:$0xff]
    %v5715 = vld [vmem:[%s5713 + $0x8] sm:$0xff]
    %v5716 = vld [vmem:[%s5713 + $0x10] sm:$0xff]
    %v5717 = vld [vmem:[%s5713 + $0x18] sm:$0xff]
    %v5719 = vsel %vm3408, %v5710, 0
    %5721 = vmatprep.subr.mxu0 0.0
    %5722 = vmatpush1.msra.mxu0 0.0
    %5723 = vmatprep.subr.mxu0 0.0
    %5724 = vmatpush1.msra.mxu0 0.0
    %5725 = vmatprep.subr.mxu0 0.0
    %5726 = vmatpush1.msra.mxu0 0.0
    %5727 = vmatprep.subr.mxu0 0.0
    %5728 = vmatpush1.msra.mxu0 0.0
    %5729 = vmatprep.subr.mxu0 0.0
    %5730 = vmatpush1.msra.mxu0 0.0
    %5731 = vmatprep.subr.mxu0 0.0
    %5732 = vmatpush1.msra.mxu0 0.0
    %5733 = vmatprep.subr.mxu0 0.0
    %5734 = vmatpush1.msra.mxu0 0.0
    %5735 = vmatprep.subr.mxu0 0.0
    %5736 = vmatpush1.msra.mxu0 0.0
    %5737 = vmatprep.subr.mxu0 0.0
    %5738 = vmatpush1.msra.mxu0 0.0
    %5739 = vmatprep.subr.mxu0 0.0
    %5740 = vmatpush1.msra.mxu0 0.0
    %5741 = vmatprep.subr.mxu0 0.0
    %5742 = vmatpush1.msra.mxu0 0.0
    %5743 = vmatprep.subr.mxu0 0.0
    %5744 = vmatpush1.msra.mxu0 0.0
    %5745 = vmatprep.subr.mxu0 0.0
    %5746 = vmatpush1.msra.mxu0 %v5717
    %5747 = vmatprep.subr.mxu0 0.0
    %5748 = vmatpush1.msra.mxu0 %v5716
    %5749 = vmatprep.subr.mxu0 0.0
    %5750 = vmatpush1.msra.mxu0 %v5715
    %5751 = vmatprep.subr.mxu0 0.0
    %5752 = vmatpush1.msra.mxu0 %v5714
    %5753 = vmatprep.subr.mxu0 0.0
    %5754 = vmatpush2.msra.mxu0 0.0
    %5755 = vmatprep.subr.mxu0 0.0
    %5756 = vmatpush2.msra.mxu0 0.0
    %5757 = vmatprep.subr.mxu0 0.0
    %5758 = vmatpush2.msra.mxu0 0.0
    %5759 = vmatprep.subr.mxu0 0.0
    %5760 = vmatpush2.msra.mxu0 0.0
    %5761 = vmatprep.subr.mxu0 0.0
    %5762 = vmatpush2.msra.mxu0 0.0
    %5763 = vmatprep.subr.mxu0 0.0
    %5764 = vmatpush2.msra.mxu0 0.0
    %5765 = vmatprep.subr.mxu0 0.0
    %5766 = vmatpush2.msra.mxu0 0.0
    %5767 = vmatprep.subr.mxu0 0.0
    %5768 = vmatpush2.msra.mxu0 0.0
    %5769 = vmatprep.subr.mxu0 0.0
    %5770 = vmatpush2.msra.mxu0 0.0
    %5771 = vmatprep.subr.mxu0 0.0
    %5772 = vmatpush2.msra.mxu0 0.0
    %5773 = vmatprep.subr.mxu0 0.0
    %5774 = vmatpush2.msra.mxu0 0.0
    %5775 = vmatprep.subr.mxu0 0.0
    %5776 = vmatpush2.msra.mxu0 0.0
    %5777 = vmatprep.subr.mxu0 0.0
    %5778 = vmatpush2.msra.mxu0 0.0
    %5779 = vmatprep.subr.mxu0 0.0
    %5780 = vmatpush2.msra.mxu0 0.0
    %5781 = vmatprep.subr.mxu0 0.0
    %5782 = vmatpush2.msra.mxu0 0.0
    %5783 = vmatprep.subr.mxu0 0.0
    %5784 = vmatpush2.msra.mxu0 0.0
    %5785 = vmatprep.mubr.f32.mxu0 0.0
    %5786 = vmatmul.mubr.f32.gmra.mxu0 %v5719
    %v5787 = vpop.f32.mrf.mxu0
    %v5788 = vadd.f32 0.0, %v5787
    %v5789 = vpop.f32.mrf.mxu0
    %5790 = vdwg.mxu0
    %v5791 = vadd.f32 %v5637, %v5788
    %s5792 = scalar_lea.vmem %s6, 120
    %v5793 = vld [vmem:[%s5792] sm:$0xff]
    %v5795 = vsel %vm3408, %v5793, 0
    %5797 = vmatprep.subr.mxu0 0.0
    %5798 = vmatpush1.msra.mxu0 0.0
    %5799 = vmatprep.subr.mxu0 0.0
    %5800 = vmatpush1.msra.mxu0 0.0
    %5801 = vmatprep.subr.mxu0 0.0
    %5802 = vmatpush1.msra.mxu0 0.0
    %5803 = vmatprep.subr.mxu0 0.0
    %5804 = vmatpush1.msra.mxu0 0.0
    %5805 = vmatprep.subr.mxu0 0.0
    %5806 = vmatpush1.msra.mxu0 0.0
    %5807 = vmatprep.subr.mxu0 0.0
    %5808 = vmatpush1.msra.mxu0 0.0
    %5809 = vmatprep.subr.mxu0 0.0
    %5810 = vmatpush1.msra.mxu0 0.0
    %5811 = vmatprep.subr.mxu0 0.0
    %5812 = vmatpush1.msra.mxu0 0.0
    %5813 = vmatprep.subr.mxu0 0.0
    %5814 = vmatpush1.msra.mxu0 0.0
    %5815 = vmatprep.subr.mxu0 0.0
    %5816 = vmatpush1.msra.mxu0 0.0
    %5817 = vmatprep.subr.mxu0 0.0
    %5818 = vmatpush1.msra.mxu0 0.0
    %5819 = vmatprep.subr.mxu0 0.0
    %5820 = vmatpush1.msra.mxu0 0.0
    %5821 = vmatprep.subr.mxu0 0.0
    %5822 = vmatpush1.msra.mxu0 %v3485
    %5823 = vmatprep.subr.mxu0 0.0
    %5824 = vmatpush1.msra.mxu0 %v3484
    %5825 = vmatprep.subr.mxu0 0.0
    %5826 = vmatpush1.msra.mxu0 %v3483
    %5827 = vmatprep.subr.mxu0 0.0
    %5828 = vmatpush1.msra.mxu0 %v3482
    %5829 = vmatprep.subr.mxu0 0.0
    %5830 = vmatpush2.msra.mxu0 0.0
    %5831 = vmatprep.subr.mxu0 0.0
    %5832 = vmatpush2.msra.mxu0 0.0
    %5833 = vmatprep.subr.mxu0 0.0
    %5834 = vmatpush2.msra.mxu0 0.0
    %5835 = vmatprep.subr.mxu0 0.0
    %5836 = vmatpush2.msra.mxu0 0.0
    %5837 = vmatprep.subr.mxu0 0.0
    %5838 = vmatpush2.msra.mxu0 0.0
    %5839 = vmatprep.subr.mxu0 0.0
    %5840 = vmatpush2.msra.mxu0 0.0
    %5841 = vmatprep.subr.mxu0 0.0
    %5842 = vmatpush2.msra.mxu0 0.0
    %5843 = vmatprep.subr.mxu0 0.0
    %5844 = vmatpush2.msra.mxu0 0.0
    %5845 = vmatprep.subr.mxu0 0.0
    %5846 = vmatpush2.msra.mxu0 0.0
    %5847 = vmatprep.subr.mxu0 0.0
    %5848 = vmatpush2.msra.mxu0 0.0
    %5849 = vmatprep.subr.mxu0 0.0
    %5850 = vmatpush2.msra.mxu0 0.0
    %5851 = vmatprep.subr.mxu0 0.0
    %5852 = vmatpush2.msra.mxu0 0.0
    %5853 = vmatprep.subr.mxu0 0.0
    %5854 = vmatpush2.msra.mxu0 0.0
    %5855 = vmatprep.subr.mxu0 0.0
    %5856 = vmatpush2.msra.mxu0 0.0
    %5857 = vmatprep.subr.mxu0 0.0
    %5858 = vmatpush2.msra.mxu0 0.0
    %5859 = vmatprep.subr.mxu0 0.0
    %5860 = vmatpush2.msra.mxu0 0.0
    %5861 = vmatprep.mubr.f32.mxu0 0.0
    %5862 = vmatmul.mubr.f32.gmra.mxu0 %v5795
    %v5863 = vpop.f32.mrf.mxu0
    %v5864 = vadd.f32 0.0, %v5863
    %v5865 = vpop.f32.mrf.mxu0
    %5866 = vdwg.mxu0
    %s5867 = scalar_lea.vmem %s7, 480
    %v5868 = vld [vmem:[%s5867] sm:$0xff]
    %v5869 = vld [vmem:[%s5867 + $0x8] sm:$0xff]
    %v5870 = vld [vmem:[%s5867 + $0x10] sm:$0xff]
    %v5871 = vld [vmem:[%s5867 + $0x18] sm:$0xff]
    %v5873 = vsel %vm3408, %v5864, 0
    %5875 = vmatprep.subr.mxu0 0.0
    %5876 = vmatpush1.msra.mxu0 0.0
    %5877 = vmatprep.subr.mxu0 0.0
    %5878 = vmatpush1.msra.mxu0 0.0
    %5879 = vmatprep.subr.mxu0 0.0
    %5880 = vmatpush1.msra.mxu0 0.0
    %5881 = vmatprep.subr.mxu0 0.0
    %5882 = vmatpush1.msra.mxu0 0.0
    %5883 = vmatprep.subr.mxu0 0.0
    %5884 = vmatpush1.msra.mxu0 0.0
    %5885 = vmatprep.subr.mxu0 0.0
    %5886 = vmatpush1.msra.mxu0 0.0
    %5887 = vmatprep.subr.mxu0 0.0
    %5888 = vmatpush1.msra.mxu0 0.0
    %5889 = vmatprep.subr.mxu0 0.0
    %5890 = vmatpush1.msra.mxu0 0.0
    %5891 = vmatprep.subr.mxu0 0.0
    %5892 = vmatpush1.msra.mxu0 0.0
    %5893 = vmatprep.subr.mxu0 0.0
    %5894 = vmatpush1.msra.mxu0 0.0
    %5895 = vmatprep.subr.mxu0 0.0
    %5896 = vmatpush1.msra.mxu0 0.0
    %5897 = vmatprep.subr.mxu0 0.0
    %5898 = vmatpush1.msra.mxu0 0.0
    %5899 = vmatprep.subr.mxu0 0.0
    %5900 = vmatpush1.msra.mxu0 %v5871
    %5901 = vmatprep.subr.mxu0 0.0
    %5902 = vmatpush1.msra.mxu0 %v5870
    %5903 = vmatprep.subr.mxu0 0.0
    %5904 = vmatpush1.msra.mxu0 %v5869
    %5905 = vmatprep.subr.mxu0 0.0
    %5906 = vmatpush1.msra.mxu0 %v5868
    %5907 = vmatprep.subr.mxu0 0.0
    %5908 = vmatpush2.msra.mxu0 0.0
    %5909 = vmatprep.subr.mxu0 0.0
    %5910 = vmatpush2.msra.mxu0 0.0
    %5911 = vmatprep.subr.mxu0 0.0
    %5912 = vmatpush2.msra.mxu0 0.0
    %5913 = vmatprep.subr.mxu0 0.0
    %5914 = vmatpush2.msra.mxu0 0.0
    %5915 = vmatprep.subr.mxu0 0.0
    %5916 = vmatpush2.msra.mxu0 0.0
    %5917 = vmatprep.subr.mxu0 0.0
    %5918 = vmatpush2.msra.mxu0 0.0
    %5919 = vmatprep.subr.mxu0 0.0
    %5920 = vmatpush2.msra.mxu0 0.0
    %5921 = vmatprep.subr.mxu0 0.0
    %5922 = vmatpush2.msra.mxu0 0.0
    %5923 = vmatprep.subr.mxu0 0.0
    %5924 = vmatpush2.msra.mxu0 0.0
    %5925 = vmatprep.subr.mxu0 0.0
    %5926 = vmatpush2.msra.mxu0 0.0
    %5927 = vmatprep.subr.mxu0 0.0
    %5928 = vmatpush2.msra.mxu0 0.0
    %5929 = vmatprep.subr.mxu0 0.0
    %5930 = vmatpush2.msra.mxu0 0.0
    %5931 = vmatprep.subr.mxu0 0.0
    %5932 = vmatpush2.msra.mxu0 0.0
    %5933 = vmatprep.subr.mxu0 0.0
    %5934 = vmatpush2.msra.mxu0 0.0
    %5935 = vmatprep.subr.mxu0 0.0
    %5936 = vmatpush2.msra.mxu0 0.0
    %5937 = vmatprep.subr.mxu0 0.0
    %5938 = vmatpush2.msra.mxu0 0.0
    %5939 = vmatprep.mubr.f32.mxu0 0.0
    %5940 = vmatmul.mubr.f32.gmra.mxu0 %v5873
    %v5941 = vpop.f32.mrf.mxu0
    %v5942 = vadd.f32 0.0, %v5941
    %v5943 = vpop.f32.mrf.mxu0
    %5944 = vdwg.mxu0
    %v5945 = vadd.f32 %v5791, %v5942
    %vm5946 = vcmask 523264
    %v5947 = vsel %vm5946, %v5945, 0.0
    %v5948 = vrot.slane %v5947, 4
    %v5949 = vadd.f32 %v5947, %v5948
    %v5950 = vrot.slane %v5949, 2
    %v5951 = vadd.f32 %v5949, %v5950
    %v5952 = vrot.slane %v5951, 1
    %v5953 = vadd.f32 %v5951, %v5952
    %v5954 = vrcp.pop 8.0
    %v5955 = vmul.f32 %v5953, %v5954
    %v5956 = vsub.f32 %v5945, %v5955
    %v5957 = vmul.f32 %v5956, %v5956
    %v5958 = vsel %vm5946, %v5957, 0.0
    %v5959 = vrot.slane %v5958, 4
    %v5960 = vadd.f32 %v5958, %v5959
    %v5961 = vrot.slane %v5960, 2
    %v5962 = vadd.f32 %v5960, %v5961
    %v5963 = vrot.slane %v5962, 1
    %v5964 = vadd.f32 %v5962, %v5963
    %v5965 = vmul.f32 %v5964, %v5954
    %v5966 = vadd.f32 %v5965, 1e-05
    %v5967 = vrsqrt.pop %v5966
    %v5968 = vmul.f32 %v5956, %v5967
    %v5969 = vld [vmem:[%s8] sm:$0x1]
    %v5971 = vlaneseq
    %v5972 = vshrl.u32 %v5971, 7
    %v5973 = vsub.s32 0, %v5972
    %v5974 = vrot.slane %v5969, %v5973
    %v5976 = vmul.f32 %v5968, %v5974
    %v5977 = vld [vmem:[%s9] sm:$0x1]
    %v5979 = vlaneseq
    %v5980 = vshrl.u32 %v5979, 7
    %v5981 = vsub.s32 0, %v5980
    %v5982 = vrot.slane %v5977, %v5981
    %v5984 = vadd.f32 %v5976, %v5982
    %vm5985 = vcmp.gt.f32.partialorder %v5984, 0.0
    %v5986 = vmul.f32 %v5984, 0.2
    %v5987 = vsel %vm5985, %v5984, %v5986
    %v5988 = vld [vmem:[%s10] sm:$0x3]
    %vm5989 = vcmask 64512
    %v5991 = vsel %vm5989, %v5988, 0
    %5993 = vmatprep.subr.mxu0 0.0
    %5994 = vmatpush1.msra.mxu0 0.0
    %5995 = vmatprep.subr.mxu0 0.0
    %5996 = vmatpush1.msra.mxu0 0.0
    %5997 = vmatprep.subr.mxu0 0.0
    %5998 = vmatpush1.msra.mxu0 0.0
    %5999 = vmatprep.subr.mxu0 0.0
    %6000 = vmatpush1.msra.mxu0 0.0
    %6001 = vmatprep.subr.mxu0 0.0
    %6002 = vmatpush1.msra.mxu0 0.0
    %6003 = vmatprep.subr.mxu0 0.0
    %6004 = vmatpush1.msra.mxu0 0.0
    %6005 = vmatprep.subr.mxu0 0.0
    %6006 = vmatpush1.msra.mxu0 0.0
    %6007 = vmatprep.subr.mxu0 0.0
    %6008 = vmatpush1.msra.mxu0 0.0
    %6009 = vmatprep.subr.mxu0 0.0
    %6010 = vmatpush1.msra.mxu0 0.0
    %6011 = vmatprep.subr.mxu0 0.0
    %6012 = vmatpush1.msra.mxu0 0.0
    %6013 = vmatprep.subr.mxu0 0.0
    %6014 = vmatpush1.msra.mxu0 0.0
    %6015 = vmatprep.subr.mxu0 0.0
    %6016 = vmatpush1.msra.mxu0 0.0
    %6017 = vmatprep.subr.mxu0 0.0
    %6018 = vmatpush1.msra.mxu0 0.0
    %6019 = vmatprep.subr.mxu0 0.0
    %6020 = vmatpush1.msra.mxu0 0.0
    %6021 = vmatprep.subr.mxu0 0.0
    %6022 = vmatpush1.msra.mxu0 0.0
    %6023 = vmatprep.subr.mxu0 0.0
    %6024 = vmatpush1.msra.mxu0 %v5987
    %6025 = vmatprep.subr.mxu0 0.0
    %6026 = vmatpush2.msra.mxu0 0.0
    %6027 = vmatprep.subr.mxu0 0.0
    %6028 = vmatpush2.msra.mxu0 0.0
    %6029 = vmatprep.subr.mxu0 0.0
    %6030 = vmatpush2.msra.mxu0 0.0
    %6031 = vmatprep.subr.mxu0 0.0
    %6032 = vmatpush2.msra.mxu0 0.0
    %6033 = vmatprep.subr.mxu0 0.0
    %6034 = vmatpush2.msra.mxu0 0.0
    %6035 = vmatprep.subr.mxu0 0.0
    %6036 = vmatpush2.msra.mxu0 0.0
    %6037 = vmatprep.subr.mxu0 0.0
    %6038 = vmatpush2.msra.mxu0 0.0
    %6039 = vmatprep.subr.mxu0 0.0
    %6040 = vmatpush2.msra.mxu0 0.0
    %6041 = vmatprep.subr.mxu0 0.0
    %6042 = vmatpush2.msra.mxu0 0.0
    %6043 = vmatprep.subr.mxu0 0.0
    %6044 = vmatpush2.msra.mxu0 0.0
    %6045 = vmatprep.subr.mxu0 0.0
    %6046 = vmatpush2.msra.mxu0 0.0
    %6047 = vmatprep.subr.mxu0 0.0
    %6048 = vmatpush2.msra.mxu0 0.0
    %6049 = vmatprep.subr.mxu0 0.0
    %6050 = vmatpush2.msra.mxu0 0.0
    %6051 = vmatprep.subr.mxu0 0.0
    %6052 = vmatpush2.msra.mxu0 0.0
    %6053 = vmatprep.subr.mxu0 0.0
    %6054 = vmatpush2.msra.mxu0 0.0
    %6055 = vmatprep.subr.mxu0 0.0
    %6056 = vmatpush2.msra.mxu0 0.0
    %6057 = vmatprep.mubr.f32.mxu0 0.0
    %6058 = vmatmul.mubr.f32.gmra.mxu0 %v5991
    %v6059 = vpop.f32.mrf.mxu0
    %v6060 = vadd.f32 0.0, %v6059
    %v6061 = vpop.f32.mrf.mxu0
    %6062 = vdwg.mxu0
    %v6063 = vld [vmem:[%s11] sm:$0xff]
    %v6064 = vld [vmem:[%s11 + $0x8] sm:$0xff]
    %v6065 = vld [vmem:[%s11 + $0x10] sm:$0xff]
    %v6066 = vld [vmem:[%s11 + $0x18] sm:$0xff]
    %v6067 = vld [vmem:[%s11 + $0x20] sm:$0xff]
    %v6068 = vld [vmem:[%s11 + $0x28] sm:$0xff]
    %v6069 = vld [vmem:[%s11 + $0x30] sm:$0xff]
    %v6070 = vld [vmem:[%s11 + $0x38] sm:$0xff]
    %s6071 = scalar_lea.vmem %s10, 2
    %v6072 = vld [vmem:[%s6071] sm:$0x3]
    %v6074 = vsel %vm5989, %v6072, 0
    %6076 = vmatprep.subr.mxu0 0.0
    %6077 = vmatpush1.msra.mxu0 0.0
    %6078 = vmatprep.subr.mxu0 0.0
    %6079 = vmatpush1.msra.mxu0 0.0
    %6080 = vmatprep.subr.mxu0 0.0
    %6081 = vmatpush1.msra.mxu0 0.0
    %6082 = vmatprep.subr.mxu0 0.0
    %6083 = vmatpush1.msra.mxu0 0.0
    %6084 = vmatprep.subr.mxu0 0.0
    %6085 = vmatpush1.msra.mxu0 0.0
    %6086 = vmatprep.subr.mxu0 0.0
    %6087 = vmatpush1.msra.mxu0 0.0
    %6088 = vmatprep.subr.mxu0 0.0
    %6089 = vmatpush1.msra.mxu0 0.0
    %6090 = vmatprep.subr.mxu0 0.0
    %6091 = vmatpush1.msra.mxu0 0.0
    %6092 = vmatprep.subr.mxu0 0.0
    %6093 = vmatpush1.msra.mxu0 0.0
    %6094 = vmatprep.subr.mxu0 0.0
    %6095 = vmatpush1.msra.mxu0 0.0
    %6096 = vmatprep.subr.mxu0 0.0
    %6097 = vmatpush1.msra.mxu0 0.0
    %6098 = vmatprep.subr.mxu0 0.0
    %6099 = vmatpush1.msra.mxu0 0.0
    %6100 = vmatprep.subr.mxu0 0.0
    %6101 = vmatpush1.msra.mxu0 0.0
    %6102 = vmatprep.subr.mxu0 0.0
    %6103 = vmatpush1.msra.mxu0 0.0
    %6104 = vmatprep.subr.mxu0 0.0
    %6105 = vmatpush1.msra.mxu0 0.0
    %6106 = vmatprep.subr.mxu0 0.0
    %6107 = vmatpush1.msra.mxu0 %v5987
    %6108 = vmatprep.subr.mxu0 0.0
    %6109 = vmatpush2.msra.mxu0 0.0
    %6110 = vmatprep.subr.mxu0 0.0
    %6111 = vmatpush2.msra.mxu0 0.0
    %6112 = vmatprep.subr.mxu0 0.0
    %6113 = vmatpush2.msra.mxu0 0.0
    %6114 = vmatprep.subr.mxu0 0.0
    %6115 = vmatpush2.msra.mxu0 0.0
    %6116 = vmatprep.subr.mxu0 0.0
    %6117 = vmatpush2.msra.mxu0 0.0
    %6118 = vmatprep.subr.mxu0 0.0
    %6119 = vmatpush2.msra.mxu0 0.0
    %6120 = vmatprep.subr.mxu0 0.0
    %6121 = vmatpush2.msra.mxu0 0.0
    %6122 = vmatprep.subr.mxu0 0.0
    %6123 = vmatpush2.msra.mxu0 0.0
    %6124 = vmatprep.subr.mxu0 0.0
    %6125 = vmatpush2.msra.mxu0 0.0
    %6126 = vmatprep.subr.mxu0 0.0
    %6127 = vmatpush2.msra.mxu0 0.0
    %6128 = vmatprep.subr.mxu0 0.0
    %6129 = vmatpush2.msra.mxu0 0.0
    %6130 = vmatprep.subr.mxu0 0.0
    %6131 = vmatpush2.msra.mxu0 0.0
    %6132 = vmatprep.subr.mxu0 0.0
    %6133 = vmatpush2.msra.mxu0 0.0
    %6134 = vmatprep.subr.mxu0 0.0
    %6135 = vmatpush2.msra.mxu0 0.0
    %6136 = vmatprep.subr.mxu0 0.0
    %6137 = vmatpush2.msra.mxu0 0.0
    %6138 = vmatprep.subr.mxu0 0.0
    %6139 = vmatpush2.msra.mxu0 0.0
    %6140 = vmatprep.mubr.f32.mxu0 0.0
    %6141 = vmatmul.mubr.f32.gmra.mxu0 %v6074
    %v6142 = vpop.f32.mrf.mxu0
    %v6143 = vadd.f32 0.0, %v6142
    %v6144 = vpop.f32.mrf.mxu0
    %6145 = vdwg.mxu0
    %s6146 = scalar_lea.vmem %s11, 64
    %v6147 = vld [vmem:[%s6146] sm:$0xff]
    %v6148 = vld [vmem:[%s6146 + $0x8] sm:$0xff]
    %v6149 = vld [vmem:[%s6146 + $0x10] sm:$0xff]
    %v6150 = vld [vmem:[%s6146 + $0x18] sm:$0xff]
    %v6151 = vld [vmem:[%s6146 + $0x20] sm:$0xff]
    %v6152 = vld [vmem:[%s6146 + $0x28] sm:$0xff]
    %v6153 = vld [vmem:[%s6146 + $0x30] sm:$0xff]
    %v6154 = vld [vmem:[%s6146 + $0x38] sm:$0xff]
    %v6156 = vsel %vm5946, %v6143, 0
    %6158 = vmatprep.subr.mxu0 0.0
    %6159 = vmatpush1.msra.mxu0 0.0
    %6160 = vmatprep.subr.mxu0 0.0
    %6161 = vmatpush1.msra.mxu0 0.0
    %6162 = vmatprep.subr.mxu0 0.0
    %6163 = vmatpush1.msra.mxu0 0.0
    %6164 = vmatprep.subr.mxu0 0.0
    %6165 = vmatpush1.msra.mxu0 0.0
    %6166 = vmatprep.subr.mxu0 0.0
    %6167 = vmatpush1.msra.mxu0 0.0
    %6168 = vmatprep.subr.mxu0 0.0
    %6169 = vmatpush1.msra.mxu0 0.0
    %6170 = vmatprep.subr.mxu0 0.0
    %6171 = vmatpush1.msra.mxu0 0.0
    %6172 = vmatprep.subr.mxu0 0.0
    %6173 = vmatpush1.msra.mxu0 0.0
    %6174 = vmatprep.subr.mxu0 0.0
    %6175 = vmatpush1.msra.mxu0 %v6154
    %6176 = vmatprep.subr.mxu0 0.0
    %6177 = vmatpush1.msra.mxu0 %v6153
    %6178 = vmatprep.subr.mxu0 0.0
    %6179 = vmatpush1.msra.mxu0 %v6152
    %6180 = vmatprep.subr.mxu0 0.0
    %6181 = vmatpush1.msra.mxu0 %v6151
    %6182 = vmatprep.subr.mxu0 0.0
    %6183 = vmatpush1.msra.mxu0 %v6150
    %6184 = vmatprep.subr.mxu0 0.0
    %6185 = vmatpush1.msra.mxu0 %v6149
    %6186 = vmatprep.subr.mxu0 0.0
    %6187 = vmatpush1.msra.mxu0 %v6148
    %6188 = vmatprep.subr.mxu0 0.0
    %6189 = vmatpush1.msra.mxu0 %v6147
    %6190 = vmatprep.subr.mxu0 0.0
    %6191 = vmatpush2.msra.mxu0 0.0
    %6192 = vmatprep.subr.mxu0 0.0
    %6193 = vmatpush2.msra.mxu0 0.0
    %6194 = vmatprep.subr.mxu0 0.0
    %6195 = vmatpush2.msra.mxu0 0.0
    %6196 = vmatprep.subr.mxu0 0.0
    %6197 = vmatpush2.msra.mxu0 0.0
    %6198 = vmatprep.subr.mxu0 0.0
    %6199 = vmatpush2.msra.mxu0 0.0
    %6200 = vmatprep.subr.mxu0 0.0
    %6201 = vmatpush2.msra.mxu0 0.0
    %6202 = vmatprep.subr.mxu0 0.0
    %6203 = vmatpush2.msra.mxu0 0.0
    %6204 = vmatprep.subr.mxu0 0.0
    %6205 = vmatpush2.msra.mxu0 0.0
    %6206 = vmatprep.subr.mxu0 0.0
    %6207 = vmatpush2.msra.mxu0 0.0
    %6208 = vmatprep.subr.mxu0 0.0
    %6209 = vmatpush2.msra.mxu0 0.0
    %6210 = vmatprep.subr.mxu0 0.0
    %6211 = vmatpush2.msra.mxu0 0.0
    %6212 = vmatprep.subr.mxu0 0.0
    %6213 = vmatpush2.msra.mxu0 0.0
    %6214 = vmatprep.subr.mxu0 0.0
    %6215 = vmatpush2.msra.mxu0 0.0
    %6216 = vmatprep.subr.mxu0 0.0
    %6217 = vmatpush2.msra.mxu0 0.0
    %6218 = vmatprep.subr.mxu0 0.0
    %6219 = vmatpush2.msra.mxu0 0.0
    %6220 = vmatprep.subr.mxu0 0.0
    %6221 = vmatpush2.msra.mxu0 0.0
    %6222 = vmatprep.mubr.f32.mxu0 0.0
    %6223 = vmatmul.mubr.f32.gmra.mxu0 %v6156
    %v6224 = vpop.f32.mrf.mxu0
    %v6225 = vadd.f32 0.0, %v6224
    %v6226 = vpop.f32.mrf.mxu0
    %6227 = vdwg.mxu0
    %v6229 = vsel %vm5946, %v6060, 0
    %6231 = vmatprep.subr.mxu0 0.0
    %6232 = vmatpush1.msra.mxu0 0.0
    %6233 = vmatprep.subr.mxu0 0.0
    %6234 = vmatpush1.msra.mxu0 0.0
    %6235 = vmatprep.subr.mxu0 0.0
    %6236 = vmatpush1.msra.mxu0 0.0
    %6237 = vmatprep.subr.mxu0 0.0
    %6238 = vmatpush1.msra.mxu0 0.0
    %6239 = vmatprep.subr.mxu0 0.0
    %6240 = vmatpush1.msra.mxu0 0.0
    %6241 = vmatprep.subr.mxu0 0.0
    %6242 = vmatpush1.msra.mxu0 0.0
    %6243 = vmatprep.subr.mxu0 0.0
    %6244 = vmatpush1.msra.mxu0 0.0
    %6245 = vmatprep.subr.mxu0 0.0
    %6246 = vmatpush1.msra.mxu0 0.0
    %6247 = vmatprep.subr.mxu0 0.0
    %6248 = vmatpush1.msra.mxu0 %v6070
    %6249 = vmatprep.subr.mxu0 0.0
    %6250 = vmatpush1.msra.mxu0 %v6069
    %6251 = vmatprep.subr.mxu0 0.0
    %6252 = vmatpush1.msra.mxu0 %v6068
    %6253 = vmatprep.subr.mxu0 0.0
    %6254 = vmatpush1.msra.mxu0 %v6067
    %6255 = vmatprep.subr.mxu0 0.0
    %6256 = vmatpush1.msra.mxu0 %v6066
    %6257 = vmatprep.subr.mxu0 0.0
    %6258 = vmatpush1.msra.mxu0 %v6065
    %6259 = vmatprep.subr.mxu0 0.0
    %6260 = vmatpush1.msra.mxu0 %v6064
    %6261 = vmatprep.subr.mxu0 0.0
    %6262 = vmatpush1.msra.mxu0 %v6063
    %6263 = vmatprep.subr.mxu0 0.0
    %6264 = vmatpush2.msra.mxu0 0.0
    %6265 = vmatprep.subr.mxu0 0.0
    %6266 = vmatpush2.msra.mxu0 0.0
    %6267 = vmatprep.subr.mxu0 0.0
    %6268 = vmatpush2.msra.mxu0 0.0
    %6269 = vmatprep.subr.mxu0 0.0
    %6270 = vmatpush2.msra.mxu0 0.0
    %6271 = vmatprep.subr.mxu0 0.0
    %6272 = vmatpush2.msra.mxu0 0.0
    %6273 = vmatprep.subr.mxu0 0.0
    %6274 = vmatpush2.msra.mxu0 0.0
    %6275 = vmatprep.subr.mxu0 0.0
    %6276 = vmatpush2.msra.mxu0 0.0
    %6277 = vmatprep.subr.mxu0 0.0
    %6278 = vmatpush2.msra.mxu0 0.0
    %6279 = vmatprep.subr.mxu0 0.0
    %6280 = vmatpush2.msra.mxu0 0.0
    %6281 = vmatprep.subr.mxu0 0.0
    %6282 = vmatpush2.msra.mxu0 0.0
    %6283 = vmatprep.subr.mxu0 0.0
    %6284 = vmatpush2.msra.mxu0 0.0
    %6285 = vmatprep.subr.mxu0 0.0
    %6286 = vmatpush2.msra.mxu0 0.0
    %6287 = vmatprep.subr.mxu0 0.0
    %6288 = vmatpush2.msra.mxu0 0.0
    %6289 = vmatprep.subr.mxu0 0.0
    %6290 = vmatpush2.msra.mxu0 0.0
    %6291 = vmatprep.subr.mxu0 0.0
    %6292 = vmatpush2.msra.mxu0 0.0
    %6293 = vmatprep.subr.mxu0 0.0
    %6294 = vmatpush2.msra.mxu0 0.0
    %6295 = vmatprep.mubr.f32.mxu0 0.0
    %6296 = vmatmul.mubr.f32.gmra.mxu0 %v6229
    %v6297 = vpop.f32.mrf.mxu0
    %v6298 = vadd.f32 %v6225, %v6297
    %v6299 = vpop.f32.mrf.mxu0
    %6300 = vdwg.mxu0
    %s6301 = scalar_lea.vmem %s10, 4
    %v6302 = vld [vmem:[%s6301] sm:$0x3]
    %v6304 = vsel %vm5989, %v6302, 0
    %6306 = vmatprep.subr.mxu0 0.0
    %6307 = vmatpush1.msra.mxu0 0.0
    %6308 = vmatprep.subr.mxu0 0.0
    %6309 = vmatpush1.msra.mxu0 0.0
    %6310 = vmatprep.subr.mxu0 0.0
    %6311 = vmatpush1.msra.mxu0 0.0
    %6312 = vmatprep.subr.mxu0 0.0
    %6313 = vmatpush1.msra.mxu0 0.0
    %6314 = vmatprep.subr.mxu0 0.0
    %6315 = vmatpush1.msra.mxu0 0.0
    %6316 = vmatprep.subr.mxu0 0.0
    %6317 = vmatpush1.msra.mxu0 0.0
    %6318 = vmatprep.subr.mxu0 0.0
    %6319 = vmatpush1.msra.mxu0 0.0
    %6320 = vmatprep.subr.mxu0 0.0
    %6321 = vmatpush1.msra.mxu0 0.0
    %6322 = vmatprep.subr.mxu0 0.0
    %6323 = vmatpush1.msra.mxu0 0.0
    %6324 = vmatprep.subr.mxu0 0.0
    %6325 = vmatpush1.msra.mxu0 0.0
    %6326 = vmatprep.subr.mxu0 0.0
    %6327 = vmatpush1.msra.mxu0 0.0
    %6328 = vmatprep.subr.mxu0 0.0
    %6329 = vmatpush1.msra.mxu0 0.0
    %6330 = vmatprep.subr.mxu0 0.0
    %6331 = vmatpush1.msra.mxu0 0.0
    %6332 = vmatprep.subr.mxu0 0.0
    %6333 = vmatpush1.msra.mxu0 0.0
    %6334 = vmatprep.subr.mxu0 0.0
    %6335 = vmatpush1.msra.mxu0 0.0
    %6336 = vmatprep.subr.mxu0 0.0
    %6337 = vmatpush1.msra.mxu0 %v5987
    %6338 = vmatprep.subr.mxu0 0.0
    %6339 = vmatpush2.msra.mxu0 0.0
    %6340 = vmatprep.subr.mxu0 0.0
    %6341 = vmatpush2.msra.mxu0 0.0
    %6342 = vmatprep.subr.mxu0 0.0
    %6343 = vmatpush2.msra.mxu0 0.0
    %6344 = vmatprep.subr.mxu0 0.0
    %6345 = vmatpush2.msra.mxu0 0.0
    %6346 = vmatprep.subr.mxu0 0.0
    %6347 = vmatpush2.msra.mxu0 0.0
    %6348 = vmatprep.subr.mxu0 0.0
    %6349 = vmatpush2.msra.mxu0 0.0
    %6350 = vmatprep.subr.mxu0 0.0
    %6351 = vmatpush2.msra.mxu0 0.0
    %6352 = vmatprep.subr.mxu0 0.0
    %6353 = vmatpush2.msra.mxu0 0.0
    %6354 = vmatprep.subr.mxu0 0.0
    %6355 = vmatpush2.msra.mxu0 0.0
    %6356 = vmatprep.subr.mxu0 0.0
    %6357 = vmatpush2.msra.mxu0 0.0
    %6358 = vmatprep.subr.mxu0 0.0
    %6359 = vmatpush2.msra.mxu0 0.0
    %6360 = vmatprep.subr.mxu0 0.0
    %6361 = vmatpush2.msra.mxu0 0.0
    %6362 = vmatprep.subr.mxu0 0.0
    %6363 = vmatpush2.msra.mxu0 0.0
    %6364 = vmatprep.subr.mxu0 0.0
    %6365 = vmatpush2.msra.mxu0 0.0
    %6366 = vmatprep.subr.mxu0 0.0
    %6367 = vmatpush2.msra.mxu0 0.0
    %6368 = vmatprep.subr.mxu0 0.0
    %6369 = vmatpush2.msra.mxu0 0.0
    %6370 = vmatprep.mubr.f32.mxu0 0.0
    %6371 = vmatmul.mubr.f32.gmra.mxu0 %v6304
    %v6372 = vpop.f32.mrf.mxu0
    %v6373 = vadd.f32 0.0, %v6372
    %v6374 = vpop.f32.mrf.mxu0
    %6375 = vdwg.mxu0
    %s6376 = scalar_lea.vmem %s11, 128
    %v6377 = vld [vmem:[%s6376] sm:$0xff]
    %v6378 = vld [vmem:[%s6376 + $0x8] sm:$0xff]
    %v6379 = vld [vmem:[%s6376 + $0x10] sm:$0xff]
    %v6380 = vld [vmem:[%s6376 + $0x18] sm:$0xff]
    %v6381 = vld [vmem:[%s6376 + $0x20] sm:$0xff]
    %v6382 = vld [vmem:[%s6376 + $0x28] sm:$0xff]
    %v6383 = vld [vmem:[%s6376 + $0x30] sm:$0xff]
    %v6384 = vld [vmem:[%s6376 + $0x38] sm:$0xff]
    %v6386 = vsel %vm5946, %v6373, 0
    %6388 = vmatprep.subr.mxu0 0.0
    %6389 = vmatpush1.msra.mxu0 0.0
    %6390 = vmatprep.subr.mxu0 0.0
    %6391 = vmatpush1.msra.mxu0 0.0
    %6392 = vmatprep.subr.mxu0 0.0
    %6393 = vmatpush1.msra.mxu0 0.0
    %6394 = vmatprep.subr.mxu0 0.0
    %6395 = vmatpush1.msra.mxu0 0.0
    %6396 = vmatprep.subr.mxu0 0.0
    %6397 = vmatpush1.msra.mxu0 0.0
    %6398 = vmatprep.subr.mxu0 0.0
    %6399 = vmatpush1.msra.mxu0 0.0
    %6400 = vmatprep.subr.mxu0 0.0
    %6401 = vmatpush1.msra.mxu0 0.0
    %6402 = vmatprep.subr.mxu0 0.0
    %6403 = vmatpush1.msra.mxu0 0.0
    %6404 = vmatprep.subr.mxu0 0.0
    %6405 = vmatpush1.msra.mxu0 %v6384
    %6406 = vmatprep.subr.mxu0 0.0
    %6407 = vmatpush1.msra.mxu0 %v6383
    %6408 = vmatprep.subr.mxu0 0.0
    %6409 = vmatpush1.msra.mxu0 %v6382
    %6410 = vmatprep.subr.mxu0 0.0
    %6411 = vmatpush1.msra.mxu0 %v6381
    %6412 = vmatprep.subr.mxu0 0.0
    %6413 = vmatpush1.msra.mxu0 %v6380
    %6414 = vmatprep.subr.mxu0 0.0
    %6415 = vmatpush1.msra.mxu0 %v6379
    %6416 = vmatprep.subr.mxu0 0.0
    %6417 = vmatpush1.msra.mxu0 %v6378
    %6418 = vmatprep.subr.mxu0 0.0
    %6419 = vmatpush1.msra.mxu0 %v6377
    %6420 = vmatprep.subr.mxu0 0.0
    %6421 = vmatpush2.msra.mxu0 0.0
    %6422 = vmatprep.subr.mxu0 0.0
    %6423 = vmatpush2.msra.mxu0 0.0
    %6424 = vmatprep.subr.mxu0 0.0
    %6425 = vmatpush2.msra.mxu0 0.0
    %6426 = vmatprep.subr.mxu0 0.0
    %6427 = vmatpush2.msra.mxu0 0.0
    %6428 = vmatprep.subr.mxu0 0.0
    %6429 = vmatpush2.msra.mxu0 0.0
    %6430 = vmatprep.subr.mxu0 0.0
    %6431 = vmatpush2.msra.mxu0 0.0
    %6432 = vmatprep.subr.mxu0 0.0
    %6433 = vmatpush2.msra.mxu0 0.0
    %6434 = vmatprep.subr.mxu0 0.0
    %6435 = vmatpush2.msra.mxu0 0.0
    %6436 = vmatprep.subr.mxu0 0.0
    %6437 = vmatpush2.msra.mxu0 0.0
    %6438 = vmatprep.subr.mxu0 0.0
    %6439 = vmatpush2.msra.mxu0 0.0
    %6440 = vmatprep.subr.mxu0 0.0
    %6441 = vmatpush2.msra.mxu0 0.0
    %6442 = vmatprep.subr.mxu0 0.0
    %6443 = vmatpush2.msra.mxu0 0.0
    %6444 = vmatprep.subr.mxu0 0.0
    %6445 = vmatpush2.msra.mxu0 0.0
    %6446 = vmatprep.subr.mxu0 0.0
    %6447 = vmatpush2.msra.mxu0 0.0
    %6448 = vmatprep.subr.mxu0 0.0
    %6449 = vmatpush2.msra.mxu0 0.0
    %6450 = vmatprep.subr.mxu0 0.0
    %6451 = vmatpush2.msra.mxu0 0.0
    %6452 = vmatprep.mubr.f32.mxu0 0.0
    %6453 = vmatmul.mubr.f32.gmra.mxu0 %v6386
    %v6454 = vpop.f32.mrf.mxu0
    %v6455 = vadd.f32 0.0, %v6454
    %v6456 = vpop.f32.mrf.mxu0
    %6457 = vdwg.mxu0
    %v6458 = vadd.f32 %v6298, %v6455
    %s6459 = scalar_lea.vmem %s10, 6
    %v6460 = vld [vmem:[%s6459] sm:$0x3]
    %v6462 = vsel %vm5989, %v6460, 0
    %6464 = vmatprep.subr.mxu0 0.0
    %6465 = vmatpush1.msra.mxu0 0.0
    %6466 = vmatprep.subr.mxu0 0.0
    %6467 = vmatpush1.msra.mxu0 0.0
    %6468 = vmatprep.subr.mxu0 0.0
    %6469 = vmatpush1.msra.mxu0 0.0
    %6470 = vmatprep.subr.mxu0 0.0
    %6471 = vmatpush1.msra.mxu0 0.0
    %6472 = vmatprep.subr.mxu0 0.0
    %6473 = vmatpush1.msra.mxu0 0.0
    %6474 = vmatprep.subr.mxu0 0.0
    %6475 = vmatpush1.msra.mxu0 0.0
    %6476 = vmatprep.subr.mxu0 0.0
    %6477 = vmatpush1.msra.mxu0 0.0
    %6478 = vmatprep.subr.mxu0 0.0
    %6479 = vmatpush1.msra.mxu0 0.0
    %6480 = vmatprep.subr.mxu0 0.0
    %6481 = vmatpush1.msra.mxu0 0.0
    %6482 = vmatprep.subr.mxu0 0.0
    %6483 = vmatpush1.msra.mxu0 0.0
    %6484 = vmatprep.subr.mxu0 0.0
    %6485 = vmatpush1.msra.mxu0 0.0
    %6486 = vmatprep.subr.mxu0 0.0
    %6487 = vmatpush1.msra.mxu0 0.0
    %6488 = vmatprep.subr.mxu0 0.0
    %6489 = vmatpush1.msra.mxu0 0.0
    %6490 = vmatprep.subr.mxu0 0.0
    %6491 = vmatpush1.msra.mxu0 0.0
    %6492 = vmatprep.subr.mxu0 0.0
    %6493 = vmatpush1.msra.mxu0 0.0
    %6494 = vmatprep.subr.mxu0 0.0
    %6495 = vmatpush1.msra.mxu0 %v5987
    %6496 = vmatprep.subr.mxu0 0.0
    %6497 = vmatpush2.msra.mxu0 0.0
    %6498 = vmatprep.subr.mxu0 0.0
    %6499 = vmatpush2.msra.mxu0 0.0
    %6500 = vmatprep.subr.mxu0 0.0
    %6501 = vmatpush2.msra.mxu0 0.0
    %6502 = vmatprep.subr.mxu0 0.0
    %6503 = vmatpush2.msra.mxu0 0.0
    %6504 = vmatprep.subr.mxu0 0.0
    %6505 = vmatpush2.msra.mxu0 0.0
    %6506 = vmatprep.subr.mxu0 0.0
    %6507 = vmatpush2.msra.mxu0 0.0
    %6508 = vmatprep.subr.mxu0 0.0
    %6509 = vmatpush2.msra.mxu0 0.0
    %6510 = vmatprep.subr.mxu0 0.0
    %6511 = vmatpush2.msra.mxu0 0.0
    %6512 = vmatprep.subr.mxu0 0.0
    %6513 = vmatpush2.msra.mxu0 0.0
    %6514 = vmatprep.subr.mxu0 0.0
    %6515 = vmatpush2.msra.mxu0 0.0
    %6516 = vmatprep.subr.mxu0 0.0
    %6517 = vmatpush2.msra.mxu0 0.0
    %6518 = vmatprep.subr.mxu0 0.0
    %6519 = vmatpush2.msra.mxu0 0.0
    %6520 = vmatprep.subr.mxu0 0.0
    %6521 = vmatpush2.msra.mxu0 0.0
    %6522 = vmatprep.subr.mxu0 0.0
    %6523 = vmatpush2.msra.mxu0 0.0
    %6524 = vmatprep.subr.mxu0 0.0
    %6525 = vmatpush2.msra.mxu0 0.0
    %6526 = vmatprep.subr.mxu0 0.0
    %6527 = vmatpush2.msra.mxu0 0.0
    %6528 = vmatprep.mubr.f32.mxu0 0.0
    %6529 = vmatmul.mubr.f32.gmra.mxu0 %v6462
    %v6530 = vpop.f32.mrf.mxu0
    %v6531 = vadd.f32 0.0, %v6530
    %v6532 = vpop.f32.mrf.mxu0
    %6533 = vdwg.mxu0
    %s6534 = scalar_lea.vmem %s11, 192
    %v6535 = vld [vmem:[%s6534] sm:$0xff]
    %v6536 = vld [vmem:[%s6534 + $0x8] sm:$0xff]
    %v6537 = vld [vmem:[%s6534 + $0x10] sm:$0xff]
    %v6538 = vld [vmem:[%s6534 + $0x18] sm:$0xff]
    %v6539 = vld [vmem:[%s6534 + $0x20] sm:$0xff]
    %v6540 = vld [vmem:[%s6534 + $0x28] sm:$0xff]
    %v6541 = vld [vmem:[%s6534 + $0x30] sm:$0xff]
    %v6542 = vld [vmem:[%s6534 + $0x38] sm:$0xff]
    %v6544 = vsel %vm5946, %v6531, 0
    %6546 = vmatprep.subr.mxu0 0.0
    %6547 = vmatpush1.msra.mxu0 0.0
    %6548 = vmatprep.subr.mxu0 0.0
    %6549 = vmatpush1.msra.mxu0 0.0
    %6550 = vmatprep.subr.mxu0 0.0
    %6551 = vmatpush1.msra.mxu0 0.0
    %6552 = vmatprep.subr.mxu0 0.0
    %6553 = vmatpush1.msra.mxu0 0.0
    %6554 = vmatprep.subr.mxu0 0.0
    %6555 = vmatpush1.msra.mxu0 0.0
    %6556 = vmatprep.subr.mxu0 0.0
    %6557 = vmatpush1.msra.mxu0 0.0
    %6558 = vmatprep.subr.mxu0 0.0
    %6559 = vmatpush1.msra.mxu0 0.0
    %6560 = vmatprep.subr.mxu0 0.0
    %6561 = vmatpush1.msra.mxu0 0.0
    %6562 = vmatprep.subr.mxu0 0.0
    %6563 = vmatpush1.msra.mxu0 %v6542
    %6564 = vmatprep.subr.mxu0 0.0
    %6565 = vmatpush1.msra.mxu0 %v6541
    %6566 = vmatprep.subr.mxu0 0.0
    %6567 = vmatpush1.msra.mxu0 %v6540
    %6568 = vmatprep.subr.mxu0 0.0
    %6569 = vmatpush1.msra.mxu0 %v6539
    %6570 = vmatprep.subr.mxu0 0.0
    %6571 = vmatpush1.msra.mxu0 %v6538
    %6572 = vmatprep.subr.mxu0 0.0
    %6573 = vmatpush1.msra.mxu0 %v6537
    %6574 = vmatprep.subr.mxu0 0.0
    %6575 = vmatpush1.msra.mxu0 %v6536
    %6576 = vmatprep.subr.mxu0 0.0
    %6577 = vmatpush1.msra.mxu0 %v6535
    %6578 = vmatprep.subr.mxu0 0.0
    %6579 = vmatpush2.msra.mxu0 0.0
    %6580 = vmatprep.subr.mxu0 0.0
    %6581 = vmatpush2.msra.mxu0 0.0
    %6582 = vmatprep.subr.mxu0 0.0
    %6583 = vmatpush2.msra.mxu0 0.0
    %6584 = vmatprep.subr.mxu0 0.0
    %6585 = vmatpush2.msra.mxu0 0.0
    %6586 = vmatprep.subr.mxu0 0.0
    %6587 = vmatpush2.msra.mxu0 0.0
    %6588 = vmatprep.subr.mxu0 0.0
    %6589 = vmatpush2.msra.mxu0 0.0
    %6590 = vmatprep.subr.mxu0 0.0
    %6591 = vmatpush2.msra.mxu0 0.0
    %6592 = vmatprep.subr.mxu0 0.0
    %6593 = vmatpush2.msra.mxu0 0.0
    %6594 = vmatprep.subr.mxu0 0.0
    %6595 = vmatpush2.msra.mxu0 0.0
    %6596 = vmatprep.subr.mxu0 0.0
    %6597 = vmatpush2.msra.mxu0 0.0
    %6598 = vmatprep.subr.mxu0 0.0
    %6599 = vmatpush2.msra.mxu0 0.0
    %6600 = vmatprep.subr.mxu0 0.0
    %6601 = vmatpush2.msra.mxu0 0.0
    %6602 = vmatprep.subr.mxu0 0.0
    %6603 = vmatpush2.msra.mxu0 0.0
    %6604 = vmatprep.subr.mxu0 0.0
    %6605 = vmatpush2.msra.mxu0 0.0
    %6606 = vmatprep.subr.mxu0 0.0
    %6607 = vmatpush2.msra.mxu0 0.0
    %6608 = vmatprep.subr.mxu0 0.0
    %6609 = vmatpush2.msra.mxu0 0.0
    %6610 = vmatprep.mubr.f32.mxu0 0.0
    %6611 = vmatmul.mubr.f32.gmra.mxu0 %v6544
    %v6612 = vpop.f32.mrf.mxu0
    %v6613 = vadd.f32 0.0, %v6612
    %v6614 = vpop.f32.mrf.mxu0
    %6615 = vdwg.mxu0
    %v6616 = vadd.f32 %v6458, %v6613
    %s6617 = scalar_lea.vmem %s10, 8
    %v6618 = vld [vmem:[%s6617] sm:$0x3]
    %v6620 = vsel %vm5989, %v6618, 0
    %6622 = vmatprep.subr.mxu0 0.0
    %6623 = vmatpush1.msra.mxu0 0.0
    %6624 = vmatprep.subr.mxu0 0.0
    %6625 = vmatpush1.msra.mxu0 0.0
    %6626 = vmatprep.subr.mxu0 0.0
    %6627 = vmatpush1.msra.mxu0 0.0
    %6628 = vmatprep.subr.mxu0 0.0
    %6629 = vmatpush1.msra.mxu0 0.0
    %6630 = vmatprep.subr.mxu0 0.0
    %6631 = vmatpush1.msra.mxu0 0.0
    %6632 = vmatprep.subr.mxu0 0.0
    %6633 = vmatpush1.msra.mxu0 0.0
    %6634 = vmatprep.subr.mxu0 0.0
    %6635 = vmatpush1.msra.mxu0 0.0
    %6636 = vmatprep.subr.mxu0 0.0
    %6637 = vmatpush1.msra.mxu0 0.0
    %6638 = vmatprep.subr.mxu0 0.0
    %6639 = vmatpush1.msra.mxu0 0.0
    %6640 = vmatprep.subr.mxu0 0.0
    %6641 = vmatpush1.msra.mxu0 0.0
    %6642 = vmatprep.subr.mxu0 0.0
    %6643 = vmatpush1.msra.mxu0 0.0
    %6644 = vmatprep.subr.mxu0 0.0
    %6645 = vmatpush1.msra.mxu0 0.0
    %6646 = vmatprep.subr.mxu0 0.0
    %6647 = vmatpush1.msra.mxu0 0.0
    %6648 = vmatprep.subr.mxu0 0.0
    %6649 = vmatpush1.msra.mxu0 0.0
    %6650 = vmatprep.subr.mxu0 0.0
    %6651 = vmatpush1.msra.mxu0 0.0
    %6652 = vmatprep.subr.mxu0 0.0
    %6653 = vmatpush1.msra.mxu0 %v5987
    %6654 = vmatprep.subr.mxu0 0.0
    %6655 = vmatpush2.msra.mxu0 0.0
    %6656 = vmatprep.subr.mxu0 0.0
    %6657 = vmatpush2.msra.mxu0 0.0
    %6658 = vmatprep.subr.mxu0 0.0
    %6659 = vmatpush2.msra.mxu0 0.0
    %6660 = vmatprep.subr.mxu0 0.0
    %6661 = vmatpush2.msra.mxu0 0.0
    %6662 = vmatprep.subr.mxu0 0.0
    %6663 = vmatpush2.msra.mxu0 0.0
    %6664 = vmatprep.subr.mxu0 0.0
    %6665 = vmatpush2.msra.mxu0 0.0
    %6666 = vmatprep.subr.mxu0 0.0
    %6667 = vmatpush2.msra.mxu0 0.0
    %6668 = vmatprep.subr.mxu0 0.0
    %6669 = vmatpush2.msra.mxu0 0.0
    %6670 = vmatprep.subr.mxu0 0.0
    %6671 = vmatpush2.msra.mxu0 0.0
    %6672 = vmatprep.subr.mxu0 0.0
    %6673 = vmatpush2.msra.mxu0 0.0
    %6674 = vmatprep.subr.mxu0 0.0
    %6675 = vmatpush2.msra.mxu0 0.0
    %6676 = vmatprep.subr.mxu0 0.0
    %6677 = vmatpush2.msra.mxu0 0.0
    %6678 = vmatprep.subr.mxu0 0.0
    %6679 = vmatpush2.msra.mxu0 0.0
    %6680 = vmatprep.subr.mxu0 0.0
    %6681 = vmatpush2.msra.mxu0 0.0
    %6682 = vmatprep.subr.mxu0 0.0
    %6683 = vmatpush2.msra.mxu0 0.0
    %6684 = vmatprep.subr.mxu0 0.0
    %6685 = vmatpush2.msra.mxu0 0.0
    %6686 = vmatprep.mubr.f32.mxu0 0.0
    %6687 = vmatmul.mubr.f32.gmra.mxu0 %v6620
    %v6688 = vpop.f32.mrf.mxu0
    %v6689 = vadd.f32 0.0, %v6688
    %v6690 = vpop.f32.mrf.mxu0
    %6691 = vdwg.mxu0
    %s6692 = scalar_lea.vmem %s11, 256
    %v6693 = vld [vmem:[%s6692] sm:$0xff]
    %v6694 = vld [vmem:[%s6692 + $0x8] sm:$0xff]
    %v6695 = vld [vmem:[%s6692 + $0x10] sm:$0xff]
    %v6696 = vld [vmem:[%s6692 + $0x18] sm:$0xff]
    %v6697 = vld [vmem:[%s6692 + $0x20] sm:$0xff]
    %v6698 = vld [vmem:[%s6692 + $0x28] sm:$0xff]
    %v6699 = vld [vmem:[%s6692 + $0x30] sm:$0xff]
    %v6700 = vld [vmem:[%s6692 + $0x38] sm:$0xff]
    %v6702 = vsel %vm5946, %v6689, 0
    %6704 = vmatprep.subr.mxu0 0.0
    %6705 = vmatpush1.msra.mxu0 0.0
    %6706 = vmatprep.subr.mxu0 0.0
    %6707 = vmatpush1.msra.mxu0 0.0
    %6708 = vmatprep.subr.mxu0 0.0
    %6709 = vmatpush1.msra.mxu0 0.0
    %6710 = vmatprep.subr.mxu0 0.0
    %6711 = vmatpush1.msra.mxu0 0.0
    %6712 = vmatprep.subr.mxu0 0.0
    %6713 = vmatpush1.msra.mxu0 0.0
    %6714 = vmatprep.subr.mxu0 0.0
    %6715 = vmatpush1.msra.mxu0 0.0
    %6716 = vmatprep.subr.mxu0 0.0
    %6717 = vmatpush1.msra.mxu0 0.0
    %6718 = vmatprep.subr.mxu0 0.0
    %6719 = vmatpush1.msra.mxu0 0.0
    %6720 = vmatprep.subr.mxu0 0.0
    %6721 = vmatpush1.msra.mxu0 %v6700
    %6722 = vmatprep.subr.mxu0 0.0
    %6723 = vmatpush1.msra.mxu0 %v6699
    %6724 = vmatprep.subr.mxu0 0.0
    %6725 = vmatpush1.msra.mxu0 %v6698
    %6726 = vmatprep.subr.mxu0 0.0
    %6727 = vmatpush1.msra.mxu0 %v6697
    %6728 = vmatprep.subr.mxu0 0.0
    %6729 = vmatpush1.msra.mxu0 %v6696
    %6730 = vmatprep.subr.mxu0 0.0
    %6731 = vmatpush1.msra.mxu0 %v6695
    %6732 = vmatprep.subr.mxu0 0.0
    %6733 = vmatpush1.msra.mxu0 %v6694
    %6734 = vmatprep.subr.mxu0 0.0
    %6735 = vmatpush1.msra.mxu0 %v6693
    %6736 = vmatprep.subr.mxu0 0.0
    %6737 = vmatpush2.msra.mxu0 0.0
    %6738 = vmatprep.subr.mxu0 0.0
    %6739 = vmatpush2.msra.mxu0 0.0
    %6740 = vmatprep.subr.mxu0 0.0
    %6741 = vmatpush2.msra.mxu0 0.0
    %6742 = vmatprep.subr.mxu0 0.0
    %6743 = vmatpush2.msra.mxu0 0.0
    %6744 = vmatprep.subr.mxu0 0.0
    %6745 = vmatpush2.msra.mxu0 0.0
    %6746 = vmatprep.subr.mxu0 0.0
    %6747 = vmatpush2.msra.mxu0 0.0
    %6748 = vmatprep.subr.mxu0 0.0
    %6749 = vmatpush2.msra.mxu0 0.0
    %6750 = vmatprep.subr.mxu0 0.0
    %6751 = vmatpush2.msra.mxu0 0.0
    %6752 = vmatprep.subr.mxu0 0.0
    %6753 = vmatpush2.msra.mxu0 0.0
    %6754 = vmatprep.subr.mxu0 0.0
    %6755 = vmatpush2.msra.mxu0 0.0
    %6756 = vmatprep.subr.mxu0 0.0
    %6757 = vmatpush2.msra.mxu0 0.0
    %6758 = vmatprep.subr.mxu0 0.0
    %6759 = vmatpush2.msra.mxu0 0.0
    %6760 = vmatprep.subr.mxu0 0.0
    %6761 = vmatpush2.msra.mxu0 0.0
    %6762 = vmatprep.subr.mxu0 0.0
    %6763 = vmatpush2.msra.mxu0 0.0
    %6764 = vmatprep.subr.mxu0 0.0
    %6765 = vmatpush2.msra.mxu0 0.0
    %6766 = vmatprep.subr.mxu0 0.0
    %6767 = vmatpush2.msra.mxu0 0.0
    %6768 = vmatprep.mubr.f32.mxu0 0.0
    %6769 = vmatmul.mubr.f32.gmra.mxu0 %v6702
    %v6770 = vpop.f32.mrf.mxu0
    %v6771 = vadd.f32 0.0, %v6770
    %v6772 = vpop.f32.mrf.mxu0
    %6773 = vdwg.mxu0
    %v6774 = vadd.f32 %v6616, %v6771
    %s6775 = scalar_lea.vmem %s10, 10
    %v6776 = vld [vmem:[%s6775] sm:$0x3]
    %v6778 = vsel %vm5989, %v6776, 0
    %6780 = vmatprep.subr.mxu0 0.0
    %6781 = vmatpush1.msra.mxu0 0.0
    %6782 = vmatprep.subr.mxu0 0.0
    %6783 = vmatpush1.msra.mxu0 0.0
    %6784 = vmatprep.subr.mxu0 0.0
    %6785 = vmatpush1.msra.mxu0 0.0
    %6786 = vmatprep.subr.mxu0 0.0
    %6787 = vmatpush1.msra.mxu0 0.0
    %6788 = vmatprep.subr.mxu0 0.0
    %6789 = vmatpush1.msra.mxu0 0.0
    %6790 = vmatprep.subr.mxu0 0.0
    %6791 = vmatpush1.msra.mxu0 0.0
    %6792 = vmatprep.subr.mxu0 0.0
    %6793 = vmatpush1.msra.mxu0 0.0
    %6794 = vmatprep.subr.mxu0 0.0
    %6795 = vmatpush1.msra.mxu0 0.0
    %6796 = vmatprep.subr.mxu0 0.0
    %6797 = vmatpush1.msra.mxu0 0.0
    %6798 = vmatprep.subr.mxu0 0.0
    %6799 = vmatpush1.msra.mxu0 0.0
    %6800 = vmatprep.subr.mxu0 0.0
    %6801 = vmatpush1.msra.mxu0 0.0
    %6802 = vmatprep.subr.mxu0 0.0
    %6803 = vmatpush1.msra.mxu0 0.0
    %6804 = vmatprep.subr.mxu0 0.0
    %6805 = vmatpush1.msra.mxu0 0.0
    %6806 = vmatprep.subr.mxu0 0.0
    %6807 = vmatpush1.msra.mxu0 0.0
    %6808 = vmatprep.subr.mxu0 0.0
    %6809 = vmatpush1.msra.mxu0 0.0
    %6810 = vmatprep.subr.mxu0 0.0
    %6811 = vmatpush1.msra.mxu0 %v5987
    %6812 = vmatprep.subr.mxu0 0.0
    %6813 = vmatpush2.msra.mxu0 0.0
    %6814 = vmatprep.subr.mxu0 0.0
    %6815 = vmatpush2.msra.mxu0 0.0
    %6816 = vmatprep.subr.mxu0 0.0
    %6817 = vmatpush2.msra.mxu0 0.0
    %6818 = vmatprep.subr.mxu0 0.0
    %6819 = vmatpush2.msra.mxu0 0.0
    %6820 = vmatprep.subr.mxu0 0.0
    %6821 = vmatpush2.msra.mxu0 0.0
    %6822 = vmatprep.subr.mxu0 0.0
    %6823 = vmatpush2.msra.mxu0 0.0
    %6824 = vmatprep.subr.mxu0 0.0
    %6825 = vmatpush2.msra.mxu0 0.0
    %6826 = vmatprep.subr.mxu0 0.0
    %6827 = vmatpush2.msra.mxu0 0.0
    %6828 = vmatprep.subr.mxu0 0.0
    %6829 = vmatpush2.msra.mxu0 0.0
    %6830 = vmatprep.subr.mxu0 0.0
    %6831 = vmatpush2.msra.mxu0 0.0
    %6832 = vmatprep.subr.mxu0 0.0
    %6833 = vmatpush2.msra.mxu0 0.0
    %6834 = vmatprep.subr.mxu0 0.0
    %6835 = vmatpush2.msra.mxu0 0.0
    %6836 = vmatprep.subr.mxu0 0.0
    %6837 = vmatpush2.msra.mxu0 0.0
    %6838 = vmatprep.subr.mxu0 0.0
    %6839 = vmatpush2.msra.mxu0 0.0
    %6840 = vmatprep.subr.mxu0 0.0
    %6841 = vmatpush2.msra.mxu0 0.0
    %6842 = vmatprep.subr.mxu0 0.0
    %6843 = vmatpush2.msra.mxu0 0.0
    %6844 = vmatprep.mubr.f32.mxu0 0.0
    %6845 = vmatmul.mubr.f32.gmra.mxu0 %v6778
    %v6846 = vpop.f32.mrf.mxu0
    %v6847 = vadd.f32 0.0, %v6846
    %v6848 = vpop.f32.mrf.mxu0
    %6849 = vdwg.mxu0
    %s6850 = scalar_lea.vmem %s11, 320
    %v6851 = vld [vmem:[%s6850] sm:$0xff]
    %v6852 = vld [vmem:[%s6850 + $0x8] sm:$0xff]
    %v6853 = vld [vmem:[%s6850 + $0x10] sm:$0xff]
    %v6854 = vld [vmem:[%s6850 + $0x18] sm:$0xff]
    %v6855 = vld [vmem:[%s6850 + $0x20] sm:$0xff]
    %v6856 = vld [vmem:[%s6850 + $0x28] sm:$0xff]
    %v6857 = vld [vmem:[%s6850 + $0x30] sm:$0xff]
    %v6858 = vld [vmem:[%s6850 + $0x38] sm:$0xff]
    %v6860 = vsel %vm5946, %v6847, 0
    %6862 = vmatprep.subr.mxu0 0.0
    %6863 = vmatpush1.msra.mxu0 0.0
    %6864 = vmatprep.subr.mxu0 0.0
    %6865 = vmatpush1.msra.mxu0 0.0
    %6866 = vmatprep.subr.mxu0 0.0
    %6867 = vmatpush1.msra.mxu0 0.0
    %6868 = vmatprep.subr.mxu0 0.0
    %6869 = vmatpush1.msra.mxu0 0.0
    %6870 = vmatprep.subr.mxu0 0.0
    %6871 = vmatpush1.msra.mxu0 0.0
    %6872 = vmatprep.subr.mxu0 0.0
    %6873 = vmatpush1.msra.mxu0 0.0
    %6874 = vmatprep.subr.mxu0 0.0
    %6875 = vmatpush1.msra.mxu0 0.0
    %6876 = vmatprep.subr.mxu0 0.0
    %6877 = vmatpush1.msra.mxu0 0.0
    %6878 = vmatprep.subr.mxu0 0.0
    %6879 = vmatpush1.msra.mxu0 %v6858
    %6880 = vmatprep.subr.mxu0 0.0
    %6881 = vmatpush1.msra.mxu0 %v6857
    %6882 = vmatprep.subr.mxu0 0.0
    %6883 = vmatpush1.msra.mxu0 %v6856
    %6884 = vmatprep.subr.mxu0 0.0
    %6885 = vmatpush1.msra.mxu0 %v6855
    %6886 = vmatprep.subr.mxu0 0.0
    %6887 = vmatpush1.msra.mxu0 %v6854
    %6888 = vmatprep.subr.mxu0 0.0
    %6889 = vmatpush1.msra.mxu0 %v6853
    %6890 = vmatprep.subr.mxu0 0.0
    %6891 = vmatpush1.msra.mxu0 %v6852
    %6892 = vmatprep.subr.mxu0 0.0
    %6893 = vmatpush1.msra.mxu0 %v6851
    %6894 = vmatprep.subr.mxu0 0.0
    %6895 = vmatpush2.msra.mxu0 0.0
    %6896 = vmatprep.subr.mxu0 0.0
    %6897 = vmatpush2.msra.mxu0 0.0
    %6898 = vmatprep.subr.mxu0 0.0
    %6899 = vmatpush2.msra.mxu0 0.0
    %6900 = vmatprep.subr.mxu0 0.0
    %6901 = vmatpush2.msra.mxu0 0.0
    %6902 = vmatprep.subr.mxu0 0.0
    %6903 = vmatpush2.msra.mxu0 0.0
    %6904 = vmatprep.subr.mxu0 0.0
    %6905 = vmatpush2.msra.mxu0 0.0
    %6906 = vmatprep.subr.mxu0 0.0
    %6907 = vmatpush2.msra.mxu0 0.0
    %6908 = vmatprep.subr.mxu0 0.0
    %6909 = vmatpush2.msra.mxu0 0.0
    %6910 = vmatprep.subr.mxu0 0.0
    %6911 = vmatpush2.msra.mxu0 0.0
    %6912 = vmatprep.subr.mxu0 0.0
    %6913 = vmatpush2.msra.mxu0 0.0
    %6914 = vmatprep.subr.mxu0 0.0
    %6915 = vmatpush2.msra.mxu0 0.0
    %6916 = vmatprep.subr.mxu0 0.0
    %6917 = vmatpush2.msra.mxu0 0.0
    %6918 = vmatprep.subr.mxu0 0.0
    %6919 = vmatpush2.msra.mxu0 0.0
    %6920 = vmatprep.subr.mxu0 0.0
    %6921 = vmatpush2.msra.mxu0 0.0
    %6922 = vmatprep.subr.mxu0 0.0
    %6923 = vmatpush2.msra.mxu0 0.0
    %6924 = vmatprep.subr.mxu0 0.0
    %6925 = vmatpush2.msra.mxu0 0.0
    %6926 = vmatprep.mubr.f32.mxu0 0.0
    %6927 = vmatmul.mubr.f32.gmra.mxu0 %v6860
    %v6928 = vpop.f32.mrf.mxu0
    %v6929 = vadd.f32 0.0, %v6928
    %v6930 = vpop.f32.mrf.mxu0
    %6931 = vdwg.mxu0
    %v6932 = vadd.f32 %v6774, %v6929
    %s6933 = scalar_lea.vmem %s10, 12
    %v6934 = vld [vmem:[%s6933] sm:$0x3]
    %v6936 = vsel %vm5989, %v6934, 0
    %6938 = vmatprep.subr.mxu0 0.0
    %6939 = vmatpush1.msra.mxu0 0.0
    %6940 = vmatprep.subr.mxu0 0.0
    %6941 = vmatpush1.msra.mxu0 0.0
    %6942 = vmatprep.subr.mxu0 0.0
    %6943 = vmatpush1.msra.mxu0 0.0
    %6944 = vmatprep.subr.mxu0 0.0
    %6945 = vmatpush1.msra.mxu0 0.0
    %6946 = vmatprep.subr.mxu0 0.0
    %6947 = vmatpush1.msra.mxu0 0.0
    %6948 = vmatprep.subr.mxu0 0.0
    %6949 = vmatpush1.msra.mxu0 0.0
    %6950 = vmatprep.subr.mxu0 0.0
    %6951 = vmatpush1.msra.mxu0 0.0
    %6952 = vmatprep.subr.mxu0 0.0
    %6953 = vmatpush1.msra.mxu0 0.0
    %6954 = vmatprep.subr.mxu0 0.0
    %6955 = vmatpush1.msra.mxu0 0.0
    %6956 = vmatprep.subr.mxu0 0.0
    %6957 = vmatpush1.msra.mxu0 0.0
    %6958 = vmatprep.subr.mxu0 0.0
    %6959 = vmatpush1.msra.mxu0 0.0
    %6960 = vmatprep.subr.mxu0 0.0
    %6961 = vmatpush1.msra.mxu0 0.0
    %6962 = vmatprep.subr.mxu0 0.0
    %6963 = vmatpush1.msra.mxu0 0.0
    %6964 = vmatprep.subr.mxu0 0.0
    %6965 = vmatpush1.msra.mxu0 0.0
    %6966 = vmatprep.subr.mxu0 0.0
    %6967 = vmatpush1.msra.mxu0 0.0
    %6968 = vmatprep.subr.mxu0 0.0
    %6969 = vmatpush1.msra.mxu0 %v5987
    %6970 = vmatprep.subr.mxu0 0.0
    %6971 = vmatpush2.msra.mxu0 0.0
    %6972 = vmatprep.subr.mxu0 0.0
    %6973 = vmatpush2.msra.mxu0 0.0
    %6974 = vmatprep.subr.mxu0 0.0
    %6975 = vmatpush2.msra.mxu0 0.0
    %6976 = vmatprep.subr.mxu0 0.0
    %6977 = vmatpush2.msra.mxu0 0.0
    %6978 = vmatprep.subr.mxu0 0.0
    %6979 = vmatpush2.msra.mxu0 0.0
    %6980 = vmatprep.subr.mxu0 0.0
    %6981 = vmatpush2.msra.mxu0 0.0
    %6982 = vmatprep.subr.mxu0 0.0
    %6983 = vmatpush2.msra.mxu0 0.0
    %6984 = vmatprep.subr.mxu0 0.0
    %6985 = vmatpush2.msra.mxu0 0.0
    %6986 = vmatprep.subr.mxu0 0.0
    %6987 = vmatpush2.msra.mxu0 0.0
    %6988 = vmatprep.subr.mxu0 0.0
    %6989 = vmatpush2.msra.mxu0 0.0
    %6990 = vmatprep.subr.mxu0 0.0
    %6991 = vmatpush2.msra.mxu0 0.0
    %6992 = vmatprep.subr.mxu0 0.0
    %6993 = vmatpush2.msra.mxu0 0.0
    %6994 = vmatprep.subr.mxu0 0.0
    %6995 = vmatpush2.msra.mxu0 0.0
    %6996 = vmatprep.subr.mxu0 0.0
    %6997 = vmatpush2.msra.mxu0 0.0
    %6998 = vmatprep.subr.mxu0 0.0
    %6999 = vmatpush2.msra.mxu0 0.0
    %7000 = vmatprep.subr.mxu0 0.0
    %7001 = vmatpush2.msra.mxu0 0.0
    %7002 = vmatprep.mubr.f32.mxu0 0.0
    %7003 = vmatmul.mubr.f32.gmra.mxu0 %v6936
    %v7004 = vpop.f32.mrf.mxu0
    %v7005 = vadd.f32 0.0, %v7004
    %v7006 = vpop.f32.mrf.mxu0
    %7007 = vdwg.mxu0
    %s7008 = scalar_lea.vmem %s11, 384
    %v7009 = vld [vmem:[%s7008] sm:$0xff]
    %v7010 = vld [vmem:[%s7008 + $0x8] sm:$0xff]
    %v7011 = vld [vmem:[%s7008 + $0x10] sm:$0xff]
    %v7012 = vld [vmem:[%s7008 + $0x18] sm:$0xff]
    %v7013 = vld [vmem:[%s7008 + $0x20] sm:$0xff]
    %v7014 = vld [vmem:[%s7008 + $0x28] sm:$0xff]
    %v7015 = vld [vmem:[%s7008 + $0x30] sm:$0xff]
    %v7016 = vld [vmem:[%s7008 + $0x38] sm:$0xff]
    %v7018 = vsel %vm5946, %v7005, 0
    %7020 = vmatprep.subr.mxu0 0.0
    %7021 = vmatpush1.msra.mxu0 0.0
    %7022 = vmatprep.subr.mxu0 0.0
    %7023 = vmatpush1.msra.mxu0 0.0
    %7024 = vmatprep.subr.mxu0 0.0
    %7025 = vmatpush1.msra.mxu0 0.0
    %7026 = vmatprep.subr.mxu0 0.0
    %7027 = vmatpush1.msra.mxu0 0.0
    %7028 = vmatprep.subr.mxu0 0.0
    %7029 = vmatpush1.msra.mxu0 0.0
    %7030 = vmatprep.subr.mxu0 0.0
    %7031 = vmatpush1.msra.mxu0 0.0
    %7032 = vmatprep.subr.mxu0 0.0
    %7033 = vmatpush1.msra.mxu0 0.0
    %7034 = vmatprep.subr.mxu0 0.0
    %7035 = vmatpush1.msra.mxu0 0.0
    %7036 = vmatprep.subr.mxu0 0.0
    %7037 = vmatpush1.msra.mxu0 %v7016
    %7038 = vmatprep.subr.mxu0 0.0
    %7039 = vmatpush1.msra.mxu0 %v7015
    %7040 = vmatprep.subr.mxu0 0.0
    %7041 = vmatpush1.msra.mxu0 %v7014
    %7042 = vmatprep.subr.mxu0 0.0
    %7043 = vmatpush1.msra.mxu0 %v7013
    %7044 = vmatprep.subr.mxu0 0.0
    %7045 = vmatpush1.msra.mxu0 %v7012
    %7046 = vmatprep.subr.mxu0 0.0
    %7047 = vmatpush1.msra.mxu0 %v7011
    %7048 = vmatprep.subr.mxu0 0.0
    %7049 = vmatpush1.msra.mxu0 %v7010
    %7050 = vmatprep.subr.mxu0 0.0
    %7051 = vmatpush1.msra.mxu0 %v7009
    %7052 = vmatprep.subr.mxu0 0.0
    %7053 = vmatpush2.msra.mxu0 0.0
    %7054 = vmatprep.subr.mxu0 0.0
    %7055 = vmatpush2.msra.mxu0 0.0
    %7056 = vmatprep.subr.mxu0 0.0
    %7057 = vmatpush2.msra.mxu0 0.0
    %7058 = vmatprep.subr.mxu0 0.0
    %7059 = vmatpush2.msra.mxu0 0.0
    %7060 = vmatprep.subr.mxu0 0.0
    %7061 = vmatpush2.msra.mxu0 0.0
    %7062 = vmatprep.subr.mxu0 0.0
    %7063 = vmatpush2.msra.mxu0 0.0
    %7064 = vmatprep.subr.mxu0 0.0
    %7065 = vmatpush2.msra.mxu0 0.0
    %7066 = vmatprep.subr.mxu0 0.0
    %7067 = vmatpush2.msra.mxu0 0.0
    %7068 = vmatprep.subr.mxu0 0.0
    %7069 = vmatpush2.msra.mxu0 0.0
    %7070 = vmatprep.subr.mxu0 0.0
    %7071 = vmatpush2.msra.mxu0 0.0
    %7072 = vmatprep.subr.mxu0 0.0
    %7073 = vmatpush2.msra.mxu0 0.0
    %7074 = vmatprep.subr.mxu0 0.0
    %7075 = vmatpush2.msra.mxu0 0.0
    %7076 = vmatprep.subr.mxu0 0.0
    %7077 = vmatpush2.msra.mxu0 0.0
    %7078 = vmatprep.subr.mxu0 0.0
    %7079 = vmatpush2.msra.mxu0 0.0
    %7080 = vmatprep.subr.mxu0 0.0
    %7081 = vmatpush2.msra.mxu0 0.0
    %7082 = vmatprep.subr.mxu0 0.0
    %7083 = vmatpush2.msra.mxu0 0.0
    %7084 = vmatprep.mubr.f32.mxu0 0.0
    %7085 = vmatmul.mubr.f32.gmra.mxu0 %v7018
    %v7086 = vpop.f32.mrf.mxu0
    %v7087 = vadd.f32 0.0, %v7086
    %v7088 = vpop.f32.mrf.mxu0
    %7089 = vdwg.mxu0
    %v7090 = vadd.f32 %v6932, %v7087
    %s7091 = scalar_lea.vmem %s10, 14
    %v7092 = vld [vmem:[%s7091] sm:$0x3]
    %v7094 = vsel %vm5989, %v7092, 0
    %7096 = vmatprep.subr.mxu0 0.0
    %7097 = vmatpush1.msra.mxu0 0.0
    %7098 = vmatprep.subr.mxu0 0.0
    %7099 = vmatpush1.msra.mxu0 0.0
    %7100 = vmatprep.subr.mxu0 0.0
    %7101 = vmatpush1.msra.mxu0 0.0
    %7102 = vmatprep.subr.mxu0 0.0
    %7103 = vmatpush1.msra.mxu0 0.0
    %7104 = vmatprep.subr.mxu0 0.0
    %7105 = vmatpush1.msra.mxu0 0.0
    %7106 = vmatprep.subr.mxu0 0.0
    %7107 = vmatpush1.msra.mxu0 0.0
    %7108 = vmatprep.subr.mxu0 0.0
    %7109 = vmatpush1.msra.mxu0 0.0
    %7110 = vmatprep.subr.mxu0 0.0
    %7111 = vmatpush1.msra.mxu0 0.0
    %7112 = vmatprep.subr.mxu0 0.0
    %7113 = vmatpush1.msra.mxu0 0.0
    %7114 = vmatprep.subr.mxu0 0.0
    %7115 = vmatpush1.msra.mxu0 0.0
    %7116 = vmatprep.subr.mxu0 0.0
    %7117 = vmatpush1.msra.mxu0 0.0
    %7118 = vmatprep.subr.mxu0 0.0
    %7119 = vmatpush1.msra.mxu0 0.0
    %7120 = vmatprep.subr.mxu0 0.0
    %7121 = vmatpush1.msra.mxu0 0.0
    %7122 = vmatprep.subr.mxu0 0.0
    %7123 = vmatpush1.msra.mxu0 0.0
    %7124 = vmatprep.subr.mxu0 0.0
    %7125 = vmatpush1.msra.mxu0 0.0
    %7126 = vmatprep.subr.mxu0 0.0
    %7127 = vmatpush1.msra.mxu0 %v5987
    %7128 = vmatprep.subr.mxu0 0.0
    %7129 = vmatpush2.msra.mxu0 0.0
    %7130 = vmatprep.subr.mxu0 0.0
    %7131 = vmatpush2.msra.mxu0 0.0
    %7132 = vmatprep.subr.mxu0 0.0
    %7133 = vmatpush2.msra.mxu0 0.0
    %7134 = vmatprep.subr.mxu0 0.0
    %7135 = vmatpush2.msra.mxu0 0.0
    %7136 = vmatprep.subr.mxu0 0.0
    %7137 = vmatpush2.msra.mxu0 0.0
    %7138 = vmatprep.subr.mxu0 0.0
    %7139 = vmatpush2.msra.mxu0 0.0
    %7140 = vmatprep.subr.mxu0 0.0
    %7141 = vmatpush2.msra.mxu0 0.0
    %7142 = vmatprep.subr.mxu0 0.0
    %7143 = vmatpush2.msra.mxu0 0.0
    %7144 = vmatprep.subr.mxu0 0.0
    %7145 = vmatpush2.msra.mxu0 0.0
    %7146 = vmatprep.subr.mxu0 0.0
    %7147 = vmatpush2.msra.mxu0 0.0
    %7148 = vmatprep.subr.mxu0 0.0
    %7149 = vmatpush2.msra.mxu0 0.0
    %7150 = vmatprep.subr.mxu0 0.0
    %7151 = vmatpush2.msra.mxu0 0.0
    %7152 = vmatprep.subr.mxu0 0.0
    %7153 = vmatpush2.msra.mxu0 0.0
    %7154 = vmatprep.subr.mxu0 0.0
    %7155 = vmatpush2.msra.mxu0 0.0
    %7156 = vmatprep.subr.mxu0 0.0
    %7157 = vmatpush2.msra.mxu0 0.0
    %7158 = vmatprep.subr.mxu0 0.0
    %7159 = vmatpush2.msra.mxu0 0.0
    %7160 = vmatprep.mubr.f32.mxu0 0.0
    %7161 = vmatmul.mubr.f32.gmra.mxu0 %v7094
    %v7162 = vpop.f32.mrf.mxu0
    %v7163 = vadd.f32 0.0, %v7162
    %v7164 = vpop.f32.mrf.mxu0
    %7165 = vdwg.mxu0
    %s7166 = scalar_lea.vmem %s11, 448
    %v7167 = vld [vmem:[%s7166] sm:$0xff]
    %v7168 = vld [vmem:[%s7166 + $0x8] sm:$0xff]
    %v7169 = vld [vmem:[%s7166 + $0x10] sm:$0xff]
    %v7170 = vld [vmem:[%s7166 + $0x18] sm:$0xff]
    %v7171 = vld [vmem:[%s7166 + $0x20] sm:$0xff]
    %v7172 = vld [vmem:[%s7166 + $0x28] sm:$0xff]
    %v7173 = vld [vmem:[%s7166 + $0x30] sm:$0xff]
    %v7174 = vld [vmem:[%s7166 + $0x38] sm:$0xff]
    %v7176 = vsel %vm5946, %v7163, 0
    %7178 = vmatprep.subr.mxu0 0.0
    %7179 = vmatpush1.msra.mxu0 0.0
    %7180 = vmatprep.subr.mxu0 0.0
    %7181 = vmatpush1.msra.mxu0 0.0
    %7182 = vmatprep.subr.mxu0 0.0
    %7183 = vmatpush1.msra.mxu0 0.0
    %7184 = vmatprep.subr.mxu0 0.0
    %7185 = vmatpush1.msra.mxu0 0.0
    %7186 = vmatprep.subr.mxu0 0.0
    %7187 = vmatpush1.msra.mxu0 0.0
    %7188 = vmatprep.subr.mxu0 0.0
    %7189 = vmatpush1.msra.mxu0 0.0
    %7190 = vmatprep.subr.mxu0 0.0
    %7191 = vmatpush1.msra.mxu0 0.0
    %7192 = vmatprep.subr.mxu0 0.0
    %7193 = vmatpush1.msra.mxu0 0.0
    %7194 = vmatprep.subr.mxu0 0.0
    %7195 = vmatpush1.msra.mxu0 %v7174
    %7196 = vmatprep.subr.mxu0 0.0
    %7197 = vmatpush1.msra.mxu0 %v7173
    %7198 = vmatprep.subr.mxu0 0.0
    %7199 = vmatpush1.msra.mxu0 %v7172
    %7200 = vmatprep.subr.mxu0 0.0
    %7201 = vmatpush1.msra.mxu0 %v7171
    %7202 = vmatprep.subr.mxu0 0.0
    %7203 = vmatpush1.msra.mxu0 %v7170
    %7204 = vmatprep.subr.mxu0 0.0
    %7205 = vmatpush1.msra.mxu0 %v7169
    %7206 = vmatprep.subr.mxu0 0.0
    %7207 = vmatpush1.msra.mxu0 %v7168
    %7208 = vmatprep.subr.mxu0 0.0
    %7209 = vmatpush1.msra.mxu0 %v7167
    %7210 = vmatprep.subr.mxu0 0.0
    %7211 = vmatpush2.msra.mxu0 0.0
    %7212 = vmatprep.subr.mxu0 0.0
    %7213 = vmatpush2.msra.mxu0 0.0
    %7214 = vmatprep.subr.mxu0 0.0
    %7215 = vmatpush2.msra.mxu0 0.0
    %7216 = vmatprep.subr.mxu0 0.0
    %7217 = vmatpush2.msra.mxu0 0.0
    %7218 = vmatprep.subr.mxu0 0.0
    %7219 = vmatpush2.msra.mxu0 0.0
    %7220 = vmatprep.subr.mxu0 0.0
    %7221 = vmatpush2.msra.mxu0 0.0
    %7222 = vmatprep.subr.mxu0 0.0
    %7223 = vmatpush2.msra.mxu0 0.0
    %7224 = vmatprep.subr.mxu0 0.0
    %7225 = vmatpush2.msra.mxu0 0.0
    %7226 = vmatprep.subr.mxu0 0.0
    %7227 = vmatpush2.msra.mxu0 0.0
    %7228 = vmatprep.subr.mxu0 0.0
    %7229 = vmatpush2.msra.mxu0 0.0
    %7230 = vmatprep.subr.mxu0 0.0
    %7231 = vmatpush2.msra.mxu0 0.0
    %7232 = vmatprep.subr.mxu0 0.0
    %7233 = vmatpush2.msra.mxu0 0.0
    %7234 = vmatprep.subr.mxu0 0.0
    %7235 = vmatpush2.msra.mxu0 0.0
    %7236 = vmatprep.subr.mxu0 0.0
    %7237 = vmatpush2.msra.mxu0 0.0
    %7238 = vmatprep.subr.mxu0 0.0
    %7239 = vmatpush2.msra.mxu0 0.0
    %7240 = vmatprep.subr.mxu0 0.0
    %7241 = vmatpush2.msra.mxu0 0.0
    %7242 = vmatprep.mubr.f32.mxu0 0.0
    %7243 = vmatmul.mubr.f32.gmra.mxu0 %v7176
    %v7244 = vpop.f32.mrf.mxu0
    %v7245 = vadd.f32 0.0, %v7244
    %v7246 = vpop.f32.mrf.mxu0
    %7247 = vdwg.mxu0
    %v7248 = vadd.f32 %v7090, %v7245
    %s7249 = scalar_lea.vmem %s10, 16
    %v7250 = vld [vmem:[%s7249] sm:$0x3]
    %v7252 = vsel %vm5989, %v7250, 0
    %7254 = vmatprep.subr.mxu0 0.0
    %7255 = vmatpush1.msra.mxu0 0.0
    %7256 = vmatprep.subr.mxu0 0.0
    %7257 = vmatpush1.msra.mxu0 0.0
    %7258 = vmatprep.subr.mxu0 0.0
    %7259 = vmatpush1.msra.mxu0 0.0
    %7260 = vmatprep.subr.mxu0 0.0
    %7261 = vmatpush1.msra.mxu0 0.0
    %7262 = vmatprep.subr.mxu0 0.0
    %7263 = vmatpush1.msra.mxu0 0.0
    %7264 = vmatprep.subr.mxu0 0.0
    %7265 = vmatpush1.msra.mxu0 0.0
    %7266 = vmatprep.subr.mxu0 0.0
    %7267 = vmatpush1.msra.mxu0 0.0
    %7268 = vmatprep.subr.mxu0 0.0
    %7269 = vmatpush1.msra.mxu0 0.0
    %7270 = vmatprep.subr.mxu0 0.0
    %7271 = vmatpush1.msra.mxu0 0.0
    %7272 = vmatprep.subr.mxu0 0.0
    %7273 = vmatpush1.msra.mxu0 0.0
    %7274 = vmatprep.subr.mxu0 0.0
    %7275 = vmatpush1.msra.mxu0 0.0
    %7276 = vmatprep.subr.mxu0 0.0
    %7277 = vmatpush1.msra.mxu0 0.0
    %7278 = vmatprep.subr.mxu0 0.0
    %7279 = vmatpush1.msra.mxu0 0.0
    %7280 = vmatprep.subr.mxu0 0.0
    %7281 = vmatpush1.msra.mxu0 0.0
    %7282 = vmatprep.subr.mxu0 0.0
    %7283 = vmatpush1.msra.mxu0 0.0
    %7284 = vmatprep.subr.mxu0 0.0
    %7285 = vmatpush1.msra.mxu0 %v5987
    %7286 = vmatprep.subr.mxu0 0.0
    %7287 = vmatpush2.msra.mxu0 0.0
    %7288 = vmatprep.subr.mxu0 0.0
    %7289 = vmatpush2.msra.mxu0 0.0
    %7290 = vmatprep.subr.mxu0 0.0
    %7291 = vmatpush2.msra.mxu0 0.0
    %7292 = vmatprep.subr.mxu0 0.0
    %7293 = vmatpush2.msra.mxu0 0.0
    %7294 = vmatprep.subr.mxu0 0.0
    %7295 = vmatpush2.msra.mxu0 0.0
    %7296 = vmatprep.subr.mxu0 0.0
    %7297 = vmatpush2.msra.mxu0 0.0
    %7298 = vmatprep.subr.mxu0 0.0
    %7299 = vmatpush2.msra.mxu0 0.0
    %7300 = vmatprep.subr.mxu0 0.0
    %7301 = vmatpush2.msra.mxu0 0.0
    %7302 = vmatprep.subr.mxu0 0.0
    %7303 = vmatpush2.msra.mxu0 0.0
    %7304 = vmatprep.subr.mxu0 0.0
    %7305 = vmatpush2.msra.mxu0 0.0
    %7306 = vmatprep.subr.mxu0 0.0
    %7307 = vmatpush2.msra.mxu0 0.0
    %7308 = vmatprep.subr.mxu0 0.0
    %7309 = vmatpush2.msra.mxu0 0.0
    %7310 = vmatprep.subr.mxu0 0.0
    %7311 = vmatpush2.msra.mxu0 0.0
    %7312 = vmatprep.subr.mxu0 0.0
    %7313 = vmatpush2.msra.mxu0 0.0
    %7314 = vmatprep.subr.mxu0 0.0
    %7315 = vmatpush2.msra.mxu0 0.0
    %7316 = vmatprep.subr.mxu0 0.0
    %7317 = vmatpush2.msra.mxu0 0.0
    %7318 = vmatprep.mubr.f32.mxu0 0.0
    %7319 = vmatmul.mubr.f32.gmra.mxu0 %v7252
    %v7320 = vpop.f32.mrf.mxu0
    %v7321 = vadd.f32 0.0, %v7320
    %v7322 = vpop.f32.mrf.mxu0
    %7323 = vdwg.mxu0
    %s7324 = scalar_lea.vmem %s11, 512
    %v7325 = vld [vmem:[%s7324] sm:$0xff]
    %v7326 = vld [vmem:[%s7324 + $0x8] sm:$0xff]
    %v7327 = vld [vmem:[%s7324 + $0x10] sm:$0xff]
    %v7328 = vld [vmem:[%s7324 + $0x18] sm:$0xff]
    %v7329 = vld [vmem:[%s7324 + $0x20] sm:$0xff]
    %v7330 = vld [vmem:[%s7324 + $0x28] sm:$0xff]
    %v7331 = vld [vmem:[%s7324 + $0x30] sm:$0xff]
    %v7332 = vld [vmem:[%s7324 + $0x38] sm:$0xff]
    %v7334 = vsel %vm5946, %v7321, 0
    %7336 = vmatprep.subr.mxu0 0.0
    %7337 = vmatpush1.msra.mxu0 0.0
    %7338 = vmatprep.subr.mxu0 0.0
    %7339 = vmatpush1.msra.mxu0 0.0
    %7340 = vmatprep.subr.mxu0 0.0
    %7341 = vmatpush1.msra.mxu0 0.0
    %7342 = vmatprep.subr.mxu0 0.0
    %7343 = vmatpush1.msra.mxu0 0.0
    %7344 = vmatprep.subr.mxu0 0.0
    %7345 = vmatpush1.msra.mxu0 0.0
    %7346 = vmatprep.subr.mxu0 0.0
    %7347 = vmatpush1.msra.mxu0 0.0
    %7348 = vmatprep.subr.mxu0 0.0
    %7349 = vmatpush1.msra.mxu0 0.0
    %7350 = vmatprep.subr.mxu0 0.0
    %7351 = vmatpush1.msra.mxu0 0.0
    %7352 = vmatprep.subr.mxu0 0.0
    %7353 = vmatpush1.msra.mxu0 %v7332
    %7354 = vmatprep.subr.mxu0 0.0
    %7355 = vmatpush1.msra.mxu0 %v7331
    %7356 = vmatprep.subr.mxu0 0.0
    %7357 = vmatpush1.msra.mxu0 %v7330
    %7358 = vmatprep.subr.mxu0 0.0
    %7359 = vmatpush1.msra.mxu0 %v7329
    %7360 = vmatprep.subr.mxu0 0.0
    %7361 = vmatpush1.msra.mxu0 %v7328
    %7362 = vmatprep.subr.mxu0 0.0
    %7363 = vmatpush1.msra.mxu0 %v7327
    %7364 = vmatprep.subr.mxu0 0.0
    %7365 = vmatpush1.msra.mxu0 %v7326
    %7366 = vmatprep.subr.mxu0 0.0
    %7367 = vmatpush1.msra.mxu0 %v7325
    %7368 = vmatprep.subr.mxu0 0.0
    %7369 = vmatpush2.msra.mxu0 0.0
    %7370 = vmatprep.subr.mxu0 0.0
    %7371 = vmatpush2.msra.mxu0 0.0
    %7372 = vmatprep.subr.mxu0 0.0
    %7373 = vmatpush2.msra.mxu0 0.0
    %7374 = vmatprep.subr.mxu0 0.0
    %7375 = vmatpush2.msra.mxu0 0.0
    %7376 = vmatprep.subr.mxu0 0.0
    %7377 = vmatpush2.msra.mxu0 0.0
    %7378 = vmatprep.subr.mxu0 0.0
    %7379 = vmatpush2.msra.mxu0 0.0
    %7380 = vmatprep.subr.mxu0 0.0
    %7381 = vmatpush2.msra.mxu0 0.0
    %7382 = vmatprep.subr.mxu0 0.0
    %7383 = vmatpush2.msra.mxu0 0.0
    %7384 = vmatprep.subr.mxu0 0.0
    %7385 = vmatpush2.msra.mxu0 0.0
    %7386 = vmatprep.subr.mxu0 0.0
    %7387 = vmatpush2.msra.mxu0 0.0
    %7388 = vmatprep.subr.mxu0 0.0
    %7389 = vmatpush2.msra.mxu0 0.0
    %7390 = vmatprep.subr.mxu0 0.0
    %7391 = vmatpush2.msra.mxu0 0.0
    %7392 = vmatprep.subr.mxu0 0.0
    %7393 = vmatpush2.msra.mxu0 0.0
    %7394 = vmatprep.subr.mxu0 0.0
    %7395 = vmatpush2.msra.mxu0 0.0
    %7396 = vmatprep.subr.mxu0 0.0
    %7397 = vmatpush2.msra.mxu0 0.0
    %7398 = vmatprep.subr.mxu0 0.0
    %7399 = vmatpush2.msra.mxu0 0.0
    %7400 = vmatprep.mubr.f32.mxu0 0.0
    %7401 = vmatmul.mubr.f32.gmra.mxu0 %v7334
    %v7402 = vpop.f32.mrf.mxu0
    %v7403 = vadd.f32 0.0, %v7402
    %v7404 = vpop.f32.mrf.mxu0
    %7405 = vdwg.mxu0
    %v7406 = vadd.f32 %v7248, %v7403
    %s7407 = scalar_lea.vmem %s10, 18
    %v7408 = vld [vmem:[%s7407] sm:$0x3]
    %v7410 = vsel %vm5989, %v7408, 0
    %7412 = vmatprep.subr.mxu0 0.0
    %7413 = vmatpush1.msra.mxu0 0.0
    %7414 = vmatprep.subr.mxu0 0.0
    %7415 = vmatpush1.msra.mxu0 0.0
    %7416 = vmatprep.subr.mxu0 0.0
    %7417 = vmatpush1.msra.mxu0 0.0
    %7418 = vmatprep.subr.mxu0 0.0
    %7419 = vmatpush1.msra.mxu0 0.0
    %7420 = vmatprep.subr.mxu0 0.0
    %7421 = vmatpush1.msra.mxu0 0.0
    %7422 = vmatprep.subr.mxu0 0.0
    %7423 = vmatpush1.msra.mxu0 0.0
    %7424 = vmatprep.subr.mxu0 0.0
    %7425 = vmatpush1.msra.mxu0 0.0
    %7426 = vmatprep.subr.mxu0 0.0
    %7427 = vmatpush1.msra.mxu0 0.0
    %7428 = vmatprep.subr.mxu0 0.0
    %7429 = vmatpush1.msra.mxu0 0.0
    %7430 = vmatprep.subr.mxu0 0.0
    %7431 = vmatpush1.msra.mxu0 0.0
    %7432 = vmatprep.subr.mxu0 0.0
    %7433 = vmatpush1.msra.mxu0 0.0
    %7434 = vmatprep.subr.mxu0 0.0
    %7435 = vmatpush1.msra.mxu0 0.0
    %7436 = vmatprep.subr.mxu0 0.0
    %7437 = vmatpush1.msra.mxu0 0.0
    %7438 = vmatprep.subr.mxu0 0.0
    %7439 = vmatpush1.msra.mxu0 0.0
    %7440 = vmatprep.subr.mxu0 0.0
    %7441 = vmatpush1.msra.mxu0 0.0
    %7442 = vmatprep.subr.mxu0 0.0
    %7443 = vmatpush1.msra.mxu0 %v5987
    %7444 = vmatprep.subr.mxu0 0.0
    %7445 = vmatpush2.msra.mxu0 0.0
    %7446 = vmatprep.subr.mxu0 0.0
    %7447 = vmatpush2.msra.mxu0 0.0
    %7448 = vmatprep.subr.mxu0 0.0
    %7449 = vmatpush2.msra.mxu0 0.0
    %7450 = vmatprep.subr.mxu0 0.0
    %7451 = vmatpush2.msra.mxu0 0.0
    %7452 = vmatprep.subr.mxu0 0.0
    %7453 = vmatpush2.msra.mxu0 0.0
    %7454 = vmatprep.subr.mxu0 0.0
    %7455 = vmatpush2.msra.mxu0 0.0
    %7456 = vmatprep.subr.mxu0 0.0
    %7457 = vmatpush2.msra.mxu0 0.0
    %7458 = vmatprep.subr.mxu0 0.0
    %7459 = vmatpush2.msra.mxu0 0.0
    %7460 = vmatprep.subr.mxu0 0.0
    %7461 = vmatpush2.msra.mxu0 0.0
    %7462 = vmatprep.subr.mxu0 0.0
    %7463 = vmatpush2.msra.mxu0 0.0
    %7464 = vmatprep.subr.mxu0 0.0
    %7465 = vmatpush2.msra.mxu0 0.0
    %7466 = vmatprep.subr.mxu0 0.0
    %7467 = vmatpush2.msra.mxu0 0.0
    %7468 = vmatprep.subr.mxu0 0.0
    %7469 = vmatpush2.msra.mxu0 0.0
    %7470 = vmatprep.subr.mxu0 0.0
    %7471 = vmatpush2.msra.mxu0 0.0
    %7472 = vmatprep.subr.mxu0 0.0
    %7473 = vmatpush2.msra.mxu0 0.0
    %7474 = vmatprep.subr.mxu0 0.0
    %7475 = vmatpush2.msra.mxu0 0.0
    %7476 = vmatprep.mubr.f32.mxu0 0.0
    %7477 = vmatmul.mubr.f32.gmra.mxu0 %v7410
    %v7478 = vpop.f32.mrf.mxu0
    %v7479 = vadd.f32 0.0, %v7478
    %v7480 = vpop.f32.mrf.mxu0
    %7481 = vdwg.mxu0
    %s7482 = scalar_lea.vmem %s11, 576
    %v7483 = vld [vmem:[%s7482] sm:$0xff]
    %v7484 = vld [vmem:[%s7482 + $0x8] sm:$0xff]
    %v7485 = vld [vmem:[%s7482 + $0x10] sm:$0xff]
    %v7486 = vld [vmem:[%s7482 + $0x18] sm:$0xff]
    %v7487 = vld [vmem:[%s7482 + $0x20] sm:$0xff]
    %v7488 = vld [vmem:[%s7482 + $0x28] sm:$0xff]
    %v7489 = vld [vmem:[%s7482 + $0x30] sm:$0xff]
    %v7490 = vld [vmem:[%s7482 + $0x38] sm:$0xff]
    %v7492 = vsel %vm5946, %v7479, 0
    %7494 = vmatprep.subr.mxu0 0.0
    %7495 = vmatpush1.msra.mxu0 0.0
    %7496 = vmatprep.subr.mxu0 0.0
    %7497 = vmatpush1.msra.mxu0 0.0
    %7498 = vmatprep.subr.mxu0 0.0
    %7499 = vmatpush1.msra.mxu0 0.0
    %7500 = vmatprep.subr.mxu0 0.0
    %7501 = vmatpush1.msra.mxu0 0.0
    %7502 = vmatprep.subr.mxu0 0.0
    %7503 = vmatpush1.msra.mxu0 0.0
    %7504 = vmatprep.subr.mxu0 0.0
    %7505 = vmatpush1.msra.mxu0 0.0
    %7506 = vmatprep.subr.mxu0 0.0
    %7507 = vmatpush1.msra.mxu0 0.0
    %7508 = vmatprep.subr.mxu0 0.0
    %7509 = vmatpush1.msra.mxu0 0.0
    %7510 = vmatprep.subr.mxu0 0.0
    %7511 = vmatpush1.msra.mxu0 %v7490
    %7512 = vmatprep.subr.mxu0 0.0
    %7513 = vmatpush1.msra.mxu0 %v7489
    %7514 = vmatprep.subr.mxu0 0.0
    %7515 = vmatpush1.msra.mxu0 %v7488
    %7516 = vmatprep.subr.mxu0 0.0
    %7517 = vmatpush1.msra.mxu0 %v7487
    %7518 = vmatprep.subr.mxu0 0.0
    %7519 = vmatpush1.msra.mxu0 %v7486
    %7520 = vmatprep.subr.mxu0 0.0
    %7521 = vmatpush1.msra.mxu0 %v7485
    %7522 = vmatprep.subr.mxu0 0.0
    %7523 = vmatpush1.msra.mxu0 %v7484
    %7524 = vmatprep.subr.mxu0 0.0
    %7525 = vmatpush1.msra.mxu0 %v7483
    %7526 = vmatprep.subr.mxu0 0.0
    %7527 = vmatpush2.msra.mxu0 0.0
    %7528 = vmatprep.subr.mxu0 0.0
    %7529 = vmatpush2.msra.mxu0 0.0
    %7530 = vmatprep.subr.mxu0 0.0
    %7531 = vmatpush2.msra.mxu0 0.0
    %7532 = vmatprep.subr.mxu0 0.0
    %7533 = vmatpush2.msra.mxu0 0.0
    %7534 = vmatprep.subr.mxu0 0.0
    %7535 = vmatpush2.msra.mxu0 0.0
    %7536 = vmatprep.subr.mxu0 0.0
    %7537 = vmatpush2.msra.mxu0 0.0
    %7538 = vmatprep.subr.mxu0 0.0
    %7539 = vmatpush2.msra.mxu0 0.0
    %7540 = vmatprep.subr.mxu0 0.0
    %7541 = vmatpush2.msra.mxu0 0.0
    %7542 = vmatprep.subr.mxu0 0.0
    %7543 = vmatpush2.msra.mxu0 0.0
    %7544 = vmatprep.subr.mxu0 0.0
    %7545 = vmatpush2.msra.mxu0 0.0
    %7546 = vmatprep.subr.mxu0 0.0
    %7547 = vmatpush2.msra.mxu0 0.0
    %7548 = vmatprep.subr.mxu0 0.0
    %7549 = vmatpush2.msra.mxu0 0.0
    %7550 = vmatprep.subr.mxu0 0.0
    %7551 = vmatpush2.msra.mxu0 0.0
    %7552 = vmatprep.subr.mxu0 0.0
    %7553 = vmatpush2.msra.mxu0 0.0
    %7554 = vmatprep.subr.mxu0 0.0
    %7555 = vmatpush2.msra.mxu0 0.0
    %7556 = vmatprep.subr.mxu0 0.0
    %7557 = vmatpush2.msra.mxu0 0.0
    %7558 = vmatprep.mubr.f32.mxu0 0.0
    %7559 = vmatmul.mubr.f32.gmra.mxu0 %v7492
    %v7560 = vpop.f32.mrf.mxu0
    %v7561 = vadd.f32 0.0, %v7560
    %v7562 = vpop.f32.mrf.mxu0
    %7563 = vdwg.mxu0
    %v7564 = vadd.f32 %v7406, %v7561
    %s7565 = scalar_lea.vmem %s10, 20
    %v7566 = vld [vmem:[%s7565] sm:$0x3]
    %v7568 = vsel %vm5989, %v7566, 0
    %7570 = vmatprep.subr.mxu0 0.0
    %7571 = vmatpush1.msra.mxu0 0.0
    %7572 = vmatprep.subr.mxu0 0.0
    %7573 = vmatpush1.msra.mxu0 0.0
    %7574 = vmatprep.subr.mxu0 0.0
    %7575 = vmatpush1.msra.mxu0 0.0
    %7576 = vmatprep.subr.mxu0 0.0
    %7577 = vmatpush1.msra.mxu0 0.0
    %7578 = vmatprep.subr.mxu0 0.0
    %7579 = vmatpush1.msra.mxu0 0.0
    %7580 = vmatprep.subr.mxu0 0.0
    %7581 = vmatpush1.msra.mxu0 0.0
    %7582 = vmatprep.subr.mxu0 0.0
    %7583 = vmatpush1.msra.mxu0 0.0
    %7584 = vmatprep.subr.mxu0 0.0
    %7585 = vmatpush1.msra.mxu0 0.0
    %7586 = vmatprep.subr.mxu0 0.0
    %7587 = vmatpush1.msra.mxu0 0.0
    %7588 = vmatprep.subr.mxu0 0.0
    %7589 = vmatpush1.msra.mxu0 0.0
    %7590 = vmatprep.subr.mxu0 0.0
    %7591 = vmatpush1.msra.mxu0 0.0
    %7592 = vmatprep.subr.mxu0 0.0
    %7593 = vmatpush1.msra.mxu0 0.0
    %7594 = vmatprep.subr.mxu0 0.0
    %7595 = vmatpush1.msra.mxu0 0.0
    %7596 = vmatprep.subr.mxu0 0.0
    %7597 = vmatpush1.msra.mxu0 0.0
    %7598 = vmatprep.subr.mxu0 0.0
    %7599 = vmatpush1.msra.mxu0 0.0
    %7600 = vmatprep.subr.mxu0 0.0
    %7601 = vmatpush1.msra.mxu0 %v5987
    %7602 = vmatprep.subr.mxu0 0.0
    %7603 = vmatpush2.msra.mxu0 0.0
    %7604 = vmatprep.subr.mxu0 0.0
    %7605 = vmatpush2.msra.mxu0 0.0
    %7606 = vmatprep.subr.mxu0 0.0
    %7607 = vmatpush2.msra.mxu0 0.0
    %7608 = vmatprep.subr.mxu0 0.0
    %7609 = vmatpush2.msra.mxu0 0.0
    %7610 = vmatprep.subr.mxu0 0.0
    %7611 = vmatpush2.msra.mxu0 0.0
    %7612 = vmatprep.subr.mxu0 0.0
    %7613 = vmatpush2.msra.mxu0 0.0
    %7614 = vmatprep.subr.mxu0 0.0
    %7615 = vmatpush2.msra.mxu0 0.0
    %7616 = vmatprep.subr.mxu0 0.0
    %7617 = vmatpush2.msra.mxu0 0.0
    %7618 = vmatprep.subr.mxu0 0.0
    %7619 = vmatpush2.msra.mxu0 0.0
    %7620 = vmatprep.subr.mxu0 0.0
    %7621 = vmatpush2.msra.mxu0 0.0
    %7622 = vmatprep.subr.mxu0 0.0
    %7623 = vmatpush2.msra.mxu0 0.0
    %7624 = vmatprep.subr.mxu0 0.0
    %7625 = vmatpush2.msra.mxu0 0.0
    %7626 = vmatprep.subr.mxu0 0.0
    %7627 = vmatpush2.msra.mxu0 0.0
    %7628 = vmatprep.subr.mxu0 0.0
    %7629 = vmatpush2.msra.mxu0 0.0
    %7630 = vmatprep.subr.mxu0 0.0
    %7631 = vmatpush2.msra.mxu0 0.0
    %7632 = vmatprep.subr.mxu0 0.0
    %7633 = vmatpush2.msra.mxu0 0.0
    %7634 = vmatprep.mubr.f32.mxu0 0.0
    %7635 = vmatmul.mubr.f32.gmra.mxu0 %v7568
    %v7636 = vpop.f32.mrf.mxu0
    %v7637 = vadd.f32 0.0, %v7636
    %v7638 = vpop.f32.mrf.mxu0
    %7639 = vdwg.mxu0
    %s7640 = scalar_lea.vmem %s11, 640
    %v7641 = vld [vmem:[%s7640] sm:$0xff]
    %v7642 = vld [vmem:[%s7640 + $0x8] sm:$0xff]
    %v7643 = vld [vmem:[%s7640 + $0x10] sm:$0xff]
    %v7644 = vld [vmem:[%s7640 + $0x18] sm:$0xff]
    %v7645 = vld [vmem:[%s7640 + $0x20] sm:$0xff]
    %v7646 = vld [vmem:[%s7640 + $0x28] sm:$0xff]
    %v7647 = vld [vmem:[%s7640 + $0x30] sm:$0xff]
    %v7648 = vld [vmem:[%s7640 + $0x38] sm:$0xff]
    %v7650 = vsel %vm5946, %v7637, 0
    %7652 = vmatprep.subr.mxu0 0.0
    %7653 = vmatpush1.msra.mxu0 0.0
    %7654 = vmatprep.subr.mxu0 0.0
    %7655 = vmatpush1.msra.mxu0 0.0
    %7656 = vmatprep.subr.mxu0 0.0
    %7657 = vmatpush1.msra.mxu0 0.0
    %7658 = vmatprep.subr.mxu0 0.0
    %7659 = vmatpush1.msra.mxu0 0.0
    %7660 = vmatprep.subr.mxu0 0.0
    %7661 = vmatpush1.msra.mxu0 0.0
    %7662 = vmatprep.subr.mxu0 0.0
    %7663 = vmatpush1.msra.mxu0 0.0
    %7664 = vmatprep.subr.mxu0 0.0
    %7665 = vmatpush1.msra.mxu0 0.0
    %7666 = vmatprep.subr.mxu0 0.0
    %7667 = vmatpush1.msra.mxu0 0.0
    %7668 = vmatprep.subr.mxu0 0.0
    %7669 = vmatpush1.msra.mxu0 %v7648
    %7670 = vmatprep.subr.mxu0 0.0
    %7671 = vmatpush1.msra.mxu0 %v7647
    %7672 = vmatprep.subr.mxu0 0.0
    %7673 = vmatpush1.msra.mxu0 %v7646
    %7674 = vmatprep.subr.mxu0 0.0
    %7675 = vmatpush1.msra.mxu0 %v7645
    %7676 = vmatprep.subr.mxu0 0.0
    %7677 = vmatpush1.msra.mxu0 %v7644
    %7678 = vmatprep.subr.mxu0 0.0
    %7679 = vmatpush1.msra.mxu0 %v7643
    %7680 = vmatprep.subr.mxu0 0.0
    %7681 = vmatpush1.msra.mxu0 %v7642
    %7682 = vmatprep.subr.mxu0 0.0
    %7683 = vmatpush1.msra.mxu0 %v7641
    %7684 = vmatprep.subr.mxu0 0.0
    %7685 = vmatpush2.msra.mxu0 0.0
    %7686 = vmatprep.subr.mxu0 0.0
    %7687 = vmatpush2.msra.mxu0 0.0
    %7688 = vmatprep.subr.mxu0 0.0
    %7689 = vmatpush2.msra.mxu0 0.0
    %7690 = vmatprep.subr.mxu0 0.0
    %7691 = vmatpush2.msra.mxu0 0.0
    %7692 = vmatprep.subr.mxu0 0.0
    %7693 = vmatpush2.msra.mxu0 0.0
    %7694 = vmatprep.subr.mxu0 0.0
    %7695 = vmatpush2.msra.mxu0 0.0
    %7696 = vmatprep.subr.mxu0 0.0
    %7697 = vmatpush2.msra.mxu0 0.0
    %7698 = vmatprep.subr.mxu0 0.0
    %7699 = vmatpush2.msra.mxu0 0.0
    %7700 = vmatprep.subr.mxu0 0.0
    %7701 = vmatpush2.msra.mxu0 0.0
    %7702 = vmatprep.subr.mxu0 0.0
    %7703 = vmatpush2.msra.mxu0 0.0
    %7704 = vmatprep.subr.mxu0 0.0
    %7705 = vmatpush2.msra.mxu0 0.0
    %7706 = vmatprep.subr.mxu0 0.0
    %7707 = vmatpush2.msra.mxu0 0.0
    %7708 = vmatprep.subr.mxu0 0.0
    %7709 = vmatpush2.msra.mxu0 0.0
    %7710 = vmatprep.subr.mxu0 0.0
    %7711 = vmatpush2.msra.mxu0 0.0
    %7712 = vmatprep.subr.mxu0 0.0
    %7713 = vmatpush2.msra.mxu0 0.0
    %7714 = vmatprep.subr.mxu0 0.0
    %7715 = vmatpush2.msra.mxu0 0.0
    %7716 = vmatprep.mubr.f32.mxu0 0.0
    %7717 = vmatmul.mubr.f32.gmra.mxu0 %v7650
    %v7718 = vpop.f32.mrf.mxu0
    %v7719 = vadd.f32 0.0, %v7718
    %v7720 = vpop.f32.mrf.mxu0
    %7721 = vdwg.mxu0
    %v7722 = vadd.f32 %v7564, %v7719
    %s7723 = scalar_lea.vmem %s10, 22
    %v7724 = vld [vmem:[%s7723] sm:$0x3]
    %v7726 = vsel %vm5989, %v7724, 0
    %7728 = vmatprep.subr.mxu0 0.0
    %7729 = vmatpush1.msra.mxu0 0.0
    %7730 = vmatprep.subr.mxu0 0.0
    %7731 = vmatpush1.msra.mxu0 0.0
    %7732 = vmatprep.subr.mxu0 0.0
    %7733 = vmatpush1.msra.mxu0 0.0
    %7734 = vmatprep.subr.mxu0 0.0
    %7735 = vmatpush1.msra.mxu0 0.0
    %7736 = vmatprep.subr.mxu0 0.0
    %7737 = vmatpush1.msra.mxu0 0.0
    %7738 = vmatprep.subr.mxu0 0.0
    %7739 = vmatpush1.msra.mxu0 0.0
    %7740 = vmatprep.subr.mxu0 0.0
    %7741 = vmatpush1.msra.mxu0 0.0
    %7742 = vmatprep.subr.mxu0 0.0
    %7743 = vmatpush1.msra.mxu0 0.0
    %7744 = vmatprep.subr.mxu0 0.0
    %7745 = vmatpush1.msra.mxu0 0.0
    %7746 = vmatprep.subr.mxu0 0.0
    %7747 = vmatpush1.msra.mxu0 0.0
    %7748 = vmatprep.subr.mxu0 0.0
    %7749 = vmatpush1.msra.mxu0 0.0
    %7750 = vmatprep.subr.mxu0 0.0
    %7751 = vmatpush1.msra.mxu0 0.0
    %7752 = vmatprep.subr.mxu0 0.0
    %7753 = vmatpush1.msra.mxu0 0.0
    %7754 = vmatprep.subr.mxu0 0.0
    %7755 = vmatpush1.msra.mxu0 0.0
    %7756 = vmatprep.subr.mxu0 0.0
    %7757 = vmatpush1.msra.mxu0 0.0
    %7758 = vmatprep.subr.mxu0 0.0
    %7759 = vmatpush1.msra.mxu0 %v5987
    %7760 = vmatprep.subr.mxu0 0.0
    %7761 = vmatpush2.msra.mxu0 0.0
    %7762 = vmatprep.subr.mxu0 0.0
    %7763 = vmatpush2.msra.mxu0 0.0
    %7764 = vmatprep.subr.mxu0 0.0
    %7765 = vmatpush2.msra.mxu0 0.0
    %7766 = vmatprep.subr.mxu0 0.0
    %7767 = vmatpush2.msra.mxu0 0.0
    %7768 = vmatprep.subr.mxu0 0.0
    %7769 = vmatpush2.msra.mxu0 0.0
    %7770 = vmatprep.subr.mxu0 0.0
    %7771 = vmatpush2.msra.mxu0 0.0
    %7772 = vmatprep.subr.mxu0 0.0
    %7773 = vmatpush2.msra.mxu0 0.0
    %7774 = vmatprep.subr.mxu0 0.0
    %7775 = vmatpush2.msra.mxu0 0.0
    %7776 = vmatprep.subr.mxu0 0.0
    %7777 = vmatpush2.msra.mxu0 0.0
    %7778 = vmatprep.subr.mxu0 0.0
    %7779 = vmatpush2.msra.mxu0 0.0
    %7780 = vmatprep.subr.mxu0 0.0
    %7781 = vmatpush2.msra.mxu0 0.0
    %7782 = vmatprep.subr.mxu0 0.0
    %7783 = vmatpush2.msra.mxu0 0.0
    %7784 = vmatprep.subr.mxu0 0.0
    %7785 = vmatpush2.msra.mxu0 0.0
    %7786 = vmatprep.subr.mxu0 0.0
    %7787 = vmatpush2.msra.mxu0 0.0
    %7788 = vmatprep.subr.mxu0 0.0
    %7789 = vmatpush2.msra.mxu0 0.0
    %7790 = vmatprep.subr.mxu0 0.0
    %7791 = vmatpush2.msra.mxu0 0.0
    %7792 = vmatprep.mubr.f32.mxu0 0.0
    %7793 = vmatmul.mubr.f32.gmra.mxu0 %v7726
    %v7794 = vpop.f32.mrf.mxu0
    %v7795 = vadd.f32 0.0, %v7794
    %v7796 = vpop.f32.mrf.mxu0
    %7797 = vdwg.mxu0
    %s7798 = scalar_lea.vmem %s11, 704
    %v7799 = vld [vmem:[%s7798] sm:$0xff]
    %v7800 = vld [vmem:[%s7798 + $0x8] sm:$0xff]
    %v7801 = vld [vmem:[%s7798 + $0x10] sm:$0xff]
    %v7802 = vld [vmem:[%s7798 + $0x18] sm:$0xff]
    %v7803 = vld [vmem:[%s7798 + $0x20] sm:$0xff]
    %v7804 = vld [vmem:[%s7798 + $0x28] sm:$0xff]
    %v7805 = vld [vmem:[%s7798 + $0x30] sm:$0xff]
    %v7806 = vld [vmem:[%s7798 + $0x38] sm:$0xff]
    %v7808 = vsel %vm5946, %v7795, 0
    %7810 = vmatprep.subr.mxu0 0.0
    %7811 = vmatpush1.msra.mxu0 0.0
    %7812 = vmatprep.subr.mxu0 0.0
    %7813 = vmatpush1.msra.mxu0 0.0
    %7814 = vmatprep.subr.mxu0 0.0
    %7815 = vmatpush1.msra.mxu0 0.0
    %7816 = vmatprep.subr.mxu0 0.0
    %7817 = vmatpush1.msra.mxu0 0.0
    %7818 = vmatprep.subr.mxu0 0.0
    %7819 = vmatpush1.msra.mxu0 0.0
    %7820 = vmatprep.subr.mxu0 0.0
    %7821 = vmatpush1.msra.mxu0 0.0
    %7822 = vmatprep.subr.mxu0 0.0
    %7823 = vmatpush1.msra.mxu0 0.0
    %7824 = vmatprep.subr.mxu0 0.0
    %7825 = vmatpush1.msra.mxu0 0.0
    %7826 = vmatprep.subr.mxu0 0.0
    %7827 = vmatpush1.msra.mxu0 %v7806
    %7828 = vmatprep.subr.mxu0 0.0
    %7829 = vmatpush1.msra.mxu0 %v7805
    %7830 = vmatprep.subr.mxu0 0.0
    %7831 = vmatpush1.msra.mxu0 %v7804
    %7832 = vmatprep.subr.mxu0 0.0
    %7833 = vmatpush1.msra.mxu0 %v7803
    %7834 = vmatprep.subr.mxu0 0.0
    %7835 = vmatpush1.msra.mxu0 %v7802
    %7836 = vmatprep.subr.mxu0 0.0
    %7837 = vmatpush1.msra.mxu0 %v7801
    %7838 = vmatprep.subr.mxu0 0.0
    %7839 = vmatpush1.msra.mxu0 %v7800
    %7840 = vmatprep.subr.mxu0 0.0
    %7841 = vmatpush1.msra.mxu0 %v7799
    %7842 = vmatprep.subr.mxu0 0.0
    %7843 = vmatpush2.msra.mxu0 0.0
    %7844 = vmatprep.subr.mxu0 0.0
    %7845 = vmatpush2.msra.mxu0 0.0
    %7846 = vmatprep.subr.mxu0 0.0
    %7847 = vmatpush2.msra.mxu0 0.0
    %7848 = vmatprep.subr.mxu0 0.0
    %7849 = vmatpush2.msra.mxu0 0.0
    %7850 = vmatprep.subr.mxu0 0.0
    %7851 = vmatpush2.msra.mxu0 0.0
    %7852 = vmatprep.subr.mxu0 0.0
    %7853 = vmatpush2.msra.mxu0 0.0
    %7854 = vmatprep.subr.mxu0 0.0
    %7855 = vmatpush2.msra.mxu0 0.0
    %7856 = vmatprep.subr.mxu0 0.0
    %7857 = vmatpush2.msra.mxu0 0.0
    %7858 = vmatprep.subr.mxu0 0.0
    %7859 = vmatpush2.msra.mxu0 0.0
    %7860 = vmatprep.subr.mxu0 0.0
    %7861 = vmatpush2.msra.mxu0 0.0
    %7862 = vmatprep.subr.mxu0 0.0
    %7863 = vmatpush2.msra.mxu0 0.0
    %7864 = vmatprep.subr.mxu0 0.0
    %7865 = vmatpush2.msra.mxu0 0.0
    %7866 = vmatprep.subr.mxu0 0.0
    %7867 = vmatpush2.msra.mxu0 0.0
    %7868 = vmatprep.subr.mxu0 0.0
    %7869 = vmatpush2.msra.mxu0 0.0
    %7870 = vmatprep.subr.mxu0 0.0
    %7871 = vmatpush2.msra.mxu0 0.0
    %7872 = vmatprep.subr.mxu0 0.0
    %7873 = vmatpush2.msra.mxu0 0.0
    %7874 = vmatprep.mubr.f32.mxu0 0.0
    %7875 = vmatmul.mubr.f32.gmra.mxu0 %v7808
    %v7876 = vpop.f32.mrf.mxu0
    %v7877 = vadd.f32 0.0, %v7876
    %v7878 = vpop.f32.mrf.mxu0
    %7879 = vdwg.mxu0
    %v7880 = vadd.f32 %v7722, %v7877
    %s7881 = scalar_lea.vmem %s10, 24
    %v7882 = vld [vmem:[%s7881] sm:$0x3]
    %v7884 = vsel %vm5989, %v7882, 0
    %7886 = vmatprep.subr.mxu0 0.0
    %7887 = vmatpush1.msra.mxu0 0.0
    %7888 = vmatprep.subr.mxu0 0.0
    %7889 = vmatpush1.msra.mxu0 0.0
    %7890 = vmatprep.subr.mxu0 0.0
    %7891 = vmatpush1.msra.mxu0 0.0
    %7892 = vmatprep.subr.mxu0 0.0
    %7893 = vmatpush1.msra.mxu0 0.0
    %7894 = vmatprep.subr.mxu0 0.0
    %7895 = vmatpush1.msra.mxu0 0.0
    %7896 = vmatprep.subr.mxu0 0.0
    %7897 = vmatpush1.msra.mxu0 0.0
    %7898 = vmatprep.subr.mxu0 0.0
    %7899 = vmatpush1.msra.mxu0 0.0
    %7900 = vmatprep.subr.mxu0 0.0
    %7901 = vmatpush1.msra.mxu0 0.0
    %7902 = vmatprep.subr.mxu0 0.0
    %7903 = vmatpush1.msra.mxu0 0.0
    %7904 = vmatprep.subr.mxu0 0.0
    %7905 = vmatpush1.msra.mxu0 0.0
    %7906 = vmatprep.subr.mxu0 0.0
    %7907 = vmatpush1.msra.mxu0 0.0
    %7908 = vmatprep.subr.mxu0 0.0
    %7909 = vmatpush1.msra.mxu0 0.0
    %7910 = vmatprep.subr.mxu0 0.0
    %7911 = vmatpush1.msra.mxu0 0.0
    %7912 = vmatprep.subr.mxu0 0.0
    %7913 = vmatpush1.msra.mxu0 0.0
    %7914 = vmatprep.subr.mxu0 0.0
    %7915 = vmatpush1.msra.mxu0 0.0
    %7916 = vmatprep.subr.mxu0 0.0
    %7917 = vmatpush1.msra.mxu0 %v5987
    %7918 = vmatprep.subr.mxu0 0.0
    %7919 = vmatpush2.msra.mxu0 0.0
    %7920 = vmatprep.subr.mxu0 0.0
    %7921 = vmatpush2.msra.mxu0 0.0
    %7922 = vmatprep.subr.mxu0 0.0
    %7923 = vmatpush2.msra.mxu0 0.0
    %7924 = vmatprep.subr.mxu0 0.0
    %7925 = vmatpush2.msra.mxu0 0.0
    %7926 = vmatprep.subr.mxu0 0.0
    %7927 = vmatpush2.msra.mxu0 0.0
    %7928 = vmatprep.subr.mxu0 0.0
    %7929 = vmatpush2.msra.mxu0 0.0
    %7930 = vmatprep.subr.mxu0 0.0
    %7931 = vmatpush2.msra.mxu0 0.0
    %7932 = vmatprep.subr.mxu0 0.0
    %7933 = vmatpush2.msra.mxu0 0.0
    %7934 = vmatprep.subr.mxu0 0.0
    %7935 = vmatpush2.msra.mxu0 0.0
    %7936 = vmatprep.subr.mxu0 0.0
    %7937 = vmatpush2.msra.mxu0 0.0
    %7938 = vmatprep.subr.mxu0 0.0
    %7939 = vmatpush2.msra.mxu0 0.0
    %7940 = vmatprep.subr.mxu0 0.0
    %7941 = vmatpush2.msra.mxu0 0.0
    %7942 = vmatprep.subr.mxu0 0.0
    %7943 = vmatpush2.msra.mxu0 0.0
    %7944 = vmatprep.subr.mxu0 0.0
    %7945 = vmatpush2.msra.mxu0 0.0
    %7946 = vmatprep.subr.mxu0 0.0
    %7947 = vmatpush2.msra.mxu0 0.0
    %7948 = vmatprep.subr.mxu0 0.0
    %7949 = vmatpush2.msra.mxu0 0.0
    %7950 = vmatprep.mubr.f32.mxu0 0.0
    %7951 = vmatmul.mubr.f32.gmra.mxu0 %v7884
    %v7952 = vpop.f32.mrf.mxu0
    %v7953 = vadd.f32 0.0, %v7952
    %v7954 = vpop.f32.mrf.mxu0
    %7955 = vdwg.mxu0
    %s7956 = scalar_lea.vmem %s11, 768
    %v7957 = vld [vmem:[%s7956] sm:$0xff]
    %v7958 = vld [vmem:[%s7956 + $0x8] sm:$0xff]
    %v7959 = vld [vmem:[%s7956 + $0x10] sm:$0xff]
    %v7960 = vld [vmem:[%s7956 + $0x18] sm:$0xff]
    %v7961 = vld [vmem:[%s7956 + $0x20] sm:$0xff]
    %v7962 = vld [vmem:[%s7956 + $0x28] sm:$0xff]
    %v7963 = vld [vmem:[%s7956 + $0x30] sm:$0xff]
    %v7964 = vld [vmem:[%s7956 + $0x38] sm:$0xff]
    %v7966 = vsel %vm5946, %v7953, 0
    %7968 = vmatprep.subr.mxu0 0.0
    %7969 = vmatpush1.msra.mxu0 0.0
    %7970 = vmatprep.subr.mxu0 0.0
    %7971 = vmatpush1.msra.mxu0 0.0
    %7972 = vmatprep.subr.mxu0 0.0
    %7973 = vmatpush1.msra.mxu0 0.0
    %7974 = vmatprep.subr.mxu0 0.0
    %7975 = vmatpush1.msra.mxu0 0.0
    %7976 = vmatprep.subr.mxu0 0.0
    %7977 = vmatpush1.msra.mxu0 0.0
    %7978 = vmatprep.subr.mxu0 0.0
    %7979 = vmatpush1.msra.mxu0 0.0
    %7980 = vmatprep.subr.mxu0 0.0
    %7981 = vmatpush1.msra.mxu0 0.0
    %7982 = vmatprep.subr.mxu0 0.0
    %7983 = vmatpush1.msra.mxu0 0.0
    %7984 = vmatprep.subr.mxu0 0.0
    %7985 = vmatpush1.msra.mxu0 %v7964
    %7986 = vmatprep.subr.mxu0 0.0
    %7987 = vmatpush1.msra.mxu0 %v7963
    %7988 = vmatprep.subr.mxu0 0.0
    %7989 = vmatpush1.msra.mxu0 %v7962
    %7990 = vmatprep.subr.mxu0 0.0
    %7991 = vmatpush1.msra.mxu0 %v7961
    %7992 = vmatprep.subr.mxu0 0.0
    %7993 = vmatpush1.msra.mxu0 %v7960
    %7994 = vmatprep.subr.mxu0 0.0
    %7995 = vmatpush1.msra.mxu0 %v7959
    %7996 = vmatprep.subr.mxu0 0.0
    %7997 = vmatpush1.msra.mxu0 %v7958
    %7998 = vmatprep.subr.mxu0 0.0
    %7999 = vmatpush1.msra.mxu0 %v7957
    %8000 = vmatprep.subr.mxu0 0.0
    %8001 = vmatpush2.msra.mxu0 0.0
    %8002 = vmatprep.subr.mxu0 0.0
    %8003 = vmatpush2.msra.mxu0 0.0
    %8004 = vmatprep.subr.mxu0 0.0
    %8005 = vmatpush2.msra.mxu0 0.0
    %8006 = vmatprep.subr.mxu0 0.0
    %8007 = vmatpush2.msra.mxu0 0.0
    %8008 = vmatprep.subr.mxu0 0.0
    %8009 = vmatpush2.msra.mxu0 0.0
    %8010 = vmatprep.subr.mxu0 0.0
    %8011 = vmatpush2.msra.mxu0 0.0
    %8012 = vmatprep.subr.mxu0 0.0
    %8013 = vmatpush2.msra.mxu0 0.0
    %8014 = vmatprep.subr.mxu0 0.0
    %8015 = vmatpush2.msra.mxu0 0.0
    %8016 = vmatprep.subr.mxu0 0.0
    %8017 = vmatpush2.msra.mxu0 0.0
    %8018 = vmatprep.subr.mxu0 0.0
    %8019 = vmatpush2.msra.mxu0 0.0
    %8020 = vmatprep.subr.mxu0 0.0
    %8021 = vmatpush2.msra.mxu0 0.0
    %8022 = vmatprep.subr.mxu0 0.0
    %8023 = vmatpush2.msra.mxu0 0.0
    %8024 = vmatprep.subr.mxu0 0.0
    %8025 = vmatpush2.msra.mxu0 0.0
    %8026 = vmatprep.subr.mxu0 0.0
    %8027 = vmatpush2.msra.mxu0 0.0
    %8028 = vmatprep.subr.mxu0 0.0
    %8029 = vmatpush2.msra.mxu0 0.0
    %8030 = vmatprep.subr.mxu0 0.0
    %8031 = vmatpush2.msra.mxu0 0.0
    %8032 = vmatprep.mubr.f32.mxu0 0.0
    %8033 = vmatmul.mubr.f32.gmra.mxu0 %v7966
    %v8034 = vpop.f32.mrf.mxu0
    %v8035 = vadd.f32 0.0, %v8034
    %v8036 = vpop.f32.mrf.mxu0
    %8037 = vdwg.mxu0
    %v8038 = vadd.f32 %v7880, %v8035
    %s8039 = scalar_lea.vmem %s10, 26
    %v8040 = vld [vmem:[%s8039] sm:$0x3]
    %v8042 = vsel %vm5989, %v8040, 0
    %8044 = vmatprep.subr.mxu0 0.0
    %8045 = vmatpush1.msra.mxu0 0.0
    %8046 = vmatprep.subr.mxu0 0.0
    %8047 = vmatpush1.msra.mxu0 0.0
    %8048 = vmatprep.subr.mxu0 0.0
    %8049 = vmatpush1.msra.mxu0 0.0
    %8050 = vmatprep.subr.mxu0 0.0
    %8051 = vmatpush1.msra.mxu0 0.0
    %8052 = vmatprep.subr.mxu0 0.0
    %8053 = vmatpush1.msra.mxu0 0.0
    %8054 = vmatprep.subr.mxu0 0.0
    %8055 = vmatpush1.msra.mxu0 0.0
    %8056 = vmatprep.subr.mxu0 0.0
    %8057 = vmatpush1.msra.mxu0 0.0
    %8058 = vmatprep.subr.mxu0 0.0
    %8059 = vmatpush1.msra.mxu0 0.0
    %8060 = vmatprep.subr.mxu0 0.0
    %8061 = vmatpush1.msra.mxu0 0.0
    %8062 = vmatprep.subr.mxu0 0.0
    %8063 = vmatpush1.msra.mxu0 0.0
    %8064 = vmatprep.subr.mxu0 0.0
    %8065 = vmatpush1.msra.mxu0 0.0
    %8066 = vmatprep.subr.mxu0 0.0
    %8067 = vmatpush1.msra.mxu0 0.0
    %8068 = vmatprep.subr.mxu0 0.0
    %8069 = vmatpush1.msra.mxu0 0.0
    %8070 = vmatprep.subr.mxu0 0.0
    %8071 = vmatpush1.msra.mxu0 0.0
    %8072 = vmatprep.subr.mxu0 0.0
    %8073 = vmatpush1.msra.mxu0 0.0
    %8074 = vmatprep.subr.mxu0 0.0
    %8075 = vmatpush1.msra.mxu0 %v5987
    %8076 = vmatprep.subr.mxu0 0.0
    %8077 = vmatpush2.msra.mxu0 0.0
    %8078 = vmatprep.subr.mxu0 0.0
    %8079 = vmatpush2.msra.mxu0 0.0
    %8080 = vmatprep.subr.mxu0 0.0
    %8081 = vmatpush2.msra.mxu0 0.0
    %8082 = vmatprep.subr.mxu0 0.0
    %8083 = vmatpush2.msra.mxu0 0.0
    %8084 = vmatprep.subr.mxu0 0.0
    %8085 = vmatpush2.msra.mxu0 0.0
    %8086 = vmatprep.subr.mxu0 0.0
    %8087 = vmatpush2.msra.mxu0 0.0
    %8088 = vmatprep.subr.mxu0 0.0
    %8089 = vmatpush2.msra.mxu0 0.0
    %8090 = vmatprep.subr.mxu0 0.0
    %8091 = vmatpush2.msra.mxu0 0.0
    %8092 = vmatprep.subr.mxu0 0.0
    %8093 = vmatpush2.msra.mxu0 0.0
    %8094 = vmatprep.subr.mxu0 0.0
    %8095 = vmatpush2.msra.mxu0 0.0
    %8096 = vmatprep.subr.mxu0 0.0
    %8097 = vmatpush2.msra.mxu0 0.0
    %8098 = vmatprep.subr.mxu0 0.0
    %8099 = vmatpush2.msra.mxu0 0.0
    %8100 = vmatprep.subr.mxu0 0.0
    %8101 = vmatpush2.msra.mxu0 0.0
    %8102 = vmatprep.subr.mxu0 0.0
    %8103 = vmatpush2.msra.mxu0 0.0
    %8104 = vmatprep.subr.mxu0 0.0
    %8105 = vmatpush2.msra.mxu0 0.0
    %8106 = vmatprep.subr.mxu0 0.0
    %8107 = vmatpush2.msra.mxu0 0.0
    %8108 = vmatprep.mubr.f32.mxu0 0.0
    %8109 = vmatmul.mubr.f32.gmra.mxu0 %v8042
    %v8110 = vpop.f32.mrf.mxu0
    %v8111 = vadd.f32 0.0, %v8110
    %v8112 = vpop.f32.mrf.mxu0
    %8113 = vdwg.mxu0
    %s8114 = scalar_lea.vmem %s11, 832
    %v8115 = vld [vmem:[%s8114] sm:$0xff]
    %v8116 = vld [vmem:[%s8114 + $0x8] sm:$0xff]
    %v8117 = vld [vmem:[%s8114 + $0x10] sm:$0xff]
    %v8118 = vld [vmem:[%s8114 + $0x18] sm:$0xff]
    %v8119 = vld [vmem:[%s8114 + $0x20] sm:$0xff]
    %v8120 = vld [vmem:[%s8114 + $0x28] sm:$0xff]
    %v8121 = vld [vmem:[%s8114 + $0x30] sm:$0xff]
    %v8122 = vld [vmem:[%s8114 + $0x38] sm:$0xff]
    %v8124 = vsel %vm5946, %v8111, 0
    %8126 = vmatprep.subr.mxu0 0.0
    %8127 = vmatpush1.msra.mxu0 0.0
    %8128 = vmatprep.subr.mxu0 0.0
    %8129 = vmatpush1.msra.mxu0 0.0
    %8130 = vmatprep.subr.mxu0 0.0
    %8131 = vmatpush1.msra.mxu0 0.0
    %8132 = vmatprep.subr.mxu0 0.0
    %8133 = vmatpush1.msra.mxu0 0.0
    %8134 = vmatprep.subr.mxu0 0.0
    %8135 = vmatpush1.msra.mxu0 0.0
    %8136 = vmatprep.subr.mxu0 0.0
    %8137 = vmatpush1.msra.mxu0 0.0
    %8138 = vmatprep.subr.mxu0 0.0
    %8139 = vmatpush1.msra.mxu0 0.0
    %8140 = vmatprep.subr.mxu0 0.0
    %8141 = vmatpush1.msra.mxu0 0.0
    %8142 = vmatprep.subr.mxu0 0.0
    %8143 = vmatpush1.msra.mxu0 %v8122
    %8144 = vmatprep.subr.mxu0 0.0
    %8145 = vmatpush1.msra.mxu0 %v8121
    %8146 = vmatprep.subr.mxu0 0.0
    %8147 = vmatpush1.msra.mxu0 %v8120
    %8148 = vmatprep.subr.mxu0 0.0
    %8149 = vmatpush1.msra.mxu0 %v8119
    %8150 = vmatprep.subr.mxu0 0.0
    %8151 = vmatpush1.msra.mxu0 %v8118
    %8152 = vmatprep.subr.mxu0 0.0
    %8153 = vmatpush1.msra.mxu0 %v8117
    %8154 = vmatprep.subr.mxu0 0.0
    %8155 = vmatpush1.msra.mxu0 %v8116
    %8156 = vmatprep.subr.mxu0 0.0
    %8157 = vmatpush1.msra.mxu0 %v8115
    %8158 = vmatprep.subr.mxu0 0.0
    %8159 = vmatpush2.msra.mxu0 0.0
    %8160 = vmatprep.subr.mxu0 0.0
    %8161 = vmatpush2.msra.mxu0 0.0
    %8162 = vmatprep.subr.mxu0 0.0
    %8163 = vmatpush2.msra.mxu0 0.0
    %8164 = vmatprep.subr.mxu0 0.0
    %8165 = vmatpush2.msra.mxu0 0.0
    %8166 = vmatprep.subr.mxu0 0.0
    %8167 = vmatpush2.msra.mxu0 0.0
    %8168 = vmatprep.subr.mxu0 0.0
    %8169 = vmatpush2.msra.mxu0 0.0
    %8170 = vmatprep.subr.mxu0 0.0
    %8171 = vmatpush2.msra.mxu0 0.0
    %8172 = vmatprep.subr.mxu0 0.0
    %8173 = vmatpush2.msra.mxu0 0.0
    %8174 = vmatprep.subr.mxu0 0.0
    %8175 = vmatpush2.msra.mxu0 0.0
    %8176 = vmatprep.subr.mxu0 0.0
    %8177 = vmatpush2.msra.mxu0 0.0
    %8178 = vmatprep.subr.mxu0 0.0
    %8179 = vmatpush2.msra.mxu0 0.0
    %8180 = vmatprep.subr.mxu0 0.0
    %8181 = vmatpush2.msra.mxu0 0.0
    %8182 = vmatprep.subr.mxu0 0.0
    %8183 = vmatpush2.msra.mxu0 0.0
    %8184 = vmatprep.subr.mxu0 0.0
    %8185 = vmatpush2.msra.mxu0 0.0
    %8186 = vmatprep.subr.mxu0 0.0
    %8187 = vmatpush2.msra.mxu0 0.0
    %8188 = vmatprep.subr.mxu0 0.0
    %8189 = vmatpush2.msra.mxu0 0.0
    %8190 = vmatprep.mubr.f32.mxu0 0.0
    %8191 = vmatmul.mubr.f32.gmra.mxu0 %v8124
    %v8192 = vpop.f32.mrf.mxu0
    %v8193 = vadd.f32 0.0, %v8192
    %v8194 = vpop.f32.mrf.mxu0
    %8195 = vdwg.mxu0
    %v8196 = vadd.f32 %v8038, %v8193
    %s8197 = scalar_lea.vmem %s10, 28
    %v8198 = vld [vmem:[%s8197] sm:$0x3]
    %v8200 = vsel %vm5989, %v8198, 0
    %8202 = vmatprep.subr.mxu0 0.0
    %8203 = vmatpush1.msra.mxu0 0.0
    %8204 = vmatprep.subr.mxu0 0.0
    %8205 = vmatpush1.msra.mxu0 0.0
    %8206 = vmatprep.subr.mxu0 0.0
    %8207 = vmatpush1.msra.mxu0 0.0
    %8208 = vmatprep.subr.mxu0 0.0
    %8209 = vmatpush1.msra.mxu0 0.0
    %8210 = vmatprep.subr.mxu0 0.0
    %8211 = vmatpush1.msra.mxu0 0.0
    %8212 = vmatprep.subr.mxu0 0.0
    %8213 = vmatpush1.msra.mxu0 0.0
    %8214 = vmatprep.subr.mxu0 0.0
    %8215 = vmatpush1.msra.mxu0 0.0
    %8216 = vmatprep.subr.mxu0 0.0
    %8217 = vmatpush1.msra.mxu0 0.0
    %8218 = vmatprep.subr.mxu0 0.0
    %8219 = vmatpush1.msra.mxu0 0.0
    %8220 = vmatprep.subr.mxu0 0.0
    %8221 = vmatpush1.msra.mxu0 0.0
    %8222 = vmatprep.subr.mxu0 0.0
    %8223 = vmatpush1.msra.mxu0 0.0
    %8224 = vmatprep.subr.mxu0 0.0
    %8225 = vmatpush1.msra.mxu0 0.0
    %8226 = vmatprep.subr.mxu0 0.0
    %8227 = vmatpush1.msra.mxu0 0.0
    %8228 = vmatprep.subr.mxu0 0.0
    %8229 = vmatpush1.msra.mxu0 0.0
    %8230 = vmatprep.subr.mxu0 0.0
    %8231 = vmatpush1.msra.mxu0 0.0
    %8232 = vmatprep.subr.mxu0 0.0
    %8233 = vmatpush1.msra.mxu0 %v5987
    %8234 = vmatprep.subr.mxu0 0.0
    %8235 = vmatpush2.msra.mxu0 0.0
    %8236 = vmatprep.subr.mxu0 0.0
    %8237 = vmatpush2.msra.mxu0 0.0
    %8238 = vmatprep.subr.mxu0 0.0
    %8239 = vmatpush2.msra.mxu0 0.0
    %8240 = vmatprep.subr.mxu0 0.0
    %8241 = vmatpush2.msra.mxu0 0.0
    %8242 = vmatprep.subr.mxu0 0.0
    %8243 = vmatpush2.msra.mxu0 0.0
    %8244 = vmatprep.subr.mxu0 0.0
    %8245 = vmatpush2.msra.mxu0 0.0
    %8246 = vmatprep.subr.mxu0 0.0
    %8247 = vmatpush2.msra.mxu0 0.0
    %8248 = vmatprep.subr.mxu0 0.0
    %8249 = vmatpush2.msra.mxu0 0.0
    %8250 = vmatprep.subr.mxu0 0.0
    %8251 = vmatpush2.msra.mxu0 0.0
    %8252 = vmatprep.subr.mxu0 0.0
    %8253 = vmatpush2.msra.mxu0 0.0
    %8254 = vmatprep.subr.mxu0 0.0
    %8255 = vmatpush2.msra.mxu0 0.0
    %8256 = vmatprep.subr.mxu0 0.0
    %8257 = vmatpush2.msra.mxu0 0.0
    %8258 = vmatprep.subr.mxu0 0.0
    %8259 = vmatpush2.msra.mxu0 0.0
    %8260 = vmatprep.subr.mxu0 0.0
    %8261 = vmatpush2.msra.mxu0 0.0
    %8262 = vmatprep.subr.mxu0 0.0
    %8263 = vmatpush2.msra.mxu0 0.0
    %8264 = vmatprep.subr.mxu0 0.0
    %8265 = vmatpush2.msra.mxu0 0.0
    %8266 = vmatprep.mubr.f32.mxu0 0.0
    %8267 = vmatmul.mubr.f32.gmra.mxu0 %v8200
    %v8268 = vpop.f32.mrf.mxu0
    %v8269 = vadd.f32 0.0, %v8268
    %v8270 = vpop.f32.mrf.mxu0
    %8271 = vdwg.mxu0
    %s8272 = scalar_lea.vmem %s11, 896
    %v8273 = vld [vmem:[%s8272] sm:$0xff]
    %v8274 = vld [vmem:[%s8272 + $0x8] sm:$0xff]
    %v8275 = vld [vmem:[%s8272 + $0x10] sm:$0xff]
    %v8276 = vld [vmem:[%s8272 + $0x18] sm:$0xff]
    %v8277 = vld [vmem:[%s8272 + $0x20] sm:$0xff]
    %v8278 = vld [vmem:[%s8272 + $0x28] sm:$0xff]
    %v8279 = vld [vmem:[%s8272 + $0x30] sm:$0xff]
    %v8280 = vld [vmem:[%s8272 + $0x38] sm:$0xff]
    %v8282 = vsel %vm5946, %v8269, 0
    %8284 = vmatprep.subr.mxu0 0.0
    %8285 = vmatpush1.msra.mxu0 0.0
    %8286 = vmatprep.subr.mxu0 0.0
    %8287 = vmatpush1.msra.mxu0 0.0
    %8288 = vmatprep.subr.mxu0 0.0
    %8289 = vmatpush1.msra.mxu0 0.0
    %8290 = vmatprep.subr.mxu0 0.0
    %8291 = vmatpush1.msra.mxu0 0.0
    %8292 = vmatprep.subr.mxu0 0.0
    %8293 = vmatpush1.msra.mxu0 0.0
    %8294 = vmatprep.subr.mxu0 0.0
    %8295 = vmatpush1.msra.mxu0 0.0
    %8296 = vmatprep.subr.mxu0 0.0
    %8297 = vmatpush1.msra.mxu0 0.0
    %8298 = vmatprep.subr.mxu0 0.0
    %8299 = vmatpush1.msra.mxu0 0.0
    %8300 = vmatprep.subr.mxu0 0.0
    %8301 = vmatpush1.msra.mxu0 %v8280
    %8302 = vmatprep.subr.mxu0 0.0
    %8303 = vmatpush1.msra.mxu0 %v8279
    %8304 = vmatprep.subr.mxu0 0.0
    %8305 = vmatpush1.msra.mxu0 %v8278
    %8306 = vmatprep.subr.mxu0 0.0
    %8307 = vmatpush1.msra.mxu0 %v8277
    %8308 = vmatprep.subr.mxu0 0.0
    %8309 = vmatpush1.msra.mxu0 %v8276
    %8310 = vmatprep.subr.mxu0 0.0
    %8311 = vmatpush1.msra.mxu0 %v8275
    %8312 = vmatprep.subr.mxu0 0.0
    %8313 = vmatpush1.msra.mxu0 %v8274
    %8314 = vmatprep.subr.mxu0 0.0
    %8315 = vmatpush1.msra.mxu0 %v8273
    %8316 = vmatprep.subr.mxu0 0.0
    %8317 = vmatpush2.msra.mxu0 0.0
    %8318 = vmatprep.subr.mxu0 0.0
    %8319 = vmatpush2.msra.mxu0 0.0
    %8320 = vmatprep.subr.mxu0 0.0
    %8321 = vmatpush2.msra.mxu0 0.0
    %8322 = vmatprep.subr.mxu0 0.0
    %8323 = vmatpush2.msra.mxu0 0.0
    %8324 = vmatprep.subr.mxu0 0.0
    %8325 = vmatpush2.msra.mxu0 0.0
    %8326 = vmatprep.subr.mxu0 0.0
    %8327 = vmatpush2.msra.mxu0 0.0
    %8328 = vmatprep.subr.mxu0 0.0
    %8329 = vmatpush2.msra.mxu0 0.0
    %8330 = vmatprep.subr.mxu0 0.0
    %8331 = vmatpush2.msra.mxu0 0.0
    %8332 = vmatprep.subr.mxu0 0.0
    %8333 = vmatpush2.msra.mxu0 0.0
    %8334 = vmatprep.subr.mxu0 0.0
    %8335 = vmatpush2.msra.mxu0 0.0
    %8336 = vmatprep.subr.mxu0 0.0
    %8337 = vmatpush2.msra.mxu0 0.0
    %8338 = vmatprep.subr.mxu0 0.0
    %8339 = vmatpush2.msra.mxu0 0.0
    %8340 = vmatprep.subr.mxu0 0.0
    %8341 = vmatpush2.msra.mxu0 0.0
    %8342 = vmatprep.subr.mxu0 0.0
    %8343 = vmatpush2.msra.mxu0 0.0
    %8344 = vmatprep.subr.mxu0 0.0
    %8345 = vmatpush2.msra.mxu0 0.0
    %8346 = vmatprep.subr.mxu0 0.0
    %8347 = vmatpush2.msra.mxu0 0.0
    %8348 = vmatprep.mubr.f32.mxu0 0.0
    %8349 = vmatmul.mubr.f32.gmra.mxu0 %v8282
    %v8350 = vpop.f32.mrf.mxu0
    %v8351 = vadd.f32 0.0, %v8350
    %v8352 = vpop.f32.mrf.mxu0
    %8353 = vdwg.mxu0
    %v8354 = vadd.f32 %v8196, %v8351
    %s8355 = scalar_lea.vmem %s10, 30
    %v8356 = vld [vmem:[%s8355] sm:$0x3]
    %v8358 = vsel %vm5989, %v8356, 0
    %8360 = vmatprep.subr.mxu0 0.0
    %8361 = vmatpush1.msra.mxu0 0.0
    %8362 = vmatprep.subr.mxu0 0.0
    %8363 = vmatpush1.msra.mxu0 0.0
    %8364 = vmatprep.subr.mxu0 0.0
    %8365 = vmatpush1.msra.mxu0 0.0
    %8366 = vmatprep.subr.mxu0 0.0
    %8367 = vmatpush1.msra.mxu0 0.0
    %8368 = vmatprep.subr.mxu0 0.0
    %8369 = vmatpush1.msra.mxu0 0.0
    %8370 = vmatprep.subr.mxu0 0.0
    %8371 = vmatpush1.msra.mxu0 0.0
    %8372 = vmatprep.subr.mxu0 0.0
    %8373 = vmatpush1.msra.mxu0 0.0
    %8374 = vmatprep.subr.mxu0 0.0
    %8375 = vmatpush1.msra.mxu0 0.0
    %8376 = vmatprep.subr.mxu0 0.0
    %8377 = vmatpush1.msra.mxu0 0.0
    %8378 = vmatprep.subr.mxu0 0.0
    %8379 = vmatpush1.msra.mxu0 0.0
    %8380 = vmatprep.subr.mxu0 0.0
    %8381 = vmatpush1.msra.mxu0 0.0
    %8382 = vmatprep.subr.mxu0 0.0
    %8383 = vmatpush1.msra.mxu0 0.0
    %8384 = vmatprep.subr.mxu0 0.0
    %8385 = vmatpush1.msra.mxu0 0.0
    %8386 = vmatprep.subr.mxu0 0.0
    %8387 = vmatpush1.msra.mxu0 0.0
    %8388 = vmatprep.subr.mxu0 0.0
    %8389 = vmatpush1.msra.mxu0 0.0
    %8390 = vmatprep.subr.mxu0 0.0
    %8391 = vmatpush1.msra.mxu0 %v5987
    %8392 = vmatprep.subr.mxu0 0.0
    %8393 = vmatpush2.msra.mxu0 0.0
    %8394 = vmatprep.subr.mxu0 0.0
    %8395 = vmatpush2.msra.mxu0 0.0
    %8396 = vmatprep.subr.mxu0 0.0
    %8397 = vmatpush2.msra.mxu0 0.0
    %8398 = vmatprep.subr.mxu0 0.0
    %8399 = vmatpush2.msra.mxu0 0.0
    %8400 = vmatprep.subr.mxu0 0.0
    %8401 = vmatpush2.msra.mxu0 0.0
    %8402 = vmatprep.subr.mxu0 0.0
    %8403 = vmatpush2.msra.mxu0 0.0
    %8404 = vmatprep.subr.mxu0 0.0
    %8405 = vmatpush2.msra.mxu0 0.0
    %8406 = vmatprep.subr.mxu0 0.0
    %8407 = vmatpush2.msra.mxu0 0.0
    %8408 = vmatprep.subr.mxu0 0.0
    %8409 = vmatpush2.msra.mxu0 0.0
    %8410 = vmatprep.subr.mxu0 0.0
    %8411 = vmatpush2.msra.mxu0 0.0
    %8412 = vmatprep.subr.mxu0 0.0
    %8413 = vmatpush2.msra.mxu0 0.0
    %8414 = vmatprep.subr.mxu0 0.0
    %8415 = vmatpush2.msra.mxu0 0.0
    %8416 = vmatprep.subr.mxu0 0.0
    %8417 = vmatpush2.msra.mxu0 0.0
    %8418 = vmatprep.subr.mxu0 0.0
    %8419 = vmatpush2.msra.mxu0 0.0
    %8420 = vmatprep.subr.mxu0 0.0
    %8421 = vmatpush2.msra.mxu0 0.0
    %8422 = vmatprep.subr.mxu0 0.0
    %8423 = vmatpush2.msra.mxu0 0.0
    %8424 = vmatprep.mubr.f32.mxu0 0.0
    %8425 = vmatmul.mubr.f32.gmra.mxu0 %v8358
    %v8426 = vpop.f32.mrf.mxu0
    %v8427 = vadd.f32 0.0, %v8426
    %v8428 = vpop.f32.mrf.mxu0
    %8429 = vdwg.mxu0
    %s8430 = scalar_lea.vmem %s11, 960
    %v8431 = vld [vmem:[%s8430] sm:$0xff]
    %v8432 = vld [vmem:[%s8430 + $0x8] sm:$0xff]
    %v8433 = vld [vmem:[%s8430 + $0x10] sm:$0xff]
    %v8434 = vld [vmem:[%s8430 + $0x18] sm:$0xff]
    %v8435 = vld [vmem:[%s8430 + $0x20] sm:$0xff]
    %v8436 = vld [vmem:[%s8430 + $0x28] sm:$0xff]
    %v8437 = vld [vmem:[%s8430 + $0x30] sm:$0xff]
    %v8438 = vld [vmem:[%s8430 + $0x38] sm:$0xff]
    %v8440 = vsel %vm5946, %v8427, 0
    %8442 = vmatprep.subr.mxu0 0.0
    %8443 = vmatpush1.msra.mxu0 0.0
    %8444 = vmatprep.subr.mxu0 0.0
    %8445 = vmatpush1.msra.mxu0 0.0
    %8446 = vmatprep.subr.mxu0 0.0
    %8447 = vmatpush1.msra.mxu0 0.0
    %8448 = vmatprep.subr.mxu0 0.0
    %8449 = vmatpush1.msra.mxu0 0.0
    %8450 = vmatprep.subr.mxu0 0.0
    %8451 = vmatpush1.msra.mxu0 0.0
    %8452 = vmatprep.subr.mxu0 0.0
    %8453 = vmatpush1.msra.mxu0 0.0
    %8454 = vmatprep.subr.mxu0 0.0
    %8455 = vmatpush1.msra.mxu0 0.0
    %8456 = vmatprep.subr.mxu0 0.0
    %8457 = vmatpush1.msra.mxu0 0.0
    %8458 = vmatprep.subr.mxu0 0.0
    %8459 = vmatpush1.msra.mxu0 %v8438
    %8460 = vmatprep.subr.mxu0 0.0
    %8461 = vmatpush1.msra.mxu0 %v8437
    %8462 = vmatprep.subr.mxu0 0.0
    %8463 = vmatpush1.msra.mxu0 %v8436
    %8464 = vmatprep.subr.mxu0 0.0
    %8465 = vmatpush1.msra.mxu0 %v8435
    %8466 = vmatprep.subr.mxu0 0.0
    %8467 = vmatpush1.msra.mxu0 %v8434
    %8468 = vmatprep.subr.mxu0 0.0
    %8469 = vmatpush1.msra.mxu0 %v8433
    %8470 = vmatprep.subr.mxu0 0.0
    %8471 = vmatpush1.msra.mxu0 %v8432
    %8472 = vmatprep.subr.mxu0 0.0
    %8473 = vmatpush1.msra.mxu0 %v8431
    %8474 = vmatprep.subr.mxu0 0.0
    %8475 = vmatpush2.msra.mxu0 0.0
    %8476 = vmatprep.subr.mxu0 0.0
    %8477 = vmatpush2.msra.mxu0 0.0
    %8478 = vmatprep.subr.mxu0 0.0
    %8479 = vmatpush2.msra.mxu0 0.0
    %8480 = vmatprep.subr.mxu0 0.0
    %8481 = vmatpush2.msra.mxu0 0.0
    %8482 = vmatprep.subr.mxu0 0.0
    %8483 = vmatpush2.msra.mxu0 0.0
    %8484 = vmatprep.subr.mxu0 0.0
    %8485 = vmatpush2.msra.mxu0 0.0
    %8486 = vmatprep.subr.mxu0 0.0
    %8487 = vmatpush2.msra.mxu0 0.0
    %8488 = vmatprep.subr.mxu0 0.0
    %8489 = vmatpush2.msra.mxu0 0.0
    %8490 = vmatprep.subr.mxu0 0.0
    %8491 = vmatpush2.msra.mxu0 0.0
    %8492 = vmatprep.subr.mxu0 0.0
    %8493 = vmatpush2.msra.mxu0 0.0
    %8494 = vmatprep.subr.mxu0 0.0
    %8495 = vmatpush2.msra.mxu0 0.0
    %8496 = vmatprep.subr.mxu0 0.0
    %8497 = vmatpush2.msra.mxu0 0.0
    %8498 = vmatprep.subr.mxu0 0.0
    %8499 = vmatpush2.msra.mxu0 0.0
    %8500 = vmatprep.subr.mxu0 0.0
    %8501 = vmatpush2.msra.mxu0 0.0
    %8502 = vmatprep.subr.mxu0 0.0
    %8503 = vmatpush2.msra.mxu0 0.0
    %8504 = vmatprep.subr.mxu0 0.0
    %8505 = vmatpush2.msra.mxu0 0.0
    %8506 = vmatprep.mubr.f32.mxu0 0.0
    %8507 = vmatmul.mubr.f32.gmra.mxu0 %v8440
    %v8508 = vpop.f32.mrf.mxu0
    %v8509 = vadd.f32 0.0, %v8508
    %v8510 = vpop.f32.mrf.mxu0
    %8511 = vdwg.mxu0
    %v8512 = vadd.f32 %v8354, %v8509
    %vm8513 = vcmask 1041408
    %v8514 = vsel %vm8513, %v8512, 0.0
    %v8515 = vrot.slane %v8514, 4
    %v8516 = vadd.f32 %v8514, %v8515
    %v8517 = vrot.slane %v8516, 2
    %v8518 = vadd.f32 %v8516, %v8517
    %v8519 = vrot.slane %v8518, 1
    %v8520 = vadd.f32 %v8518, %v8519
    %v8521 = vrcp.pop 2.0
    %v8522 = vmul.f32 %v8520, %v8521
    %v8523 = vsub.f32 %v8512, %v8522
    %v8524 = vmul.f32 %v8523, %v8523
    %v8525 = vsel %vm8513, %v8524, 0.0
    %v8526 = vrot.slane %v8525, 4
    %v8527 = vadd.f32 %v8525, %v8526
    %v8528 = vrot.slane %v8527, 2
    %v8529 = vadd.f32 %v8527, %v8528
    %v8530 = vrot.slane %v8529, 1
    %v8531 = vadd.f32 %v8529, %v8530
    %v8532 = vmul.f32 %v8531, %v8521
    %v8533 = vadd.f32 %v8532, 1e-05
    %v8534 = vrsqrt.pop %v8533
    %v8535 = vmul.f32 %v8523, %v8534
    %v8536 = vld [vmem:[%s12] sm:$0x1]
    %v8538 = vlaneseq
    %v8539 = vshrl.u32 %v8538, 7
    %v8540 = vsub.s32 0, %v8539
    %v8541 = vrot.slane %v8536, %v8540
    %v8543 = vmul.f32 %v8535, %v8541
    %v8544 = vld [vmem:[%s13] sm:$0x1]
    %v8546 = vlaneseq
    %v8547 = vshrl.u32 %v8546, 7
    %v8548 = vsub.s32 0, %v8547
    %v8549 = vrot.slane %v8544, %v8548
    %v8551 = vadd.f32 %v8543, %v8549
    %vm8552 = vcmp.gt.f32.partialorder %v8551, 0.0
    %v8553 = vmul.f32 %v8551, 0.2
    %v8554 = vsel %vm8552, %v8551, %v8553
    %v8555 = vld [vmem:[%s14] sm:$0xff]
    %v8556 = vld [vmem:[%s14 + $0x8] sm:$0xff]
    %v8557 = vld [vmem:[%s14 + $0x10] sm:$0xff]
    %v8558 = vld [vmem:[%s14 + $0x18] sm:$0xff]
    %v8559 = vld [vmem:[%s14 + $0x20] sm:$0xff]
    %v8560 = vld [vmem:[%s14 + $0x28] sm:$0xff]
    %v8561 = vld [vmem:[%s14 + $0x30] sm:$0xff]
    %v8562 = vld [vmem:[%s14 + $0x38] sm:$0xff]
    %v8563 = vld [vmem:[%s14 + $0x40] sm:$0xff]
    %v8564 = vld [vmem:[%s14 + $0x48] sm:$0xff]
    %v8565 = vld [vmem:[%s14 + $0x50] sm:$0xff]
    %v8566 = vld [vmem:[%s14 + $0x58] sm:$0xff]
    %v8567 = vld [vmem:[%s14 + $0x60] sm:$0xff]
    %v8568 = vld [vmem:[%s14 + $0x68] sm:$0xff]
    %v8569 = vld [vmem:[%s14 + $0x70] sm:$0xff]
    %v8570 = vld [vmem:[%s14 + $0x78] sm:$0xff]
    %v8571 = vld [vmem:[%s15] sm:$0x1]
    %v8573 = vlaneseq
    %v8574 = vshrl.u32 %v8573, 7
    %v8575 = vsub.s32 0, %v8574
    %v8576 = vrot.slane %v8571, %v8575
    %8578 = vmatprep.subr.mxu0 0.0
    %8579 = vmatpush1.msra.mxu0 %v8570
    %8580 = vmatprep.subr.mxu0 0.0
    %8581 = vmatpush1.msra.mxu0 %v8569
    %8582 = vmatprep.subr.mxu0 0.0
    %8583 = vmatpush1.msra.mxu0 %v8568
    %8584 = vmatprep.subr.mxu0 0.0
    %8585 = vmatpush1.msra.mxu0 %v8567
    %8586 = vmatprep.subr.mxu0 0.0
    %8587 = vmatpush1.msra.mxu0 %v8566
    %8588 = vmatprep.subr.mxu0 0.0
    %8589 = vmatpush1.msra.mxu0 %v8565
    %8590 = vmatprep.subr.mxu0 0.0
    %8591 = vmatpush1.msra.mxu0 %v8564
    %8592 = vmatprep.subr.mxu0 0.0
    %8593 = vmatpush1.msra.mxu0 %v8563
    %8594 = vmatprep.subr.mxu0 0.0
    %8595 = vmatpush1.msra.mxu0 %v8562
    %8596 = vmatprep.subr.mxu0 0.0
    %8597 = vmatpush1.msra.mxu0 %v8561
    %8598 = vmatprep.subr.mxu0 0.0
    %8599 = vmatpush1.msra.mxu0 %v8560
    %8600 = vmatprep.subr.mxu0 0.0
    %8601 = vmatpush1.msra.mxu0 %v8559
    %8602 = vmatprep.subr.mxu0 0.0
    %8603 = vmatpush1.msra.mxu0 %v8558
    %8604 = vmatprep.subr.mxu0 0.0
    %8605 = vmatpush1.msra.mxu0 %v8557
    %8606 = vmatprep.subr.mxu0 0.0
    %8607 = vmatpush1.msra.mxu0 %v8556
    %8608 = vmatprep.subr.mxu0 0.0
    %8609 = vmatpush1.msra.mxu0 %v8555
    %8610 = vmatprep.subr.mxu0 0.0
    %8611 = vmatpush2.msra.mxu0 0.0
    %8612 = vmatprep.subr.mxu0 0.0
    %8613 = vmatpush2.msra.mxu0 0.0
    %8614 = vmatprep.subr.mxu0 0.0
    %8615 = vmatpush2.msra.mxu0 0.0
    %8616 = vmatprep.subr.mxu0 0.0
    %8617 = vmatpush2.msra.mxu0 0.0
    %8618 = vmatprep.subr.mxu0 0.0
    %8619 = vmatpush2.msra.mxu0 0.0
    %8620 = vmatprep.subr.mxu0 0.0
    %8621 = vmatpush2.msra.mxu0 0.0
    %8622 = vmatprep.subr.mxu0 0.0
    %8623 = vmatpush2.msra.mxu0 0.0
    %8624 = vmatprep.subr.mxu0 0.0
    %8625 = vmatpush2.msra.mxu0 0.0
    %8626 = vmatprep.subr.mxu0 0.0
    %8627 = vmatpush2.msra.mxu0 0.0
    %8628 = vmatprep.subr.mxu0 0.0
    %8629 = vmatpush2.msra.mxu0 0.0
    %8630 = vmatprep.subr.mxu0 0.0
    %8631 = vmatpush2.msra.mxu0 0.0
    %8632 = vmatprep.subr.mxu0 0.0
    %8633 = vmatpush2.msra.mxu0 0.0
    %8634 = vmatprep.subr.mxu0 0.0
    %8635 = vmatpush2.msra.mxu0 0.0
    %8636 = vmatprep.subr.mxu0 0.0
    %8637 = vmatpush2.msra.mxu0 0.0
    %8638 = vmatprep.subr.mxu0 0.0
    %8639 = vmatpush2.msra.mxu0 0.0
    %8640 = vmatprep.subr.mxu0 0.0
    %8641 = vmatpush2.msra.mxu0 0.0
    %8642 = vmatprep.mubr.f32.mxu0 0.0
    %8643 = vmatmul.mubr.f32.gmra.mxu0 %v8554
    %v8644 = vpop.f32.mrf.mxu0
    %v8645 = vadd.f32 %v8576, %v8644
    %v8646 = vpop.f32.mrf.mxu0
    %8647 = vdwg.mxu0
    %vm8648 = vcmask 58368
    %8649 = vst.msk [vmem:[#allocation2] sm:$0x3] %vm8648, %v8645
    // Predicated region
    $region66: #{encoder_forward.1} parent=1 // pred_check
      _
    $region67: #{encoder_forward.1} parent=1 // pred_check_branch
      %8651 = sbr.rel (0) target = $region69
    $region68: #{encoder_forward.1} parent=1 // pred_region
      %s8653 = ssub.s32 32, 32
      %8654 = vsyncadd [#allocation3], %s8653
      %s8656 = sshll.u32 [#allocation2], 4
      %s8657 = int_to_ptr.vmem [resolvable:$true] %s8656
      %8659 = dma.vmem_to_hbm [thread:$0]  %s8657, 32, %s16, [#allocation3]
    $region69: #{encoder_forward.1} parent=1 // pred_fallthru
      _
    // Predicated region
    $region70: #{encoder_forward.1} parent=1 // pred_check
      _
    $region71: #{encoder_forward.1} parent=1 // pred_check_branch
      %8661 = sbr.rel (0) target = $region73
    $region72: #{encoder_forward.1} parent=1 // pred_region
      %8662 = dma.done [#allocation3], 32
    $region73: #{encoder_forward.1} parent=1 // pred_fallthru
      _
    %8663 = vsyncpa [#allocation3], 1

</llo_original>
